<compile_context>
chip_gen: v6e
topology: v6e:2x2x1
jax: 0.10.0
libtpu: 0.0.40
codegen_flags: <defaults>
</compile_context>

<pallas_src>
import functools
import math

import jax
import jax.numpy as jnp
from jax import lax
from jax.experimental import pallas as pl
from jax.experimental.pallas import tpu as pltpu

_BN_EPS = 1e-5

# Tile caps. _TM is deliberately small so that at the toy shapes in __main__
# both grid axes (M "parallel", K reduction "arbitrary") actually run multiple
# steps; for production image sizes raise _TM (256-512) to amortize per-step
# overhead while staying inside the per-generation VMEM budget (64 MiB v7x).
_TM = 64
_TK = 128

_MM_PARAMS = pltpu.CompilerParams(
    dimension_semantics=("parallel", "arbitrary"),
    vmem_limit_bytes=32 * 1024 * 1024,
)
_VQ_PARAMS = pltpu.CompilerParams(
    dimension_semantics=("parallel",),
    vmem_limit_bytes=32 * 1024 * 1024,
)


def _round_up(x, m):
    return ((x + m - 1) // m) * m


# ------------------------------ Pallas kernels ------------------------------

def _fused_matmul_kernel(*refs, n_in, has_res, activation):
    """acc += x1@w1 (+ x2@w2); at last K step: y = act(acc*scale+shift [+res])."""
    x1_ref, w1_ref = refs[0], refs[1]
    pos = 2
    if n_in == 2:
        x2_ref, w2_ref = refs[pos], refs[pos + 1]
        pos += 2
    scale_ref, shift_ref = refs[pos], refs[pos + 1]
    pos += 2
    if has_res:
        res_ref = refs[pos]
        pos += 1
    o_ref, acc_ref = refs[pos], refs[pos + 1]

    k = pl.program_id(1)

    @pl.when(k == 0)
    def _init():
        acc_ref[...] = jnp.zeros_like(acc_ref)

    acc_ref[...] += jnp.dot(x1_ref[...], w1_ref[...],
                            preferred_element_type=jnp.float32)

    if n_in == 2:
        # Second operand pair (concat-free "combine" conv): full-K, add once.
        @pl.when(k == 0)
        def _second_operand():
            acc_ref[...] += jnp.dot(x2_ref[...], w2_ref[...],
                                    preferred_element_type=jnp.float32)

    @pl.when(k == pl.num_programs(1) - 1)
    def _finalize():
        y = acc_ref[...] * scale_ref[...] + shift_ref[...]
        if has_res:
            y = y + res_ref[...].astype(jnp.float32)
        if activation == "relu":
            y = jnp.maximum(y, 0.0)
        elif activation == "tanh":
            y = jnp.tanh(y)
        o_ref[...] = y.astype(o_ref.dtype)


def fused_matmul(x1, w1, scale, shift, activation="none", residual=None,
                 x2=None, w2=None, out_dtype=jnp.bfloat16):
    """y = act((x1@w1 [+ x2@w2]) * scale + shift [+ residual]).

    Tiled over an (M-parallel, K-reduction) grid; bf16 MXU inputs, f32 VMEM
    accumulator scratch.  scale/shift broadcast over rows.
    """
    M, K = x1.shape
    N = w1.shape[1]

    x1 = x1.astype(jnp.bfloat16)
    w1 = w1.astype(jnp.bfloat16)
    scale = scale.reshape(1, N).astype(jnp.float32)
    shift = shift.reshape(1, N).astype(jnp.float32)

    # K (reduction) tiling: a single full-K step for small K, otherwise pad K
    # up to a multiple of _TK so every MXU pass is 128-lane aligned.
    if K <= _TK:
        tk, k_steps = K, 1
    else:
        kpad = _round_up(K, _TK)
        if kpad != K:
            x1 = jnp.pad(x1, ((0, 0), (0, kpad - K)))
            w1 = jnp.pad(w1, ((0, kpad - K), (0, 0)))
        tk, k_steps = _TK, kpad // _TK

    # M (rows) tiling.
    tm = min(_TM, _round_up(M, 8))
    mp = _round_up(M, tm)
    if mp != M:
        x1 = jnp.pad(x1, ((0, mp - M), (0, 0)))
    m_steps = mp // tm

    in_specs = [
        pl.BlockSpec((tm, tk), lambda m, k: (m, k)),
        pl.BlockSpec((tk, N), lambda m, k: (k, 0)),
    ]
    operands = [x1, w1]

    n_in = 1
    if x2 is not None:
        k2 = x2.shape[1]
        x2 = x2.astype(jnp.bfloat16)
        w2 = w2.astype(jnp.bfloat16)
        if mp != M:
            x2 = jnp.pad(x2, ((0, mp - M), (0, 0)))
        in_specs += [
            pl.BlockSpec((tm, k2), lambda m, k: (m, 0)),
            pl.BlockSpec((k2, N), lambda m, k: (0, 0)),
        ]
        operands += [x2, w2]
        n_in = 2

    in_specs += [
        pl.BlockSpec((1, N), lambda m, k: (0, 0)),
        pl.BlockSpec((1, N), lambda m, k: (0, 0)),
    ]
    operands += [scale, shift]

    has_res = residual is not None
    if has_res:
        if mp != M:
            residual = jnp.pad(residual, ((0, mp - M), (0, 0)))
        in_specs += [pl.BlockSpec((tm, N), lambda m, k: (m, 0))]
        operands += [residual]

    kernel = functools.partial(_fused_matmul_kernel, n_in=n_in,
                               has_res=has_res, activation=activation)
    y = pl.pallas_call(
        kernel,
        out_shape=jax.ShapeDtypeStruct((mp, N), out_dtype),
        grid=(m_steps, k_steps),
        in_specs=in_specs,
        out_specs=pl.BlockSpec((tm, N), lambda m, k: (m, 0)),
        scratch_shapes=[pltpu.VMEM((tm, N), jnp.float32)],
        compiler_params=_MM_PARAMS,
    )(*operands)
    return y[:M] if mp != M else y


def _vq_kernel(x_ref, e_ref, ebias_ref, q_ref):
    # Nearest-codebook lookup; |x|^2 dropped (argmin-invariant); first-minimum
    # tie-break matches torch.argmin.  Padded codebook rows carry a huge bias
    # so they are never selected.
    x = x_ref[...].astype(jnp.float32)                         # (TM, D)
    e = e_ref[...]                                             # (KP, D)
    xe = lax.dot_general(x, e, (((1,), (1,)), ((), ())),
                         preferred_element_type=jnp.float32)   # (TM, KP)
    dist = ebias_ref[...] - 2.0 * xe
    kp = dist.shape[1]
    col = lax.broadcasted_iota(jnp.int32, dist.shape, 1)
    min_d = jnp.min(dist, axis=1, keepdims=True)
    idx = jnp.min(jnp.where(dist <= min_d, col, kp), axis=1, keepdims=True)
    onehot = (col == idx).astype(jnp.float32)
    q_ref[...] = jnp.dot(onehot, e,
                         preferred_element_type=jnp.float32).astype(q_ref.dtype)


def vq_quantize(flat_x, codebook):
    M, D = flat_x.shape
    kc = codebook.shape[0]
    kp = _round_up(max(kc, 128), 128)          # full 128-lane distance matrix
    e = codebook.astype(jnp.float32)
    ebias = jnp.sum(e * e, axis=1)
    if kp != kc:
        e = jnp.pad(e, ((0, kp - kc), (0, 0)))
        ebias = jnp.pad(ebias, ((0, kp - kc),), constant_values=1e30)
    ebias = ebias.reshape(1, kp)

    tm = min(256, _round_up(M, 8))
    mp = _round_up(M, tm)
    x = flat_x if mp == M else jnp.pad(flat_x, ((0, mp - M), (0, 0)))

    q = pl.pallas_call(
        _vq_kernel,
        out_shape=jax.ShapeDtypeStruct((mp, D), jnp.float32),
        grid=(mp // tm,),
        in_specs=[pl.BlockSpec((tm, D), lambda m: (m, 0)),
                  pl.BlockSpec((kp, D), lambda m: (0, 0)),
                  pl.BlockSpec((1, kp), lambda m: (0, 0))],
        out_specs=pl.BlockSpec((tm, D), lambda m: (m, 0)),
        compiler_params=_VQ_PARAMS,
    )(x, e, ebias)
    return q[:M] if mp != M else q


# ------------------------------ glue (plain JAX) ----------------------------

def _im2col(x, kh, kw, stride, pad):
    # Wrapper-side im2col (bf16 to halve the traffic).
    # TODO(synk): build the patch matrix inside the kernel (halo windows via
    # Element/manual-DMA BlockSpecs) to avoid the kh*kw HBM expansion.
    B, H, W, C = x.shape
    xp = jnp.pad(x, ((0, 0), (pad, pad), (pad, pad), (0, 0)))
    Ho = (H + 2 * pad - kh) // stride + 1
    Wo = (W + 2 * pad - kw) // stride + 1
    patches = []
    for i in range(kh):
        for j in range(kw):
            patches.append(
                xp[:, i:i + stride * Ho:stride, j:j + stride * Wo:stride, :])
    cols = jnp.concatenate(patches, axis=-1)
    return cols.reshape(B * Ho * Wo, kh * kw * C), (B, Ho, Wo)


def _fold_affine(cout, bias, bn):
    if bn is None:
        scale = jnp.ones((cout,), jnp.float32)
        shift = (bias.astype(jnp.float32) if bias is not None
                 else jnp.zeros((cout,), jnp.float32))
    else:
        scale = bn["gamma"] / jnp.sqrt(bn["var"] + _BN_EPS)
        shift = bn["beta"] - bn["mean"] * scale
        if bias is not None:
            shift = shift + bias * scale
    return scale, shift


def conv_bn_act(x, w, bias, bn, stride, pad, activation, residual=None):
    """Conv2d + folded BatchNorm/bias + optional fused residual + activation."""
    cout, cin, kh, kw = w.shape
    cols, (B, Ho, Wo) = _im2col(x.astype(jnp.bfloat16), kh, kw, stride, pad)
    wmat = jnp.transpose(w, (2, 3, 1, 0)).reshape(kh * kw * cin, cout)
    scale, shift = _fold_affine(cout, bias, bn)
    res = None if residual is None else residual.reshape(-1, cout)
    y = fused_matmul(cols, wmat, scale, shift, activation=activation,
                     residual=res)
    return y.reshape(B, Ho, Wo, cout)


def combine_conv_bn_relu(x1, x2, w, bias, bn):
    """1x1 conv over channel-concat([x1, x2]) without materializing the concat:
    y = relu(bn(x1 @ W[:C1] + x2 @ W[C1:] + b)), fused in one kernel."""
    cout, cin2 = w.shape[0], w.shape[1]
    B, H, Wd, c1 = x1.shape
    c2 = x2.shape[-1]
    wm = w.reshape(cout, cin2).T
    scale, shift = _fold_affine(cout, bias, bn)
    y = fused_matmul(x1.reshape(-1, c1), wm[:c1], scale, shift,
                     activation="relu",
                     x2=x2.reshape(-1, c2), w2=wm[c1:])
    return y.reshape(B, H, Wd, cout)


def _pixel_shuffle2(y, B, H, W, cout):
    # (B*H*W, 4*cout) parity-major channels -> (B, 2H, 2W, cout)
    y = y.reshape(B, H, W, 2, 2, cout)
    y = jnp.transpose(y, (0, 1, 3, 2, 4, 5))
    return y.reshape(B, 2 * H, 2 * W, cout)


def conv_transpose3x3_s2(x, w_t, bias, bn, activation):
    """ConvTranspose2d(k=3, s=2, p=1, output_padding=1) as a 2x2 stride-1 conv
    producing 4*Cout parity channels + pixel shuffle (no zero-dilation)."""
    cin, cout = w_t.shape[0], w_t.shape[1]
    B, H, W, _ = x.shape
    xp = jnp.pad(x.astype(jnp.bfloat16), ((0, 0), (0, 1), (0, 1), (0, 0)))
    patches = [xp[:, a:a + H, b:b + W, :] for a in range(2) for b in range(2)]
    cols = jnp.concatenate(patches, axis=-1).reshape(B * H * W, 4 * cin)

    # G[ph,pw][a,b] = w[:, :, ph+1-2a, pw+1-2b] where valid, else 0.
    wm = jnp.zeros((2, 2, cin, 2, 2, cout), jnp.float32)
    for a in range(2):
        for b in range(2):
            for ph in range(2):
                for pw in range(2):
                    kh = ph + 1 - 2 * a
                    kw = pw + 1 - 2 * b
                    if 0 <= kh < 3 and 0 <= kw < 3:
                        wm = wm.at[a, b, :, ph, pw, :].set(w_t[:, :, kh, kw])
    wm = wm.reshape(4 * cin, 4 * cout)

    scale, shift = _fold_affine(cout, bias, bn)
    y = fused_matmul(cols, wm, jnp.tile(scale, 4), jnp.tile(shift, 4),
                     activation=activation)
    return _pixel_shuffle2(y, B, H, W, cout)


def conv_transpose2x2_s2(x, w_t, bias, bn, activation):
    """ConvTranspose2d(k=2, s=2, p=0): each output parity is a 1x1 conv."""
    cin, cout = w_t.shape[0], w_t.shape[1]
    B, H, W, _ = x.shape
    wm = jnp.transpose(w_t, (0, 2, 3, 1)).reshape(cin, 4 * cout)
    scale, shift = _fold_affine(cout, bias, bn)
    y = fused_matmul(x.reshape(-1, cin).astype(jnp.bfloat16), wm,
                     jnp.tile(scale, 4), jnp.tile(shift, 4),
                     activation=activation)
    return _pixel_shuffle2(y, B, H, W, cout)


def resblock_fwd(x, p, stride):
    out = conv_bn_act(x, p["w1"], p["b1"], p["bn1"], stride, 1, "relu")
    if "wi" in p:
        identity = conv_bn_act(x, p["wi"], None, p["bni"], stride, 0, "none")
    else:
        identity = x
    # second conv: residual add + final ReLU fused into the epilogue
    return conv_bn_act(out, p["w2"], p["b2"], p["bn2"], 1, 1, "relu",
                       residual=identity)


def transpose_resblock_fwd(x, p):
    out = conv_transpose3x3_s2(x, p["wt1"], p["b1"], p["bn1"], "relu")
    identity = conv_transpose2x2_s2(x, p["wtu"], None, p["bnu"], "none")
    return conv_bn_act(out, p["w2"], p["b2"], p["bn2"], 1, 1, "relu",
                       residual=identity)


def vq_fwd(x, codebook):
    B, H, W, C = x.shape
    return vq_quantize(x.reshape(-1, C), codebook).reshape(B, H, W, C)


# --------------------------- parameter construction -------------------------

def _bn_init(c):
    return dict(gamma=jnp.ones((c,), jnp.float32), beta=jnp.zeros((c,), jnp.float32),
                mean=jnp.zeros((c,), jnp.float32), var=jnp.ones((c,), jnp.float32))


def _xavier(key, shape, fan_in, fan_out):
    a = math.sqrt(6.0 / (fan_in + fan_out))
    return jax.random.uniform(key, shape, jnp.float32, -a, a)


class _Keys:
    def __init__(self, key):
        self._key = key

    def __call__(self):
        self._key, sub = jax.random.split(self._key)
        return sub


def _conv_params(kg, cin, cout, k, bias=True, bn=True):
    return dict(
        w=_xavier(kg(), (cout, cin, k, k), cin * k * k, cout * k * k),
        b=jnp.zeros((cout,), jnp.float32) if bias else None,
        bn=_bn_init(cout) if bn else None,
    )


def _resblock_params(kg, in_dim, dim, stride=1):
    p = dict(
        w1=_xavier(kg(), (dim, in_dim, 3, 3), in_dim * 9, dim * 9),
        b1=jnp.zeros((dim,), jnp.float32), bn1=_bn_init(dim),
        w2=_xavier(kg(), (dim, dim, 3, 3), dim * 9, dim * 9),
        b2=jnp.zeros((dim,), jnp.float32), bn2=_bn_init(dim),
    )
    if stride != 1 or in_dim != dim:
        p["wi"] = _xavier(kg(), (dim, in_dim, 1, 1), in_dim, dim)
        p["bni"] = _bn_init(dim)
    return p


def _transpose_resblock_params(kg, in_dim, dim):
    return dict(
        wt1=_xavier(kg(), (in_dim, dim, 3, 3), dim * 9, in_dim * 9),
        b1=jnp.zeros((dim,), jnp.float32), bn1=_bn_init(dim),
        w2=_xavier(kg(), (dim, dim, 3, 3), dim * 9, dim * 9),
        b2=jnp.zeros((dim,), jnp.float32), bn2=_bn_init(dim),
        wtu=_xavier(kg(), (in_dim, dim, 2, 2), dim * 4, in_dim * 4),
        bnu=_bn_init(dim),
    )


def init_params(key, input_dim, hidden_dim, codebook_size):
    kg = _Keys(key)
    hd = hidden_dim
    return dict(
        enc1_c0=_conv_params(kg, input_dim, hd // 4, 3),
        enc1_c1=_conv_params(kg, hd // 4, hd // 2, 3),
        enc1_rb0=_resblock_params(kg, hd // 2, hd),
        enc1_rb1=_resblock_params(kg, hd, hd),
        enc2_rb0=_resblock_params(kg, hd, hd, stride=2),
        enc2_rb1=_resblock_params(kg, hd, hd),
        vq2_emb=jax.random.normal(kg(), (codebook_size, hd), jnp.float32),
        dec2_rb=_resblock_params(kg, hd, hd),
        dec2_trb=_transpose_resblock_params(kg, hd, hd),
        comb1=_conv_params(kg, hd * 2, hd, 1),
        vq1_emb=jax.random.normal(kg(), (codebook_size, hd), jnp.float32),
        comb2=_conv_params(kg, hd * 2, hd, 1),
        dec_rb0=_resblock_params(kg, hd, hd),
        dec_rb1=_resblock_params(kg, hd, hd // 2),
        dec_ct0=dict(
            w=_xavier(kg(), (hd // 2, hd // 4, 3, 3), (hd // 4) * 9, (hd // 2) * 9),
            b=jnp.zeros((hd // 4,), jnp.float32), bn=_bn_init(hd // 4)),
        dec_ct1=dict(
            w=_xavier(kg(), (hd // 4, input_dim, 3, 3), input_dim * 9, (hd // 4) * 9),
            b=jnp.zeros((input_dim,), jnp.float32), bn=None),
    )


# --------------------------------- forward ----------------------------------

def vqvae2_forward(params, x_nchw):
    x = jnp.transpose(x_nchw, (0, 2, 3, 1)).astype(jnp.float32)   # NCHW -> NHWC

    c0, c1 = params["enc1_c0"], params["enc1_c1"]
    h = conv_bn_act(x, c0["w"], c0["b"], c0["bn"], 2, 1, "relu")
    h = conv_bn_act(h, c1["w"], c1["b"], c1["bn"], 2, 1, "relu")
    h = resblock_fwd(h, params["enc1_rb0"], 1)
    encoded1 = resblock_fwd(h, params["enc1_rb1"], 1)

    h = resblock_fwd(encoded1, params["enc2_rb0"], 2)
    encoded2 = resblock_fwd(h, params["enc2_rb1"], 1)

    quantized2 = vq_fwd(encoded2, params["vq2_emb"])

    h = resblock_fwd(quantized2, params["dec2_rb"], 1)
    decoded2 = transpose_resblock_fwd(h, params["dec2_trb"])

    cb = params["comb1"]
    encoded1 = combine_conv_bn_relu(encoded1, decoded2, cb["w"], cb["b"], cb["bn"])

    quantized1 = vq_fwd(encoded1, params["vq1_emb"])

    upsampled2 = jnp.repeat(jnp.repeat(quantized2, 2, axis=1), 2, axis=2)  # nearest x2
    cb2 = params["comb2"]
    combined = combine_conv_bn_relu(quantized1, upsampled2, cb2["w"], cb2["b"], cb2["bn"])

    h = resblock_fwd(combined, params["dec_rb0"], 1)
    h = resblock_fwd(h, params["dec_rb1"], 1)
    ct0 = params["dec_ct0"]
    h = conv_transpose3x3_s2(h, ct0["w"], ct0["b"], ct0["bn"], "relu")
    ct1 = params["dec_ct1"]
    x_recon = conv_transpose3x3_s2(h, ct1["w"], ct1["b"], ct1["bn"], "tanh")

    to_nchw = lambda t: jnp.transpose(t.astype(jnp.float32), (0, 3, 1, 2))
    return (to_nchw(x_recon),
            (to_nchw(encoded1), to_nchw(encoded2)),
            (to_nchw(quantized1), to_nchw(quantized2)))


# ----------------------------------- main ------------------------------------

if __name__ == "__main__":
    root = jax.random.PRNGKey(0)
    kparam, kx = jax.random.split(root)

    input_dim, hidden_dim, codebook_size = 4, 32, 16
    params = init_params(kparam, input_dim, hidden_dim, codebook_size)
    x = jax.random.normal(kx, (2, input_dim, 16, 16), jnp.float32)

    fwd = jax.jit(vqvae2_forward)
    out = fwd(params, x)
    jax.block_until_ready(out)

    x_recon, (e1, e2), (q1, q2) = out
    assert x_recon.shape == (2, input_dim, 16, 16)
    assert e1.shape == (2, hidden_dim, 4, 4) and e2.shape == (2, hidden_dim, 2, 2)
    assert q1.shape == (2, hidden_dim, 4, 4) and q2.shape == (2, hidden_dim, 2, 2)

    print("KERNEL_OK")
</pallas_src>

<mosaic_0001>
module attributes {stable_mosaic.version = 11 : i64} {
  func.func @_fused_matmul_kernel(%arg0: i32, %arg1: i32, %arg2: memref<64x36xbf16, #tpu.memory_space<vmem>>, %arg3: memref<36x8xbf16, #tpu.memory_space<vmem>>, %arg4: memref<1x8xf32, #tpu.memory_space<vmem>>, %arg5: memref<1x8xf32, #tpu.memory_space<vmem>>, %arg6: memref<64x8xbf16, #tpu.memory_space<vmem>>, %arg7: memref<64x8xf32, #tpu.memory_space<vmem>>) attributes {dimension_semantics = [#tpu.dimension_semantics<parallel>, #tpu.dimension_semantics<arbitrary>], iteration_bounds = array<i64: 2, 1>, scalar_prefetch = 0 : i64, scratch_operands = 1 : i64, tpu.core_type = #tpu.core_type<tc>, window_params = [{transform_indices = @transform_0, window_bounds = array<i64: 64, 36>}, {transform_indices = @transform_1, window_bounds = array<i64: 36, 8>}, {pipeline_mode = #tpu.pipeline_mode<synchronous>, transform_indices = @transform_2, window_bounds = array<i64: 1, 8>}, {pipeline_mode = #tpu.pipeline_mode<synchronous>, transform_indices = @transform_3, window_bounds = array<i64: 1, 8>}, {transform_indices = @transform_4, window_bounds = array<i64: 64, 8>}]} {
    %c0_i32 = arith.constant 0 : i32
    %0 = arith.cmpi eq, %arg1, %c0_i32 : i32
    %1 = arith.extui %0 : i1 to i32
    %c0_i32_0 = arith.constant 0 : i32
    %2 = arith.cmpi ne, %1, %c0_i32_0 : i32
    scf.if %2 {
      %cst_10 = arith.constant 0.000000e+00 : f32
      %12 = vector.broadcast %cst_10 : f32 to vector<64x8xf32>
      %c0_11 = arith.constant 0 : index
      %c0_12 = arith.constant 0 : index
      %13 = vector.load %arg7[%c0_11, %c0_12] : memref<64x8xf32, #tpu.memory_space<vmem>>, vector<64x8xf32>
      tpu.vector_store %arg7[%c0_11, %c0_12], %12 {strides = array<i32>} : memref<64x8xf32, #tpu.memory_space<vmem>>, vector<64x8xf32>,
    } else {
    }
    %c0 = arith.constant 0 : index
    %c0_1 = arith.constant 0 : index
    %3 = vector.load %arg7[%c0, %c0_1] : memref<64x8xf32, #tpu.memory_space<vmem>>, vector<64x8xf32>
    %c0_2 = arith.constant 0 : index
    %c0_3 = arith.constant 0 : index
    %4 = vector.load %arg2[%c0_2, %c0_3] : memref<64x36xbf16, #tpu.memory_space<vmem>>, vector<64x36xbf16>
    %c0_4 = arith.constant 0 : index
    %c0_5 = arith.constant 0 : index
    %5 = vector.load %arg3[%c0_4, %c0_5] : memref<36x8xbf16, #tpu.memory_space<vmem>>, vector<36x8xbf16>
    %cst = arith.constant dense<0.000000e+00> : vector<64x8xf32>
    %6 = tpu.matmul %4, %5, %cst {dimension_numbers = #tpu.dot_dimension_numbers<[1], [0], [0], [1], [0, 0, 1, 1], [], []>} : vector<64x36xbf16>, vector<36x8xbf16>, vector<64x8xf32> -> vector<64x8xf32>
    %7 = arith.addf %3, %6 : vector<64x8xf32>
    %c0_6 = arith.constant 0 : index
    %c0_7 = arith.constant 0 : index
    %8 = vector.load %arg7[%c0_6, %c0_7] : memref<64x8xf32, #tpu.memory_space<vmem>>, vector<64x8xf32>
    tpu.vector_store %arg7[%c0_6, %c0_7], %7 {strides = array<i32>} : memref<64x8xf32, #tpu.memory_space<vmem>>, vector<64x8xf32>,
    %c0_i32_8 = arith.constant 0 : i32
    %9 = arith.cmpi eq, %arg1, %c0_i32_8 : i32
    %10 = arith.extui %9 : i1 to i32
    %c0_i32_9 = arith.constant 0 : i32
    %11 = arith.cmpi ne, %10, %c0_i32_9 : i32
    scf.if %11 {
      %c0_10 = arith.constant 0 : index
      %c0_11 = arith.constant 0 : index
      %12 = vector.load %arg7[%c0_10, %c0_11] : memref<64x8xf32, #tpu.memory_space<vmem>>, vector<64x8xf32>
      %c0_12 = arith.constant 0 : index
      %c0_13 = arith.constant 0 : index
      %13 = vector.load %arg4[%c0_12, %c0_13] : memref<1x8xf32, #tpu.memory_space<vmem>>, vector<1x8xf32>
      %14 = vector.broadcast %13 : vector<1x8xf32> to vector<64x8xf32>
      %15 = arith.mulf %12, %14 : vector<64x8xf32>
      %c0_14 = arith.constant 0 : index
      %c0_15 = arith.constant 0 : index
      %16 = vector.load %arg5[%c0_14, %c0_15] : memref<1x8xf32, #tpu.memory_space<vmem>>, vector<1x8xf32>
      %17 = vector.broadcast %16 : vector<1x8xf32> to vector<64x8xf32>
      %18 = arith.addf %15, %17 : vector<64x8xf32>
      %cst_16 = arith.constant 0.000000e+00 : f32
      %19 = vector.broadcast %cst_16 : f32 to vector<64x8xf32>
      %20 = arith.maximumf %18, %19 : vector<64x8xf32>
      %21 = arith.truncf %20 : vector<64x8xf32> to vector<64x8xbf16>
      %c0_17 = arith.constant 0 : index
      %c0_18 = arith.constant 0 : index
      %22 = vector.load %arg6[%c0_17, %c0_18] : memref<64x8xbf16, #tpu.memory_space<vmem>>, vector<64x8xbf16>
      tpu.vector_store %arg6[%c0_17, %c0_18], %21 {strides = array<i32>} : memref<64x8xbf16, #tpu.memory_space<vmem>>, vector<64x8xbf16>,
    } else {
    }
    return
  }
  func.func @transform_0(%arg0: i32, %arg1: i32) -> (i32, i32) {
    %c0_i32 = arith.constant 0 : i32
    return %arg0, %arg1 : i32, i32
  }
  func.func @transform_1(%arg0: i32, %arg1: i32) -> (i32, i32) {
    %c0_i32 = arith.constant 0 : i32
    %c0_i32_0 = arith.constant 0 : i32
    return %arg1, %c0_i32 : i32, i32
  }
  func.func @transform_2(%arg0: i32, %arg1: i32) -> (i32, i32) {
    %c0_i32 = arith.constant 0 : i32
    %c0_i32_0 = arith.constant 0 : i32
    %c0_i32_1 = arith.constant 0 : i32
    return %c0_i32, %c0_i32_0 : i32, i32
  }
  func.func @transform_3(%arg0: i32, %arg1: i32) -> (i32, i32) {
    %c0_i32 = arith.constant 0 : i32
    %c0_i32_0 = arith.constant 0 : i32
    %c0_i32_1 = arith.constant 0 : i32
    return %c0_i32, %c0_i32_0 : i32, i32
  }
  func.func @transform_4(%arg0: i32, %arg1: i32) -> (i32, i32) {
    %c0_i32 = arith.constant 0 : i32
    %c0_i32_0 = arith.constant 0 : i32
    return %arg0, %c0_i32 : i32, i32
  }
}

module attributes {stable_mosaic.version = 11 : i64} {
  func.func @_fused_matmul_kernel(%arg0: i32, %arg1: i32, %arg2: memref<32x72xbf16, #tpu.memory_space<vmem>>, %arg3: memref<72x16xbf16, #tpu.memory_space<vmem>>, %arg4: memref<1x16xf32, #tpu.memory_space<vmem>>, %arg5: memref<1x16xf32, #tpu.memory_space<vmem>>, %arg6: memref<32x16xbf16, #tpu.memory_space<vmem>>, %arg7: memref<32x16xf32, #tpu.memory_space<vmem>>) attributes {dimension_semantics = [#tpu.dimension_semantics<parallel>, #tpu.dimension_semantics<arbitrary>], iteration_bounds = array<i64: 1, 1>, scalar_prefetch = 0 : i64, scratch_operands = 1 : i64, tpu.core_type = #tpu.core_type<tc>, window_params = [{transform_indices = @transform_0, window_bounds = array<i64: 32, 72>}, {transform_indices = @transform_1, window_bounds = array<i64: 72, 16>}, {pipeline_mode = #tpu.pipeline_mode<synchronous>, transform_indices = @transform_2, window_bounds = array<i64: 1, 16>}, {pipeline_mode = #tpu.pipeline_mode<synchronous>, transform_indices = @transform_3, window_bounds = array<i64: 1, 16>}, {transform_indices = @transform_4, window_bounds = array<i64: 32, 16>}]} {
    %c0_i32 = arith.constant 0 : i32
    %0 = arith.cmpi eq, %arg1, %c0_i32 : i32
    %1 = arith.extui %0 : i1 to i32
    %c0_i32_0 = arith.constant 0 : i32
    %2 = arith.cmpi ne, %1, %c0_i32_0 : i32
    scf.if %2 {
      %cst_10 = arith.constant 0.000000e+00 : f32
      %12 = vector.broadcast %cst_10 : f32 to vector<32x16xf32>
      %c0_11 = arith.constant 0 : index
      %c0_12 = arith.constant 0 : index
      %13 = vector.load %arg7[%c0_11, %c0_12] : memref<32x16xf32, #tpu.memory_space<vmem>>, vector<32x16xf32>
      tpu.vector_store %arg7[%c0_11, %c0_12], %12 {strides = array<i32>} : memref<32x16xf32, #tpu.memory_space<vmem>>, vector<32x16xf32>,
    } else {
    }
    %c0 = arith.constant 0 : index
    %c0_1 = arith.constant 0 : index
    %3 = vector.load %arg7[%c0, %c0_1] : memref<32x16xf32, #tpu.memory_space<vmem>>, vector<32x16xf32>
    %c0_2 = arith.constant 0 : index
    %c0_3 = arith.constant 0 : index
    %4 = vector.load %arg2[%c0_2, %c0_3] : memref<32x72xbf16, #tpu.memory_space<vmem>>, vector<32x72xbf16>
    %c0_4 = arith.constant 0 : index
    %c0_5 = arith.constant 0 : index
    %5 = vector.load %arg3[%c0_4, %c0_5] : memref<72x16xbf16, #tpu.memory_space<vmem>>, vector<72x16xbf16>
    %cst = arith.constant dense<0.000000e+00> : vector<32x16xf32>
    %6 = tpu.matmul %4, %5, %cst {dimension_numbers = #tpu.dot_dimension_numbers<[1], [0], [0], [1], [0, 0, 1, 1], [], []>} : vector<32x72xbf16>, vector<72x16xbf16>, vector<32x16xf32> -> vector<32x16xf32>
    %7 = arith.addf %3, %6 : vector<32x16xf32>
    %c0_6 = arith.constant 0 : index
    %c0_7 = arith.constant 0 : index
    %8 = vector.load %arg7[%c0_6, %c0_7] : memref<32x16xf32, #tpu.memory_space<vmem>>, vector<32x16xf32>
    tpu.vector_store %arg7[%c0_6, %c0_7], %7 {strides = array<i32>} : memref<32x16xf32, #tpu.memory_space<vmem>>, vector<32x16xf32>,
    %c0_i32_8 = arith.constant 0 : i32
    %9 = arith.cmpi eq, %arg1, %c0_i32_8 : i32
    %10 = arith.extui %9 : i1 to i32
    %c0_i32_9 = arith.constant 0 : i32
    %11 = arith.cmpi ne, %10, %c0_i32_9 : i32
    scf.if %11 {
      %c0_10 = arith.constant 0 : index
      %c0_11 = arith.constant 0 : index
      %12 = vector.load %arg7[%c0_10, %c0_11] : memref<32x16xf32, #tpu.memory_space<vmem>>, vector<32x16xf32>
      %c0_12 = arith.constant 0 : index
      %c0_13 = arith.constant 0 : index
      %13 = vector.load %arg4[%c0_12, %c0_13] : memref<1x16xf32, #tpu.memory_space<vmem>>, vector<1x16xf32>
      %14 = vector.broadcast %13 : vector<1x16xf32> to vector<32x16xf32>
      %15 = arith.mulf %12, %14 : vector<32x16xf32>
      %c0_14 = arith.constant 0 : index
      %c0_15 = arith.constant 0 : index
      %16 = vector.load %arg5[%c0_14, %c0_15] : memref<1x16xf32, #tpu.memory_space<vmem>>, vector<1x16xf32>
      %17 = vector.broadcast %16 : vector<1x16xf32> to vector<32x16xf32>
      %18 = arith.addf %15, %17 : vector<32x16xf32>
      %cst_16 = arith.constant 0.000000e+00 : f32
      %19 = vector.broadcast %cst_16 : f32 to vector<32x16xf32>
      %20 = arith.maximumf %18, %19 : vector<32x16xf32>
      %21 = arith.truncf %20 : vector<32x16xf32> to vector<32x16xbf16>
      %c0_17 = arith.constant 0 : index
      %c0_18 = arith.constant 0 : index
      %22 = vector.load %arg6[%c0_17, %c0_18] : memref<32x16xbf16, #tpu.memory_space<vmem>>, vector<32x16xbf16>
      tpu.vector_store %arg6[%c0_17, %c0_18], %21 {strides = array<i32>} : memref<32x16xbf16, #tpu.memory_space<vmem>>, vector<32x16xbf16>,
    } else {
    }
    return
  }
  func.func @transform_0(%arg0: i32, %arg1: i32) -> (i32, i32) {
    %c0_i32 = arith.constant 0 : i32
    return %arg0, %arg1 : i32, i32
  }
  func.func @transform_1(%arg0: i32, %arg1: i32) -> (i32, i32) {
    %c0_i32 = arith.constant 0 : i32
    %c0_i32_0 = arith.constant 0 : i32
    return %arg1, %c0_i32 : i32, i32
  }
  func.func @transform_2(%arg0: i32, %arg1: i32) -> (i32, i32) {
    %c0_i32 = arith.constant 0 : i32
    %c0_i32_0 = arith.constant 0 : i32
    %c0_i32_1 = arith.constant 0 : i32
    return %c0_i32, %c0_i32_0 : i32, i32
  }
  func.func @transform_3(%arg0: i32, %arg1: i32) -> (i32, i32) {
    %c0_i32 = arith.constant 0 : i32
    %c0_i32_0 = arith.constant 0 : i32
    %c0_i32_1 = arith.constant 0 : i32
    return %c0_i32, %c0_i32_0 : i32, i32
  }
  func.func @transform_4(%arg0: i32, %arg1: i32) -> (i32, i32) {
    %c0_i32 = arith.constant 0 : i32
    %c0_i32_0 = arith.constant 0 : i32
    return %arg0, %c0_i32 : i32, i32
  }
}

module attributes {stable_mosaic.version = 11 : i64} {
  func.func @_fused_matmul_kernel(%arg0: i32, %arg1: i32, %arg2: memref<32x128xbf16, #tpu.memory_space<vmem>>, %arg3: memref<128x32xbf16, #tpu.memory_space<vmem>>, %arg4: memref<1x32xf32, #tpu.memory_space<vmem>>, %arg5: memref<1x32xf32, #tpu.memory_space<vmem>>, %arg6: memref<32x32xbf16, #tpu.memory_space<vmem>>, %arg7: memref<32x32xf32, #tpu.memory_space<vmem>>) attributes {dimension_semantics = [#tpu.dimension_semantics<parallel>, #tpu.dimension_semantics<arbitrary>], iteration_bounds = array<i64: 1, 2>, scalar_prefetch = 0 : i64, scratch_operands = 1 : i64, tpu.core_type = #tpu.core_type<tc>, window_params = [{transform_indices = @transform_0, window_bounds = array<i64: 32, 128>}, {transform_indices = @transform_1, window_bounds = array<i64: 128, 32>}, {pipeline_mode = #tpu.pipeline_mode<synchronous>, transform_indices = @transform_2, window_bounds = array<i64: 1, 32>}, {pipeline_mode = #tpu.pipeline_mode<synchronous>, transform_indices = @transform_3, window_bounds = array<i64: 1, 32>}, {transform_indices = @transform_4, window_bounds = array<i64: 32, 32>}]} {
    %c0_i32 = arith.constant 0 : i32
    %0 = arith.cmpi eq, %arg1, %c0_i32 : i32
    %1 = arith.extui %0 : i1 to i32
    %c0_i32_0 = arith.constant 0 : i32
    %2 = arith.cmpi ne, %1, %c0_i32_0 : i32
    scf.if %2 {
      %cst_9 = arith.constant 0.000000e+00 : f32
      %12 = vector.broadcast %cst_9 : f32 to vector<32x32xf32>
      %c0_10 = arith.constant 0 : index
      %c0_11 = arith.constant 0 : index
      %13 = vector.load %arg7[%c0_10, %c0_11] : memref<32x32xf32, #tpu.memory_space<vmem>>, vector<32x32xf32>
      tpu.vector_store %arg7[%c0_10, %c0_11], %12 {strides = array<i32>} : memref<32x32xf32, #tpu.memory_space<vmem>>, vector<32x32xf32>,
    } else {
    }
    %c0 = arith.constant 0 : index
    %c0_1 = arith.constant 0 : index
    %3 = vector.load %arg7[%c0, %c0_1] : memref<32x32xf32, #tpu.memory_space<vmem>>, vector<32x32xf32>
    %c0_2 = arith.constant 0 : index
    %c0_3 = arith.constant 0 : index
    %4 = vector.load %arg2[%c0_2, %c0_3] : memref<32x128xbf16, #tpu.memory_space<vmem>>, vector<32x128xbf16>
    %c0_4 = arith.constant 0 : index
    %c0_5 = arith.constant 0 : index
    %5 = vector.load %arg3[%c0_4, %c0_5] : memref<128x32xbf16, #tpu.memory_space<vmem>>, vector<128x32xbf16>
    %cst = arith.constant dense<0.000000e+00> : vector<32x32xf32>
    %6 = tpu.matmul %4, %5, %cst {dimension_numbers = #tpu.dot_dimension_numbers<[1], [0], [0], [1], [0, 0, 1, 1], [], []>} : vector<32x128xbf16>, vector<128x32xbf16>, vector<32x32xf32> -> vector<32x32xf32>
    %7 = arith.addf %3, %6 : vector<32x32xf32>
    %c0_6 = arith.constant 0 : index
    %c0_7 = arith.constant 0 : index
    %8 = vector.load %arg7[%c0_6, %c0_7] : memref<32x32xf32, #tpu.memory_space<vmem>>, vector<32x32xf32>
    tpu.vector_store %arg7[%c0_6, %c0_7], %7 {strides = array<i32>} : memref<32x32xf32, #tpu.memory_space<vmem>>, vector<32x32xf32>,
    %c1_i32 = arith.constant 1 : i32
    %9 = arith.cmpi eq, %arg1, %c1_i32 : i32
    %10 = arith.extui %9 : i1 to i32
    %c0_i32_8 = arith.constant 0 : i32
    %11 = arith.cmpi ne, %10, %c0_i32_8 : i32
    scf.if %11 {
      %c0_9 = arith.constant 0 : index
      %c0_10 = arith.constant 0 : index
      %12 = vector.load %arg7[%c0_9, %c0_10] : memref<32x32xf32, #tpu.memory_space<vmem>>, vector<32x32xf32>
      %c0_11 = arith.constant 0 : index
      %c0_12 = arith.constant 0 : index
      %13 = vector.load %arg4[%c0_11, %c0_12] : memref<1x32xf32, #tpu.memory_space<vmem>>, vector<1x32xf32>
      %14 = vector.broadcast %13 : vector<1x32xf32> to vector<32x32xf32>
      %15 = arith.mulf %12, %14 : vector<32x32xf32>
      %c0_13 = arith.constant 0 : index
      %c0_14 = arith.constant 0 : index
      %16 = vector.load %arg5[%c0_13, %c0_14] : memref<1x32xf32, #tpu.memory_space<vmem>>, vector<1x32xf32>
      %17 = vector.broadcast %16 : vector<1x32xf32> to vector<32x32xf32>
      %18 = arith.addf %15, %17 : vector<32x32xf32>
      %cst_15 = arith.constant 0.000000e+00 : f32
      %19 = vector.broadcast %cst_15 : f32 to vector<32x32xf32>
      %20 = arith.maximumf %18, %19 : vector<32x32xf32>
      %21 = arith.truncf %20 : vector<32x32xf32> to vector<32x32xbf16>
      %c0_16 = arith.constant 0 : index
      %c0_17 = arith.constant 0 : index
      %22 = vector.load %arg6[%c0_16, %c0_17] : memref<32x32xbf16, #tpu.memory_space<vmem>>, vector<32x32xbf16>
      tpu.vector_store %arg6[%c0_16, %c0_17], %21 {strides = array<i32>} : memref<32x32xbf16, #tpu.memory_space<vmem>>, vector<32x32xbf16>,
    } else {
    }
    return
  }
  func.func @transform_0(%arg0: i32, %arg1: i32) -> (i32, i32) {
    %c0_i32 = arith.constant 0 : i32
    return %arg0, %arg1 : i32, i32
  }
  func.func @transform_1(%arg0: i32, %arg1: i32) -> (i32, i32) {
    %c0_i32 = arith.constant 0 : i32
    %c0_i32_0 = arith.constant 0 : i32
    return %arg1, %c0_i32 : i32, i32
  }
  func.func @transform_2(%arg0: i32, %arg1: i32) -> (i32, i32) {
    %c0_i32 = arith.constant 0 : i32
    %c0_i32_0 = arith.constant 0 : i32
    %c0_i32_1 = arith.constant 0 : i32
    return %c0_i32, %c0_i32_0 : i32, i32
  }
  func.func @transform_3(%arg0: i32, %arg1: i32) -> (i32, i32) {
    %c0_i32 = arith.constant 0 : i32
    %c0_i32_0 = arith.constant 0 : i32
    %c0_i32_1 = arith.constant 0 : i32
    return %c0_i32, %c0_i32_0 : i32, i32
  }
  func.func @transform_4(%arg0: i32, %arg1: i32) -> (i32, i32) {
    %c0_i32 = arith.constant 0 : i32
    %c0_i32_0 = arith.constant 0 : i32
    return %arg0, %c0_i32 : i32, i32
  }
}

module attributes {stable_mosaic.version = 11 : i64} {
  func.func @_fused_matmul_kernel(%arg0: i32, %arg1: i32, %arg2: memref<32x16xbf16, #tpu.memory_space<vmem>>, %arg3: memref<16x32xbf16, #tpu.memory_space<vmem>>, %arg4: memref<1x32xf32, #tpu.memory_space<vmem>>, %arg5: memref<1x32xf32, #tpu.memory_space<vmem>>, %arg6: memref<32x32xbf16, #tpu.memory_space<vmem>>, %arg7: memref<32x32xf32, #tpu.memory_space<vmem>>) attributes {dimension_semantics = [#tpu.dimension_semantics<parallel>, #tpu.dimension_semantics<arbitrary>], iteration_bounds = array<i64: 1, 1>, scalar_prefetch = 0 : i64, scratch_operands = 1 : i64, tpu.core_type = #tpu.core_type<tc>, window_params = [{transform_indices = @transform_0, window_bounds = array<i64: 32, 16>}, {transform_indices = @transform_1, window_bounds = array<i64: 16, 32>}, {pipeline_mode = #tpu.pipeline_mode<synchronous>, transform_indices = @transform_2, window_bounds = array<i64: 1, 32>}, {pipeline_mode = #tpu.pipeline_mode<synchronous>, transform_indices = @transform_3, window_bounds = array<i64: 1, 32>}, {transform_indices = @transform_4, window_bounds = array<i64: 32, 32>}]} {
    %c0_i32 = arith.constant 0 : i32
    %0 = arith.cmpi eq, %arg1, %c0_i32 : i32
    %1 = arith.extui %0 : i1 to i32
    %c0_i32_0 = arith.constant 0 : i32
    %2 = arith.cmpi ne, %1, %c0_i32_0 : i32
    scf.if %2 {
      %cst_10 = arith.constant 0.000000e+00 : f32
      %12 = vector.broadcast %cst_10 : f32 to vector<32x32xf32>
      %c0_11 = arith.constant 0 : index
      %c0_12 = arith.constant 0 : index
      %13 = vector.load %arg7[%c0_11, %c0_12] : memref<32x32xf32, #tpu.memory_space<vmem>>, vector<32x32xf32>
      tpu.vector_store %arg7[%c0_11, %c0_12], %12 {strides = array<i32>} : memref<32x32xf32, #tpu.memory_space<vmem>>, vector<32x32xf32>,
    } else {
    }
    %c0 = arith.constant 0 : index
    %c0_1 = arith.constant 0 : index
    %3 = vector.load %arg7[%c0, %c0_1] : memref<32x32xf32, #tpu.memory_space<vmem>>, vector<32x32xf32>
    %c0_2 = arith.constant 0 : index
    %c0_3 = arith.constant 0 : index
    %4 = vector.load %arg2[%c0_2, %c0_3] : memref<32x16xbf16, #tpu.memory_space<vmem>>, vector<32x16xbf16>
    %c0_4 = arith.constant 0 : index
    %c0_5 = arith.constant 0 : index
    %5 = vector.load %arg3[%c0_4, %c0_5] : memref<16x32xbf16, #tpu.memory_space<vmem>>, vector<16x32xbf16>
    %cst = arith.constant dense<0.000000e+00> : vector<32x32xf32>
    %6 = tpu.matmul %4, %5, %cst {dimension_numbers = #tpu.dot_dimension_numbers<[1], [0], [0], [1], [0, 0, 1, 1], [], []>} : vector<32x16xbf16>, vector<16x32xbf16>, vector<32x32xf32> -> vector<32x32xf32>
    %7 = arith.addf %3, %6 : vector<32x32xf32>
    %c0_6 = arith.constant 0 : index
    %c0_7 = arith.constant 0 : index
    %8 = vector.load %arg7[%c0_6, %c0_7] : memref<32x32xf32, #tpu.memory_space<vmem>>, vector<32x32xf32>
    tpu.vector_store %arg7[%c0_6, %c0_7], %7 {strides = array<i32>} : memref<32x32xf32, #tpu.memory_space<vmem>>, vector<32x32xf32>,
    %c0_i32_8 = arith.constant 0 : i32
    %9 = arith.cmpi eq, %arg1, %c0_i32_8 : i32
    %10 = arith.extui %9 : i1 to i32
    %c0_i32_9 = arith.constant 0 : i32
    %11 = arith.cmpi ne, %10, %c0_i32_9 : i32
    scf.if %11 {
      %c0_10 = arith.constant 0 : index
      %c0_11 = arith.constant 0 : index
      %12 = vector.load %arg7[%c0_10, %c0_11] : memref<32x32xf32, #tpu.memory_space<vmem>>, vector<32x32xf32>
      %c0_12 = arith.constant 0 : index
      %c0_13 = arith.constant 0 : index
      %13 = vector.load %arg4[%c0_12, %c0_13] : memref<1x32xf32, #tpu.memory_space<vmem>>, vector<1x32xf32>
      %14 = vector.broadcast %13 : vector<1x32xf32> to vector<32x32xf32>
      %15 = arith.mulf %12, %14 : vector<32x32xf32>
      %c0_14 = arith.constant 0 : index
      %c0_15 = arith.constant 0 : index
      %16 = vector.load %arg5[%c0_14, %c0_15] : memref<1x32xf32, #tpu.memory_space<vmem>>, vector<1x32xf32>
      %17 = vector.broadcast %16 : vector<1x32xf32> to vector<32x32xf32>
      %18 = arith.addf %15, %17 : vector<32x32xf32>
      %19 = arith.truncf %18 : vector<32x32xf32> to vector<32x32xbf16>
      %c0_16 = arith.constant 0 : index
      %c0_17 = arith.constant 0 : index
      %20 = vector.load %arg6[%c0_16, %c0_17] : memref<32x32xbf16, #tpu.memory_space<vmem>>, vector<32x32xbf16>
      tpu.vector_store %arg6[%c0_16, %c0_17], %19 {strides = array<i32>} : memref<32x32xbf16, #tpu.memory_space<vmem>>, vector<32x32xbf16>,
    } else {
    }
    return
  }
  func.func @transform_0(%arg0: i32, %arg1: i32) -> (i32, i32) {
    %c0_i32 = arith.constant 0 : i32
    return %arg0, %arg1 : i32, i32
  }
  func.func @transform_1(%arg0: i32, %arg1: i32) -> (i32, i32) {
    %c0_i32 = arith.constant 0 : i32
    %c0_i32_0 = arith.constant 0 : i32
    return %arg1, %c0_i32 : i32, i32
  }
  func.func @transform_2(%arg0: i32, %arg1: i32) -> (i32, i32) {
    %c0_i32 = arith.constant 0 : i32
    %c0_i32_0 = arith.constant 0 : i32
    %c0_i32_1 = arith.constant 0 : i32
    return %c0_i32, %c0_i32_0 : i32, i32
  }
  func.func @transform_3(%arg0: i32, %arg1: i32) -> (i32, i32) {
    %c0_i32 = arith.constant 0 : i32
    %c0_i32_0 = arith.constant 0 : i32
    %c0_i32_1 = arith.constant 0 : i32
    return %c0_i32, %c0_i32_0 : i32, i32
  }
  func.func @transform_4(%arg0: i32, %arg1: i32) -> (i32, i32) {
    %c0_i32 = arith.constant 0 : i32
    %c0_i32_0 = arith.constant 0 : i32
    return %arg0, %c0_i32 : i32, i32
  }
}

module attributes {stable_mosaic.version = 11 : i64} {
  func.func @_fused_matmul_kernel(%arg0: i32, %arg1: i32, %arg2: memref<32x128xbf16, #tpu.memory_space<vmem>>, %arg3: memref<128x32xbf16, #tpu.memory_space<vmem>>, %arg4: memref<1x32xf32, #tpu.memory_space<vmem>>, %arg5: memref<1x32xf32, #tpu.memory_space<vmem>>, %arg6: memref<32x32xbf16, #tpu.memory_space<vmem>>, %arg7: memref<32x32xbf16, #tpu.memory_space<vmem>>, %arg8: memref<32x32xf32, #tpu.memory_space<vmem>>) attributes {dimension_semantics = [#tpu.dimension_semantics<parallel>, #tpu.dimension_semantics<arbitrary>], iteration_bounds = array<i64: 1, 3>, scalar_prefetch = 0 : i64, scratch_operands = 1 : i64, tpu.core_type = #tpu.core_type<tc>, window_params = [{transform_indices = @transform_0, window_bounds = array<i64: 32, 128>}, {transform_indices = @transform_1, window_bounds = array<i64: 128, 32>}, {pipeline_mode = #tpu.pipeline_mode<synchronous>, transform_indices = @transform_2, window_bounds = array<i64: 1, 32>}, {pipeline_mode = #tpu.pipeline_mode<synchronous>, transform_indices = @transform_3, window_bounds = array<i64: 1, 32>}, {transform_indices = @transform_4, window_bounds = array<i64: 32, 32>}, {transform_indices = @transform_5, window_bounds = array<i64: 32, 32>}]} {
    %c0_i32 = arith.constant 0 : i32
    %0 = arith.cmpi eq, %arg1, %c0_i32 : i32
    %1 = arith.extui %0 : i1 to i32
    %c0_i32_0 = arith.constant 0 : i32
    %2 = arith.cmpi ne, %1, %c0_i32_0 : i32
    scf.if %2 {
      %cst_9 = arith.constant 0.000000e+00 : f32
      %12 = vector.broadcast %cst_9 : f32 to vector<32x32xf32>
      %c0_10 = arith.constant 0 : index
      %c0_11 = arith.constant 0 : index
      %13 = vector.load %arg8[%c0_10, %c0_11] : memref<32x32xf32, #tpu.memory_space<vmem>>, vector<32x32xf32>
      tpu.vector_store %arg8[%c0_10, %c0_11], %12 {strides = array<i32>} : memref<32x32xf32, #tpu.memory_space<vmem>>, vector<32x32xf32>,
    } else {
    }
    %c0 = arith.constant 0 : index
    %c0_1 = arith.constant 0 : index
    %3 = vector.load %arg8[%c0, %c0_1] : memref<32x32xf32, #tpu.memory_space<vmem>>, vector<32x32xf32>
    %c0_2 = arith.constant 0 : index
    %c0_3 = arith.constant 0 : index
    %4 = vector.load %arg2[%c0_2, %c0_3] : memref<32x128xbf16, #tpu.memory_space<vmem>>, vector<32x128xbf16>
    %c0_4 = arith.constant 0 : index
    %c0_5 = arith.constant 0 : index
    %5 = vector.load %arg3[%c0_4, %c0_5] : memref<128x32xbf16, #tpu.memory_space<vmem>>, vector<128x32xbf16>
    %cst = arith.constant dense<0.000000e+00> : vector<32x32xf32>
    %6 = tpu.matmul %4, %5, %cst {dimension_numbers = #tpu.dot_dimension_numbers<[1], [0], [0], [1], [0, 0, 1, 1], [], []>} : vector<32x128xbf16>, vector<128x32xbf16>, vector<32x32xf32> -> vector<32x32xf32>
    %7 = arith.addf %3, %6 : vector<32x32xf32>
    %c0_6 = arith.constant 0 : index
    %c0_7 = arith.constant 0 : index
    %8 = vector.load %arg8[%c0_6, %c0_7] : memref<32x32xf32, #tpu.memory_space<vmem>>, vector<32x32xf32>
    tpu.vector_store %arg8[%c0_6, %c0_7], %7 {strides = array<i32>} : memref<32x32xf32, #tpu.memory_space<vmem>>, vector<32x32xf32>,
    %c2_i32 = arith.constant 2 : i32
    %9 = arith.cmpi eq, %arg1, %c2_i32 : i32
    %10 = arith.extui %9 : i1 to i32
    %c0_i32_8 = arith.constant 0 : i32
    %11 = arith.cmpi ne, %10, %c0_i32_8 : i32
    scf.if %11 {
      %c0_9 = arith.constant 0 : index
      %c0_10 = arith.constant 0 : index
      %12 = vector.load %arg8[%c0_9, %c0_10] : memref<32x32xf32, #tpu.memory_space<vmem>>, vector<32x32xf32>
      %c0_11 = arith.constant 0 : index
      %c0_12 = arith.constant 0 : index
      %13 = vector.load %arg4[%c0_11, %c0_12] : memref<1x32xf32, #tpu.memory_space<vmem>>, vector<1x32xf32>
      %14 = vector.broadcast %13 : vector<1x32xf32> to vector<32x32xf32>
      %15 = arith.mulf %12, %14 : vector<32x32xf32>
      %c0_13 = arith.constant 0 : index
      %c0_14 = arith.constant 0 : index
      %16 = vector.load %arg5[%c0_13, %c0_14] : memref<1x32xf32, #tpu.memory_space<vmem>>, vector<1x32xf32>
      %17 = vector.broadcast %16 : vector<1x32xf32> to vector<32x32xf32>
      %18 = arith.addf %15, %17 : vector<32x32xf32>
      %c0_15 = arith.constant 0 : index
      %c0_16 = arith.constant 0 : index
      %19 = vector.load %arg6[%c0_15, %c0_16] : memref<32x32xbf16, #tpu.memory_space<vmem>>, vector<32x32xbf16>
      %20 = arith.extf %19 : vector<32x32xbf16> to vector<32x32xf32>
      %21 = arith.addf %18, %20 : vector<32x32xf32>
      %cst_17 = arith.constant 0.000000e+00 : f32
      %22 = vector.broadcast %cst_17 : f32 to vector<32x32xf32>
      %23 = arith.maximumf %21, %22 : vector<32x32xf32>
      %24 = arith.truncf %23 : vector<32x32xf32> to vector<32x32xbf16>
      %c0_18 = arith.constant 0 : index
      %c0_19 = arith.constant 0 : index
      %25 = vector.load %arg7[%c0_18, %c0_19] : memref<32x32xbf16, #tpu.memory_space<vmem>>, vector<32x32xbf16>
      tpu.vector_store %arg7[%c0_18, %c0_19], %24 {strides = array<i32>} : memref<32x32xbf16, #tpu.memory_space<vmem>>, vector<32x32xbf16>,
    } else {
    }
    return
  }
  func.func @transform_0(%arg0: i32, %arg1: i32) -> (i32, i32) {
    %c0_i32 = arith.constant 0 : i32
    return %arg0, %arg1 : i32, i32
  }
  func.func @transform_1(%arg0: i32, %arg1: i32) -> (i32, i32) {
    %c0_i32 = arith.constant 0 : i32
    %c0_i32_0 = arith.constant 0 : i32
    return %arg1, %c0_i32 : i32, i32
  }
  func.func @transform_2(%arg0: i32, %arg1: i32) -> (i32, i32) {
    %c0_i32 = arith.constant 0 : i32
    %c0_i32_0 = arith.constant 0 : i32
    %c0_i32_1 = arith.constant 0 : i32
    return %c0_i32, %c0_i32_0 : i32, i32
  }
  func.func @transform_3(%arg0: i32, %arg1: i32) -> (i32, i32) {
    %c0_i32 = arith.constant 0 : i32
    %c0_i32_0 = arith.constant 0 : i32
    %c0_i32_1 = arith.constant 0 : i32
    return %c0_i32, %c0_i32_0 : i32, i32
  }
  func.func @transform_4(%arg0: i32, %arg1: i32) -> (i32, i32) {
    %c0_i32 = arith.constant 0 : i32
    %c0_i32_0 = arith.constant 0 : i32
    return %arg0, %c0_i32 : i32, i32
  }
  func.func @transform_5(%arg0: i32, %arg1: i32) -> (i32, i32) {
    %c0_i32 = arith.constant 0 : i32
    %c0_i32_0 = arith.constant 0 : i32
    return %arg0, %c0_i32 : i32, i32
  }
}

module attributes {stable_mosaic.version = 11 : i64} {
  func.func @_fused_matmul_kernel(%arg0: i32, %arg1: i32, %arg2: memref<32x128xbf16, #tpu.memory_space<vmem>>, %arg3: memref<128x32xbf16, #tpu.memory_space<vmem>>, %arg4: memref<1x32xf32, #tpu.memory_space<vmem>>, %arg5: memref<1x32xf32, #tpu.memory_space<vmem>>, %arg6: memref<32x32xbf16, #tpu.memory_space<vmem>>, %arg7: memref<32x32xf32, #tpu.memory_space<vmem>>) attributes {dimension_semantics = [#tpu.dimension_semantics<parallel>, #tpu.dimension_semantics<arbitrary>], iteration_bounds = array<i64: 1, 3>, scalar_prefetch = 0 : i64, scratch_operands = 1 : i64, tpu.core_type = #tpu.core_type<tc>, window_params = [{transform_indices = @transform_0, window_bounds = array<i64: 32, 128>}, {transform_indices = @transform_1, window_bounds = array<i64: 128, 32>}, {pipeline_mode = #tpu.pipeline_mode<synchronous>, transform_indices = @transform_2, window_bounds = array<i64: 1, 32>}, {pipeline_mode = #tpu.pipeline_mode<synchronous>, transform_indices = @transform_3, window_bounds = array<i64: 1, 32>}, {transform_indices = @transform_4, window_bounds = array<i64: 32, 32>}]} {
    %c0_i32 = arith.constant 0 : i32
    %0 = arith.cmpi eq, %arg1, %c0_i32 : i32
    %1 = arith.extui %0 : i1 to i32
    %c0_i32_0 = arith.constant 0 : i32
    %2 = arith.cmpi ne, %1, %c0_i32_0 : i32
    scf.if %2 {
      %cst_9 = arith.constant 0.000000e+00 : f32
      %12 = vector.broadcast %cst_9 : f32 to vector<32x32xf32>
      %c0_10 = arith.constant 0 : index
      %c0_11 = arith.constant 0 : index
      %13 = vector.load %arg7[%c0_10, %c0_11] : memref<32x32xf32, #tpu.memory_space<vmem>>, vector<32x32xf32>
      tpu.vector_store %arg7[%c0_10, %c0_11], %12 {strides = array<i32>} : memref<32x32xf32, #tpu.memory_space<vmem>>, vector<32x32xf32>,
    } else {
    }
    %c0 = arith.constant 0 : index
    %c0_1 = arith.constant 0 : index
    %3 = vector.load %arg7[%c0, %c0_1] : memref<32x32xf32, #tpu.memory_space<vmem>>, vector<32x32xf32>
    %c0_2 = arith.constant 0 : index
    %c0_3 = arith.constant 0 : index
    %4 = vector.load %arg2[%c0_2, %c0_3] : memref<32x128xbf16, #tpu.memory_space<vmem>>, vector<32x128xbf16>
    %c0_4 = arith.constant 0 : index
    %c0_5 = arith.constant 0 : index
    %5 = vector.load %arg3[%c0_4, %c0_5] : memref<128x32xbf16, #tpu.memory_space<vmem>>, vector<128x32xbf16>
    %cst = arith.constant dense<0.000000e+00> : vector<32x32xf32>
    %6 = tpu.matmul %4, %5, %cst {dimension_numbers = #tpu.dot_dimension_numbers<[1], [0], [0], [1], [0, 0, 1, 1], [], []>} : vector<32x128xbf16>, vector<128x32xbf16>, vector<32x32xf32> -> vector<32x32xf32>
    %7 = arith.addf %3, %6 : vector<32x32xf32>
    %c0_6 = arith.constant 0 : index
    %c0_7 = arith.constant 0 : index
    %8 = vector.load %arg7[%c0_6, %c0_7] : memref<32x32xf32, #tpu.memory_space<vmem>>, vector<32x32xf32>
    tpu.vector_store %arg7[%c0_6, %c0_7], %7 {strides = array<i32>} : memref<32x32xf32, #tpu.memory_space<vmem>>, vector<32x32xf32>,
    %c2_i32 = arith.constant 2 : i32
    %9 = arith.cmpi eq, %arg1, %c2_i32 : i32
    %10 = arith.extui %9 : i1 to i32
    %c0_i32_8 = arith.constant 0 : i32
    %11 = arith.cmpi ne, %10, %c0_i32_8 : i32
    scf.if %11 {
      %c0_9 = arith.constant 0 : index
      %c0_10 = arith.constant 0 : index
      %12 = vector.load %arg7[%c0_9, %c0_10] : memref<32x32xf32, #tpu.memory_space<vmem>>, vector<32x32xf32>
      %c0_11 = arith.constant 0 : index
      %c0_12 = arith.constant 0 : index
      %13 = vector.load %arg4[%c0_11, %c0_12] : memref<1x32xf32, #tpu.memory_space<vmem>>, vector<1x32xf32>
      %14 = vector.broadcast %13 : vector<1x32xf32> to vector<32x32xf32>
      %15 = arith.mulf %12, %14 : vector<32x32xf32>
      %c0_13 = arith.constant 0 : index
      %c0_14 = arith.constant 0 : index
      %16 = vector.load %arg5[%c0_13, %c0_14] : memref<1x32xf32, #tpu.memory_space<vmem>>, vector<1x32xf32>
      %17 = vector.broadcast %16 : vector<1x32xf32> to vector<32x32xf32>
      %18 = arith.addf %15, %17 : vector<32x32xf32>
      %cst_15 = arith.constant 0.000000e+00 : f32
      %19 = vector.broadcast %cst_15 : f32 to vector<32x32xf32>
      %20 = arith.maximumf %18, %19 : vector<32x32xf32>
      %21 = arith.truncf %20 : vector<32x32xf32> to vector<32x32xbf16>
      %c0_16 = arith.constant 0 : index
      %c0_17 = arith.constant 0 : index
      %22 = vector.load %arg6[%c0_16, %c0_17] : memref<32x32xbf16, #tpu.memory_space<vmem>>, vector<32x32xbf16>
      tpu.vector_store %arg6[%c0_16, %c0_17], %21 {strides = array<i32>} : memref<32x32xbf16, #tpu.memory_space<vmem>>, vector<32x32xbf16>,
    } else {
    }
    return
  }
  func.func @transform_0(%arg0: i32, %arg1: i32) -> (i32, i32) {
    %c0_i32 = arith.constant 0 : i32
    return %arg0, %arg1 : i32, i32
  }
  func.func @transform_1(%arg0: i32, %arg1: i32) -> (i32, i32) {
    %c0_i32 = arith.constant 0 : i32
    %c0_i32_0 = arith.constant 0 : i32
    return %arg1, %c0_i32 : i32, i32
  }
  func.func @transform_2(%arg0: i32, %arg1: i32) -> (i32, i32) {
    %c0_i32 = arith.constant 0 : i32
    %c0_i32_0 = arith.constant 0 : i32
    %c0_i32_1 = arith.constant 0 : i32
    return %c0_i32, %c0_i32_0 : i32, i32
  }
  func.func @transform_3(%arg0: i32, %arg1: i32) -> (i32, i32) {
    %c0_i32 = arith.constant 0 : i32
    %c0_i32_0 = arith.constant 0 : i32
    %c0_i32_1 = arith.constant 0 : i32
    return %c0_i32, %c0_i32_0 : i32, i32
  }
  func.func @transform_4(%arg0: i32, %arg1: i32) -> (i32, i32) {
    %c0_i32 = arith.constant 0 : i32
    %c0_i32_0 = arith.constant 0 : i32
    return %arg0, %c0_i32 : i32, i32
  }
}

module attributes {stable_mosaic.version = 11 : i64} {
  func.func @_fused_matmul_kernel(%arg0: i32, %arg1: i32, %arg2: memref<8x128xbf16, #tpu.memory_space<vmem>>, %arg3: memref<128x32xbf16, #tpu.memory_space<vmem>>, %arg4: memref<1x32xf32, #tpu.memory_space<vmem>>, %arg5: memref<1x32xf32, #tpu.memory_space<vmem>>, %arg6: memref<8x32xbf16, #tpu.memory_space<vmem>>, %arg7: memref<8x32xf32, #tpu.memory_space<vmem>>) attributes {dimension_semantics = [#tpu.dimension_semantics<parallel>, #tpu.dimension_semantics<arbitrary>], iteration_bounds = array<i64: 1, 3>, scalar_prefetch = 0 : i64, scratch_operands = 1 : i64, tpu.core_type = #tpu.core_type<tc>, window_params = [{transform_indices = @transform_0, window_bounds = array<i64: 8, 128>}, {transform_indices = @transform_1, window_bounds = array<i64: 128, 32>}, {pipeline_mode = #tpu.pipeline_mode<synchronous>, transform_indices = @transform_2, window_bounds = array<i64: 1, 32>}, {pipeline_mode = #tpu.pipeline_mode<synchronous>, transform_indices = @transform_3, window_bounds = array<i64: 1, 32>}, {transform_indices = @transform_4, window_bounds = array<i64: 8, 32>}]} {
    %c0_i32 = arith.constant 0 : i32
    %0 = arith.cmpi eq, %arg1, %c0_i32 : i32
    %1 = arith.extui %0 : i1 to i32
    %c0_i32_0 = arith.constant 0 : i32
    %2 = arith.cmpi ne, %1, %c0_i32_0 : i32
    scf.if %2 {
      %cst_9 = arith.constant 0.000000e+00 : f32
      %12 = vector.broadcast %cst_9 : f32 to vector<8x32xf32>
      %c0_10 = arith.constant 0 : index
      %c0_11 = arith.constant 0 : index
      %13 = vector.load %arg7[%c0_10, %c0_11] : memref<8x32xf32, #tpu.memory_space<vmem>>, vector<8x32xf32>
      tpu.vector_store %arg7[%c0_10, %c0_11], %12 {strides = array<i32>} : memref<8x32xf32, #tpu.memory_space<vmem>>, vector<8x32xf32>,
    } else {
    }
    %c0 = arith.constant 0 : index
    %c0_1 = arith.constant 0 : index
    %3 = vector.load %arg7[%c0, %c0_1] : memref<8x32xf32, #tpu.memory_space<vmem>>, vector<8x32xf32>
    %c0_2 = arith.constant 0 : index
    %c0_3 = arith.constant 0 : index
    %4 = vector.load %arg2[%c0_2, %c0_3] : memref<8x128xbf16, #tpu.memory_space<vmem>>, vector<8x128xbf16>
    %c0_4 = arith.constant 0 : index
    %c0_5 = arith.constant 0 : index
    %5 = vector.load %arg3[%c0_4, %c0_5] : memref<128x32xbf16, #tpu.memory_space<vmem>>, vector<128x32xbf16>
    %cst = arith.constant dense<0.000000e+00> : vector<8x32xf32>
    %6 = tpu.matmul %4, %5, %cst {dimension_numbers = #tpu.dot_dimension_numbers<[1], [0], [0], [1], [0, 0, 1, 1], [], []>} : vector<8x128xbf16>, vector<128x32xbf16>, vector<8x32xf32> -> vector<8x32xf32>
    %7 = arith.addf %3, %6 : vector<8x32xf32>
    %c0_6 = arith.constant 0 : index
    %c0_7 = arith.constant 0 : index
    %8 = vector.load %arg7[%c0_6, %c0_7] : memref<8x32xf32, #tpu.memory_space<vmem>>, vector<8x32xf32>
    tpu.vector_store %arg7[%c0_6, %c0_7], %7 {strides = array<i32>} : memref<8x32xf32, #tpu.memory_space<vmem>>, vector<8x32xf32>,
    %c2_i32 = arith.constant 2 : i32
    %9 = arith.cmpi eq, %arg1, %c2_i32 : i32
    %10 = arith.extui %9 : i1 to i32
    %c0_i32_8 = arith.constant 0 : i32
    %11 = arith.cmpi ne, %10, %c0_i32_8 : i32
    scf.if %11 {
      %c0_9 = arith.constant 0 : index
      %c0_10 = arith.constant 0 : index
      %12 = vector.load %arg7[%c0_9, %c0_10] : memref<8x32xf32, #tpu.memory_space<vmem>>, vector<8x32xf32>
      %c0_11 = arith.constant 0 : index
      %c0_12 = arith.constant 0 : index
      %13 = vector.load %arg4[%c0_11, %c0_12] : memref<1x32xf32, #tpu.memory_space<vmem>>, vector<1x32xf32>
      %14 = vector.broadcast %13 : vector<1x32xf32> to vector<8x32xf32>
      %15 = arith.mulf %12, %14 : vector<8x32xf32>
      %c0_13 = arith.constant 0 : index
      %c0_14 = arith.constant 0 : index
      %16 = vector.load %arg5[%c0_13, %c0_14] : memref<1x32xf32, #tpu.memory_space<vmem>>, vector<1x32xf32>
      %17 = vector.broadcast %16 : vector<1x32xf32> to vector<8x32xf32>
      %18 = arith.addf %15, %17 : vector<8x32xf32>
      %cst_15 = arith.constant 0.000000e+00 : f32
      %19 = vector.broadcast %cst_15 : f32 to vector<8x32xf32>
      %20 = arith.maximumf %18, %19 : vector<8x32xf32>
      %21 = arith.truncf %20 : vector<8x32xf32> to vector<8x32xbf16>
      %c0_16 = arith.constant 0 : index
      %c0_17 = arith.constant 0 : index
      %22 = vector.load %arg6[%c0_16, %c0_17] : memref<8x32xbf16, #tpu.memory_space<vmem>>, vector<8x32xbf16>
      tpu.vector_store %arg6[%c0_16, %c0_17], %21 {strides = array<i32>} : memref<8x32xbf16, #tpu.memory_space<vmem>>, vector<8x32xbf16>,
    } else {
    }
    return
  }
  func.func @transform_0(%arg0: i32, %arg1: i32) -> (i32, i32) {
    %c0_i32 = arith.constant 0 : i32
    return %arg0, %arg1 : i32, i32
  }
  func.func @transform_1(%arg0: i32, %arg1: i32) -> (i32, i32) {
    %c0_i32 = arith.constant 0 : i32
    %c0_i32_0 = arith.constant 0 : i32
    return %arg1, %c0_i32 : i32, i32
  }
  func.func @transform_2(%arg0: i32, %arg1: i32) -> (i32, i32) {
    %c0_i32 = arith.constant 0 : i32
    %c0_i32_0 = arith.constant 0 : i32
    %c0_i32_1 = arith.constant 0 : i32
    return %c0_i32, %c0_i32_0 : i32, i32
  }
  func.func @transform_3(%arg0: i32, %arg1: i32) -> (i32, i32) {
    %c0_i32 = arith.constant 0 : i32
    %c0_i32_0 = arith.constant 0 : i32
    %c0_i32_1 = arith.constant 0 : i32
    return %c0_i32, %c0_i32_0 : i32, i32
  }
  func.func @transform_4(%arg0: i32, %arg1: i32) -> (i32, i32) {
    %c0_i32 = arith.constant 0 : i32
    %c0_i32_0 = arith.constant 0 : i32
    return %arg0, %c0_i32 : i32, i32
  }
}

module attributes {stable_mosaic.version = 11 : i64} {
  func.func @_fused_matmul_kernel(%arg0: i32, %arg1: i32, %arg2: memref<8x32xbf16, #tpu.memory_space<vmem>>, %arg3: memref<32x32xbf16, #tpu.memory_space<vmem>>, %arg4: memref<1x32xf32, #tpu.memory_space<vmem>>, %arg5: memref<1x32xf32, #tpu.memory_space<vmem>>, %arg6: memref<8x32xbf16, #tpu.memory_space<vmem>>, %arg7: memref<8x32xf32, #tpu.memory_space<vmem>>) attributes {dimension_semantics = [#tpu.dimension_semantics<parallel>, #tpu.dimension_semantics<arbitrary>], iteration_bounds = array<i64: 1, 1>, scalar_prefetch = 0 : i64, scratch_operands = 1 : i64, tpu.core_type = #tpu.core_type<tc>, window_params = [{transform_indices = @transform_0, window_bounds = array<i64: 8, 32>}, {transform_indices = @transform_1, window_bounds = array<i64: 32, 32>}, {pipeline_mode = #tpu.pipeline_mode<synchronous>, transform_indices = @transform_2, window_bounds = array<i64: 1, 32>}, {pipeline_mode = #tpu.pipeline_mode<synchronous>, transform_indices = @transform_3, window_bounds = array<i64: 1, 32>}, {transform_indices = @transform_4, window_bounds = array<i64: 8, 32>}]} {
    %c0_i32 = arith.constant 0 : i32
    %0 = arith.cmpi eq, %arg1, %c0_i32 : i32
    %1 = arith.extui %0 : i1 to i32
    %c0_i32_0 = arith.constant 0 : i32
    %2 = arith.cmpi ne, %1, %c0_i32_0 : i32
    scf.if %2 {
      %cst_10 = arith.constant 0.000000e+00 : f32
      %12 = vector.broadcast %cst_10 : f32 to vector<8x32xf32>
      %c0_11 = arith.constant 0 : index
      %c0_12 = arith.constant 0 : index
      %13 = vector.load %arg7[%c0_11, %c0_12] : memref<8x32xf32, #tpu.memory_space<vmem>>, vector<8x32xf32>
      tpu.vector_store %arg7[%c0_11, %c0_12], %12 {strides = array<i32>} : memref<8x32xf32, #tpu.memory_space<vmem>>, vector<8x32xf32>,
    } else {
    }
    %c0 = arith.constant 0 : index
    %c0_1 = arith.constant 0 : index
    %3 = vector.load %arg7[%c0, %c0_1] : memref<8x32xf32, #tpu.memory_space<vmem>>, vector<8x32xf32>
    %c0_2 = arith.constant 0 : index
    %c0_3 = arith.constant 0 : index
    %4 = vector.load %arg2[%c0_2, %c0_3] : memref<8x32xbf16, #tpu.memory_space<vmem>>, vector<8x32xbf16>
    %c0_4 = arith.constant 0 : index
    %c0_5 = arith.constant 0 : index
    %5 = vector.load %arg3[%c0_4, %c0_5] : memref<32x32xbf16, #tpu.memory_space<vmem>>, vector<32x32xbf16>
    %cst = arith.constant dense<0.000000e+00> : vector<8x32xf32>
    %6 = tpu.matmul %4, %5, %cst {dimension_numbers = #tpu.dot_dimension_numbers<[1], [0], [0], [1], [0, 0, 1, 1], [], []>} : vector<8x32xbf16>, vector<32x32xbf16>, vector<8x32xf32> -> vector<8x32xf32>
    %7 = arith.addf %3, %6 : vector<8x32xf32>
    %c0_6 = arith.constant 0 : index
    %c0_7 = arith.constant 0 : index
    %8 = vector.load %arg7[%c0_6, %c0_7] : memref<8x32xf32, #tpu.memory_space<vmem>>, vector<8x32xf32>
    tpu.vector_store %arg7[%c0_6, %c0_7], %7 {strides = array<i32>} : memref<8x32xf32, #tpu.memory_space<vmem>>, vector<8x32xf32>,
    %c0_i32_8 = arith.constant 0 : i32
    %9 = arith.cmpi eq, %arg1, %c0_i32_8 : i32
    %10 = arith.extui %9 : i1 to i32
    %c0_i32_9 = arith.constant 0 : i32
    %11 = arith.cmpi ne, %10, %c0_i32_9 : i32
    scf.if %11 {
      %c0_10 = arith.constant 0 : index
      %c0_11 = arith.constant 0 : index
      %12 = vector.load %arg7[%c0_10, %c0_11] : memref<8x32xf32, #tpu.memory_space<vmem>>, vector<8x32xf32>
      %c0_12 = arith.constant 0 : index
      %c0_13 = arith.constant 0 : index
      %13 = vector.load %arg4[%c0_12, %c0_13] : memref<1x32xf32, #tpu.memory_space<vmem>>, vector<1x32xf32>
      %14 = vector.broadcast %13 : vector<1x32xf32> to vector<8x32xf32>
      %15 = arith.mulf %12, %14 : vector<8x32xf32>
      %c0_14 = arith.constant 0 : index
      %c0_15 = arith.constant 0 : index
      %16 = vector.load %arg5[%c0_14, %c0_15] : memref<1x32xf32, #tpu.memory_space<vmem>>, vector<1x32xf32>
      %17 = vector.broadcast %16 : vector<1x32xf32> to vector<8x32xf32>
      %18 = arith.addf %15, %17 : vector<8x32xf32>
      %19 = arith.truncf %18 : vector<8x32xf32> to vector<8x32xbf16>
      %c0_16 = arith.constant 0 : index
      %c0_17 = arith.constant 0 : index
      %20 = vector.load %arg6[%c0_16, %c0_17] : memref<8x32xbf16, #tpu.memory_space<vmem>>, vector<8x32xbf16>
      tpu.vector_store %arg6[%c0_16, %c0_17], %19 {strides = array<i32>} : memref<8x32xbf16, #tpu.memory_space<vmem>>, vector<8x32xbf16>,
    } else {
    }
    return
  }
  func.func @transform_0(%arg0: i32, %arg1: i32) -> (i32, i32) {
    %c0_i32 = arith.constant 0 : i32
    return %arg0, %arg1 : i32, i32
  }
  func.func @transform_1(%arg0: i32, %arg1: i32) -> (i32, i32) {
    %c0_i32 = arith.constant 0 : i32
    %c0_i32_0 = arith.constant 0 : i32
    return %arg1, %c0_i32 : i32, i32
  }
  func.func @transform_2(%arg0: i32, %arg1: i32) -> (i32, i32) {
    %c0_i32 = arith.constant 0 : i32
    %c0_i32_0 = arith.constant 0 : i32
    %c0_i32_1 = arith.constant 0 : i32
    return %c0_i32, %c0_i32_0 : i32, i32
  }
  func.func @transform_3(%arg0: i32, %arg1: i32) -> (i32, i32) {
    %c0_i32 = arith.constant 0 : i32
    %c0_i32_0 = arith.constant 0 : i32
    %c0_i32_1 = arith.constant 0 : i32
    return %c0_i32, %c0_i32_0 : i32, i32
  }
  func.func @transform_4(%arg0: i32, %arg1: i32) -> (i32, i32) {
    %c0_i32 = arith.constant 0 : i32
    %c0_i32_0 = arith.constant 0 : i32
    return %arg0, %c0_i32 : i32, i32
  }
}

module attributes {stable_mosaic.version = 11 : i64} {
  func.func @_fused_matmul_kernel(%arg0: i32, %arg1: i32, %arg2: memref<8x128xbf16, #tpu.memory_space<vmem>>, %arg3: memref<128x32xbf16, #tpu.memory_space<vmem>>, %arg4: memref<1x32xf32, #tpu.memory_space<vmem>>, %arg5: memref<1x32xf32, #tpu.memory_space<vmem>>, %arg6: memref<8x32xbf16, #tpu.memory_space<vmem>>, %arg7: memref<8x32xbf16, #tpu.memory_space<vmem>>, %arg8: memref<8x32xf32, #tpu.memory_space<vmem>>) attributes {dimension_semantics = [#tpu.dimension_semantics<parallel>, #tpu.dimension_semantics<arbitrary>], iteration_bounds = array<i64: 1, 3>, scalar_prefetch = 0 : i64, scratch_operands = 1 : i64, tpu.core_type = #tpu.core_type<tc>, window_params = [{transform_indices = @transform_0, window_bounds = array<i64: 8, 128>}, {transform_indices = @transform_1, window_bounds = array<i64: 128, 32>}, {pipeline_mode = #tpu.pipeline_mode<synchronous>, transform_indices = @transform_2, window_bounds = array<i64: 1, 32>}, {pipeline_mode = #tpu.pipeline_mode<synchronous>, transform_indices = @transform_3, window_bounds = array<i64: 1, 32>}, {transform_indices = @transform_4, window_bounds = array<i64: 8, 32>}, {transform_indices = @transform_5, window_bounds = array<i64: 8, 32>}]} {
    %c0_i32 = arith.constant 0 : i32
    %0 = arith.cmpi eq, %arg1, %c0_i32 : i32
    %1 = arith.extui %0 : i1 to i32
    %c0_i32_0 = arith.constant 0 : i32
    %2 = arith.cmpi ne, %1, %c0_i32_0 : i32
    scf.if %2 {
      %cst_9 = arith.constant 0.000000e+00 : f32
      %12 = vector.broadcast %cst_9 : f32 to vector<8x32xf32>
      %c0_10 = arith.constant 0 : index
      %c0_11 = arith.constant 0 : index
      %13 = vector.load %arg8[%c0_10, %c0_11] : memref<8x32xf32, #tpu.memory_space<vmem>>, vector<8x32xf32>
      tpu.vector_store %arg8[%c0_10, %c0_11], %12 {strides = array<i32>} : memref<8x32xf32, #tpu.memory_space<vmem>>, vector<8x32xf32>,
    } else {
    }
    %c0 = arith.constant 0 : index
    %c0_1 = arith.constant 0 : index
    %3 = vector.load %arg8[%c0, %c0_1] : memref<8x32xf32, #tpu.memory_space<vmem>>, vector<8x32xf32>
    %c0_2 = arith.constant 0 : index
    %c0_3 = arith.constant 0 : index
    %4 = vector.load %arg2[%c0_2, %c0_3] : memref<8x128xbf16, #tpu.memory_space<vmem>>, vector<8x128xbf16>
    %c0_4 = arith.constant 0 : index
    %c0_5 = arith.constant 0 : index
    %5 = vector.load %arg3[%c0_4, %c0_5] : memref<128x32xbf16, #tpu.memory_space<vmem>>, vector<128x32xbf16>
    %cst = arith.constant dense<0.000000e+00> : vector<8x32xf32>
    %6 = tpu.matmul %4, %5, %cst {dimension_numbers = #tpu.dot_dimension_numbers<[1], [0], [0], [1], [0, 0, 1, 1], [], []>} : vector<8x128xbf16>, vector<128x32xbf16>, vector<8x32xf32> -> vector<8x32xf32>
    %7 = arith.addf %3, %6 : vector<8x32xf32>
    %c0_6 = arith.constant 0 : index
    %c0_7 = arith.constant 0 : index
    %8 = vector.load %arg8[%c0_6, %c0_7] : memref<8x32xf32, #tpu.memory_space<vmem>>, vector<8x32xf32>
    tpu.vector_store %arg8[%c0_6, %c0_7], %7 {strides = array<i32>} : memref<8x32xf32, #tpu.memory_space<vmem>>, vector<8x32xf32>,
    %c2_i32 = arith.constant 2 : i32
    %9 = arith.cmpi eq, %arg1, %c2_i32 : i32
    %10 = arith.extui %9 : i1 to i32
    %c0_i32_8 = arith.constant 0 : i32
    %11 = arith.cmpi ne, %10, %c0_i32_8 : i32
    scf.if %11 {
      %c0_9 = arith.constant 0 : index
      %c0_10 = arith.constant 0 : index
      %12 = vector.load %arg8[%c0_9, %c0_10] : memref<8x32xf32, #tpu.memory_space<vmem>>, vector<8x32xf32>
      %c0_11 = arith.constant 0 : index
      %c0_12 = arith.constant 0 : index
      %13 = vector.load %arg4[%c0_11, %c0_12] : memref<1x32xf32, #tpu.memory_space<vmem>>, vector<1x32xf32>
      %14 = vector.broadcast %13 : vector<1x32xf32> to vector<8x32xf32>
      %15 = arith.mulf %12, %14 : vector<8x32xf32>
      %c0_13 = arith.constant 0 : index
      %c0_14 = arith.constant 0 : index
      %16 = vector.load %arg5[%c0_13, %c0_14] : memref<1x32xf32, #tpu.memory_space<vmem>>, vector<1x32xf32>
      %17 = vector.broadcast %16 : vector<1x32xf32> to vector<8x32xf32>
      %18 = arith.addf %15, %17 : vector<8x32xf32>
      %c0_15 = arith.constant 0 : index
      %c0_16 = arith.constant 0 : index
      %19 = vector.load %arg6[%c0_15, %c0_16] : memref<8x32xbf16, #tpu.memory_space<vmem>>, vector<8x32xbf16>
      %20 = arith.extf %19 : vector<8x32xbf16> to vector<8x32xf32>
      %21 = arith.addf %18, %20 : vector<8x32xf32>
      %cst_17 = arith.constant 0.000000e+00 : f32
      %22 = vector.broadcast %cst_17 : f32 to vector<8x32xf32>
      %23 = arith.maximumf %21, %22 : vector<8x32xf32>
      %24 = arith.truncf %23 : vector<8x32xf32> to vector<8x32xbf16>
      %c0_18 = arith.constant 0 : index
      %c0_19 = arith.constant 0 : index
      %25 = vector.load %arg7[%c0_18, %c0_19] : memref<8x32xbf16, #tpu.memory_space<vmem>>, vector<8x32xbf16>
      tpu.vector_store %arg7[%c0_18, %c0_19], %24 {strides = array<i32>} : memref<8x32xbf16, #tpu.memory_space<vmem>>, vector<8x32xbf16>,
    } else {
    }
    return
  }
  func.func @transform_0(%arg0: i32, %arg1: i32) -> (i32, i32) {
    %c0_i32 = arith.constant 0 : i32
    return %arg0, %arg1 : i32, i32
  }
  func.func @transform_1(%arg0: i32, %arg1: i32) -> (i32, i32) {
    %c0_i32 = arith.constant 0 : i32
    %c0_i32_0 = arith.constant 0 : i32
    return %arg1, %c0_i32 : i32, i32
  }
  func.func @transform_2(%arg0: i32, %arg1: i32) -> (i32, i32) {
    %c0_i32 = arith.constant 0 : i32
    %c0_i32_0 = arith.constant 0 : i32
    %c0_i32_1 = arith.constant 0 : i32
    return %c0_i32, %c0_i32_0 : i32, i32
  }
  func.func @transform_3(%arg0: i32, %arg1: i32) -> (i32, i32) {
    %c0_i32 = arith.constant 0 : i32
    %c0_i32_0 = arith.constant 0 : i32
    %c0_i32_1 = arith.constant 0 : i32
    return %c0_i32, %c0_i32_0 : i32, i32
  }
  func.func @transform_4(%arg0: i32, %arg1: i32) -> (i32, i32) {
    %c0_i32 = arith.constant 0 : i32
    %c0_i32_0 = arith.constant 0 : i32
    return %arg0, %c0_i32 : i32, i32
  }
  func.func @transform_5(%arg0: i32, %arg1: i32) -> (i32, i32) {
    %c0_i32 = arith.constant 0 : i32
    %c0_i32_0 = arith.constant 0 : i32
    return %arg0, %c0_i32 : i32, i32
  }
}

module attributes {stable_mosaic.version = 11 : i64} {
  func.func @_vq_kernel(%arg0: i32, %arg1: memref<8x32xbf16, #tpu.memory_space<vmem>>, %arg2: memref<128x32xf32, #tpu.memory_space<vmem>>, %arg3: memref<1x128xf32, #tpu.memory_space<vmem>>, %arg4: memref<8x32xf32, #tpu.memory_space<vmem>>) attributes {dimension_semantics = [#tpu.dimension_semantics<parallel>], iteration_bounds = array<i64: 1>, scalar_prefetch = 0 : i64, scratch_operands = 0 : i64, tpu.core_type = #tpu.core_type<tc>, window_params = [{transform_indices = @transform_0, window_bounds = array<i64: 8, 32>}, {pipeline_mode = #tpu.pipeline_mode<synchronous>, transform_indices = @transform_1, window_bounds = array<i64: 128, 32>}, {pipeline_mode = #tpu.pipeline_mode<synchronous>, transform_indices = @transform_2, window_bounds = array<i64: 1, 128>}, {transform_indices = @transform_3, window_bounds = array<i64: 8, 32>}]} {
    %c0 = arith.constant 0 : index
    %c0_0 = arith.constant 0 : index
    %0 = vector.load %arg1[%c0, %c0_0] : memref<8x32xbf16, #tpu.memory_space<vmem>>, vector<8x32xbf16>
    %1 = arith.extf %0 : vector<8x32xbf16> to vector<8x32xf32>
    %c0_1 = arith.constant 0 : index
    %c0_2 = arith.constant 0 : index
    %2 = vector.load %arg2[%c0_1, %c0_2] : memref<128x32xf32, #tpu.memory_space<vmem>>, vector<128x32xf32>
    %cst = arith.constant dense<0.000000e+00> : vector<8x128xf32>
    %3 = tpu.matmul %1, %2, %cst {dimension_numbers = #tpu.dot_dimension_numbers<[1], [1], [0], [0], [0, 0, 1, 0], [], []>} : vector<8x32xf32>, vector<128x32xf32>, vector<8x128xf32> -> vector<8x128xf32>
    %c0_3 = arith.constant 0 : index
    %c0_4 = arith.constant 0 : index
    %4 = vector.load %arg3[%c0_3, %c0_4] : memref<1x128xf32, #tpu.memory_space<vmem>>, vector<1x128xf32>
    %cst_5 = arith.constant 2.000000e+00 : f32
    %5 = vector.broadcast %cst_5 : f32 to vector<8x128xf32>
    %6 = arith.mulf %5, %3 : vector<8x128xf32>
    %7 = vector.broadcast %4 : vector<1x128xf32> to vector<8x128xf32>
    %8 = arith.subf %7, %6 : vector<8x128xf32>
    %9 = tpu.iota {dimensions = array<i32: 1>} : vector<8x128xi32>
    %cst_6 = arith.constant dense<0x7F800000> : vector<8xf32>
    %10 = vector.multi_reduction <minimumf>, %8, %cst_6 [1] : vector<8x128xf32> to vector<8xf32>
    %11 = vector.shape_cast %10 : vector<8xf32> to vector<8x1xf32>
    %12 = vector.broadcast %11 : vector<8x1xf32> to vector<8x128xf32>
    %13 = arith.cmpf ole, %8, %12 : vector<8x128xf32>
    %c128_i32 = arith.constant 128 : i32
    %14 = vector.broadcast %c128_i32 : i32 to vector<8x128xi32>
    %15 = arith.select %13, %9, %14 : vector<8x128xi1>, vector<8x128xi32>
    %cst_7 = arith.constant dense<2147483647> : vector<8xi32>
    %16 = vector.multi_reduction <minsi>, %15, %cst_7 [1] : vector<8x128xi32> to vector<8xi32>
    %17 = vector.shape_cast %16 : vector<8xi32> to vector<8x1xi32>
    %18 = vector.broadcast %17 : vector<8x1xi32> to vector<8x128xi32>
    %19 = arith.cmpi eq, %9, %18 : vector<8x128xi32>
    %20 = arith.extui %19 : vector<8x128xi1> to vector<8x128xi32>
    %21 = arith.sitofp %20 : vector<8x128xi32> to vector<8x128xf32>
    %cst_8 = arith.constant dense<0.000000e+00> : vector<8x32xf32>
    %22 = tpu.matmul %21, %2, %cst_8 {dimension_numbers = #tpu.dot_dimension_numbers<[1], [0], [0], [1], [0, 0, 1, 1], [], []>} : vector<8x128xf32>, vector<128x32xf32>, vector<8x32xf32> -> vector<8x32xf32>
    %c0_9 = arith.constant 0 : index
    %c0_10 = arith.constant 0 : index
    %23 = vector.load %arg4[%c0_9, %c0_10] : memref<8x32xf32, #tpu.memory_space<vmem>>, vector<8x32xf32>
    tpu.vector_store %arg4[%c0_9, %c0_10], %22 {strides = array<i32>} : memref<8x32xf32, #tpu.memory_space<vmem>>, vector<8x32xf32>,
    return
  }
  func.func @transform_0(%arg0: i32) -> (i32, i32) {
    %c0_i32 = arith.constant 0 : i32
    %c0_i32_0 = arith.constant 0 : i32
    return %arg0, %c0_i32 : i32, i32
  }
  func.func @transform_1(%arg0: i32) -> (i32, i32) {
    %c0_i32 = arith.constant 0 : i32
    %c0_i32_0 = arith.constant 0 : i32
    %c0_i32_1 = arith.constant 0 : i32
    return %c0_i32, %c0_i32_0 : i32, i32
  }
  func.func @transform_2(%arg0: i32) -> (i32, i32) {
    %c0_i32 = arith.constant 0 : i32
    %c0_i32_0 = arith.constant 0 : i32
    %c0_i32_1 = arith.constant 0 : i32
    return %c0_i32, %c0_i32_0 : i32, i32
  }
  func.func @transform_3(%arg0: i32) -> (i32, i32) {
    %c0_i32 = arith.constant 0 : i32
    %c0_i32_0 = arith.constant 0 : i32
    return %arg0, %c0_i32 : i32, i32
  }
}

module attributes {stable_mosaic.version = 11 : i64} {
  func.func @_fused_matmul_kernel(%arg0: i32, %arg1: i32, %arg2: memref<8x128xbf16, #tpu.memory_space<vmem>>, %arg3: memref<128x32xbf16, #tpu.memory_space<vmem>>, %arg4: memref<1x32xf32, #tpu.memory_space<vmem>>, %arg5: memref<1x32xf32, #tpu.memory_space<vmem>>, %arg6: memref<8x32xf32, #tpu.memory_space<vmem>>, %arg7: memref<8x32xbf16, #tpu.memory_space<vmem>>, %arg8: memref<8x32xf32, #tpu.memory_space<vmem>>) attributes {dimension_semantics = [#tpu.dimension_semantics<parallel>, #tpu.dimension_semantics<arbitrary>], iteration_bounds = array<i64: 1, 3>, scalar_prefetch = 0 : i64, scratch_operands = 1 : i64, tpu.core_type = #tpu.core_type<tc>, window_params = [{transform_indices = @transform_0, window_bounds = array<i64: 8, 128>}, {transform_indices = @transform_1, window_bounds = array<i64: 128, 32>}, {pipeline_mode = #tpu.pipeline_mode<synchronous>, transform_indices = @transform_2, window_bounds = array<i64: 1, 32>}, {pipeline_mode = #tpu.pipeline_mode<synchronous>, transform_indices = @transform_3, window_bounds = array<i64: 1, 32>}, {transform_indices = @transform_4, window_bounds = array<i64: 8, 32>}, {transform_indices = @transform_5, window_bounds = array<i64: 8, 32>}]} {
    %c0_i32 = arith.constant 0 : i32
    %0 = arith.cmpi eq, %arg1, %c0_i32 : i32
    %1 = arith.extui %0 : i1 to i32
    %c0_i32_0 = arith.constant 0 : i32
    %2 = arith.cmpi ne, %1, %c0_i32_0 : i32
    scf.if %2 {
      %cst_9 = arith.constant 0.000000e+00 : f32
      %12 = vector.broadcast %cst_9 : f32 to vector<8x32xf32>
      %c0_10 = arith.constant 0 : index
      %c0_11 = arith.constant 0 : index
      %13 = vector.load %arg8[%c0_10, %c0_11] : memref<8x32xf32, #tpu.memory_space<vmem>>, vector<8x32xf32>
      tpu.vector_store %arg8[%c0_10, %c0_11], %12 {strides = array<i32>} : memref<8x32xf32, #tpu.memory_space<vmem>>, vector<8x32xf32>,
    } else {
    }
    %c0 = arith.constant 0 : index
    %c0_1 = arith.constant 0 : index
    %3 = vector.load %arg8[%c0, %c0_1] : memref<8x32xf32, #tpu.memory_space<vmem>>, vector<8x32xf32>
    %c0_2 = arith.constant 0 : index
    %c0_3 = arith.constant 0 : index
    %4 = vector.load %arg2[%c0_2, %c0_3] : memref<8x128xbf16, #tpu.memory_space<vmem>>, vector<8x128xbf16>
    %c0_4 = arith.constant 0 : index
    %c0_5 = arith.constant 0 : index
    %5 = vector.load %arg3[%c0_4, %c0_5] : memref<128x32xbf16, #tpu.memory_space<vmem>>, vector<128x32xbf16>
    %cst = arith.constant dense<0.000000e+00> : vector<8x32xf32>
    %6 = tpu.matmul %4, %5, %cst {dimension_numbers = #tpu.dot_dimension_numbers<[1], [0], [0], [1], [0, 0, 1, 1], [], []>} : vector<8x128xbf16>, vector<128x32xbf16>, vector<8x32xf32> -> vector<8x32xf32>
    %7 = arith.addf %3, %6 : vector<8x32xf32>
    %c0_6 = arith.constant 0 : index
    %c0_7 = arith.constant 0 : index
    %8 = vector.load %arg8[%c0_6, %c0_7] : memref<8x32xf32, #tpu.memory_space<vmem>>, vector<8x32xf32>
    tpu.vector_store %arg8[%c0_6, %c0_7], %7 {strides = array<i32>} : memref<8x32xf32, #tpu.memory_space<vmem>>, vector<8x32xf32>,
    %c2_i32 = arith.constant 2 : i32
    %9 = arith.cmpi eq, %arg1, %c2_i32 : i32
    %10 = arith.extui %9 : i1 to i32
    %c0_i32_8 = arith.constant 0 : i32
    %11 = arith.cmpi ne, %10, %c0_i32_8 : i32
    scf.if %11 {
      %c0_9 = arith.constant 0 : index
      %c0_10 = arith.constant 0 : index
      %12 = vector.load %arg8[%c0_9, %c0_10] : memref<8x32xf32, #tpu.memory_space<vmem>>, vector<8x32xf32>
      %c0_11 = arith.constant 0 : index
      %c0_12 = arith.constant 0 : index
      %13 = vector.load %arg4[%c0_11, %c0_12] : memref<1x32xf32, #tpu.memory_space<vmem>>, vector<1x32xf32>
      %14 = vector.broadcast %13 : vector<1x32xf32> to vector<8x32xf32>
      %15 = arith.mulf %12, %14 : vector<8x32xf32>
      %c0_13 = arith.constant 0 : index
      %c0_14 = arith.constant 0 : index
      %16 = vector.load %arg5[%c0_13, %c0_14] : memref<1x32xf32, #tpu.memory_space<vmem>>, vector<1x32xf32>
      %17 = vector.broadcast %16 : vector<1x32xf32> to vector<8x32xf32>
      %18 = arith.addf %15, %17 : vector<8x32xf32>
      %c0_15 = arith.constant 0 : index
      %c0_16 = arith.constant 0 : index
      %19 = vector.load %arg6[%c0_15, %c0_16] : memref<8x32xf32, #tpu.memory_space<vmem>>, vector<8x32xf32>
      %20 = arith.addf %18, %19 : vector<8x32xf32>
      %cst_17 = arith.constant 0.000000e+00 : f32
      %21 = vector.broadcast %cst_17 : f32 to vector<8x32xf32>
      %22 = arith.maximumf %20, %21 : vector<8x32xf32>
      %23 = arith.truncf %22 : vector<8x32xf32> to vector<8x32xbf16>
      %c0_18 = arith.constant 0 : index
      %c0_19 = arith.constant 0 : index
      %24 = vector.load %arg7[%c0_18, %c0_19] : memref<8x32xbf16, #tpu.memory_space<vmem>>, vector<8x32xbf16>
      tpu.vector_store %arg7[%c0_18, %c0_19], %23 {strides = array<i32>} : memref<8x32xbf16, #tpu.memory_space<vmem>>, vector<8x32xbf16>,
    } else {
    }
    return
  }
  func.func @transform_0(%arg0: i32, %arg1: i32) -> (i32, i32) {
    %c0_i32 = arith.constant 0 : i32
    return %arg0, %arg1 : i32, i32
  }
  func.func @transform_1(%arg0: i32, %arg1: i32) -> (i32, i32) {
    %c0_i32 = arith.constant 0 : i32
    %c0_i32_0 = arith.constant 0 : i32
    return %arg1, %c0_i32 : i32, i32
  }
  func.func @transform_2(%arg0: i32, %arg1: i32) -> (i32, i32) {
    %c0_i32 = arith.constant 0 : i32
    %c0_i32_0 = arith.constant 0 : i32
    %c0_i32_1 = arith.constant 0 : i32
    return %c0_i32, %c0_i32_0 : i32, i32
  }
  func.func @transform_3(%arg0: i32, %arg1: i32) -> (i32, i32) {
    %c0_i32 = arith.constant 0 : i32
    %c0_i32_0 = arith.constant 0 : i32
    %c0_i32_1 = arith.constant 0 : i32
    return %c0_i32, %c0_i32_0 : i32, i32
  }
  func.func @transform_4(%arg0: i32, %arg1: i32) -> (i32, i32) {
    %c0_i32 = arith.constant 0 : i32
    %c0_i32_0 = arith.constant 0 : i32
    return %arg0, %c0_i32 : i32, i32
  }
  func.func @transform_5(%arg0: i32, %arg1: i32) -> (i32, i32) {
    %c0_i32 = arith.constant 0 : i32
    %c0_i32_0 = arith.constant 0 : i32
    return %arg0, %c0_i32 : i32, i32
  }
}

module attributes {stable_mosaic.version = 11 : i64} {
  func.func @_fused_matmul_kernel(%arg0: i32, %arg1: i32, %arg2: memref<8x128xbf16, #tpu.memory_space<vmem>>, %arg3: memref<128x128xbf16, #tpu.memory_space<vmem>>, %arg4: memref<1x128xf32, #tpu.memory_space<vmem>>, %arg5: memref<1x128xf32, #tpu.memory_space<vmem>>, %arg6: memref<8x128xbf16, #tpu.memory_space<vmem>>, %arg7: memref<8x128xf32, #tpu.memory_space<vmem>>) attributes {dimension_semantics = [#tpu.dimension_semantics<parallel>, #tpu.dimension_semantics<arbitrary>], iteration_bounds = array<i64: 1, 1>, scalar_prefetch = 0 : i64, scratch_operands = 1 : i64, tpu.core_type = #tpu.core_type<tc>, window_params = [{transform_indices = @transform_0, window_bounds = array<i64: 8, 128>}, {transform_indices = @transform_1, window_bounds = array<i64: 128, 128>}, {pipeline_mode = #tpu.pipeline_mode<synchronous>, transform_indices = @transform_2, window_bounds = array<i64: 1, 128>}, {pipeline_mode = #tpu.pipeline_mode<synchronous>, transform_indices = @transform_3, window_bounds = array<i64: 1, 128>}, {transform_indices = @transform_4, window_bounds = array<i64: 8, 128>}]} {
    %c0_i32 = arith.constant 0 : i32
    %0 = arith.cmpi eq, %arg1, %c0_i32 : i32
    %1 = arith.extui %0 : i1 to i32
    %c0_i32_0 = arith.constant 0 : i32
    %2 = arith.cmpi ne, %1, %c0_i32_0 : i32
    scf.if %2 {
      %cst_10 = arith.constant 0.000000e+00 : f32
      %12 = vector.broadcast %cst_10 : f32 to vector<8x128xf32>
      %c0_11 = arith.constant 0 : index
      %c0_12 = arith.constant 0 : index
      %13 = vector.load %arg7[%c0_11, %c0_12] : memref<8x128xf32, #tpu.memory_space<vmem>>, vector<8x128xf32>
      tpu.vector_store %arg7[%c0_11, %c0_12], %12 {strides = array<i32>} : memref<8x128xf32, #tpu.memory_space<vmem>>, vector<8x128xf32>,
    } else {
    }
    %c0 = arith.constant 0 : index
    %c0_1 = arith.constant 0 : index
    %3 = vector.load %arg7[%c0, %c0_1] : memref<8x128xf32, #tpu.memory_space<vmem>>, vector<8x128xf32>
    %c0_2 = arith.constant 0 : index
    %c0_3 = arith.constant 0 : index
    %4 = vector.load %arg2[%c0_2, %c0_3] : memref<8x128xbf16, #tpu.memory_space<vmem>>, vector<8x128xbf16>
    %c0_4 = arith.constant 0 : index
    %c0_5 = arith.constant 0 : index
    %5 = vector.load %arg3[%c0_4, %c0_5] : memref<128x128xbf16, #tpu.memory_space<vmem>>, vector<128x128xbf16>
    %cst = arith.constant dense<0.000000e+00> : vector<8x128xf32>
    %6 = tpu.matmul %4, %5, %cst {dimension_numbers = #tpu.dot_dimension_numbers<[1], [0], [0], [1], [0, 0, 1, 1], [], []>} : vector<8x128xbf16>, vector<128x128xbf16>, vector<8x128xf32> -> vector<8x128xf32>
    %7 = arith.addf %3, %6 : vector<8x128xf32>
    %c0_6 = arith.constant 0 : index
    %c0_7 = arith.constant 0 : index
    %8 = vector.load %arg7[%c0_6, %c0_7] : memref<8x128xf32, #tpu.memory_space<vmem>>, vector<8x128xf32>
    tpu.vector_store %arg7[%c0_6, %c0_7], %7 {strides = array<i32>} : memref<8x128xf32, #tpu.memory_space<vmem>>, vector<8x128xf32>,
    %c0_i32_8 = arith.constant 0 : i32
    %9 = arith.cmpi eq, %arg1, %c0_i32_8 : i32
    %10 = arith.extui %9 : i1 to i32
    %c0_i32_9 = arith.constant 0 : i32
    %11 = arith.cmpi ne, %10, %c0_i32_9 : i32
    scf.if %11 {
      %c0_10 = arith.constant 0 : index
      %c0_11 = arith.constant 0 : index
      %12 = vector.load %arg7[%c0_10, %c0_11] : memref<8x128xf32, #tpu.memory_space<vmem>>, vector<8x128xf32>
      %c0_12 = arith.constant 0 : index
      %c0_13 = arith.constant 0 : index
      %13 = vector.load %arg4[%c0_12, %c0_13] : memref<1x128xf32, #tpu.memory_space<vmem>>, vector<1x128xf32>
      %14 = vector.broadcast %13 : vector<1x128xf32> to vector<8x128xf32>
      %15 = arith.mulf %12, %14 : vector<8x128xf32>
      %c0_14 = arith.constant 0 : index
      %c0_15 = arith.constant 0 : index
      %16 = vector.load %arg5[%c0_14, %c0_15] : memref<1x128xf32, #tpu.memory_space<vmem>>, vector<1x128xf32>
      %17 = vector.broadcast %16 : vector<1x128xf32> to vector<8x128xf32>
      %18 = arith.addf %15, %17 : vector<8x128xf32>
      %cst_16 = arith.constant 0.000000e+00 : f32
      %19 = vector.broadcast %cst_16 : f32 to vector<8x128xf32>
      %20 = arith.maximumf %18, %19 : vector<8x128xf32>
      %21 = arith.truncf %20 : vector<8x128xf32> to vector<8x128xbf16>
      %c0_17 = arith.constant 0 : index
      %c0_18 = arith.constant 0 : index
      %22 = vector.load %arg6[%c0_17, %c0_18] : memref<8x128xbf16, #tpu.memory_space<vmem>>, vector<8x128xbf16>
      tpu.vector_store %arg6[%c0_17, %c0_18], %21 {strides = array<i32>} : memref<8x128xbf16, #tpu.memory_space<vmem>>, vector<8x128xbf16>,
    } else {
    }
    return
  }
  func.func @transform_0(%arg0: i32, %arg1: i32) -> (i32, i32) {
    %c0_i32 = arith.constant 0 : i32
    return %arg0, %arg1 : i32, i32
  }
  func.func @transform_1(%arg0: i32, %arg1: i32) -> (i32, i32) {
    %c0_i32 = arith.constant 0 : i32
    %c0_i32_0 = arith.constant 0 : i32
    return %arg1, %c0_i32 : i32, i32
  }
  func.func @transform_2(%arg0: i32, %arg1: i32) -> (i32, i32) {
    %c0_i32 = arith.constant 0 : i32
    %c0_i32_0 = arith.constant 0 : i32
    %c0_i32_1 = arith.constant 0 : i32
    return %c0_i32, %c0_i32_0 : i32, i32
  }
  func.func @transform_3(%arg0: i32, %arg1: i32) -> (i32, i32) {
    %c0_i32 = arith.constant 0 : i32
    %c0_i32_0 = arith.constant 0 : i32
    %c0_i32_1 = arith.constant 0 : i32
    return %c0_i32, %c0_i32_0 : i32, i32
  }
  func.func @transform_4(%arg0: i32, %arg1: i32) -> (i32, i32) {
    %c0_i32 = arith.constant 0 : i32
    %c0_i32_0 = arith.constant 0 : i32
    return %arg0, %c0_i32 : i32, i32
  }
}

module attributes {stable_mosaic.version = 11 : i64} {
  func.func @_fused_matmul_kernel(%arg0: i32, %arg1: i32, %arg2: memref<8x32xbf16, #tpu.memory_space<vmem>>, %arg3: memref<32x128xbf16, #tpu.memory_space<vmem>>, %arg4: memref<1x128xf32, #tpu.memory_space<vmem>>, %arg5: memref<1x128xf32, #tpu.memory_space<vmem>>, %arg6: memref<8x128xbf16, #tpu.memory_space<vmem>>, %arg7: memref<8x128xf32, #tpu.memory_space<vmem>>) attributes {dimension_semantics = [#tpu.dimension_semantics<parallel>, #tpu.dimension_semantics<arbitrary>], iteration_bounds = array<i64: 1, 1>, scalar_prefetch = 0 : i64, scratch_operands = 1 : i64, tpu.core_type = #tpu.core_type<tc>, window_params = [{transform_indices = @transform_0, window_bounds = array<i64: 8, 32>}, {transform_indices = @transform_1, window_bounds = array<i64: 32, 128>}, {pipeline_mode = #tpu.pipeline_mode<synchronous>, transform_indices = @transform_2, window_bounds = array<i64: 1, 128>}, {pipeline_mode = #tpu.pipeline_mode<synchronous>, transform_indices = @transform_3, window_bounds = array<i64: 1, 128>}, {transform_indices = @transform_4, window_bounds = array<i64: 8, 128>}]} {
    %c0_i32 = arith.constant 0 : i32
    %0 = arith.cmpi eq, %arg1, %c0_i32 : i32
    %1 = arith.extui %0 : i1 to i32
    %c0_i32_0 = arith.constant 0 : i32
    %2 = arith.cmpi ne, %1, %c0_i32_0 : i32
    scf.if %2 {
      %cst_10 = arith.constant 0.000000e+00 : f32
      %12 = vector.broadcast %cst_10 : f32 to vector<8x128xf32>
      %c0_11 = arith.constant 0 : index
      %c0_12 = arith.constant 0 : index
      %13 = vector.load %arg7[%c0_11, %c0_12] : memref<8x128xf32, #tpu.memory_space<vmem>>, vector<8x128xf32>
      tpu.vector_store %arg7[%c0_11, %c0_12], %12 {strides = array<i32>} : memref<8x128xf32, #tpu.memory_space<vmem>>, vector<8x128xf32>,
    } else {
    }
    %c0 = arith.constant 0 : index
    %c0_1 = arith.constant 0 : index
    %3 = vector.load %arg7[%c0, %c0_1] : memref<8x128xf32, #tpu.memory_space<vmem>>, vector<8x128xf32>
    %c0_2 = arith.constant 0 : index
    %c0_3 = arith.constant 0 : index
    %4 = vector.load %arg2[%c0_2, %c0_3] : memref<8x32xbf16, #tpu.memory_space<vmem>>, vector<8x32xbf16>
    %c0_4 = arith.constant 0 : index
    %c0_5 = arith.constant 0 : index
    %5 = vector.load %arg3[%c0_4, %c0_5] : memref<32x128xbf16, #tpu.memory_space<vmem>>, vector<32x128xbf16>
    %cst = arith.constant dense<0.000000e+00> : vector<8x128xf32>
    %6 = tpu.matmul %4, %5, %cst {dimension_numbers = #tpu.dot_dimension_numbers<[1], [0], [0], [1], [0, 0, 1, 1], [], []>} : vector<8x32xbf16>, vector<32x128xbf16>, vector<8x128xf32> -> vector<8x128xf32>
    %7 = arith.addf %3, %6 : vector<8x128xf32>
    %c0_6 = arith.constant 0 : index
    %c0_7 = arith.constant 0 : index
    %8 = vector.load %arg7[%c0_6, %c0_7] : memref<8x128xf32, #tpu.memory_space<vmem>>, vector<8x128xf32>
    tpu.vector_store %arg7[%c0_6, %c0_7], %7 {strides = array<i32>} : memref<8x128xf32, #tpu.memory_space<vmem>>, vector<8x128xf32>,
    %c0_i32_8 = arith.constant 0 : i32
    %9 = arith.cmpi eq, %arg1, %c0_i32_8 : i32
    %10 = arith.extui %9 : i1 to i32
    %c0_i32_9 = arith.constant 0 : i32
    %11 = arith.cmpi ne, %10, %c0_i32_9 : i32
    scf.if %11 {
      %c0_10 = arith.constant 0 : index
      %c0_11 = arith.constant 0 : index
      %12 = vector.load %arg7[%c0_10, %c0_11] : memref<8x128xf32, #tpu.memory_space<vmem>>, vector<8x128xf32>
      %c0_12 = arith.constant 0 : index
      %c0_13 = arith.constant 0 : index
      %13 = vector.load %arg4[%c0_12, %c0_13] : memref<1x128xf32, #tpu.memory_space<vmem>>, vector<1x128xf32>
      %14 = vector.broadcast %13 : vector<1x128xf32> to vector<8x128xf32>
      %15 = arith.mulf %12, %14 : vector<8x128xf32>
      %c0_14 = arith.constant 0 : index
      %c0_15 = arith.constant 0 : index
      %16 = vector.load %arg5[%c0_14, %c0_15] : memref<1x128xf32, #tpu.memory_space<vmem>>, vector<1x128xf32>
      %17 = vector.broadcast %16 : vector<1x128xf32> to vector<8x128xf32>
      %18 = arith.addf %15, %17 : vector<8x128xf32>
      %19 = arith.truncf %18 : vector<8x128xf32> to vector<8x128xbf16>
      %c0_16 = arith.constant 0 : index
      %c0_17 = arith.constant 0 : index
      %20 = vector.load %arg6[%c0_16, %c0_17] : memref<8x128xbf16, #tpu.memory_space<vmem>>, vector<8x128xbf16>
      tpu.vector_store %arg6[%c0_16, %c0_17], %19 {strides = array<i32>} : memref<8x128xbf16, #tpu.memory_space<vmem>>, vector<8x128xbf16>,
    } else {
    }
    return
  }
  func.func @transform_0(%arg0: i32, %arg1: i32) -> (i32, i32) {
    %c0_i32 = arith.constant 0 : i32
    return %arg0, %arg1 : i32, i32
  }
  func.func @transform_1(%arg0: i32, %arg1: i32) -> (i32, i32) {
    %c0_i32 = arith.constant 0 : i32
    %c0_i32_0 = arith.constant 0 : i32
    return %arg1, %c0_i32 : i32, i32
  }
  func.func @transform_2(%arg0: i32, %arg1: i32) -> (i32, i32) {
    %c0_i32 = arith.constant 0 : i32
    %c0_i32_0 = arith.constant 0 : i32
    %c0_i32_1 = arith.constant 0 : i32
    return %c0_i32, %c0_i32_0 : i32, i32
  }
  func.func @transform_3(%arg0: i32, %arg1: i32) -> (i32, i32) {
    %c0_i32 = arith.constant 0 : i32
    %c0_i32_0 = arith.constant 0 : i32
    %c0_i32_1 = arith.constant 0 : i32
    return %c0_i32, %c0_i32_0 : i32, i32
  }
  func.func @transform_4(%arg0: i32, %arg1: i32) -> (i32, i32) {
    %c0_i32 = arith.constant 0 : i32
    %c0_i32_0 = arith.constant 0 : i32
    return %arg0, %c0_i32 : i32, i32
  }
}

module attributes {stable_mosaic.version = 11 : i64} {
  func.func @_fused_matmul_kernel(%arg0: i32, %arg1: i32, %arg2: memref<32x32xbf16, #tpu.memory_space<vmem>>, %arg3: memref<32x32xbf16, #tpu.memory_space<vmem>>, %arg4: memref<32x32xbf16, #tpu.memory_space<vmem>>, %arg5: memref<32x32xbf16, #tpu.memory_space<vmem>>, %arg6: memref<1x32xf32, #tpu.memory_space<vmem>>, %arg7: memref<1x32xf32, #tpu.memory_space<vmem>>, %arg8: memref<32x32xbf16, #tpu.memory_space<vmem>>, %arg9: memref<32x32xf32, #tpu.memory_space<vmem>>) attributes {dimension_semantics = [#tpu.dimension_semantics<parallel>, #tpu.dimension_semantics<arbitrary>], iteration_bounds = array<i64: 1, 1>, scalar_prefetch = 0 : i64, scratch_operands = 1 : i64, tpu.core_type = #tpu.core_type<tc>, window_params = [{transform_indices = @transform_0, window_bounds = array<i64: 32, 32>}, {transform_indices = @transform_1, window_bounds = array<i64: 32, 32>}, {transform_indices = @transform_2, window_bounds = array<i64: 32, 32>}, {pipeline_mode = #tpu.pipeline_mode<synchronous>, transform_indices = @transform_3, window_bounds = array<i64: 32, 32>}, {pipeline_mode = #tpu.pipeline_mode<synchronous>, transform_indices = @transform_4, window_bounds = array<i64: 1, 32>}, {pipeline_mode = #tpu.pipeline_mode<synchronous>, transform_indices = @transform_5, window_bounds = array<i64: 1, 32>}, {transform_indices = @transform_6, window_bounds = array<i64: 32, 32>}]} {
    %c0_i32 = arith.constant 0 : i32
    %0 = arith.cmpi eq, %arg1, %c0_i32 : i32
    %1 = arith.extui %0 : i1 to i32
    %c0_i32_0 = arith.constant 0 : i32
    %2 = arith.cmpi ne, %1, %c0_i32_0 : i32
    scf.if %2 {
      %cst_12 = arith.constant 0.000000e+00 : f32
      %15 = vector.broadcast %cst_12 : f32 to vector<32x32xf32>
      %c0_13 = arith.constant 0 : index
      %c0_14 = arith.constant 0 : index
      %16 = vector.load %arg9[%c0_13, %c0_14] : memref<32x32xf32, #tpu.memory_space<vmem>>, vector<32x32xf32>
      tpu.vector_store %arg9[%c0_13, %c0_14], %15 {strides = array<i32>} : memref<32x32xf32, #tpu.memory_space<vmem>>, vector<32x32xf32>,
    } else {
    }
    %c0 = arith.constant 0 : index
    %c0_1 = arith.constant 0 : index
    %3 = vector.load %arg9[%c0, %c0_1] : memref<32x32xf32, #tpu.memory_space<vmem>>, vector<32x32xf32>
    %c0_2 = arith.constant 0 : index
    %c0_3 = arith.constant 0 : index
    %4 = vector.load %arg2[%c0_2, %c0_3] : memref<32x32xbf16, #tpu.memory_space<vmem>>, vector<32x32xbf16>
    %c0_4 = arith.constant 0 : index
    %c0_5 = arith.constant 0 : index
    %5 = vector.load %arg3[%c0_4, %c0_5] : memref<32x32xbf16, #tpu.memory_space<vmem>>, vector<32x32xbf16>
    %cst = arith.constant dense<0.000000e+00> : vector<32x32xf32>
    %6 = tpu.matmul %4, %5, %cst {dimension_numbers = #tpu.dot_dimension_numbers<[1], [0], [0], [1], [0, 0, 1, 1], [], []>} : vector<32x32xbf16>, vector<32x32xbf16>, vector<32x32xf32> -> vector<32x32xf32>
    %7 = arith.addf %3, %6 : vector<32x32xf32>
    %c0_6 = arith.constant 0 : index
    %c0_7 = arith.constant 0 : index
    %8 = vector.load %arg9[%c0_6, %c0_7] : memref<32x32xf32, #tpu.memory_space<vmem>>, vector<32x32xf32>
    tpu.vector_store %arg9[%c0_6, %c0_7], %7 {strides = array<i32>} : memref<32x32xf32, #tpu.memory_space<vmem>>, vector<32x32xf32>,
    %c0_i32_8 = arith.constant 0 : i32
    %9 = arith.cmpi eq, %arg1, %c0_i32_8 : i32
    %10 = arith.extui %9 : i1 to i32
    %c0_i32_9 = arith.constant 0 : i32
    %11 = arith.cmpi ne, %10, %c0_i32_9 : i32
    scf.if %11 {
      %c0_12 = arith.constant 0 : index
      %c0_13 = arith.constant 0 : index
      %15 = vector.load %arg9[%c0_12, %c0_13] : memref<32x32xf32, #tpu.memory_space<vmem>>, vector<32x32xf32>
      %c0_14 = arith.constant 0 : index
      %c0_15 = arith.constant 0 : index
      %16 = vector.load %arg4[%c0_14, %c0_15] : memref<32x32xbf16, #tpu.memory_space<vmem>>, vector<32x32xbf16>
      %c0_16 = arith.constant 0 : index
      %c0_17 = arith.constant 0 : index
      %17 = vector.load %arg5[%c0_16, %c0_17] : memref<32x32xbf16, #tpu.memory_space<vmem>>, vector<32x32xbf16>
      %cst_18 = arith.constant dense<0.000000e+00> : vector<32x32xf32>
      %18 = tpu.matmul %16, %17, %cst_18 {dimension_numbers = #tpu.dot_dimension_numbers<[1], [0], [0], [1], [0, 0, 1, 1], [], []>} : vector<32x32xbf16>, vector<32x32xbf16>, vector<32x32xf32> -> vector<32x32xf32>
      %19 = arith.addf %15, %18 : vector<32x32xf32>
      %c0_19 = arith.constant 0 : index
      %c0_20 = arith.constant 0 : index
      %20 = vector.load %arg9[%c0_19, %c0_20] : memref<32x32xf32, #tpu.memory_space<vmem>>, vector<32x32xf32>
      tpu.vector_store %arg9[%c0_19, %c0_20], %19 {strides = array<i32>} : memref<32x32xf32, #tpu.memory_space<vmem>>, vector<32x32xf32>,
    } else {
    }
    %c0_i32_10 = arith.constant 0 : i32
    %12 = arith.cmpi eq, %arg1, %c0_i32_10 : i32
    %13 = arith.extui %12 : i1 to i32
    %c0_i32_11 = arith.constant 0 : i32
    %14 = arith.cmpi ne, %13, %c0_i32_11 : i32
    scf.if %14 {
      %c0_12 = arith.constant 0 : index
      %c0_13 = arith.constant 0 : index
      %15 = vector.load %arg9[%c0_12, %c0_13] : memref<32x32xf32, #tpu.memory_space<vmem>>, vector<32x32xf32>
      %c0_14 = arith.constant 0 : index
      %c0_15 = arith.constant 0 : index
      %16 = vector.load %arg6[%c0_14, %c0_15] : memref<1x32xf32, #tpu.memory_space<vmem>>, vector<1x32xf32>
      %17 = vector.broadcast %16 : vector<1x32xf32> to vector<32x32xf32>
      %18 = arith.mulf %15, %17 : vector<32x32xf32>
      %c0_16 = arith.constant 0 : index
      %c0_17 = arith.constant 0 : index
      %19 = vector.load %arg7[%c0_16, %c0_17] : memref<1x32xf32, #tpu.memory_space<vmem>>, vector<1x32xf32>
      %20 = vector.broadcast %19 : vector<1x32xf32> to vector<32x32xf32>
      %21 = arith.addf %18, %20 : vector<32x32xf32>
      %cst_18 = arith.constant 0.000000e+00 : f32
      %22 = vector.broadcast %cst_18 : f32 to vector<32x32xf32>
      %23 = arith.maximumf %21, %22 : vector<32x32xf32>
      %24 = arith.truncf %23 : vector<32x32xf32> to vector<32x32xbf16>
      %c0_19 = arith.constant 0 : index
      %c0_20 = arith.constant 0 : index
      %25 = vector.load %arg8[%c0_19, %c0_20] : memref<32x32xbf16, #tpu.memory_space<vmem>>, vector<32x32xbf16>
      tpu.vector_store %arg8[%c0_19, %c0_20], %24 {strides = array<i32>} : memref<32x32xbf16, #tpu.memory_space<vmem>>, vector<32x32xbf16>,
    } else {
    }
    return
  }
  func.func @transform_0(%arg0: i32, %arg1: i32) -> (i32, i32) {
    %c0_i32 = arith.constant 0 : i32
    return %arg0, %arg1 : i32, i32
  }
  func.func @transform_1(%arg0: i32, %arg1: i32) -> (i32, i32) {
    %c0_i32 = arith.constant 0 : i32
    %c0_i32_0 = arith.constant 0 : i32
    return %arg1, %c0_i32 : i32, i32
  }
  func.func @transform_2(%arg0: i32, %arg1: i32) -> (i32, i32) {
    %c0_i32 = arith.constant 0 : i32
    %c0_i32_0 = arith.constant 0 : i32
    return %arg0, %c0_i32 : i32, i32
  }
  func.func @transform_3(%arg0: i32, %arg1: i32) -> (i32, i32) {
    %c0_i32 = arith.constant 0 : i32
    %c0_i32_0 = arith.constant 0 : i32
    %c0_i32_1 = arith.constant 0 : i32
    return %c0_i32, %c0_i32_0 : i32, i32
  }
  func.func @transform_4(%arg0: i32, %arg1: i32) -> (i32, i32) {
    %c0_i32 = arith.constant 0 : i32
    %c0_i32_0 = arith.constant 0 : i32
    %c0_i32_1 = arith.constant 0 : i32
    return %c0_i32, %c0_i32_0 : i32, i32
  }
  func.func @transform_5(%arg0: i32, %arg1: i32) -> (i32, i32) {
    %c0_i32 = arith.constant 0 : i32
    %c0_i32_0 = arith.constant 0 : i32
    %c0_i32_1 = arith.constant 0 : i32
    return %c0_i32, %c0_i32_0 : i32, i32
  }
  func.func @transform_6(%arg0: i32, %arg1: i32) -> (i32, i32) {
    %c0_i32 = arith.constant 0 : i32
    %c0_i32_0 = arith.constant 0 : i32
    return %arg0, %c0_i32 : i32, i32
  }
}

module attributes {stable_mosaic.version = 11 : i64} {
  func.func @_vq_kernel(%arg0: i32, %arg1: memref<32x32xbf16, #tpu.memory_space<vmem>>, %arg2: memref<128x32xf32, #tpu.memory_space<vmem>>, %arg3: memref<1x128xf32, #tpu.memory_space<vmem>>, %arg4: memref<32x32xf32, #tpu.memory_space<vmem>>) attributes {dimension_semantics = [#tpu.dimension_semantics<parallel>], iteration_bounds = array<i64: 1>, scalar_prefetch = 0 : i64, scratch_operands = 0 : i64, tpu.core_type = #tpu.core_type<tc>, window_params = [{transform_indices = @transform_0, window_bounds = array<i64: 32, 32>}, {pipeline_mode = #tpu.pipeline_mode<synchronous>, transform_indices = @transform_1, window_bounds = array<i64: 128, 32>}, {pipeline_mode = #tpu.pipeline_mode<synchronous>, transform_indices = @transform_2, window_bounds = array<i64: 1, 128>}, {transform_indices = @transform_3, window_bounds = array<i64: 32, 32>}]} {
    %c0 = arith.constant 0 : index
    %c0_0 = arith.constant 0 : index
    %0 = vector.load %arg1[%c0, %c0_0] : memref<32x32xbf16, #tpu.memory_space<vmem>>, vector<32x32xbf16>
    %1 = arith.extf %0 : vector<32x32xbf16> to vector<32x32xf32>
    %c0_1 = arith.constant 0 : index
    %c0_2 = arith.constant 0 : index
    %2 = vector.load %arg2[%c0_1, %c0_2] : memref<128x32xf32, #tpu.memory_space<vmem>>, vector<128x32xf32>
    %cst = arith.constant dense<0.000000e+00> : vector<32x128xf32>
    %3 = tpu.matmul %1, %2, %cst {dimension_numbers = #tpu.dot_dimension_numbers<[1], [1], [0], [0], [0, 0, 1, 0], [], []>} : vector<32x32xf32>, vector<128x32xf32>, vector<32x128xf32> -> vector<32x128xf32>
    %c0_3 = arith.constant 0 : index
    %c0_4 = arith.constant 0 : index
    %4 = vector.load %arg3[%c0_3, %c0_4] : memref<1x128xf32, #tpu.memory_space<vmem>>, vector<1x128xf32>
    %cst_5 = arith.constant 2.000000e+00 : f32
    %5 = vector.broadcast %cst_5 : f32 to vector<32x128xf32>
    %6 = arith.mulf %5, %3 : vector<32x128xf32>
    %7 = vector.broadcast %4 : vector<1x128xf32> to vector<32x128xf32>
    %8 = arith.subf %7, %6 : vector<32x128xf32>
    %9 = tpu.iota {dimensions = array<i32: 1>} : vector<32x128xi32>
    %cst_6 = arith.constant dense<0x7F800000> : vector<32xf32>
    %10 = vector.multi_reduction <minimumf>, %8, %cst_6 [1] : vector<32x128xf32> to vector<32xf32>
    %11 = vector.shape_cast %10 : vector<32xf32> to vector<32x1xf32>
    %12 = vector.broadcast %11 : vector<32x1xf32> to vector<32x128xf32>
    %13 = arith.cmpf ole, %8, %12 : vector<32x128xf32>
    %c128_i32 = arith.constant 128 : i32
    %14 = vector.broadcast %c128_i32 : i32 to vector<32x128xi32>
    %15 = arith.select %13, %9, %14 : vector<32x128xi1>, vector<32x128xi32>
    %cst_7 = arith.constant dense<2147483647> : vector<32xi32>
    %16 = vector.multi_reduction <minsi>, %15, %cst_7 [1] : vector<32x128xi32> to vector<32xi32>
    %17 = vector.shape_cast %16 : vector<32xi32> to vector<32x1xi32>
    %18 = vector.broadcast %17 : vector<32x1xi32> to vector<32x128xi32>
    %19 = arith.cmpi eq, %9, %18 : vector<32x128xi32>
    %20 = arith.extui %19 : vector<32x128xi1> to vector<32x128xi32>
    %21 = arith.sitofp %20 : vector<32x128xi32> to vector<32x128xf32>
    %cst_8 = arith.constant dense<0.000000e+00> : vector<32x32xf32>
    %22 = tpu.matmul %21, %2, %cst_8 {dimension_numbers = #tpu.dot_dimension_numbers<[1], [0], [0], [1], [0, 0, 1, 1], [], []>} : vector<32x128xf32>, vector<128x32xf32>, vector<32x32xf32> -> vector<32x32xf32>
    %c0_9 = arith.constant 0 : index
    %c0_10 = arith.constant 0 : index
    %23 = vector.load %arg4[%c0_9, %c0_10] : memref<32x32xf32, #tpu.memory_space<vmem>>, vector<32x32xf32>
    tpu.vector_store %arg4[%c0_9, %c0_10], %22 {strides = array<i32>} : memref<32x32xf32, #tpu.memory_space<vmem>>, vector<32x32xf32>,
    return
  }
  func.func @transform_0(%arg0: i32) -> (i32, i32) {
    %c0_i32 = arith.constant 0 : i32
    %c0_i32_0 = arith.constant 0 : i32
    return %arg0, %c0_i32 : i32, i32
  }
  func.func @transform_1(%arg0: i32) -> (i32, i32) {
    %c0_i32 = arith.constant 0 : i32
    %c0_i32_0 = arith.constant 0 : i32
    %c0_i32_1 = arith.constant 0 : i32
    return %c0_i32, %c0_i32_0 : i32, i32
  }
  func.func @transform_2(%arg0: i32) -> (i32, i32) {
    %c0_i32 = arith.constant 0 : i32
    %c0_i32_0 = arith.constant 0 : i32
    %c0_i32_1 = arith.constant 0 : i32
    return %c0_i32, %c0_i32_0 : i32, i32
  }
  func.func @transform_3(%arg0: i32) -> (i32, i32) {
    %c0_i32 = arith.constant 0 : i32
    %c0_i32_0 = arith.constant 0 : i32
    return %arg0, %c0_i32 : i32, i32
  }
}

module attributes {stable_mosaic.version = 11 : i64} {
  func.func @_fused_matmul_kernel(%arg0: i32, %arg1: i32, %arg2: memref<32x128xbf16, #tpu.memory_space<vmem>>, %arg3: memref<128x16xbf16, #tpu.memory_space<vmem>>, %arg4: memref<1x16xf32, #tpu.memory_space<vmem>>, %arg5: memref<1x16xf32, #tpu.memory_space<vmem>>, %arg6: memref<32x16xbf16, #tpu.memory_space<vmem>>, %arg7: memref<32x16xf32, #tpu.memory_space<vmem>>) attributes {dimension_semantics = [#tpu.dimension_semantics<parallel>, #tpu.dimension_semantics<arbitrary>], iteration_bounds = array<i64: 1, 3>, scalar_prefetch = 0 : i64, scratch_operands = 1 : i64, tpu.core_type = #tpu.core_type<tc>, window_params = [{transform_indices = @transform_0, window_bounds = array<i64: 32, 128>}, {transform_indices = @transform_1, window_bounds = array<i64: 128, 16>}, {pipeline_mode = #tpu.pipeline_mode<synchronous>, transform_indices = @transform_2, window_bounds = array<i64: 1, 16>}, {pipeline_mode = #tpu.pipeline_mode<synchronous>, transform_indices = @transform_3, window_bounds = array<i64: 1, 16>}, {transform_indices = @transform_4, window_bounds = array<i64: 32, 16>}]} {
    %c0_i32 = arith.constant 0 : i32
    %0 = arith.cmpi eq, %arg1, %c0_i32 : i32
    %1 = arith.extui %0 : i1 to i32
    %c0_i32_0 = arith.constant 0 : i32
    %2 = arith.cmpi ne, %1, %c0_i32_0 : i32
    scf.if %2 {
      %cst_9 = arith.constant 0.000000e+00 : f32
      %12 = vector.broadcast %cst_9 : f32 to vector<32x16xf32>
      %c0_10 = arith.constant 0 : index
      %c0_11 = arith.constant 0 : index
      %13 = vector.load %arg7[%c0_10, %c0_11] : memref<32x16xf32, #tpu.memory_space<vmem>>, vector<32x16xf32>
      tpu.vector_store %arg7[%c0_10, %c0_11], %12 {strides = array<i32>} : memref<32x16xf32, #tpu.memory_space<vmem>>, vector<32x16xf32>,
    } else {
    }
    %c0 = arith.constant 0 : index
    %c0_1 = arith.constant 0 : index
    %3 = vector.load %arg7[%c0, %c0_1] : memref<32x16xf32, #tpu.memory_space<vmem>>, vector<32x16xf32>
    %c0_2 = arith.constant 0 : index
    %c0_3 = arith.constant 0 : index
    %4 = vector.load %arg2[%c0_2, %c0_3] : memref<32x128xbf16, #tpu.memory_space<vmem>>, vector<32x128xbf16>
    %c0_4 = arith.constant 0 : index
    %c0_5 = arith.constant 0 : index
    %5 = vector.load %arg3[%c0_4, %c0_5] : memref<128x16xbf16, #tpu.memory_space<vmem>>, vector<128x16xbf16>
    %cst = arith.constant dense<0.000000e+00> : vector<32x16xf32>
    %6 = tpu.matmul %4, %5, %cst {dimension_numbers = #tpu.dot_dimension_numbers<[1], [0], [0], [1], [0, 0, 1, 1], [], []>} : vector<32x128xbf16>, vector<128x16xbf16>, vector<32x16xf32> -> vector<32x16xf32>
    %7 = arith.addf %3, %6 : vector<32x16xf32>
    %c0_6 = arith.constant 0 : index
    %c0_7 = arith.constant 0 : index
    %8 = vector.load %arg7[%c0_6, %c0_7] : memref<32x16xf32, #tpu.memory_space<vmem>>, vector<32x16xf32>
    tpu.vector_store %arg7[%c0_6, %c0_7], %7 {strides = array<i32>} : memref<32x16xf32, #tpu.memory_space<vmem>>, vector<32x16xf32>,
    %c2_i32 = arith.constant 2 : i32
    %9 = arith.cmpi eq, %arg1, %c2_i32 : i32
    %10 = arith.extui %9 : i1 to i32
    %c0_i32_8 = arith.constant 0 : i32
    %11 = arith.cmpi ne, %10, %c0_i32_8 : i32
    scf.if %11 {
      %c0_9 = arith.constant 0 : index
      %c0_10 = arith.constant 0 : index
      %12 = vector.load %arg7[%c0_9, %c0_10] : memref<32x16xf32, #tpu.memory_space<vmem>>, vector<32x16xf32>
      %c0_11 = arith.constant 0 : index
      %c0_12 = arith.constant 0 : index
      %13 = vector.load %arg4[%c0_11, %c0_12] : memref<1x16xf32, #tpu.memory_space<vmem>>, vector<1x16xf32>
      %14 = vector.broadcast %13 : vector<1x16xf32> to vector<32x16xf32>
      %15 = arith.mulf %12, %14 : vector<32x16xf32>
      %c0_13 = arith.constant 0 : index
      %c0_14 = arith.constant 0 : index
      %16 = vector.load %arg5[%c0_13, %c0_14] : memref<1x16xf32, #tpu.memory_space<vmem>>, vector<1x16xf32>
      %17 = vector.broadcast %16 : vector<1x16xf32> to vector<32x16xf32>
      %18 = arith.addf %15, %17 : vector<32x16xf32>
      %cst_15 = arith.constant 0.000000e+00 : f32
      %19 = vector.broadcast %cst_15 : f32 to vector<32x16xf32>
      %20 = arith.maximumf %18, %19 : vector<32x16xf32>
      %21 = arith.truncf %20 : vector<32x16xf32> to vector<32x16xbf16>
      %c0_16 = arith.constant 0 : index
      %c0_17 = arith.constant 0 : index
      %22 = vector.load %arg6[%c0_16, %c0_17] : memref<32x16xbf16, #tpu.memory_space<vmem>>, vector<32x16xbf16>
      tpu.vector_store %arg6[%c0_16, %c0_17], %21 {strides = array<i32>} : memref<32x16xbf16, #tpu.memory_space<vmem>>, vector<32x16xbf16>,
    } else {
    }
    return
  }
  func.func @transform_0(%arg0: i32, %arg1: i32) -> (i32, i32) {
    %c0_i32 = arith.constant 0 : i32
    return %arg0, %arg1 : i32, i32
  }
  func.func @transform_1(%arg0: i32, %arg1: i32) -> (i32, i32) {
    %c0_i32 = arith.constant 0 : i32
    %c0_i32_0 = arith.constant 0 : i32
    return %arg1, %c0_i32 : i32, i32
  }
  func.func @transform_2(%arg0: i32, %arg1: i32) -> (i32, i32) {
    %c0_i32 = arith.constant 0 : i32
    %c0_i32_0 = arith.constant 0 : i32
    %c0_i32_1 = arith.constant 0 : i32
    return %c0_i32, %c0_i32_0 : i32, i32
  }
  func.func @transform_3(%arg0: i32, %arg1: i32) -> (i32, i32) {
    %c0_i32 = arith.constant 0 : i32
    %c0_i32_0 = arith.constant 0 : i32
    %c0_i32_1 = arith.constant 0 : i32
    return %c0_i32, %c0_i32_0 : i32, i32
  }
  func.func @transform_4(%arg0: i32, %arg1: i32) -> (i32, i32) {
    %c0_i32 = arith.constant 0 : i32
    %c0_i32_0 = arith.constant 0 : i32
    return %arg0, %c0_i32 : i32, i32
  }
}

module attributes {stable_mosaic.version = 11 : i64} {
  func.func @_fused_matmul_kernel(%arg0: i32, %arg1: i32, %arg2: memref<32x32xbf16, #tpu.memory_space<vmem>>, %arg3: memref<32x16xbf16, #tpu.memory_space<vmem>>, %arg4: memref<1x16xf32, #tpu.memory_space<vmem>>, %arg5: memref<1x16xf32, #tpu.memory_space<vmem>>, %arg6: memref<32x16xbf16, #tpu.memory_space<vmem>>, %arg7: memref<32x16xf32, #tpu.memory_space<vmem>>) attributes {dimension_semantics = [#tpu.dimension_semantics<parallel>, #tpu.dimension_semantics<arbitrary>], iteration_bounds = array<i64: 1, 1>, scalar_prefetch = 0 : i64, scratch_operands = 1 : i64, tpu.core_type = #tpu.core_type<tc>, window_params = [{transform_indices = @transform_0, window_bounds = array<i64: 32, 32>}, {transform_indices = @transform_1, window_bounds = array<i64: 32, 16>}, {pipeline_mode = #tpu.pipeline_mode<synchronous>, transform_indices = @transform_2, window_bounds = array<i64: 1, 16>}, {pipeline_mode = #tpu.pipeline_mode<synchronous>, transform_indices = @transform_3, window_bounds = array<i64: 1, 16>}, {transform_indices = @transform_4, window_bounds = array<i64: 32, 16>}]} {
    %c0_i32 = arith.constant 0 : i32
    %0 = arith.cmpi eq, %arg1, %c0_i32 : i32
    %1 = arith.extui %0 : i1 to i32
    %c0_i32_0 = arith.constant 0 : i32
    %2 = arith.cmpi ne, %1, %c0_i32_0 : i32
    scf.if %2 {
      %cst_10 = arith.constant 0.000000e+00 : f32
      %12 = vector.broadcast %cst_10 : f32 to vector<32x16xf32>
      %c0_11 = arith.constant 0 : index
      %c0_12 = arith.constant 0 : index
      %13 = vector.load %arg7[%c0_11, %c0_12] : memref<32x16xf32, #tpu.memory_space<vmem>>, vector<32x16xf32>
      tpu.vector_store %arg7[%c0_11, %c0_12], %12 {strides = array<i32>} : memref<32x16xf32, #tpu.memory_space<vmem>>, vector<32x16xf32>,
    } else {
    }
    %c0 = arith.constant 0 : index
    %c0_1 = arith.constant 0 : index
    %3 = vector.load %arg7[%c0, %c0_1] : memref<32x16xf32, #tpu.memory_space<vmem>>, vector<32x16xf32>
    %c0_2 = arith.constant 0 : index
    %c0_3 = arith.constant 0 : index
    %4 = vector.load %arg2[%c0_2, %c0_3] : memref<32x32xbf16, #tpu.memory_space<vmem>>, vector<32x32xbf16>
    %c0_4 = arith.constant 0 : index
    %c0_5 = arith.constant 0 : index
    %5 = vector.load %arg3[%c0_4, %c0_5] : memref<32x16xbf16, #tpu.memory_space<vmem>>, vector<32x16xbf16>
    %cst = arith.constant dense<0.000000e+00> : vector<32x16xf32>
    %6 = tpu.matmul %4, %5, %cst {dimension_numbers = #tpu.dot_dimension_numbers<[1], [0], [0], [1], [0, 0, 1, 1], [], []>} : vector<32x32xbf16>, vector<32x16xbf16>, vector<32x16xf32> -> vector<32x16xf32>
    %7 = arith.addf %3, %6 : vector<32x16xf32>
    %c0_6 = arith.constant 0 : index
    %c0_7 = arith.constant 0 : index
    %8 = vector.load %arg7[%c0_6, %c0_7] : memref<32x16xf32, #tpu.memory_space<vmem>>, vector<32x16xf32>
    tpu.vector_store %arg7[%c0_6, %c0_7], %7 {strides = array<i32>} : memref<32x16xf32, #tpu.memory_space<vmem>>, vector<32x16xf32>,
    %c0_i32_8 = arith.constant 0 : i32
    %9 = arith.cmpi eq, %arg1, %c0_i32_8 : i32
    %10 = arith.extui %9 : i1 to i32
    %c0_i32_9 = arith.constant 0 : i32
    %11 = arith.cmpi ne, %10, %c0_i32_9 : i32
    scf.if %11 {
      %c0_10 = arith.constant 0 : index
      %c0_11 = arith.constant 0 : index
      %12 = vector.load %arg7[%c0_10, %c0_11] : memref<32x16xf32, #tpu.memory_space<vmem>>, vector<32x16xf32>
      %c0_12 = arith.constant 0 : index
      %c0_13 = arith.constant 0 : index
      %13 = vector.load %arg4[%c0_12, %c0_13] : memref<1x16xf32, #tpu.memory_space<vmem>>, vector<1x16xf32>
      %14 = vector.broadcast %13 : vector<1x16xf32> to vector<32x16xf32>
      %15 = arith.mulf %12, %14 : vector<32x16xf32>
      %c0_14 = arith.constant 0 : index
      %c0_15 = arith.constant 0 : index
      %16 = vector.load %arg5[%c0_14, %c0_15] : memref<1x16xf32, #tpu.memory_space<vmem>>, vector<1x16xf32>
      %17 = vector.broadcast %16 : vector<1x16xf32> to vector<32x16xf32>
      %18 = arith.addf %15, %17 : vector<32x16xf32>
      %19 = arith.truncf %18 : vector<32x16xf32> to vector<32x16xbf16>
      %c0_16 = arith.constant 0 : index
      %c0_17 = arith.constant 0 : index
      %20 = vector.load %arg6[%c0_16, %c0_17] : memref<32x16xbf16, #tpu.memory_space<vmem>>, vector<32x16xbf16>
      tpu.vector_store %arg6[%c0_16, %c0_17], %19 {strides = array<i32>} : memref<32x16xbf16, #tpu.memory_space<vmem>>, vector<32x16xbf16>,
    } else {
    }
    return
  }
  func.func @transform_0(%arg0: i32, %arg1: i32) -> (i32, i32) {
    %c0_i32 = arith.constant 0 : i32
    return %arg0, %arg1 : i32, i32
  }
  func.func @transform_1(%arg0: i32, %arg1: i32) -> (i32, i32) {
    %c0_i32 = arith.constant 0 : i32
    %c0_i32_0 = arith.constant 0 : i32
    return %arg1, %c0_i32 : i32, i32
  }
  func.func @transform_2(%arg0: i32, %arg1: i32) -> (i32, i32) {
    %c0_i32 = arith.constant 0 : i32
    %c0_i32_0 = arith.constant 0 : i32
    %c0_i32_1 = arith.constant 0 : i32
    return %c0_i32, %c0_i32_0 : i32, i32
  }
  func.func @transform_3(%arg0: i32, %arg1: i32) -> (i32, i32) {
    %c0_i32 = arith.constant 0 : i32
    %c0_i32_0 = arith.constant 0 : i32
    %c0_i32_1 = arith.constant 0 : i32
    return %c0_i32, %c0_i32_0 : i32, i32
  }
  func.func @transform_4(%arg0: i32, %arg1: i32) -> (i32, i32) {
    %c0_i32 = arith.constant 0 : i32
    %c0_i32_0 = arith.constant 0 : i32
    return %arg0, %c0_i32 : i32, i32
  }
}

module attributes {stable_mosaic.version = 11 : i64} {
  func.func @_fused_matmul_kernel(%arg0: i32, %arg1: i32, %arg2: memref<32x128xbf16, #tpu.memory_space<vmem>>, %arg3: memref<128x16xbf16, #tpu.memory_space<vmem>>, %arg4: memref<1x16xf32, #tpu.memory_space<vmem>>, %arg5: memref<1x16xf32, #tpu.memory_space<vmem>>, %arg6: memref<32x16xbf16, #tpu.memory_space<vmem>>, %arg7: memref<32x16xbf16, #tpu.memory_space<vmem>>, %arg8: memref<32x16xf32, #tpu.memory_space<vmem>>) attributes {dimension_semantics = [#tpu.dimension_semantics<parallel>, #tpu.dimension_semantics<arbitrary>], iteration_bounds = array<i64: 1, 2>, scalar_prefetch = 0 : i64, scratch_operands = 1 : i64, tpu.core_type = #tpu.core_type<tc>, window_params = [{transform_indices = @transform_0, window_bounds = array<i64: 32, 128>}, {transform_indices = @transform_1, window_bounds = array<i64: 128, 16>}, {pipeline_mode = #tpu.pipeline_mode<synchronous>, transform_indices = @transform_2, window_bounds = array<i64: 1, 16>}, {pipeline_mode = #tpu.pipeline_mode<synchronous>, transform_indices = @transform_3, window_bounds = array<i64: 1, 16>}, {transform_indices = @transform_4, window_bounds = array<i64: 32, 16>}, {transform_indices = @transform_5, window_bounds = array<i64: 32, 16>}]} {
    %c0_i32 = arith.constant 0 : i32
    %0 = arith.cmpi eq, %arg1, %c0_i32 : i32
    %1 = arith.extui %0 : i1 to i32
    %c0_i32_0 = arith.constant 0 : i32
    %2 = arith.cmpi ne, %1, %c0_i32_0 : i32
    scf.if %2 {
      %cst_9 = arith.constant 0.000000e+00 : f32
      %12 = vector.broadcast %cst_9 : f32 to vector<32x16xf32>
      %c0_10 = arith.constant 0 : index
      %c0_11 = arith.constant 0 : index
      %13 = vector.load %arg8[%c0_10, %c0_11] : memref<32x16xf32, #tpu.memory_space<vmem>>, vector<32x16xf32>
      tpu.vector_store %arg8[%c0_10, %c0_11], %12 {strides = array<i32>} : memref<32x16xf32, #tpu.memory_space<vmem>>, vector<32x16xf32>,
    } else {
    }
    %c0 = arith.constant 0 : index
    %c0_1 = arith.constant 0 : index
    %3 = vector.load %arg8[%c0, %c0_1] : memref<32x16xf32, #tpu.memory_space<vmem>>, vector<32x16xf32>
    %c0_2 = arith.constant 0 : index
    %c0_3 = arith.constant 0 : index
    %4 = vector.load %arg2[%c0_2, %c0_3] : memref<32x128xbf16, #tpu.memory_space<vmem>>, vector<32x128xbf16>
    %c0_4 = arith.constant 0 : index
    %c0_5 = arith.constant 0 : index
    %5 = vector.load %arg3[%c0_4, %c0_5] : memref<128x16xbf16, #tpu.memory_space<vmem>>, vector<128x16xbf16>
    %cst = arith.constant dense<0.000000e+00> : vector<32x16xf32>
    %6 = tpu.matmul %4, %5, %cst {dimension_numbers = #tpu.dot_dimension_numbers<[1], [0], [0], [1], [0, 0, 1, 1], [], []>} : vector<32x128xbf16>, vector<128x16xbf16>, vector<32x16xf32> -> vector<32x16xf32>
    %7 = arith.addf %3, %6 : vector<32x16xf32>
    %c0_6 = arith.constant 0 : index
    %c0_7 = arith.constant 0 : index
    %8 = vector.load %arg8[%c0_6, %c0_7] : memref<32x16xf32, #tpu.memory_space<vmem>>, vector<32x16xf32>
    tpu.vector_store %arg8[%c0_6, %c0_7], %7 {strides = array<i32>} : memref<32x16xf32, #tpu.memory_space<vmem>>, vector<32x16xf32>,
    %c1_i32 = arith.constant 1 : i32
    %9 = arith.cmpi eq, %arg1, %c1_i32 : i32
    %10 = arith.extui %9 : i1 to i32
    %c0_i32_8 = arith.constant 0 : i32
    %11 = arith.cmpi ne, %10, %c0_i32_8 : i32
    scf.if %11 {
      %c0_9 = arith.constant 0 : index
      %c0_10 = arith.constant 0 : index
      %12 = vector.load %arg8[%c0_9, %c0_10] : memref<32x16xf32, #tpu.memory_space<vmem>>, vector<32x16xf32>
      %c0_11 = arith.constant 0 : index
      %c0_12 = arith.constant 0 : index
      %13 = vector.load %arg4[%c0_11, %c0_12] : memref<1x16xf32, #tpu.memory_space<vmem>>, vector<1x16xf32>
      %14 = vector.broadcast %13 : vector<1x16xf32> to vector<32x16xf32>
      %15 = arith.mulf %12, %14 : vector<32x16xf32>
      %c0_13 = arith.constant 0 : index
      %c0_14 = arith.constant 0 : index
      %16 = vector.load %arg5[%c0_13, %c0_14] : memref<1x16xf32, #tpu.memory_space<vmem>>, vector<1x16xf32>
      %17 = vector.broadcast %16 : vector<1x16xf32> to vector<32x16xf32>
      %18 = arith.addf %15, %17 : vector<32x16xf32>
      %c0_15 = arith.constant 0 : index
      %c0_16 = arith.constant 0 : index
      %19 = vector.load %arg6[%c0_15, %c0_16] : memref<32x16xbf16, #tpu.memory_space<vmem>>, vector<32x16xbf16>
      %20 = arith.extf %19 : vector<32x16xbf16> to vector<32x16xf32>
      %21 = arith.addf %18, %20 : vector<32x16xf32>
      %cst_17 = arith.constant 0.000000e+00 : f32
      %22 = vector.broadcast %cst_17 : f32 to vector<32x16xf32>
      %23 = arith.maximumf %21, %22 : vector<32x16xf32>
      %24 = arith.truncf %23 : vector<32x16xf32> to vector<32x16xbf16>
      %c0_18 = arith.constant 0 : index
      %c0_19 = arith.constant 0 : index
      %25 = vector.load %arg7[%c0_18, %c0_19] : memref<32x16xbf16, #tpu.memory_space<vmem>>, vector<32x16xbf16>
      tpu.vector_store %arg7[%c0_18, %c0_19], %24 {strides = array<i32>} : memref<32x16xbf16, #tpu.memory_space<vmem>>, vector<32x16xbf16>,
    } else {
    }
    return
  }
  func.func @transform_0(%arg0: i32, %arg1: i32) -> (i32, i32) {
    %c0_i32 = arith.constant 0 : i32
    return %arg0, %arg1 : i32, i32
  }
  func.func @transform_1(%arg0: i32, %arg1: i32) -> (i32, i32) {
    %c0_i32 = arith.constant 0 : i32
    %c0_i32_0 = arith.constant 0 : i32
    return %arg1, %c0_i32 : i32, i32
  }
  func.func @transform_2(%arg0: i32, %arg1: i32) -> (i32, i32) {
    %c0_i32 = arith.constant 0 : i32
    %c0_i32_0 = arith.constant 0 : i32
    %c0_i32_1 = arith.constant 0 : i32
    return %c0_i32, %c0_i32_0 : i32, i32
  }
  func.func @transform_3(%arg0: i32, %arg1: i32) -> (i32, i32) {
    %c0_i32 = arith.constant 0 : i32
    %c0_i32_0 = arith.constant 0 : i32
    %c0_i32_1 = arith.constant 0 : i32
    return %c0_i32, %c0_i32_0 : i32, i32
  }
  func.func @transform_4(%arg0: i32, %arg1: i32) -> (i32, i32) {
    %c0_i32 = arith.constant 0 : i32
    %c0_i32_0 = arith.constant 0 : i32
    return %arg0, %c0_i32 : i32, i32
  }
  func.func @transform_5(%arg0: i32, %arg1: i32) -> (i32, i32) {
    %c0_i32 = arith.constant 0 : i32
    %c0_i32_0 = arith.constant 0 : i32
    return %arg0, %c0_i32 : i32, i32
  }
}

module attributes {stable_mosaic.version = 11 : i64} {
  func.func @_fused_matmul_kernel(%arg0: i32, %arg1: i32, %arg2: memref<32x64xbf16, #tpu.memory_space<vmem>>, %arg3: memref<64x32xbf16, #tpu.memory_space<vmem>>, %arg4: memref<1x32xf32, #tpu.memory_space<vmem>>, %arg5: memref<1x32xf32, #tpu.memory_space<vmem>>, %arg6: memref<32x32xbf16, #tpu.memory_space<vmem>>, %arg7: memref<32x32xf32, #tpu.memory_space<vmem>>) attributes {dimension_semantics = [#tpu.dimension_semantics<parallel>, #tpu.dimension_semantics<arbitrary>], iteration_bounds = array<i64: 1, 1>, scalar_prefetch = 0 : i64, scratch_operands = 1 : i64, tpu.core_type = #tpu.core_type<tc>, window_params = [{transform_indices = @transform_0, window_bounds = array<i64: 32, 64>}, {transform_indices = @transform_1, window_bounds = array<i64: 64, 32>}, {pipeline_mode = #tpu.pipeline_mode<synchronous>, transform_indices = @transform_2, window_bounds = array<i64: 1, 32>}, {pipeline_mode = #tpu.pipeline_mode<synchronous>, transform_indices = @transform_3, window_bounds = array<i64: 1, 32>}, {transform_indices = @transform_4, window_bounds = array<i64: 32, 32>}]} {
    %c0_i32 = arith.constant 0 : i32
    %0 = arith.cmpi eq, %arg1, %c0_i32 : i32
    %1 = arith.extui %0 : i1 to i32
    %c0_i32_0 = arith.constant 0 : i32
    %2 = arith.cmpi ne, %1, %c0_i32_0 : i32
    scf.if %2 {
      %cst_10 = arith.constant 0.000000e+00 : f32
      %12 = vector.broadcast %cst_10 : f32 to vector<32x32xf32>
      %c0_11 = arith.constant 0 : index
      %c0_12 = arith.constant 0 : index
      %13 = vector.load %arg7[%c0_11, %c0_12] : memref<32x32xf32, #tpu.memory_space<vmem>>, vector<32x32xf32>
      tpu.vector_store %arg7[%c0_11, %c0_12], %12 {strides = array<i32>} : memref<32x32xf32, #tpu.memory_space<vmem>>, vector<32x32xf32>,
    } else {
    }
    %c0 = arith.constant 0 : index
    %c0_1 = arith.constant 0 : index
    %3 = vector.load %arg7[%c0, %c0_1] : memref<32x32xf32, #tpu.memory_space<vmem>>, vector<32x32xf32>
    %c0_2 = arith.constant 0 : index
    %c0_3 = arith.constant 0 : index
    %4 = vector.load %arg2[%c0_2, %c0_3] : memref<32x64xbf16, #tpu.memory_space<vmem>>, vector<32x64xbf16>
    %c0_4 = arith.constant 0 : index
    %c0_5 = arith.constant 0 : index
    %5 = vector.load %arg3[%c0_4, %c0_5] : memref<64x32xbf16, #tpu.memory_space<vmem>>, vector<64x32xbf16>
    %cst = arith.constant dense<0.000000e+00> : vector<32x32xf32>
    %6 = tpu.matmul %4, %5, %cst {dimension_numbers = #tpu.dot_dimension_numbers<[1], [0], [0], [1], [0, 0, 1, 1], [], []>} : vector<32x64xbf16>, vector<64x32xbf16>, vector<32x32xf32> -> vector<32x32xf32>
    %7 = arith.addf %3, %6 : vector<32x32xf32>
    %c0_6 = arith.constant 0 : index
    %c0_7 = arith.constant 0 : index
    %8 = vector.load %arg7[%c0_6, %c0_7] : memref<32x32xf32, #tpu.memory_space<vmem>>, vector<32x32xf32>
    tpu.vector_store %arg7[%c0_6, %c0_7], %7 {strides = array<i32>} : memref<32x32xf32, #tpu.memory_space<vmem>>, vector<32x32xf32>,
    %c0_i32_8 = arith.constant 0 : i32
    %9 = arith.cmpi eq, %arg1, %c0_i32_8 : i32
    %10 = arith.extui %9 : i1 to i32
    %c0_i32_9 = arith.constant 0 : i32
    %11 = arith.cmpi ne, %10, %c0_i32_9 : i32
    scf.if %11 {
      %c0_10 = arith.constant 0 : index
      %c0_11 = arith.constant 0 : index
      %12 = vector.load %arg7[%c0_10, %c0_11] : memref<32x32xf32, #tpu.memory_space<vmem>>, vector<32x32xf32>
      %c0_12 = arith.constant 0 : index
      %c0_13 = arith.constant 0 : index
      %13 = vector.load %arg4[%c0_12, %c0_13] : memref<1x32xf32, #tpu.memory_space<vmem>>, vector<1x32xf32>
      %14 = vector.broadcast %13 : vector<1x32xf32> to vector<32x32xf32>
      %15 = arith.mulf %12, %14 : vector<32x32xf32>
      %c0_14 = arith.constant 0 : index
      %c0_15 = arith.constant 0 : index
      %16 = vector.load %arg5[%c0_14, %c0_15] : memref<1x32xf32, #tpu.memory_space<vmem>>, vector<1x32xf32>
      %17 = vector.broadcast %16 : vector<1x32xf32> to vector<32x32xf32>
      %18 = arith.addf %15, %17 : vector<32x32xf32>
      %cst_16 = arith.constant 0.000000e+00 : f32
      %19 = vector.broadcast %cst_16 : f32 to vector<32x32xf32>
      %20 = arith.maximumf %18, %19 : vector<32x32xf32>
      %21 = arith.truncf %20 : vector<32x32xf32> to vector<32x32xbf16>
      %c0_17 = arith.constant 0 : index
      %c0_18 = arith.constant 0 : index
      %22 = vector.load %arg6[%c0_17, %c0_18] : memref<32x32xbf16, #tpu.memory_space<vmem>>, vector<32x32xbf16>
      tpu.vector_store %arg6[%c0_17, %c0_18], %21 {strides = array<i32>} : memref<32x32xbf16, #tpu.memory_space<vmem>>, vector<32x32xbf16>,
    } else {
    }
    return
  }
  func.func @transform_0(%arg0: i32, %arg1: i32) -> (i32, i32) {
    %c0_i32 = arith.constant 0 : i32
    return %arg0, %arg1 : i32, i32
  }
  func.func @transform_1(%arg0: i32, %arg1: i32) -> (i32, i32) {
    %c0_i32 = arith.constant 0 : i32
    %c0_i32_0 = arith.constant 0 : i32
    return %arg1, %c0_i32 : i32, i32
  }
  func.func @transform_2(%arg0: i32, %arg1: i32) -> (i32, i32) {
    %c0_i32 = arith.constant 0 : i32
    %c0_i32_0 = arith.constant 0 : i32
    %c0_i32_1 = arith.constant 0 : i32
    return %c0_i32, %c0_i32_0 : i32, i32
  }
  func.func @transform_3(%arg0: i32, %arg1: i32) -> (i32, i32) {
    %c0_i32 = arith.constant 0 : i32
    %c0_i32_0 = arith.constant 0 : i32
    %c0_i32_1 = arith.constant 0 : i32
    return %c0_i32, %c0_i32_0 : i32, i32
  }
  func.func @transform_4(%arg0: i32, %arg1: i32) -> (i32, i32) {
    %c0_i32 = arith.constant 0 : i32
    %c0_i32_0 = arith.constant 0 : i32
    return %arg0, %c0_i32 : i32, i32
  }
}

module attributes {stable_mosaic.version = 11 : i64} {
  func.func @_fused_matmul_kernel(%arg0: i32, %arg1: i32, %arg2: memref<64x32xbf16, #tpu.memory_space<vmem>>, %arg3: memref<32x16xbf16, #tpu.memory_space<vmem>>, %arg4: memref<1x16xf32, #tpu.memory_space<vmem>>, %arg5: memref<1x16xf32, #tpu.memory_space<vmem>>, %arg6: memref<64x16xbf16, #tpu.memory_space<vmem>>, %arg7: memref<64x16xf32, #tpu.memory_space<vmem>>) attributes {dimension_semantics = [#tpu.dimension_semantics<parallel>, #tpu.dimension_semantics<arbitrary>], iteration_bounds = array<i64: 2, 1>, scalar_prefetch = 0 : i64, scratch_operands = 1 : i64, tpu.core_type = #tpu.core_type<tc>, window_params = [{transform_indices = @transform_0, window_bounds = array<i64: 64, 32>}, {transform_indices = @transform_1, window_bounds = array<i64: 32, 16>}, {pipeline_mode = #tpu.pipeline_mode<synchronous>, transform_indices = @transform_2, window_bounds = array<i64: 1, 16>}, {pipeline_mode = #tpu.pipeline_mode<synchronous>, transform_indices = @transform_3, window_bounds = array<i64: 1, 16>}, {transform_indices = @transform_4, window_bounds = array<i64: 64, 16>}]} {
    %c0_i32 = arith.constant 0 : i32
    %0 = arith.cmpi eq, %arg1, %c0_i32 : i32
    %1 = arith.extui %0 : i1 to i32
    %c0_i32_0 = arith.constant 0 : i32
    %2 = arith.cmpi ne, %1, %c0_i32_0 : i32
    scf.if %2 {
      %cst_10 = arith.constant 0.000000e+00 : f32
      %12 = vector.broadcast %cst_10 : f32 to vector<64x16xf32>
      %c0_11 = arith.constant 0 : index
      %c0_12 = arith.constant 0 : index
      %13 = vector.load %arg7[%c0_11, %c0_12] : memref<64x16xf32, #tpu.memory_space<vmem>>, vector<64x16xf32>
      tpu.vector_store %arg7[%c0_11, %c0_12], %12 {strides = array<i32>} : memref<64x16xf32, #tpu.memory_space<vmem>>, vector<64x16xf32>,
    } else {
    }
    %c0 = arith.constant 0 : index
    %c0_1 = arith.constant 0 : index
    %3 = vector.load %arg7[%c0, %c0_1] : memref<64x16xf32, #tpu.memory_space<vmem>>, vector<64x16xf32>
    %c0_2 = arith.constant 0 : index
    %c0_3 = arith.constant 0 : index
    %4 = vector.load %arg2[%c0_2, %c0_3] : memref<64x32xbf16, #tpu.memory_space<vmem>>, vector<64x32xbf16>
    %c0_4 = arith.constant 0 : index
    %c0_5 = arith.constant 0 : index
    %5 = vector.load %arg3[%c0_4, %c0_5] : memref<32x16xbf16, #tpu.memory_space<vmem>>, vector<32x16xbf16>
    %cst = arith.constant dense<0.000000e+00> : vector<64x16xf32>
    %6 = tpu.matmul %4, %5, %cst {dimension_numbers = #tpu.dot_dimension_numbers<[1], [0], [0], [1], [0, 0, 1, 1], [], []>} : vector<64x32xbf16>, vector<32x16xbf16>, vector<64x16xf32> -> vector<64x16xf32>
    %7 = arith.addf %3, %6 : vector<64x16xf32>
    %c0_6 = arith.constant 0 : index
    %c0_7 = arith.constant 0 : index
    %8 = vector.load %arg7[%c0_6, %c0_7] : memref<64x16xf32, #tpu.memory_space<vmem>>, vector<64x16xf32>
    tpu.vector_store %arg7[%c0_6, %c0_7], %7 {strides = array<i32>} : memref<64x16xf32, #tpu.memory_space<vmem>>, vector<64x16xf32>,
    %c0_i32_8 = arith.constant 0 : i32
    %9 = arith.cmpi eq, %arg1, %c0_i32_8 : i32
    %10 = arith.extui %9 : i1 to i32
    %c0_i32_9 = arith.constant 0 : i32
    %11 = arith.cmpi ne, %10, %c0_i32_9 : i32
    scf.if %11 {
      %c0_10 = arith.constant 0 : index
      %c0_11 = arith.constant 0 : index
      %12 = vector.load %arg7[%c0_10, %c0_11] : memref<64x16xf32, #tpu.memory_space<vmem>>, vector<64x16xf32>
      %c0_12 = arith.constant 0 : index
      %c0_13 = arith.constant 0 : index
      %13 = vector.load %arg4[%c0_12, %c0_13] : memref<1x16xf32, #tpu.memory_space<vmem>>, vector<1x16xf32>
      %14 = vector.broadcast %13 : vector<1x16xf32> to vector<64x16xf32>
      %15 = arith.mulf %12, %14 : vector<64x16xf32>
      %c0_14 = arith.constant 0 : index
      %c0_15 = arith.constant 0 : index
      %16 = vector.load %arg5[%c0_14, %c0_15] : memref<1x16xf32, #tpu.memory_space<vmem>>, vector<1x16xf32>
      %17 = vector.broadcast %16 : vector<1x16xf32> to vector<64x16xf32>
      %18 = arith.addf %15, %17 : vector<64x16xf32>
      %19 = math.tanh %18 : vector<64x16xf32>
      %20 = arith.truncf %19 : vector<64x16xf32> to vector<64x16xbf16>
      %c0_16 = arith.constant 0 : index
      %c0_17 = arith.constant 0 : index
      %21 = vector.load %arg6[%c0_16, %c0_17] : memref<64x16xbf16, #tpu.memory_space<vmem>>, vector<64x16xbf16>
      tpu.vector_store %arg6[%c0_16, %c0_17], %20 {strides = array<i32>} : memref<64x16xbf16, #tpu.memory_space<vmem>>, vector<64x16xbf16>,
    } else {
    }
    return
  }
  func.func @transform_0(%arg0: i32, %arg1: i32) -> (i32, i32) {
    %c0_i32 = arith.constant 0 : i32
    return %arg0, %arg1 : i32, i32
  }
  func.func @transform_1(%arg0: i32, %arg1: i32) -> (i32, i32) {
    %c0_i32 = arith.constant 0 : i32
    %c0_i32_0 = arith.constant 0 : i32
    return %arg1, %c0_i32 : i32, i32
  }
  func.func @transform_2(%arg0: i32, %arg1: i32) -> (i32, i32) {
    %c0_i32 = arith.constant 0 : i32
    %c0_i32_0 = arith.constant 0 : i32
    %c0_i32_1 = arith.constant 0 : i32
    return %c0_i32, %c0_i32_0 : i32, i32
  }
  func.func @transform_3(%arg0: i32, %arg1: i32) -> (i32, i32) {
    %c0_i32 = arith.constant 0 : i32
    %c0_i32_0 = arith.constant 0 : i32
    %c0_i32_1 = arith.constant 0 : i32
    return %c0_i32, %c0_i32_0 : i32, i32
  }
  func.func @transform_4(%arg0: i32, %arg1: i32) -> (i32, i32) {
    %c0_i32 = arith.constant 0 : i32
    %c0_i32_0 = arith.constant 0 : i32
    return %arg0, %c0_i32 : i32, i32
  }
}

</mosaic_0001>

<llo_original>
// kernel: vqvae2_forward.28
$region0: #{vqvae2_forward.28}
  #allocation0 [shape = 'u32[]', space=smem, size = 0x4, offset = 0x4, fixed_abs, tag = 'smem constant byte address 0x4 - core index']
  #allocation1 [shape = 'u32[144,128]{1,0:T(1,128)}', space=vmem, size = 0x12000, scoped, tag = 'internal scratch']
  #allocation2 [shape = 'f32[64,8]{1,0:T(8,128)}', space=vmem, size = 0x8000, scoped, tag = 'scratch operand']
  %s0 = inlined_call_operand.vmem [shape: bf16[128,36], index: 0, kind: input, shape index: {}]
  %s1 = inlined_call_operand.vmem [shape: bf16[36,8], index: 1, kind: input, shape index: {}]
  %s2 = inlined_call_operand.vmem [shape: f32[1,8], index: 2, kind: input, shape index: {}]
  %s3 = inlined_call_operand.vmem [shape: f32[1,8], index: 3, kind: input, shape index: {}]
  %s4 = inlined_call_operand.vmem [shape: bf16[128,8], index: 4, kind: output, shape index: {}]
  %s5 = sld [smem:[#allocation0]]
  $region57: #{vqvae2_forward.28} parent=0
    _
  %s7 = ssub.s32 1, %s5
  %s8 = scalar_select 0, %s7, %s5
  loop: start=0, step=1, limit=4
  $region2: #{vqvae2_forward.28} parent=0 // loop_pre_header
    _
  $region3: #{vqvae2_forward.28} parent=0 // loop_header
    %s10 = sphi 0, %s14
    %p11 = scmp.ge.s32.totalorder %s10, 4
    %s17 = sphi 0, %s29
    %s18 = sphi 0, %s25
    %s19 = sphi 0, %s17
    %s20 = sphi 0, %s18
    %s21 = sphi 0, %s19
    %s22 = sphi 0, %s20
    %s34 = sphi 0, %s36
    %s37 = sphi 0, %s34
    %s38 = sphi 0, %s37
    %s54 = sphi 0, %s38
    %s60 = sphi 0, %s62
    %s63 = sphi 0, %s60
    %s64 = sphi 0, %s63
    %s80 = sphi 0, %s64
    %s84 = sphi 0, %s84
    %s86 = sphi 0, %s84
    %s87 = sphi 0, %s86
    %s101 = sphi 0, %s87
    %s105 = sphi 0, %s105
    %s107 = sphi 0, %s105
    %s108 = sphi 0, %s107
    %s122 = sphi 0, %s108
    %s128 = sphi 0, %s130
    %s131 = sphi 0, %s128
    %s132 = sphi 0, %s131
    %s148 = sphi 0, %s132
  $region4: #{vqvae2_forward.28} parent=0 // loop_header_branch
    %13 = sbr.rel (%p11) target = $region8
  $region5: #{vqvae2_forward.28} parent=0 // loop_body
    %s15 = ssub.s32 %s10, 1
    %s16 = ssub.s32 %s10, 2
    %s23 = sadd.s32 1, %s18
    %p24 = scmp.ge.s32.totalorder %s23, 1
    %s25 = scalar_select %p24, 0, %s23
    %s26 = sadd.s32 1, %s17
    %s27 = scalar_select %p24, %s26, %s17
    %p28 = scmp.ge.s32.totalorder %s27, 2
    %s29 = scalar_select %p28, 0, %s27
    %s30 = ssub.s32 %s17, %s29
    %s31 = ssub.s32 %s18, %s25
    %s32 = sor.u32 %s30, %s31
    %p33 = scmp.eq.s32.totalorder %s32, 0
    %s35 = sadd.s32 %s34, 1
    %s36 = scalar_select %p33, %s34, %s35
    %p39 = pneg %p33
    %p40 = scmp.eq.s32.totalorder %s10, 1
    %p41 = por %p39, %p40
    %p42 = scmp.ne.s32.totalorder %s34, %s37
    %p43 = scmp.eq.s32.totalorder %s10, 0
    %p44 = por %p42, %p43
    %p45 = scmp.ne.s32.totalorder %s34, %s37
    %p46 = scmp.eq.s32.totalorder %s15, 1
    %p47 = por %p45, %p46
    %p48 = scmp.ne.s32.totalorder %s37, %s38
    %p49 = scmp.eq.s32.totalorder %s15, 0
    %p50 = por %p48, %p49
    %p51 = scmp.ne.s32.totalorder %s37, %s38
    %p52 = scmp.eq.s32.totalorder %s16, 1
    %p53 = por %p51, %p52
    %p55 = scmp.ne.s32.totalorder %s38, %s54
    %p56 = scmp.eq.s32.totalorder %s16, 0
    %p57 = por %p55, %p56
    %s58 = ssub.s32 %s18, %s25
    %p59 = scmp.eq.s32.totalorder %s58, 0
    %s61 = sadd.s32 %s60, 1
    %s62 = scalar_select %p59, %s60, %s61
    %p65 = pneg %p59
    %p66 = scmp.eq.s32.totalorder %s10, 1
    %p67 = por %p65, %p66
    %p68 = scmp.ne.s32.totalorder %s60, %s63
    %p69 = scmp.eq.s32.totalorder %s10, 0
    %p70 = por %p68, %p69
    %p71 = scmp.ne.s32.totalorder %s60, %s63
    %p72 = scmp.eq.s32.totalorder %s15, 1
    %p73 = por %p71, %p72
    %p74 = scmp.ne.s32.totalorder %s63, %s64
    %p75 = scmp.eq.s32.totalorder %s15, 0
    %p76 = por %p74, %p75
    %p77 = scmp.ne.s32.totalorder %s63, %s64
    %p78 = scmp.eq.s32.totalorder %s16, 1
    %p79 = por %p77, %p78
    %p81 = scmp.ne.s32.totalorder %s64, %s80
    %p82 = scmp.eq.s32.totalorder %s16, 0
    %p83 = por %p81, %p82
    %s85 = sadd.s32 %s84, 1
    %p88 = scmp.eq.s32.totalorder %s10, 1
    %p89 = scmp.ne.s32.totalorder %s84, %s86
    %p90 = scmp.eq.s32.totalorder %s10, 0
    %p91 = por %p89, %p90
    %p92 = scmp.ne.s32.totalorder %s84, %s86
    %p93 = scmp.eq.s32.totalorder %s15, 1
    %p94 = por %p92, %p93
    %p95 = scmp.ne.s32.totalorder %s86, %s87
    %p96 = scmp.eq.s32.totalorder %s15, 0
    %p97 = por %p95, %p96
    %p98 = scmp.ne.s32.totalorder %s86, %s87
    %p99 = scmp.eq.s32.totalorder %s16, 1
    %p100 = por %p98, %p99
    %p102 = scmp.ne.s32.totalorder %s87, %s101
    %p103 = scmp.eq.s32.totalorder %s16, 0
    %p104 = por %p102, %p103
    %s106 = sadd.s32 %s105, 1
    %p109 = scmp.eq.s32.totalorder %s10, 1
    %p110 = scmp.ne.s32.totalorder %s105, %s107
    %p111 = scmp.eq.s32.totalorder %s10, 0
    %p112 = por %p110, %p111
    %p113 = scmp.ne.s32.totalorder %s105, %s107
    %p114 = scmp.eq.s32.totalorder %s15, 1
    %p115 = por %p113, %p114
    %p116 = scmp.ne.s32.totalorder %s107, %s108
    %p117 = scmp.eq.s32.totalorder %s15, 0
    %p118 = por %p116, %p117
    %p119 = scmp.ne.s32.totalorder %s107, %s108
    %p120 = scmp.eq.s32.totalorder %s16, 1
    %p121 = por %p119, %p120
    %p123 = scmp.ne.s32.totalorder %s108, %s122
    %p124 = scmp.eq.s32.totalorder %s16, 0
    %p125 = por %p123, %p124
    %s126 = ssub.s32 %s17, %s29
    %p127 = scmp.eq.s32.totalorder %s126, 0
    %s129 = sadd.s32 %s128, 1
    %s130 = scalar_select %p127, %s128, %s129
    %p133 = pneg %p127
    %p134 = scmp.eq.s32.totalorder %s10, 1
    %p135 = por %p133, %p134
    %p136 = scmp.ne.s32.totalorder %s128, %s131
    %p137 = scmp.eq.s32.totalorder %s10, 0
    %p138 = por %p136, %p137
    %p139 = scmp.ne.s32.totalorder %s128, %s131
    %p140 = scmp.eq.s32.totalorder %s15, 1
    %p141 = por %p139, %p140
    %p142 = scmp.ne.s32.totalorder %s131, %s132
    %p143 = scmp.eq.s32.totalorder %s15, 0
    %p144 = por %p142, %p143
    %p145 = scmp.ne.s32.totalorder %s131, %s132
    %p146 = scmp.eq.s32.totalorder %s16, 1
    %p147 = por %p145, %p146
    %p149 = scmp.ne.s32.totalorder %s132, %s148
    %p150 = scmp.eq.s32.totalorder %s16, 0
    %p151 = por %p149, %p150
    %p152 = scmp.le.s32.totalorder 1, %s10
    %p153 = scmp.lt.s32.totalorder %s10, 3
    %p154 = pnand %p152, %p153
    %p155 = pneg %p154
    // Predicated region
    $region9: #{vqvae2_forward.28} parent=5 // pred_check
      _
    $region10: #{vqvae2_forward.28} parent=5 // pred_check_branch
      %157 = sbr.rel (%p154) target = $region12
    $region11: #{vqvae2_forward.28} parent=5 // pred_region
      %s158 = ssub.s32 %s10, 1
      // Predicated region
      $region13: #{vqvae2_forward.28} parent=11 // pred_check
        %p159 = pneg %p76
      $region14: #{vqvae2_forward.28} parent=11 // pred_check_branch
        %161 = sbr.rel (%p159) target = $region16
      $region15: #{vqvae2_forward.28} parent=11 // pred_region
        %s162 = smul.u32 5, %s20
        %p163 = scmp.lt.s32.totalorder %s162, 4
        %s164 = scalar_select %p163, %s162, 4
        %s165 = smul.addr %s164, 4
        %s166 = scalar_lea.vmem %s1, %s165
        %s167 = smul.u32 5, %s20
      $region16: #{vqvae2_forward.28} parent=11 // pred_fallthru
        _
      // Predicated region
      $region17: #{vqvae2_forward.28} parent=11 // pred_check
        %p168 = pneg %p97
      $region18: #{vqvae2_forward.28} parent=11 // pred_check_branch
        %170 = sbr.rel (%p168) target = $region20
      $region19: #{vqvae2_forward.28} parent=11 // pred_region
        _
      $region20: #{vqvae2_forward.28} parent=11 // pred_fallthru
        _
      // Predicated region
      $region21: #{vqvae2_forward.28} parent=11 // pred_check
        %p171 = pneg %p118
      $region22: #{vqvae2_forward.28} parent=11 // pred_check_branch
        %173 = sbr.rel (%p171) target = $region24
      $region23: #{vqvae2_forward.28} parent=11 // pred_region
        _
      $region24: #{vqvae2_forward.28} parent=11 // pred_fallthru
        _
    $region12: #{vqvae2_forward.28} parent=5 // pred_fallthru
      _
    %p174 = scmp.lt.s32.totalorder %s10, 2
    // Predicated region
    $region25: #{vqvae2_forward.28} parent=5 // pred_check
      %p175 = pneg %p174
    $region26: #{vqvae2_forward.28} parent=5 // pred_check_branch
      %177 = sbr.rel (%p175) target = $region28
    $region27: #{vqvae2_forward.28} parent=5 // pred_region
      // Predicated region
      $region29: #{vqvae2_forward.28} parent=27 // pred_check
        %p178 = pneg %p44
      $region30: #{vqvae2_forward.28} parent=27 // pred_check_branch
        %180 = sbr.rel (%p178) target = $region32
      $region31: #{vqvae2_forward.28} parent=27 // pred_region
        %s181 = smul.u32 8, %s17
        %p182 = scmp.lt.s32.totalorder %s181, 15
        %s183 = scalar_select %p182, %s181, 15
        %p184 = scmp.lt.s32.totalorder %s18, 0
        %s185 = scalar_select %p184, %s18, 0
        %s186 = sadd.s32 %s185, %s183
        %s187 = smul.addr %s186, 4
        %s188 = scalar_lea.vmem %s0, %s187
        %s189 = smul.u32 8, %s17
      $region32: #{vqvae2_forward.28} parent=27 // pred_fallthru
        _
    $region28: #{vqvae2_forward.28} parent=5 // pred_fallthru
      _
    %p190 = scmp.le.s32.totalorder 1, %s10
    %p191 = scmp.lt.s32.totalorder %s10, 3
    %p192 = pnand %p190, %p191
    %p193 = pneg %p192
    // Predicated region
    $region33: #{vqvae2_forward.28} parent=5 // pred_check
      _
    $region34: #{vqvae2_forward.28} parent=5 // pred_check_branch
      %195 = sbr.rel (%p192) target = $region36
    $region35: #{vqvae2_forward.28} parent=5 // pred_region
      %s196 = ssub.s32 %s10, 1
      %s197 = smul.u32 8, %s19
      %p198 = scmp.lt.s32.totalorder %s197, 15
      %s199 = scalar_select %p198, %s197, 15
      %p200 = scmp.lt.s32.totalorder %s20, 0
      %s201 = scalar_select %p200, %s20, 0
      %s202 = sadd.s32 %s201, %s199
      %s203 = smul.addr %s202, 4
      %s204 = scalar_lea.vmem %s0, %s203
      %p205 = pneg %p50
      %p206 = pneg %p47
      %s207 = smul.u32 5, %s20
      %p208 = scmp.lt.s32.totalorder %s207, 4
      %s209 = scalar_select %p208, %s207, 4
      %s210 = smul.addr %s209, 4
      %s211 = scalar_lea.vmem %s1, %s210
      %p212 = pneg %p76
      %p213 = pneg %p73
      %p214 = pneg %p97
      %p215 = pneg %p94
      %p216 = pneg %p118
      %p217 = pneg %p115
      %p218 = pneg %p144
      %p219 = pneg %p141
      %s220 = smul.u32 8, %s19
      %p221 = scmp.lt.s32.totalorder %s220, 15
      %s222 = scalar_select %p221, %s220, 15
      %s223 = smul.addr %s222, 4
      %s224 = scalar_lea.vmem %s4, %s223
      %s225 = smul.u32 8, %s19
      %p226 = scmp.lt.s32.totalorder %s225, 15
      %s227 = scalar_select %p226, %s225, 15
      %p228 = scmp.lt.s32.totalorder %s20, 0
      %s229 = scalar_select %p228, %s20, 0
      %s230 = sadd.s32 %s229, %s227
      %s231 = smul.addr %s230, 4
      %s232 = scalar_lea.vmem %s0, %s231
      %s233 = smul.u32 8, %s19
      %s234 = smul.u32 5, %s20
      %p235 = scmp.lt.s32.totalorder %s234, 4
      %s236 = scalar_select %p235, %s234, 4
      %s237 = smul.addr %s236, 4
      %s238 = scalar_lea.vmem %s1, %s237
      %s239 = smul.u32 5, %s20
      %s240 = smul.u32 8, %s19
      %p241 = scmp.lt.s32.totalorder %s240, 15
      %s242 = scalar_select %p241, %s240, 15
      %s243 = smul.addr %s242, 4
      %s244 = scalar_lea.vmem %s4, %s243
      %s245 = smul.u32 8, %s19
      %p247 = scmp.eq.s32.totalorder %s20, 0
      // Predicated region
      $region37: #{vqvae2_forward.28} parent=35 // pred_check
        %p248 = pneg %p247
      $region38: #{vqvae2_forward.28} parent=35 // pred_check_branch
        %250 = sbr.rel (%p248) target = $region40
      $region39: #{vqvae2_forward.28} parent=35 // pred_region
        %vm251 = vcmask 64512
        %252 = vst.msk [vmem:[#allocation2] sm:$0xff] %vm251, 0.0
        %253 = vst.msk [vmem:[#allocation2 + $0x8] sm:$0xff] %vm251, 0.0
        %254 = vst.msk [vmem:[#allocation2 + $0x10] sm:$0xff] %vm251, 0.0
        %255 = vst.msk [vmem:[#allocation2 + $0x18] sm:$0xff] %vm251, 0.0
        %256 = vst.msk [vmem:[#allocation2 + $0x20] sm:$0xff] %vm251, 0.0
        %257 = vst.msk [vmem:[#allocation2 + $0x28] sm:$0xff] %vm251, 0.0
        %258 = vst.msk [vmem:[#allocation2 + $0x30] sm:$0xff] %vm251, 0.0
        %259 = vst.msk [vmem:[#allocation2 + $0x38] sm:$0xff] %vm251, 0.0
      $region40: #{vqvae2_forward.28} parent=35 // pred_fallthru
        _
      %v260 = vld [vmem:[#allocation2] sm:$0xff]
      %v261 = vld [vmem:[#allocation2 + $0x8] sm:$0xff]
      %v262 = vld [vmem:[#allocation2 + $0x10] sm:$0xff]
      %v263 = vld [vmem:[#allocation2 + $0x18] sm:$0xff]
      %v264 = vld [vmem:[#allocation2 + $0x20] sm:$0xff]
      %v265 = vld [vmem:[#allocation2 + $0x28] sm:$0xff]
      %v266 = vld [vmem:[#allocation2 + $0x30] sm:$0xff]
      %v267 = vld [vmem:[#allocation2 + $0x38] sm:$0xff]
      %v268 = vld [vmem:[%s232] sm:$0xf]
      %v269 = vld [vmem:[%s232 + $0x4] sm:$0xf]
      %v270 = vld [vmem:[%s232 + $0x8] sm:$0xf]
      %v271 = vld [vmem:[%s232 + $0xc] sm:$0xf]
      %v272 = vld [vmem:[%s232 + $0x10] sm:$0xf]
      %v273 = vld [vmem:[%s232 + $0x14] sm:$0xf]
      %v274 = vld [vmem:[%s232 + $0x18] sm:$0xf]
      %v275 = vld [vmem:[%s232 + $0x1c] sm:$0xf]
      %v276 = vld [vmem:[%s238] sm:$0xf]
      %v277 = vld [vmem:[%s238 + $0x4] sm:$0xf]
      %v278 = vld [vmem:[%s238 + $0x8] sm:$0xf]
      %v279 = vld [vmem:[%s238 + $0xc] sm:$0xf]
      %v280 = vld [vmem:[%s238 + $0x10] sm:$0x3]
      %v289 = vunpack.c.l.b16 %v268
      %v290 = vunpack.c.l.b16 %v269
      %v291 = vunpack.c.l.b16 %v270
      %v292 = vunpack.c.l.b16 %v271
      %v293 = vunpack.c.l.b16 %v272
      %v294 = vunpack.c.l.b16 %v273
      %v295 = vunpack.c.l.b16 %v274
      %v296 = vunpack.c.l.b16 %v275
      %v297 = vpack.c.b16 %v290, %v289
      %v298 = vpack.c.b16 %v292, %v291
      %v299 = vpack.c.b16 %v294, %v293
      %v300 = vpack.c.b16 %v296, %v295
      %v306 = vunpack.c.l.b16 %v276
      %v307 = vunpack.c.l.b16 %v277
      %v308 = vunpack.c.l.b16 %v278
      %v309 = vunpack.c.l.b16 %v279
      %v310 = vunpack.c.l.b16 %v280
      %v311 = vpack.c.b16 %v307, %v306
      %v312 = vpack.c.b16 %v309, %v308
      %v313 = vpack.c.b16 %v310, %v310
      %vm316 = vcmask 293888
      %v318 = vsel %vm316, %v297, 0
      %v321 = vsel %vm316, %v298, 0
      %v324 = vsel %vm316, %v299, 0
      %v327 = vsel %vm316, %v300, 0
      %vm329 = vcmask 1041408
      %v331 = vsel %vm329, %v313, 0
      %333 = vmatprep.subr.bf16.mxu0 0
      %334 = vmatpush1.bf16.msra.mxu0 0
      %335 = vmatprep.subr.bf16.mxu0 0
      %336 = vmatpush1.bf16.msra.mxu0 0
      %337 = vmatprep.subr.bf16.mxu0 0
      %338 = vmatpush1.bf16.msra.mxu0 0
      %339 = vmatprep.subr.bf16.mxu0 0
      %340 = vmatpush1.bf16.msra.mxu0 0
      %341 = vmatprep.subr.bf16.mxu0 0
      %342 = vmatpush1.bf16.msra.mxu0 0
      %343 = vmatprep.subr.bf16.mxu0 0
      %344 = vmatpush1.bf16.msra.mxu0 %v331
      %345 = vmatprep.subr.bf16.mxu0 0
      %346 = vmatpush1.bf16.msra.mxu0 %v312
      %347 = vmatprep.subr.bf16.mxu0 0
      %348 = vmatpush1.bf16.msra.mxu0 %v311
      %349 = vmatprep.subr.bf16.mxu0 0
      %350 = vmatpush2.bf16.msra.mxu0 0
      %351 = vmatprep.subr.bf16.mxu0 0
      %352 = vmatpush2.bf16.msra.mxu0 0
      %353 = vmatprep.subr.bf16.mxu0 0
      %354 = vmatpush2.bf16.msra.mxu0 0
      %355 = vmatprep.subr.bf16.mxu0 0
      %356 = vmatpush2.bf16.msra.mxu0 0
      %357 = vmatprep.subr.bf16.mxu0 0
      %358 = vmatpush2.bf16.msra.mxu0 0
      %359 = vmatprep.subr.bf16.mxu0 0
      %360 = vmatpush2.bf16.msra.mxu0 0
      %361 = vmatprep.subr.bf16.mxu0 0
      %362 = vmatpush2.bf16.msra.mxu0 0
      %363 = vmatprep.subr.bf16.mxu0 0
      %364 = vmatpush2.bf16.msra.mxu0 0
      %365 = vmatprep.mubr.bf16.mxu0 0
      %366 = vmatmul.mubr.bf16.gmra.mxu0 %v318
      %v367 = vpop.f32.mrf.mxu0
      %v368 = vadd.f32 0.0, %v367
      %v369 = vpop.f32.mrf.mxu0
      %v370 = vpop.f32.mrf.mxu0
      %v371 = vadd.f32 0.0, %v370
      %v372 = vpop.f32.mrf.mxu0
      %373 = vmatprep.mubr.bf16.mxu0 0
      %374 = vmatmul.mubr.bf16.gmra.mxu0 %v321
      %v375 = vpop.f32.mrf.mxu0
      %v376 = vadd.f32 0.0, %v375
      %v377 = vpop.f32.mrf.mxu0
      %v378 = vpop.f32.mrf.mxu0
      %v379 = vadd.f32 0.0, %v378
      %v380 = vpop.f32.mrf.mxu0
      %381 = vmatprep.mubr.bf16.mxu0 0
      %382 = vmatmul.mubr.bf16.gmra.mxu0 %v324
      %v383 = vpop.f32.mrf.mxu0
      %v384 = vadd.f32 0.0, %v383
      %v385 = vpop.f32.mrf.mxu0
      %v386 = vpop.f32.mrf.mxu0
      %v387 = vadd.f32 0.0, %v386
      %v388 = vpop.f32.mrf.mxu0
      %389 = vmatprep.mubr.bf16.mxu0 0
      %390 = vmatmul.mubr.bf16.gmra.mxu0 %v327
      %v391 = vpop.f32.mrf.mxu0
      %v392 = vadd.f32 0.0, %v391
      %v393 = vpop.f32.mrf.mxu0
      %v394 = vpop.f32.mrf.mxu0
      %v395 = vadd.f32 0.0, %v394
      %v396 = vpop.f32.mrf.mxu0
      %397 = vdwg.mxu0
      %v398 = vadd.f32 %v260, %v368
      %v399 = vadd.f32 %v261, %v371
      %v400 = vadd.f32 %v262, %v376
      %v401 = vadd.f32 %v263, %v379
      %v402 = vadd.f32 %v264, %v384
      %v403 = vadd.f32 %v265, %v387
      %v404 = vadd.f32 %v266, %v392
      %v405 = vadd.f32 %v267, %v395
      %vm406 = vcmask 64512
      %407 = vst.msk [vmem:[#allocation2] sm:$0xff] %vm406, %v398
      %408 = vst.msk [vmem:[#allocation2 + $0x8] sm:$0xff] %vm406, %v399
      %409 = vst.msk [vmem:[#allocation2 + $0x10] sm:$0xff] %vm406, %v400
      %410 = vst.msk [vmem:[#allocation2 + $0x18] sm:$0xff] %vm406, %v401
      %411 = vst.msk [vmem:[#allocation2 + $0x20] sm:$0xff] %vm406, %v402
      %412 = vst.msk [vmem:[#allocation2 + $0x28] sm:$0xff] %vm406, %v403
      %413 = vst.msk [vmem:[#allocation2 + $0x30] sm:$0xff] %vm406, %v404
      %414 = vst.msk [vmem:[#allocation2 + $0x38] sm:$0xff] %vm406, %v405
      // Predicated region
      $region41: #{vqvae2_forward.28} parent=35 // pred_check
        %p415 = pneg %p247
      $region42: #{vqvae2_forward.28} parent=35 // pred_check_branch
        %417 = sbr.rel (%p415) target = $region44
      $region43: #{vqvae2_forward.28} parent=35 // pred_region
        %v418 = vld [vmem:[#allocation2] sm:$0xff]
        %v419 = vld [vmem:[#allocation2 + $0x8] sm:$0xff]
        %v420 = vld [vmem:[#allocation2 + $0x10] sm:$0xff]
        %v421 = vld [vmem:[#allocation2 + $0x18] sm:$0xff]
        %v422 = vld [vmem:[#allocation2 + $0x20] sm:$0xff]
        %v423 = vld [vmem:[#allocation2 + $0x28] sm:$0xff]
        %v424 = vld [vmem:[#allocation2 + $0x30] sm:$0xff]
        %v425 = vld [vmem:[#allocation2 + $0x38] sm:$0xff]
        %v426 = vld [vmem:[%s2] sm:$0x1]
        %v428 = vlaneseq
        %v429 = vshrl.u32 %v428, 7
        %v430 = vsub.s32 0, %v429
        %v431 = vrot.slane %v426, %v430
        %v433 = vmul.f32 %v418, %v431
        %v434 = vmul.f32 %v419, %v431
        %v435 = vmul.f32 %v420, %v431
        %v436 = vmul.f32 %v421, %v431
        %v437 = vmul.f32 %v422, %v431
        %v438 = vmul.f32 %v423, %v431
        %v439 = vmul.f32 %v424, %v431
        %v440 = vmul.f32 %v425, %v431
        %v441 = vld [vmem:[%s3] sm:$0x1]
        %v443 = vlaneseq
        %v444 = vshrl.u32 %v443, 7
        %v445 = vsub.s32 0, %v444
        %v446 = vrot.slane %v441, %v445
        %v448 = vadd.f32 %v433, %v446
        %v449 = vadd.f32 %v434, %v446
        %v450 = vadd.f32 %v435, %v446
        %v451 = vadd.f32 %v436, %v446
        %v452 = vadd.f32 %v437, %v446
        %v453 = vadd.f32 %v438, %v446
        %v454 = vadd.f32 %v439, %v446
        %v455 = vadd.f32 %v440, %v446
        %v456 = vmax.f32 %v448, 0.0
        %v457 = vmax.f32 %v449, 0.0
        %v458 = vmax.f32 %v450, 0.0
        %v459 = vmax.f32 %v451, 0.0
        %v460 = vmax.f32 %v452, 0.0
        %v461 = vmax.f32 %v453, 0.0
        %v462 = vmax.f32 %v454, 0.0
        %v463 = vmax.f32 %v455, 0.0
        %v464 = vpack.c.bf16 %v457, %v456
        %v465 = vpack.c.bf16 %v459, %v458
        %v466 = vpack.c.bf16 %v461, %v460
        %v467 = vpack.c.bf16 %v463, %v462
        %v472 = vunpack.c.l.b16 %v464
        %v473 = vunpack.c.h.b16 %v464
        %v474 = vunpack.c.l.b16 %v465
        %v475 = vunpack.c.h.b16 %v465
        %v476 = vunpack.c.l.b16 %v466
        %v477 = vunpack.c.h.b16 %v466
        %v478 = vunpack.c.l.b16 %v467
        %v479 = vunpack.c.h.b16 %v467
        %v480 = vpack.c.b16 %v472, %v472
        %v481 = vpack.c.b16 %v473, %v473
        %v482 = vpack.c.b16 %v474, %v474
        %v483 = vpack.c.b16 %v475, %v475
        %v484 = vpack.c.b16 %v476, %v476
        %v485 = vpack.c.b16 %v477, %v477
        %v486 = vpack.c.b16 %v478, %v478
        %v487 = vpack.c.b16 %v479, %v479
        %vm496 = vcmask 60416
        %497 = vst.msk [vmem:[%s244] sm:$0xf] %vm496, %v480
        %498 = vst.msk [vmem:[%s244 + $0x4] sm:$0xf] %vm496, %v481
        %499 = vst.msk [vmem:[%s244 + $0x8] sm:$0xf] %vm496, %v482
        %500 = vst.msk [vmem:[%s244 + $0xc] sm:$0xf] %vm496, %v483
        %501 = vst.msk [vmem:[%s244 + $0x10] sm:$0xf] %vm496, %v484
        %502 = vst.msk [vmem:[%s244 + $0x14] sm:$0xf] %vm496, %v485
        %503 = vst.msk [vmem:[%s244 + $0x18] sm:$0xf] %vm496, %v486
        %504 = vst.msk [vmem:[%s244 + $0x1c] sm:$0xf] %vm496, %v487
      $region44: #{vqvae2_forward.28} parent=35 // pred_fallthru
        _
      %s505 = smul.u32 8, %s19
      %p506 = scmp.lt.s32.totalorder %s505, 15
      %s507 = scalar_select %p506, %s505, 15
      %s508 = smul.addr %s507, 4
      %s509 = scalar_lea.vmem %s4, %s508
      // Predicated region
      $region45: #{vqvae2_forward.28} parent=35 // pred_check
        %p510 = pneg %p141
      $region46: #{vqvae2_forward.28} parent=35 // pred_check_branch
        %512 = sbr.rel (%p510) target = $region48
      $region47: #{vqvae2_forward.28} parent=35 // pred_region
        %s513 = smul.u32 8, %s19
      $region48: #{vqvae2_forward.28} parent=35 // pred_fallthru
        _
    $region36: #{vqvae2_forward.28} parent=5 // pred_fallthru
      _
    %p514 = scmp.le.s32.totalorder 2, %s10
    // Predicated region
    $region49: #{vqvae2_forward.28} parent=5 // pred_check
      %p515 = pneg %p514
    $region50: #{vqvae2_forward.28} parent=5 // pred_check_branch
      %517 = sbr.rel (%p515) target = $region52
    $region51: #{vqvae2_forward.28} parent=5 // pred_region
      %s518 = ssub.s32 %s10, 2
      // Predicated region
      $region53: #{vqvae2_forward.28} parent=51 // pred_check
        %p519 = pneg %p147
      $region54: #{vqvae2_forward.28} parent=51 // pred_check_branch
        %521 = sbr.rel (%p519) target = $region56
      $region55: #{vqvae2_forward.28} parent=51 // pred_region
        %s522 = smul.u32 8, %s21
        %p523 = scmp.lt.s32.totalorder %s522, 15
        %s524 = scalar_select %p523, %s522, 15
        %s525 = smul.addr %s524, 4
        %s526 = scalar_lea.vmem %s4, %s525
      $region56: #{vqvae2_forward.28} parent=51 // pred_fallthru
        _
    $region52: #{vqvae2_forward.28} parent=5 // pred_fallthru
      _
  $region6: #{vqvae2_forward.28} parent=0 // loop_footer
    %s14 = sadd.s32 1, %s10
  $region7: #{vqvae2_forward.28} parent=0 // loop_footer_branch
    %9 = sbr.rel target = $region3
  $region8: #{vqvae2_forward.28} parent=0 // loop_exit
    _

// kernel: vqvae2_forward.29
$region0: #{vqvae2_forward.29}
  #allocation0 [shape = 'u32[]', space=smem, size = 0x4, offset = 0x4, fixed_abs, tag = 'smem constant byte address 0x4 - core index']
  #allocation1 [shape = 'u32[144,128]{1,0:T(1,128)}', space=vmem, size = 0x12000, scoped, tag = 'internal scratch']
  #allocation2 [shape = 'f32[32,16]{1,0:T(8,128)}', space=vmem, size = 0x4000, scoped, tag = 'scratch operand']
  %s0 = inlined_call_operand.vmem [shape: bf16[32,72], index: 0, kind: input, shape index: {}]
  %s1 = inlined_call_operand.vmem [shape: bf16[72,16], index: 1, kind: input, shape index: {}]
  %s2 = inlined_call_operand.vmem [shape: f32[1,16], index: 2, kind: input, shape index: {}]
  %s3 = inlined_call_operand.vmem [shape: f32[1,16], index: 3, kind: input, shape index: {}]
  %s4 = inlined_call_operand.vmem [shape: bf16[32,16], index: 4, kind: output, shape index: {}]
  %s5 = sld [smem:[#allocation0]]
  $region34: #{vqvae2_forward.29} parent=0
    _
  %s7 = ssub.s32 1, %s5
  %s8 = scalar_select 0, %s7, %s5
  // Predicated region
  $region2: #{vqvae2_forward.29} parent=0 // pred_check
    _
  $region3: #{vqvae2_forward.29} parent=0 // pred_check_branch
    %10 = sbr.rel (0) target = $region5
  $region4: #{vqvae2_forward.29} parent=0 // pred_region
    _
  $region5: #{vqvae2_forward.29} parent=0 // pred_fallthru
    _
  // Predicated region
  $region6: #{vqvae2_forward.29} parent=0 // pred_check
    _
  $region7: #{vqvae2_forward.29} parent=0 // pred_check_branch
    %12 = sbr.rel (0) target = $region9
  $region8: #{vqvae2_forward.29} parent=0 // pred_region
    _
  $region9: #{vqvae2_forward.29} parent=0 // pred_fallthru
    _
  // Predicated region
  $region10: #{vqvae2_forward.29} parent=0 // pred_check
    _
  $region11: #{vqvae2_forward.29} parent=0 // pred_check_branch
    %14 = sbr.rel (0) target = $region13
  $region12: #{vqvae2_forward.29} parent=0 // pred_region
    _
  $region13: #{vqvae2_forward.29} parent=0 // pred_fallthru
    _
  // Predicated region
  $region14: #{vqvae2_forward.29} parent=0 // pred_check
    _
  $region15: #{vqvae2_forward.29} parent=0 // pred_check_branch
    %16 = sbr.rel (0) target = $region17
  $region16: #{vqvae2_forward.29} parent=0 // pred_region
    _
  $region17: #{vqvae2_forward.29} parent=0 // pred_fallthru
    _
  %p18 = scmp.eq.s32.totalorder 0, 0
  // Predicated region
  $region18: #{vqvae2_forward.29} parent=0 // pred_check
    %p19 = pneg %p18
  $region19: #{vqvae2_forward.29} parent=0 // pred_check_branch
    %21 = sbr.rel (%p19) target = $region21
  $region20: #{vqvae2_forward.29} parent=0 // pred_region
    %vm22 = vcmask 130048
    %23 = vst.msk [vmem:[#allocation2] sm:$0xff] %vm22, 0.0
    %24 = vst.msk [vmem:[#allocation2 + $0x8] sm:$0xff] %vm22, 0.0
    %25 = vst.msk [vmem:[#allocation2 + $0x10] sm:$0xff] %vm22, 0.0
    %26 = vst.msk [vmem:[#allocation2 + $0x18] sm:$0xff] %vm22, 0.0
  $region21: #{vqvae2_forward.29} parent=0 // pred_fallthru
    _
  %v27 = vld [vmem:[#allocation2] sm:$0xff]
  %v28 = vld [vmem:[#allocation2 + $0x8] sm:$0xff]
  %v29 = vld [vmem:[#allocation2 + $0x10] sm:$0xff]
  %v30 = vld [vmem:[#allocation2 + $0x18] sm:$0xff]
  %v31 = vld [vmem:[%s0] sm:$0xf]
  %v32 = vld [vmem:[%s0 + $0x4] sm:$0xf]
  %v33 = vld [vmem:[%s0 + $0x8] sm:$0xf]
  %v34 = vld [vmem:[%s0 + $0xc] sm:$0xf]
  %v35 = vld [vmem:[%s1] sm:$0xf]
  %v36 = vld [vmem:[%s1 + $0x4] sm:$0xf]
  %v37 = vld [vmem:[%s1 + $0x8] sm:$0xf]
  %v38 = vld [vmem:[%s1 + $0xc] sm:$0xf]
  %v39 = vld [vmem:[%s1 + $0x10] sm:$0xf]
  %v40 = vld [vmem:[%s1 + $0x14] sm:$0xf]
  %v41 = vld [vmem:[%s1 + $0x18] sm:$0xf]
  %v42 = vld [vmem:[%s1 + $0x1c] sm:$0xf]
  %v43 = vld [vmem:[%s1 + $0x20] sm:$0xf]
  %v48 = vunpack.c.l.b16 %v31
  %v49 = vunpack.c.l.b16 %v32
  %v50 = vunpack.c.l.b16 %v33
  %v51 = vunpack.c.l.b16 %v34
  %v52 = vpack.c.b16 %v49, %v48
  %v53 = vpack.c.b16 %v51, %v50
  %v63 = vunpack.c.l.b16 %v35
  %v64 = vunpack.c.l.b16 %v36
  %v65 = vunpack.c.l.b16 %v37
  %v66 = vunpack.c.l.b16 %v38
  %v67 = vunpack.c.l.b16 %v39
  %v68 = vunpack.c.l.b16 %v40
  %v69 = vunpack.c.l.b16 %v41
  %v70 = vunpack.c.l.b16 %v42
  %v71 = vunpack.c.l.b16 %v43
  %v72 = vpack.c.b16 %v64, %v63
  %v73 = vpack.c.b16 %v66, %v65
  %v74 = vpack.c.b16 %v68, %v67
  %v75 = vpack.c.b16 %v70, %v69
  %v76 = vpack.c.b16 %v71, %v71
  %vm81 = vcmask 588800
  %v83 = vsel %vm81, %v52, 0
  %v86 = vsel %vm81, %v53, 0
  %vm88 = vcmask 1043456
  %v90 = vsel %vm88, %v76, 0
  %92 = vmatprep.subr.bf16.mxu0 0
  %93 = vmatpush1.bf16.msra.mxu0 0
  %94 = vmatprep.subr.bf16.mxu0 0
  %95 = vmatpush1.bf16.msra.mxu0 0
  %96 = vmatprep.subr.bf16.mxu0 0
  %97 = vmatpush1.bf16.msra.mxu0 0
  %98 = vmatprep.subr.bf16.mxu0 0
  %99 = vmatpush1.bf16.msra.mxu0 %v90
  %100 = vmatprep.subr.bf16.mxu0 0
  %101 = vmatpush1.bf16.msra.mxu0 %v75
  %102 = vmatprep.subr.bf16.mxu0 0
  %103 = vmatpush1.bf16.msra.mxu0 %v74
  %104 = vmatprep.subr.bf16.mxu0 0
  %105 = vmatpush1.bf16.msra.mxu0 %v73
  %106 = vmatprep.subr.bf16.mxu0 0
  %107 = vmatpush1.bf16.msra.mxu0 %v72
  %108 = vmatprep.subr.bf16.mxu0 0
  %109 = vmatpush2.bf16.msra.mxu0 0
  %110 = vmatprep.subr.bf16.mxu0 0
  %111 = vmatpush2.bf16.msra.mxu0 0
  %112 = vmatprep.subr.bf16.mxu0 0
  %113 = vmatpush2.bf16.msra.mxu0 0
  %114 = vmatprep.subr.bf16.mxu0 0
  %115 = vmatpush2.bf16.msra.mxu0 0
  %116 = vmatprep.subr.bf16.mxu0 0
  %117 = vmatpush2.bf16.msra.mxu0 0
  %118 = vmatprep.subr.bf16.mxu0 0
  %119 = vmatpush2.bf16.msra.mxu0 0
  %120 = vmatprep.subr.bf16.mxu0 0
  %121 = vmatpush2.bf16.msra.mxu0 0
  %122 = vmatprep.subr.bf16.mxu0 0
  %123 = vmatpush2.bf16.msra.mxu0 0
  %124 = vmatprep.mubr.bf16.mxu0 0
  %125 = vmatmul.mubr.bf16.gmra.mxu0 %v83
  %v126 = vpop.f32.mrf.mxu0
  %v127 = vadd.f32 0.0, %v126
  %v128 = vpop.f32.mrf.mxu0
  %v129 = vpop.f32.mrf.mxu0
  %v130 = vadd.f32 0.0, %v129
  %v131 = vpop.f32.mrf.mxu0
  %132 = vmatprep.mubr.bf16.mxu0 0
  %133 = vmatmul.mubr.bf16.gmra.mxu0 %v86
  %v134 = vpop.f32.mrf.mxu0
  %v135 = vadd.f32 0.0, %v134
  %v136 = vpop.f32.mrf.mxu0
  %v137 = vpop.f32.mrf.mxu0
  %v138 = vadd.f32 0.0, %v137
  %v139 = vpop.f32.mrf.mxu0
  %140 = vdwg.mxu0
  %v141 = vadd.f32 %v27, %v127
  %v142 = vadd.f32 %v28, %v130
  %v143 = vadd.f32 %v29, %v135
  %v144 = vadd.f32 %v30, %v138
  %vm145 = vcmask 130048
  %146 = vst.msk [vmem:[#allocation2] sm:$0xff] %vm145, %v141
  %147 = vst.msk [vmem:[#allocation2 + $0x8] sm:$0xff] %vm145, %v142
  %148 = vst.msk [vmem:[#allocation2 + $0x10] sm:$0xff] %vm145, %v143
  %149 = vst.msk [vmem:[#allocation2 + $0x18] sm:$0xff] %vm145, %v144
  // Predicated region
  $region22: #{vqvae2_forward.29} parent=0 // pred_check
    %p150 = pneg %p18
  $region23: #{vqvae2_forward.29} parent=0 // pred_check_branch
    %152 = sbr.rel (%p150) target = $region25
  $region24: #{vqvae2_forward.29} parent=0 // pred_region
    %v153 = vld [vmem:[#allocation2] sm:$0xff]
    %v154 = vld [vmem:[#allocation2 + $0x8] sm:$0xff]
    %v155 = vld [vmem:[#allocation2 + $0x10] sm:$0xff]
    %v156 = vld [vmem:[#allocation2 + $0x18] sm:$0xff]
    %v157 = vld [vmem:[%s2] sm:$0x1]
    %v159 = vlaneseq
    %v160 = vshrl.u32 %v159, 7
    %v161 = vsub.s32 0, %v160
    %v162 = vrot.slane %v157, %v161
    %v164 = vmul.f32 %v153, %v162
    %v165 = vmul.f32 %v154, %v162
    %v166 = vmul.f32 %v155, %v162
    %v167 = vmul.f32 %v156, %v162
    %v168 = vld [vmem:[%s3] sm:$0x1]
    %v170 = vlaneseq
    %v171 = vshrl.u32 %v170, 7
    %v172 = vsub.s32 0, %v171
    %v173 = vrot.slane %v168, %v172
    %v175 = vadd.f32 %v164, %v173
    %v176 = vadd.f32 %v165, %v173
    %v177 = vadd.f32 %v166, %v173
    %v178 = vadd.f32 %v167, %v173
    %v179 = vmax.f32 %v175, 0.0
    %v180 = vmax.f32 %v176, 0.0
    %v181 = vmax.f32 %v177, 0.0
    %v182 = vmax.f32 %v178, 0.0
    %v183 = vpack.c.bf16 %v180, %v179
    %v184 = vpack.c.bf16 %v182, %v181
    %v187 = vunpack.c.l.b16 %v183
    %v188 = vunpack.c.h.b16 %v183
    %v189 = vunpack.c.l.b16 %v184
    %v190 = vunpack.c.h.b16 %v184
    %v191 = vpack.c.b16 %v187, %v187
    %v192 = vpack.c.b16 %v188, %v188
    %v193 = vpack.c.b16 %v189, %v189
    %v194 = vpack.c.b16 %v190, %v190
    %vm199 = vcmask 125952
    %200 = vst.msk [vmem:[%s4] sm:$0xf] %vm199, %v191
    %201 = vst.msk [vmem:[%s4 + $0x4] sm:$0xf] %vm199, %v192
    %202 = vst.msk [vmem:[%s4 + $0x8] sm:$0xf] %vm199, %v193
    %203 = vst.msk [vmem:[%s4 + $0xc] sm:$0xf] %vm199, %v194
  $region25: #{vqvae2_forward.29} parent=0 // pred_fallthru
    _
  // Predicated region
  $region26: #{vqvae2_forward.29} parent=0 // pred_check
    _
  $region27: #{vqvae2_forward.29} parent=0 // pred_check_branch
    %205 = sbr.rel (0) target = $region29
  $region28: #{vqvae2_forward.29} parent=0 // pred_region
    _
  $region29: #{vqvae2_forward.29} parent=0 // pred_fallthru
    _
  // Predicated region
  $region30: #{vqvae2_forward.29} parent=0 // pred_check
    _
  $region31: #{vqvae2_forward.29} parent=0 // pred_check_branch
    %207 = sbr.rel (0) target = $region33
  $region32: #{vqvae2_forward.29} parent=0 // pred_region
    _
  $region33: #{vqvae2_forward.29} parent=0 // pred_fallthru
    _

// kernel: vqvae2_forward.30
$region0: #{vqvae2_forward.30}
  #allocation0 [shape = 'u32[]', space=smem, size = 0x4, offset = 0x4, fixed_abs, tag = 'smem constant byte address 0x4 - core index']
  #allocation1 [shape = 'u32[144,128]{1,0:T(1,128)}', space=vmem, size = 0x12000, scoped, tag = 'internal scratch']
  #allocation2 [shape = 'f32[32,32]{1,0:T(8,128)}', space=vmem, size = 0x4000, scoped, tag = 'scratch operand']
  %s0 = inlined_call_operand.vmem [shape: bf16[32,256], index: 0, kind: input, shape index: {}]
  %s1 = inlined_call_operand.vmem [shape: bf16[256,32], index: 1, kind: input, shape index: {}]
  %s2 = inlined_call_operand.vmem [shape: f32[1,32], index: 2, kind: input, shape index: {}]
  %s3 = inlined_call_operand.vmem [shape: f32[1,32], index: 3, kind: input, shape index: {}]
  %s4 = inlined_call_operand.vmem [shape: bf16[32,32], index: 4, kind: output, shape index: {}]
  %s5 = sld [smem:[#allocation0]]
  $region98: #{vqvae2_forward.30} parent=0
    _
  %s7 = ssub.s32 1, %s5
  %s8 = scalar_select 0, %s7, %s5
  $region1: #{vqvae2_forward.30} parent=0
    #allocation3 [shape = 'u8[16384]{0}', space=vmem, size = 0x4000, scoped, tag = 'input window, operand 0']
    loop: start=0, step=1, limit=4
    $region2: #{vqvae2_forward.30} parent=1 // loop_pre_header
      _
    $region3: #{vqvae2_forward.30} parent=1 // loop_header
      %s10 = sphi 0, %s14
      %p11 = scmp.ge.s32.totalorder %s10, 4
      %s17 = sphi 0, %s29
      %s18 = sphi 0, %s25
      %s19 = sphi 0, %s17
      %s20 = sphi 0, %s18
      %s21 = sphi 0, %s19
      %s22 = sphi 0, %s20
      %s34 = sphi 0, %s36
      %s37 = sphi 0, %s34
      %s38 = sphi 0, %s37
      %s54 = sphi 0, %s38
      %s60 = sphi 0, %s62
      %s63 = sphi 0, %s60
      %s64 = sphi 0, %s63
      %s80 = sphi 0, %s64
      %s84 = sphi 0, %s84
      %s86 = sphi 0, %s84
      %s87 = sphi 0, %s86
      %s101 = sphi 0, %s87
      %s105 = sphi 0, %s105
      %s107 = sphi 0, %s105
      %s108 = sphi 0, %s107
      %s122 = sphi 0, %s108
      %s128 = sphi 0, %s130
      %s131 = sphi 0, %s128
      %s132 = sphi 0, %s131
      %s148 = sphi 0, %s132
    $region4: #{vqvae2_forward.30} parent=1 // loop_header_branch
      %13 = sbr.rel (%p11) target = $region8
    $region5: #{vqvae2_forward.30} parent=1 // loop_body
      %s15 = ssub.s32 %s10, 1
      %s16 = ssub.s32 %s10, 2
      %s23 = sadd.s32 1, %s18
      %p24 = scmp.ge.s32.totalorder %s23, 2
      %s25 = scalar_select %p24, 0, %s23
      %s26 = sadd.s32 1, %s17
      %s27 = scalar_select %p24, %s26, %s17
      %p28 = scmp.ge.s32.totalorder %s27, 1
      %s29 = scalar_select %p28, 0, %s27
      %s30 = ssub.s32 %s17, %s29
      %s31 = ssub.s32 %s18, %s25
      %s32 = sor.u32 %s30, %s31
      %p33 = scmp.eq.s32.totalorder %s32, 0
      %s35 = sadd.s32 %s34, 1
      %s36 = scalar_select %p33, %s34, %s35
      %p39 = pneg %p33
      %p40 = scmp.eq.s32.totalorder %s10, 1
      %p41 = por %p39, %p40
      %p42 = scmp.ne.s32.totalorder %s34, %s37
      %p43 = scmp.eq.s32.totalorder %s10, 0
      %p44 = por %p42, %p43
      %p45 = scmp.ne.s32.totalorder %s34, %s37
      %p46 = scmp.eq.s32.totalorder %s15, 1
      %p47 = por %p45, %p46
      %p48 = scmp.ne.s32.totalorder %s37, %s38
      %p49 = scmp.eq.s32.totalorder %s15, 0
      %p50 = por %p48, %p49
      %p51 = scmp.ne.s32.totalorder %s37, %s38
      %p52 = scmp.eq.s32.totalorder %s16, 1
      %p53 = por %p51, %p52
      %p55 = scmp.ne.s32.totalorder %s38, %s54
      %p56 = scmp.eq.s32.totalorder %s16, 0
      %p57 = por %p55, %p56
      %s58 = ssub.s32 %s18, %s25
      %p59 = scmp.eq.s32.totalorder %s58, 0
      %s61 = sadd.s32 %s60, 1
      %s62 = scalar_select %p59, %s60, %s61
      %p65 = pneg %p59
      %p66 = scmp.eq.s32.totalorder %s10, 1
      %p67 = por %p65, %p66
      %p68 = scmp.ne.s32.totalorder %s60, %s63
      %p69 = scmp.eq.s32.totalorder %s10, 0
      %p70 = por %p68, %p69
      %p71 = scmp.ne.s32.totalorder %s60, %s63
      %p72 = scmp.eq.s32.totalorder %s15, 1
      %p73 = por %p71, %p72
      %p74 = scmp.ne.s32.totalorder %s63, %s64
      %p75 = scmp.eq.s32.totalorder %s15, 0
      %p76 = por %p74, %p75
      %p77 = scmp.ne.s32.totalorder %s63, %s64
      %p78 = scmp.eq.s32.totalorder %s16, 1
      %p79 = por %p77, %p78
      %p81 = scmp.ne.s32.totalorder %s64, %s80
      %p82 = scmp.eq.s32.totalorder %s16, 0
      %p83 = por %p81, %p82
      %s85 = sadd.s32 %s84, 1
      %p88 = scmp.eq.s32.totalorder %s10, 1
      %p89 = scmp.ne.s32.totalorder %s84, %s86
      %p90 = scmp.eq.s32.totalorder %s10, 0
      %p91 = por %p89, %p90
      %p92 = scmp.ne.s32.totalorder %s84, %s86
      %p93 = scmp.eq.s32.totalorder %s15, 1
      %p94 = por %p92, %p93
      %p95 = scmp.ne.s32.totalorder %s86, %s87
      %p96 = scmp.eq.s32.totalorder %s15, 0
      %p97 = por %p95, %p96
      %p98 = scmp.ne.s32.totalorder %s86, %s87
      %p99 = scmp.eq.s32.totalorder %s16, 1
      %p100 = por %p98, %p99
      %p102 = scmp.ne.s32.totalorder %s87, %s101
      %p103 = scmp.eq.s32.totalorder %s16, 0
      %p104 = por %p102, %p103
      %s106 = sadd.s32 %s105, 1
      %p109 = scmp.eq.s32.totalorder %s10, 1
      %p110 = scmp.ne.s32.totalorder %s105, %s107
      %p111 = scmp.eq.s32.totalorder %s10, 0
      %p112 = por %p110, %p111
      %p113 = scmp.ne.s32.totalorder %s105, %s107
      %p114 = scmp.eq.s32.totalorder %s15, 1
      %p115 = por %p113, %p114
      %p116 = scmp.ne.s32.totalorder %s107, %s108
      %p117 = scmp.eq.s32.totalorder %s15, 0
      %p118 = por %p116, %p117
      %p119 = scmp.ne.s32.totalorder %s107, %s108
      %p120 = scmp.eq.s32.totalorder %s16, 1
      %p121 = por %p119, %p120
      %p123 = scmp.ne.s32.totalorder %s108, %s122
      %p124 = scmp.eq.s32.totalorder %s16, 0
      %p125 = por %p123, %p124
      %s126 = ssub.s32 %s17, %s29
      %p127 = scmp.eq.s32.totalorder %s126, 0
      %s129 = sadd.s32 %s128, 1
      %s130 = scalar_select %p127, %s128, %s129
      %p133 = pneg %p127
      %p134 = scmp.eq.s32.totalorder %s10, 1
      %p135 = por %p133, %p134
      %p136 = scmp.ne.s32.totalorder %s128, %s131
      %p137 = scmp.eq.s32.totalorder %s10, 0
      %p138 = por %p136, %p137
      %p139 = scmp.ne.s32.totalorder %s128, %s131
      %p140 = scmp.eq.s32.totalorder %s15, 1
      %p141 = por %p139, %p140
      %p142 = scmp.ne.s32.totalorder %s131, %s132
      %p143 = scmp.eq.s32.totalorder %s15, 0
      %p144 = por %p142, %p143
      %p145 = scmp.ne.s32.totalorder %s131, %s132
      %p146 = scmp.eq.s32.totalorder %s16, 1
      %p147 = por %p145, %p146
      %p149 = scmp.ne.s32.totalorder %s132, %s148
      %p150 = scmp.eq.s32.totalorder %s16, 0
      %p151 = por %p149, %p150
      %p152 = scmp.le.s32.totalorder 1, %s10
      %p153 = scmp.lt.s32.totalorder %s10, 3
      %p154 = pnand %p152, %p153
      %p155 = pneg %p154
      // Predicated region
      $region9: #{vqvae2_forward.30} parent=5 // pred_check
        _
      $region10: #{vqvae2_forward.30} parent=5 // pred_check_branch
        %157 = sbr.rel (%p154) target = $region12
      $region11: #{vqvae2_forward.30} parent=5 // pred_region
        %s158 = ssub.s32 %s10, 1
        // Predicated region
        $region13: #{vqvae2_forward.30} parent=11 // pred_check
          %p159 = pneg %p97
        $region14: #{vqvae2_forward.30} parent=11 // pred_check_branch
          %161 = sbr.rel (%p159) target = $region16
        $region15: #{vqvae2_forward.30} parent=11 // pred_region
          _
        $region16: #{vqvae2_forward.30} parent=11 // pred_fallthru
          _
        // Predicated region
        $region17: #{vqvae2_forward.30} parent=11 // pred_check
          %p162 = pneg %p118
        $region18: #{vqvae2_forward.30} parent=11 // pred_check_branch
          %164 = sbr.rel (%p162) target = $region20
        $region19: #{vqvae2_forward.30} parent=11 // pred_region
          _
        $region20: #{vqvae2_forward.30} parent=11 // pred_fallthru
          _
      $region12: #{vqvae2_forward.30} parent=5 // pred_fallthru
        _
      %p165 = scmp.lt.s32.totalorder %s10, 2
      // Predicated region
      $region21: #{vqvae2_forward.30} parent=5 // pred_check
        %p166 = pneg %p165
      $region22: #{vqvae2_forward.30} parent=5 // pred_check_branch
        %168 = sbr.rel (%p166) target = $region24
      $region23: #{vqvae2_forward.30} parent=5 // pred_region
        // Predicated region
        $region25: #{vqvae2_forward.30} parent=23 // pred_check
          %p169 = pneg %p44
        $region26: #{vqvae2_forward.30} parent=23 // pred_check_branch
          %171 = sbr.rel (%p169) target = $region28
        $region27: #{vqvae2_forward.30} parent=23 // pred_region
          %s172 = sand.u32 %s34, 1
          %s173 = sand.u32 %s34, 1
          %s174 = smul.addr %s173, 16
          %s175 = scalar_lea.vmem [#allocation3], %s174
          %s176 = smul.u32 4, %s17
          %s177 = smul.addr %s176, 2
          %s178 = sadd.s32 %s18, %s177
          %s179 = smul.addr %s178, 4
          %s180 = scalar_lea.vmem %s0, %s179
          // Predicated region
          $region29: #{vqvae2_forward.30} parent=27 // pred_check
            _
          $region30: #{vqvae2_forward.30} parent=27 // pred_check_branch
            %182 = sbr.rel (0) target = $region32
          $region31: #{vqvae2_forward.30} parent=27 // pred_region
            // Predicated region
            $region33: #{vqvae2_forward.30} parent=31 // pred_check
              _
            $region34: #{vqvae2_forward.30} parent=31 // pred_check_branch
              %184 = sbr.rel target = $region36
            $region35: #{vqvae2_forward.30} parent=31 // pred_region
              // Predicated region
              $region48: #{vqvae2_forward.30} parent=35 // pred_check
                _
              $region49: #{vqvae2_forward.30} parent=35 // pred_check_branch
                %206 = sbr.rel (0) target = $region51
              $region50: #{vqvae2_forward.30} parent=35 // pred_region
                loop: start=0, step=1, limit=1
                $region52: #{vqvae2_forward.30} parent=50 // loop_pre_header
                  _
                $region53: #{vqvae2_forward.30} parent=50 // loop_header
                  %s208 = sphi 0, %s212
                  %p209 = scmp.ge.s32.totalorder %s208, 1
                  %s213 = sphi %s180, %s180
                  %s214 = sphi %s175, %s175
                $region54: #{vqvae2_forward.30} parent=50 // loop_header_branch
                  %211 = sbr.rel (%p209) target = $region58
                $region55: #{vqvae2_forward.30} parent=50 // loop_body
                  _
                $region56: #{vqvae2_forward.30} parent=50 // loop_footer
                  %s212 = sadd.s32 1, %s208
                $region57: #{vqvae2_forward.30} parent=50 // loop_footer_branch
                  %207 = sbr.rel target = $region53
                $region58: #{vqvae2_forward.30} parent=50 // loop_exit
                  _
                %s216 = ssub.s32 16, 1
                loop: start=0, step=1, limit=1
                $region59: #{vqvae2_forward.30} parent=50 // loop_pre_header
                  _
                $region60: #{vqvae2_forward.30} parent=50 // loop_header
                  %s218 = sphi 0, %s222
                  %p219 = scmp.ge.s32.totalorder %s218, 1
                  %s223 = sphi %s180, %s180
                  %s224 = sphi %s175, %s175
                $region61: #{vqvae2_forward.30} parent=50 // loop_header_branch
                  %221 = sbr.rel (%p219) target = $region65
                $region62: #{vqvae2_forward.30} parent=50 // loop_body
                  %v225 = vld [vmem:[%s223] sm:%s216]
                  %226 = vst [vmem:[%s224] sm:%s216] %v225
                  %v227 = vld [vmem:[%s223 + $0x8] sm:%s216]
                  %228 = vst [vmem:[%s224 + $0x4] sm:%s216] %v227
                  %v229 = vld [vmem:[%s223 + $0x10] sm:%s216]
                  %230 = vst [vmem:[%s224 + $0x8] sm:%s216] %v229
                  %v231 = vld [vmem:[%s223 + $0x18] sm:%s216]
                  %232 = vst [vmem:[%s224 + $0xc] sm:%s216] %v231
                $region63: #{vqvae2_forward.30} parent=50 // loop_footer
                  %s222 = sadd.s32 1, %s218
                $region64: #{vqvae2_forward.30} parent=50 // loop_footer_branch
                  %217 = sbr.rel target = $region60
                $region65: #{vqvae2_forward.30} parent=50 // loop_exit
                  _
              $region51: #{vqvae2_forward.30} parent=35 // pred_fallthru
                _
            $region36: #{vqvae2_forward.30} parent=31 // pred_fallthru
              _
            // Predicated region
            $region37: #{vqvae2_forward.30} parent=31 // pred_check
              _
            $region38: #{vqvae2_forward.30} parent=31 // pred_check_branch
              %186 = sbr.rel (0) target = $region40
            $region39: #{vqvae2_forward.30} parent=31 // pred_region
              %s188 = ssub.s32 16, 1
              loop: start=0, step=1, limit=1
              $region41: #{vqvae2_forward.30} parent=39 // loop_pre_header
                _
              $region42: #{vqvae2_forward.30} parent=39 // loop_header
                %s190 = sphi 0, %s194
                %p191 = scmp.ge.s32.totalorder %s190, 1
                %s195 = sphi %s180, %s180
                %s196 = sphi %s175, %s175
              $region43: #{vqvae2_forward.30} parent=39 // loop_header_branch
                %193 = sbr.rel (%p191) target = $region47
              $region44: #{vqvae2_forward.30} parent=39 // loop_body
                %v197 = vld [vmem:[%s195] sm:%s188]
                %198 = vst [vmem:[%s196] sm:%s188] %v197
                %v199 = vld [vmem:[%s195 + $0x8] sm:%s188]
                %200 = vst [vmem:[%s196 + $0x4] sm:%s188] %v199
                %v201 = vld [vmem:[%s195 + $0x10] sm:%s188]
                %202 = vst [vmem:[%s196 + $0x8] sm:%s188] %v201
                %v203 = vld [vmem:[%s195 + $0x18] sm:%s188]
                %204 = vst [vmem:[%s196 + $0xc] sm:%s188] %v203
              $region45: #{vqvae2_forward.30} parent=39 // loop_footer
                %s194 = sadd.s32 1, %s190
              $region46: #{vqvae2_forward.30} parent=39 // loop_footer_branch
                %189 = sbr.rel target = $region42
              $region47: #{vqvae2_forward.30} parent=39 // loop_exit
                _
            $region40: #{vqvae2_forward.30} parent=31 // pred_fallthru
              _
          $region32: #{vqvae2_forward.30} parent=27 // pred_fallthru
            _
          %233 = vnop
        $region28: #{vqvae2_forward.30} parent=23 // pred_fallthru
          _
        // Predicated region
        $region66: #{vqvae2_forward.30} parent=23 // pred_check
          %p234 = pneg %p70
        $region67: #{vqvae2_forward.30} parent=23 // pred_check_branch
          %236 = sbr.rel (%p234) target = $region69
        $region68: #{vqvae2_forward.30} parent=23 // pred_region
          %s237 = smul.u32 16, %s18
          %p238 = scmp.lt.s32.totalorder %s237, 31
          %s239 = scalar_select %p238, %s237, 31
          %s240 = smul.addr %s239, 4
          %s241 = scalar_lea.vmem %s1, %s240
          %s242 = smul.u32 16, %s18
        $region69: #{vqvae2_forward.30} parent=23 // pred_fallthru
          _
      $region24: #{vqvae2_forward.30} parent=5 // pred_fallthru
        _
      %p243 = scmp.le.s32.totalorder 1, %s10
      %p244 = scmp.lt.s32.totalorder %s10, 3
      %p245 = pnand %p243, %p244
      %p246 = pneg %p245
      // Predicated region
      $region70: #{vqvae2_forward.30} parent=5 // pred_check
        _
      $region71: #{vqvae2_forward.30} parent=5 // pred_check_branch
        %248 = sbr.rel (%p245) target = $region73
      $region72: #{vqvae2_forward.30} parent=5 // pred_region
        %s249 = ssub.s32 %s10, 1
        %s250 = sand.u32 %s37, 1
        %s251 = sand.u32 %s37, 1
        %s252 = smul.addr %s251, 16
        %s253 = scalar_lea.vmem [#allocation3], %s252
        // Predicated region
        $region74: #{vqvae2_forward.30} parent=72 // pred_check
          %p254 = pneg %p50
        $region75: #{vqvae2_forward.30} parent=72 // pred_check_branch
          %256 = sbr.rel (%p254) target = $region77
        $region76: #{vqvae2_forward.30} parent=72 // pred_region
          _
        $region77: #{vqvae2_forward.30} parent=72 // pred_fallthru
          _
        %s257 = sand.u32 %s37, 1
        %s258 = sand.u32 %s37, 1
        %s259 = smul.addr %s258, 16
        %s260 = scalar_lea.vmem [#allocation3], %s259
        %p261 = pneg %p50
        %p262 = pneg %p47
        %s263 = smul.u32 16, %s20
        %p264 = scmp.lt.s32.totalorder %s263, 31
        %s265 = scalar_select %p264, %s263, 31
        %s266 = smul.addr %s265, 4
        %s267 = scalar_lea.vmem %s1, %s266
        %p268 = pneg %p76
        %p269 = pneg %p73
        %p270 = pneg %p97
        %p271 = pneg %p94
        %p272 = pneg %p118
        %p273 = pneg %p115
        %p274 = pneg %p144
        %p275 = pneg %p141
        %s276 = smul.u32 4, %s19
        %p277 = scmp.lt.s32.totalorder %s276, 3
        %s278 = scalar_select %p277, %s276, 3
        %s279 = smul.addr %s278, 4
        %s280 = scalar_lea.vmem %s4, %s279
        %s281 = smul.u32 4, %s19
        %s282 = smul.u32 16, %s20
        %p283 = scmp.lt.s32.totalorder %s282, 31
        %s284 = scalar_select %p283, %s282, 31
        %s285 = smul.addr %s284, 4
        %s286 = scalar_lea.vmem %s1, %s285
        %s287 = smul.u32 16, %s20
        %s288 = smul.u32 4, %s19
        %p289 = scmp.lt.s32.totalorder %s288, 3
        %s290 = scalar_select %p289, %s288, 3
        %s291 = smul.addr %s290, 4
        %s292 = scalar_lea.vmem %s4, %s291
        %s293 = smul.u32 4, %s19
        %p295 = scmp.eq.s32.totalorder %s20, 0
        // Predicated region
        $region78: #{vqvae2_forward.30} parent=72 // pred_check
          %p296 = pneg %p295
        $region79: #{vqvae2_forward.30} parent=72 // pred_check_branch
          %298 = sbr.rel (%p296) target = $region81
        $region80: #{vqvae2_forward.30} parent=72 // pred_region
          %vm299 = vcmask 261120
          %300 = vst.msk [vmem:[#allocation2] sm:$0xff] %vm299, 0.0
          %301 = vst.msk [vmem:[#allocation2 + $0x8] sm:$0xff] %vm299, 0.0
          %302 = vst.msk [vmem:[#allocation2 + $0x10] sm:$0xff] %vm299, 0.0
          %303 = vst.msk [vmem:[#allocation2 + $0x18] sm:$0xff] %vm299, 0.0
        $region81: #{vqvae2_forward.30} parent=72 // pred_fallthru
          _
        %v304 = vld [vmem:[#allocation2] sm:$0xff]
        %v305 = vld [vmem:[#allocation2 + $0x8] sm:$0xff]
        %v306 = vld [vmem:[#allocation2 + $0x10] sm:$0xff]
        %v307 = vld [vmem:[#allocation2 + $0x18] sm:$0xff]
        %v308 = vld [vmem:[%s253] sm:$0xf]
        %v309 = vld [vmem:[%s253 + $0x4] sm:$0xf]
        %v310 = vld [vmem:[%s253 + $0x8] sm:$0xf]
        %v311 = vld [vmem:[%s253 + $0xc] sm:$0xf]
        %v312 = vld [vmem:[%s286] sm:$0xf]
        %v313 = vld [vmem:[%s286 + $0x4] sm:$0xf]
        %v314 = vld [vmem:[%s286 + $0x8] sm:$0xf]
        %v315 = vld [vmem:[%s286 + $0xc] sm:$0xf]
        %v316 = vld [vmem:[%s286 + $0x10] sm:$0xf]
        %v317 = vld [vmem:[%s286 + $0x14] sm:$0xf]
        %v318 = vld [vmem:[%s286 + $0x18] sm:$0xf]
        %v319 = vld [vmem:[%s286 + $0x1c] sm:$0xf]
        %v320 = vld [vmem:[%s286 + $0x20] sm:$0xf]
        %v321 = vld [vmem:[%s286 + $0x24] sm:$0xf]
        %v322 = vld [vmem:[%s286 + $0x28] sm:$0xf]
        %v323 = vld [vmem:[%s286 + $0x2c] sm:$0xf]
        %v324 = vld [vmem:[%s286 + $0x30] sm:$0xf]
        %v325 = vld [vmem:[%s286 + $0x34] sm:$0xf]
        %v326 = vld [vmem:[%s286 + $0x38] sm:$0xf]
        %v327 = vld [vmem:[%s286 + $0x3c] sm:$0xf]
        %v332 = vunpack.c.l.b16 %v308
        %v333 = vunpack.c.l.b16 %v309
        %v334 = vunpack.c.l.b16 %v310
        %v335 = vunpack.c.l.b16 %v311
        %v336 = vpack.c.b16 %v333, %v332
        %v337 = vpack.c.b16 %v335, %v334
        %v356 = vunpack.c.l.b16 %v312
        %v357 = vunpack.c.l.b16 %v313
        %v358 = vunpack.c.l.b16 %v314
        %v359 = vunpack.c.l.b16 %v315
        %v360 = vunpack.c.l.b16 %v316
        %v361 = vunpack.c.l.b16 %v317
        %v362 = vunpack.c.l.b16 %v318
        %v363 = vunpack.c.l.b16 %v319
        %v364 = vunpack.c.l.b16 %v320
        %v365 = vunpack.c.l.b16 %v321
        %v366 = vunpack.c.l.b16 %v322
        %v367 = vunpack.c.l.b16 %v323
        %v368 = vunpack.c.l.b16 %v324
        %v369 = vunpack.c.l.b16 %v325
        %v370 = vunpack.c.l.b16 %v326
        %v371 = vunpack.c.l.b16 %v327
        %v372 = vpack.c.b16 %v357, %v356
        %v373 = vpack.c.b16 %v359, %v358
        %v374 = vpack.c.b16 %v361, %v360
        %v375 = vpack.c.b16 %v363, %v362
        %v376 = vpack.c.b16 %v365, %v364
        %v377 = vpack.c.b16 %v367, %v366
        %v378 = vpack.c.b16 %v369, %v368
        %v379 = vpack.c.b16 %v371, %v370
        %388 = vmatprep.subr.bf16.mxu0 0
        %389 = vmatpush1.bf16.msra.mxu0 %v379
        %390 = vmatprep.subr.bf16.mxu0 0
        %391 = vmatpush1.bf16.msra.mxu0 %v378
        %392 = vmatprep.subr.bf16.mxu0 0
        %393 = vmatpush1.bf16.msra.mxu0 %v377
        %394 = vmatprep.subr.bf16.mxu0 0
        %395 = vmatpush1.bf16.msra.mxu0 %v376
        %396 = vmatprep.subr.bf16.mxu0 0
        %397 = vmatpush1.bf16.msra.mxu0 %v375
        %398 = vmatprep.subr.bf16.mxu0 0
        %399 = vmatpush1.bf16.msra.mxu0 %v374
        %400 = vmatprep.subr.bf16.mxu0 0
        %401 = vmatpush1.bf16.msra.mxu0 %v373
        %402 = vmatprep.subr.bf16.mxu0 0
        %403 = vmatpush1.bf16.msra.mxu0 %v372
        %404 = vmatprep.subr.bf16.mxu0 0
        %405 = vmatpush2.bf16.msra.mxu0 0
        %406 = vmatprep.subr.bf16.mxu0 0
        %407 = vmatpush2.bf16.msra.mxu0 0
        %408 = vmatprep.subr.bf16.mxu0 0
        %409 = vmatpush2.bf16.msra.mxu0 0
        %410 = vmatprep.subr.bf16.mxu0 0
        %411 = vmatpush2.bf16.msra.mxu0 0
        %412 = vmatprep.subr.bf16.mxu0 0
        %413 = vmatpush2.bf16.msra.mxu0 0
        %414 = vmatprep.subr.bf16.mxu0 0
        %415 = vmatpush2.bf16.msra.mxu0 0
        %416 = vmatprep.subr.bf16.mxu0 0
        %417 = vmatpush2.bf16.msra.mxu0 0
        %418 = vmatprep.subr.bf16.mxu0 0
        %419 = vmatpush2.bf16.msra.mxu0 0
        %420 = vmatprep.mubr.bf16.mxu0 0
        %421 = vmatmul.mubr.bf16.gmra.mxu0 %v336
        %v422 = vpop.f32.mrf.mxu0
        %v423 = vadd.f32 0.0, %v422
        %v424 = vpop.f32.mrf.mxu0
        %v425 = vpop.f32.mrf.mxu0
        %v426 = vadd.f32 0.0, %v425
        %v427 = vpop.f32.mrf.mxu0
        %428 = vmatprep.mubr.bf16.mxu0 0
        %429 = vmatmul.mubr.bf16.gmra.mxu0 %v337
        %v430 = vpop.f32.mrf.mxu0
        %v431 = vadd.f32 0.0, %v430
        %v432 = vpop.f32.mrf.mxu0
        %v433 = vpop.f32.mrf.mxu0
        %v434 = vadd.f32 0.0, %v433
        %v435 = vpop.f32.mrf.mxu0
        %436 = vdwg.mxu0
        %v437 = vadd.f32 %v304, %v423
        %v438 = vadd.f32 %v305, %v426
        %v439 = vadd.f32 %v306, %v431
        %v440 = vadd.f32 %v307, %v434
        %vm441 = vcmask 261120
        %442 = vst.msk [vmem:[#allocation2] sm:$0xff] %vm441, %v437
        %443 = vst.msk [vmem:[#allocation2 + $0x8] sm:$0xff] %vm441, %v438
        %444 = vst.msk [vmem:[#allocation2 + $0x10] sm:$0xff] %vm441, %v439
        %445 = vst.msk [vmem:[#allocation2 + $0x18] sm:$0xff] %vm441, %v440
        %p446 = scmp.eq.s32.totalorder %s20, 1
        // Predicated region
        $region82: #{vqvae2_forward.30} parent=72 // pred_check
          %p447 = pneg %p446
        $region83: #{vqvae2_forward.30} parent=72 // pred_check_branch
          %449 = sbr.rel (%p447) target = $region85
        $region84: #{vqvae2_forward.30} parent=72 // pred_region
          %v450 = vld [vmem:[#allocation2] sm:$0xff]
          %v451 = vld [vmem:[#allocation2 + $0x8] sm:$0xff]
          %v452 = vld [vmem:[#allocation2 + $0x10] sm:$0xff]
          %v453 = vld [vmem:[#allocation2 + $0x18] sm:$0xff]
          %v454 = vld [vmem:[%s2] sm:$0x1]
          %v456 = vlaneseq
          %v457 = vshrl.u32 %v456, 7
          %v458 = vsub.s32 0, %v457
          %v459 = vrot.slane %v454, %v458
          %v461 = vmul.f32 %v450, %v459
          %v462 = vmul.f32 %v451, %v459
          %v463 = vmul.f32 %v452, %v459
          %v464 = vmul.f32 %v453, %v459
          %v465 = vld [vmem:[%s3] sm:$0x1]
          %v467 = vlaneseq
          %v468 = vshrl.u32 %v467, 7
          %v469 = vsub.s32 0, %v468
          %v470 = vrot.slane %v465, %v469
          %v472 = vadd.f32 %v461, %v470
          %v473 = vadd.f32 %v462, %v470
          %v474 = vadd.f32 %v463, %v470
          %v475 = vadd.f32 %v464, %v470
          %v476 = vmax.f32 %v472, 0.0
          %v477 = vmax.f32 %v473, 0.0
          %v478 = vmax.f32 %v474, 0.0
          %v479 = vmax.f32 %v475, 0.0
          %v480 = vpack.c.bf16 %v477, %v476
          %v481 = vpack.c.bf16 %v479, %v478
          %v484 = vunpack.c.l.b16 %v480
          %v485 = vunpack.c.h.b16 %v480
          %v486 = vunpack.c.l.b16 %v481
          %v487 = vunpack.c.h.b16 %v481
          %v488 = vpack.c.b16 %v484, %v484
          %v489 = vpack.c.b16 %v485, %v485
          %v490 = vpack.c.b16 %v486, %v486
          %v491 = vpack.c.b16 %v487, %v487
          %vm496 = vcmask 257024
          %497 = vst.msk [vmem:[%s292] sm:$0xf] %vm496, %v488
          %498 = vst.msk [vmem:[%s292 + $0x4] sm:$0xf] %vm496, %v489
          %499 = vst.msk [vmem:[%s292 + $0x8] sm:$0xf] %vm496, %v490
          %500 = vst.msk [vmem:[%s292 + $0xc] sm:$0xf] %vm496, %v491
        $region85: #{vqvae2_forward.30} parent=72 // pred_fallthru
          _
        %s501 = smul.u32 4, %s19
        %p502 = scmp.lt.s32.totalorder %s501, 3
        %s503 = scalar_select %p502, %s501, 3
        %s504 = smul.addr %s503, 4
        %s505 = scalar_lea.vmem %s4, %s504
        // Predicated region
        $region86: #{vqvae2_forward.30} parent=72 // pred_check
          %p506 = pneg %p141
        $region87: #{vqvae2_forward.30} parent=72 // pred_check_branch
          %508 = sbr.rel (%p506) target = $region89
        $region88: #{vqvae2_forward.30} parent=72 // pred_region
          %s509 = smul.u32 4, %s19
        $region89: #{vqvae2_forward.30} parent=72 // pred_fallthru
          _
        // Predicated region
        $region90: #{vqvae2_forward.30} parent=72 // pred_check
          %p510 = pneg %p141
        $region91: #{vqvae2_forward.30} parent=72 // pred_check_branch
          %512 = sbr.rel (%p510) target = $region93
        $region92: #{vqvae2_forward.30} parent=72 // pred_region
          %s513 = smul.u32 4, %s19
          %p514 = scmp.lt.s32.totalorder %s513, 3
          %s515 = scalar_select %p514, %s513, 3
          %s516 = smul.addr %s515, 4
          %s517 = scalar_lea.vmem %s4, %s516
        $region93: #{vqvae2_forward.30} parent=72 // pred_fallthru
          _
      $region73: #{vqvae2_forward.30} parent=5 // pred_fallthru
        _
      %p518 = scmp.le.s32.totalorder 2, %s10
      // Predicated region
      $region94: #{vqvae2_forward.30} parent=5 // pred_check
        %p519 = pneg %p518
      $region95: #{vqvae2_forward.30} parent=5 // pred_check_branch
        %521 = sbr.rel (%p519) target = $region97
      $region96: #{vqvae2_forward.30} parent=5 // pred_region
        %s522 = ssub.s32 %s10, 2
      $region97: #{vqvae2_forward.30} parent=5 // pred_fallthru
        _
    $region6: #{vqvae2_forward.30} parent=1 // loop_footer
      %s14 = sadd.s32 1, %s10
    $region7: #{vqvae2_forward.30} parent=1 // loop_footer_branch
      %9 = sbr.rel target = $region3
    $region8: #{vqvae2_forward.30} parent=1 // loop_exit
      _

// kernel: vqvae2_forward.31
$region0: #{vqvae2_forward.31}
  #allocation0 [shape = 'u32[]', space=smem, size = 0x4, offset = 0x4, fixed_abs, tag = 'smem constant byte address 0x4 - core index']
  #allocation1 [shape = 'u32[144,128]{1,0:T(1,128)}', space=vmem, size = 0x12000, scoped, tag = 'internal scratch']
  #allocation2 [shape = 'f32[32,32]{1,0:T(8,128)}', space=vmem, size = 0x4000, scoped, tag = 'scratch operand']
  %s0 = inlined_call_operand.vmem [shape: bf16[32,16], index: 0, kind: input, shape index: {}]
  %s1 = inlined_call_operand.vmem [shape: bf16[16,32], index: 1, kind: input, shape index: {}]
  %s2 = inlined_call_operand.vmem [shape: f32[1,32], index: 2, kind: input, shape index: {}]
  %s3 = inlined_call_operand.vmem [shape: f32[1,32], index: 3, kind: input, shape index: {}]
  %s4 = inlined_call_operand.vmem [shape: bf16[32,32], index: 4, kind: output, shape index: {}]
  %s5 = sld [smem:[#allocation0]]
  $region34: #{vqvae2_forward.31} parent=0
    _
  %s7 = ssub.s32 1, %s5
  %s8 = scalar_select 0, %s7, %s5
  // Predicated region
  $region2: #{vqvae2_forward.31} parent=0 // pred_check
    _
  $region3: #{vqvae2_forward.31} parent=0 // pred_check_branch
    %10 = sbr.rel (0) target = $region5
  $region4: #{vqvae2_forward.31} parent=0 // pred_region
    _
  $region5: #{vqvae2_forward.31} parent=0 // pred_fallthru
    _
  // Predicated region
  $region6: #{vqvae2_forward.31} parent=0 // pred_check
    _
  $region7: #{vqvae2_forward.31} parent=0 // pred_check_branch
    %12 = sbr.rel (0) target = $region9
  $region8: #{vqvae2_forward.31} parent=0 // pred_region
    _
  $region9: #{vqvae2_forward.31} parent=0 // pred_fallthru
    _
  // Predicated region
  $region10: #{vqvae2_forward.31} parent=0 // pred_check
    _
  $region11: #{vqvae2_forward.31} parent=0 // pred_check_branch
    %14 = sbr.rel (0) target = $region13
  $region12: #{vqvae2_forward.31} parent=0 // pred_region
    _
  $region13: #{vqvae2_forward.31} parent=0 // pred_fallthru
    _
  // Predicated region
  $region14: #{vqvae2_forward.31} parent=0 // pred_check
    _
  $region15: #{vqvae2_forward.31} parent=0 // pred_check_branch
    %16 = sbr.rel (0) target = $region17
  $region16: #{vqvae2_forward.31} parent=0 // pred_region
    _
  $region17: #{vqvae2_forward.31} parent=0 // pred_fallthru
    _
  %p18 = scmp.eq.s32.totalorder 0, 0
  // Predicated region
  $region18: #{vqvae2_forward.31} parent=0 // pred_check
    %p19 = pneg %p18
  $region19: #{vqvae2_forward.31} parent=0 // pred_check_branch
    %21 = sbr.rel (%p19) target = $region21
  $region20: #{vqvae2_forward.31} parent=0 // pred_region
    %vm22 = vcmask 261120
    %23 = vst.msk [vmem:[#allocation2] sm:$0xff] %vm22, 0.0
    %24 = vst.msk [vmem:[#allocation2 + $0x8] sm:$0xff] %vm22, 0.0
    %25 = vst.msk [vmem:[#allocation2 + $0x10] sm:$0xff] %vm22, 0.0
    %26 = vst.msk [vmem:[#allocation2 + $0x18] sm:$0xff] %vm22, 0.0
  $region21: #{vqvae2_forward.31} parent=0 // pred_fallthru
    _
  %v27 = vld [vmem:[#allocation2] sm:$0xff]
  %v28 = vld [vmem:[#allocation2 + $0x8] sm:$0xff]
  %v29 = vld [vmem:[#allocation2 + $0x10] sm:$0xff]
  %v30 = vld [vmem:[#allocation2 + $0x18] sm:$0xff]
  %v31 = vld [vmem:[%s0] sm:$0xf]
  %v32 = vld [vmem:[%s0 + $0x4] sm:$0xf]
  %v33 = vld [vmem:[%s0 + $0x8] sm:$0xf]
  %v34 = vld [vmem:[%s0 + $0xc] sm:$0xf]
  %v35 = vld [vmem:[%s1] sm:$0xf]
  %v36 = vld [vmem:[%s1 + $0x4] sm:$0xf]
  %v41 = vunpack.c.l.b16 %v31
  %v42 = vunpack.c.l.b16 %v32
  %v43 = vunpack.c.l.b16 %v33
  %v44 = vunpack.c.l.b16 %v34
  %v45 = vpack.c.b16 %v42, %v41
  %v46 = vpack.c.b16 %v44, %v43
  %v49 = vunpack.c.l.b16 %v35
  %v50 = vunpack.c.l.b16 %v36
  %v51 = vpack.c.b16 %v50, %v49
  %vm53 = vcmask 130048
  %v55 = vsel %vm53, %v45, 0
  %v58 = vsel %vm53, %v46, 0
  %60 = vmatprep.subr.bf16.mxu0 0
  %61 = vmatpush1.bf16.msra.mxu0 0
  %62 = vmatprep.subr.bf16.mxu0 0
  %63 = vmatpush1.bf16.msra.mxu0 0
  %64 = vmatprep.subr.bf16.mxu0 0
  %65 = vmatpush1.bf16.msra.mxu0 0
  %66 = vmatprep.subr.bf16.mxu0 0
  %67 = vmatpush1.bf16.msra.mxu0 0
  %68 = vmatprep.subr.bf16.mxu0 0
  %69 = vmatpush1.bf16.msra.mxu0 0
  %70 = vmatprep.subr.bf16.mxu0 0
  %71 = vmatpush1.bf16.msra.mxu0 0
  %72 = vmatprep.subr.bf16.mxu0 0
  %73 = vmatpush1.bf16.msra.mxu0 0
  %74 = vmatprep.subr.bf16.mxu0 0
  %75 = vmatpush1.bf16.msra.mxu0 %v51
  %76 = vmatprep.subr.bf16.mxu0 0
  %77 = vmatpush2.bf16.msra.mxu0 0
  %78 = vmatprep.subr.bf16.mxu0 0
  %79 = vmatpush2.bf16.msra.mxu0 0
  %80 = vmatprep.subr.bf16.mxu0 0
  %81 = vmatpush2.bf16.msra.mxu0 0
  %82 = vmatprep.subr.bf16.mxu0 0
  %83 = vmatpush2.bf16.msra.mxu0 0
  %84 = vmatprep.subr.bf16.mxu0 0
  %85 = vmatpush2.bf16.msra.mxu0 0
  %86 = vmatprep.subr.bf16.mxu0 0
  %87 = vmatpush2.bf16.msra.mxu0 0
  %88 = vmatprep.subr.bf16.mxu0 0
  %89 = vmatpush2.bf16.msra.mxu0 0
  %90 = vmatprep.subr.bf16.mxu0 0
  %91 = vmatpush2.bf16.msra.mxu0 0
  %92 = vmatprep.mubr.bf16.mxu0 0
  %93 = vmatmul.mubr.bf16.gmra.mxu0 %v55
  %v94 = vpop.f32.mrf.mxu0
  %v95 = vadd.f32 0.0, %v94
  %v96 = vpop.f32.mrf.mxu0
  %v97 = vpop.f32.mrf.mxu0
  %v98 = vadd.f32 0.0, %v97
  %v99 = vpop.f32.mrf.mxu0
  %100 = vmatprep.mubr.bf16.mxu0 0
  %101 = vmatmul.mubr.bf16.gmra.mxu0 %v58
  %v102 = vpop.f32.mrf.mxu0
  %v103 = vadd.f32 0.0, %v102
  %v104 = vpop.f32.mrf.mxu0
  %v105 = vpop.f32.mrf.mxu0
  %v106 = vadd.f32 0.0, %v105
  %v107 = vpop.f32.mrf.mxu0
  %108 = vdwg.mxu0
  %v109 = vadd.f32 %v27, %v95
  %v110 = vadd.f32 %v28, %v98
  %v111 = vadd.f32 %v29, %v103
  %v112 = vadd.f32 %v30, %v106
  %vm113 = vcmask 261120
  %114 = vst.msk [vmem:[#allocation2] sm:$0xff] %vm113, %v109
  %115 = vst.msk [vmem:[#allocation2 + $0x8] sm:$0xff] %vm113, %v110
  %116 = vst.msk [vmem:[#allocation2 + $0x10] sm:$0xff] %vm113, %v111
  %117 = vst.msk [vmem:[#allocation2 + $0x18] sm:$0xff] %vm113, %v112
  // Predicated region
  $region22: #{vqvae2_forward.31} parent=0 // pred_check
    %p118 = pneg %p18
  $region23: #{vqvae2_forward.31} parent=0 // pred_check_branch
    %120 = sbr.rel (%p118) target = $region25
  $region24: #{vqvae2_forward.31} parent=0 // pred_region
    %v121 = vld [vmem:[#allocation2] sm:$0xff]
    %v122 = vld [vmem:[#allocation2 + $0x8] sm:$0xff]
    %v123 = vld [vmem:[#allocation2 + $0x10] sm:$0xff]
    %v124 = vld [vmem:[#allocation2 + $0x18] sm:$0xff]
    %v125 = vld [vmem:[%s2] sm:$0x1]
    %v127 = vlaneseq
    %v128 = vshrl.u32 %v127, 7
    %v129 = vsub.s32 0, %v128
    %v130 = vrot.slane %v125, %v129
    %v132 = vmul.f32 %v121, %v130
    %v133 = vmul.f32 %v122, %v130
    %v134 = vmul.f32 %v123, %v130
    %v135 = vmul.f32 %v124, %v130
    %v136 = vld [vmem:[%s3] sm:$0x1]
    %v138 = vlaneseq
    %v139 = vshrl.u32 %v138, 7
    %v140 = vsub.s32 0, %v139
    %v141 = vrot.slane %v136, %v140
    %v143 = vadd.f32 %v132, %v141
    %v144 = vadd.f32 %v133, %v141
    %v145 = vadd.f32 %v134, %v141
    %v146 = vadd.f32 %v135, %v141
    %v147 = vpack.c.bf16 %v144, %v143
    %v148 = vpack.c.bf16 %v146, %v145
    %v151 = vunpack.c.l.b16 %v147
    %v152 = vunpack.c.h.b16 %v147
    %v153 = vunpack.c.l.b16 %v148
    %v154 = vunpack.c.h.b16 %v148
    %v155 = vpack.c.b16 %v151, %v151
    %v156 = vpack.c.b16 %v152, %v152
    %v157 = vpack.c.b16 %v153, %v153
    %v158 = vpack.c.b16 %v154, %v154
    %vm163 = vcmask 257024
    %164 = vst.msk [vmem:[%s4] sm:$0xf] %vm163, %v155
    %165 = vst.msk [vmem:[%s4 + $0x4] sm:$0xf] %vm163, %v156
    %166 = vst.msk [vmem:[%s4 + $0x8] sm:$0xf] %vm163, %v157
    %167 = vst.msk [vmem:[%s4 + $0xc] sm:$0xf] %vm163, %v158
  $region25: #{vqvae2_forward.31} parent=0 // pred_fallthru
    _
  // Predicated region
  $region26: #{vqvae2_forward.31} parent=0 // pred_check
    _
  $region27: #{vqvae2_forward.31} parent=0 // pred_check_branch
    %169 = sbr.rel (0) target = $region29
  $region28: #{vqvae2_forward.31} parent=0 // pred_region
    _
  $region29: #{vqvae2_forward.31} parent=0 // pred_fallthru
    _
  // Predicated region
  $region30: #{vqvae2_forward.31} parent=0 // pred_check
    _
  $region31: #{vqvae2_forward.31} parent=0 // pred_check_branch
    %171 = sbr.rel (0) target = $region33
  $region32: #{vqvae2_forward.31} parent=0 // pred_region
    _
  $region33: #{vqvae2_forward.31} parent=0 // pred_fallthru
    _

// kernel: vqvae2_forward.32
$region0: #{vqvae2_forward.32}
  #allocation0 [shape = 'u32[]', space=smem, size = 0x4, offset = 0x4, fixed_abs, tag = 'smem constant byte address 0x4 - core index']
  #allocation1 [shape = 'u32[144,128]{1,0:T(1,128)}', space=vmem, size = 0x12000, scoped, tag = 'internal scratch']
  #allocation2 [shape = 'f32[32,32]{1,0:T(8,128)}', space=vmem, size = 0x4000, scoped, tag = 'scratch operand']
  %s0 = inlined_call_operand.vmem [shape: bf16[32,384], index: 0, kind: input, shape index: {}]
  %s1 = inlined_call_operand.vmem [shape: bf16[384,32], index: 1, kind: input, shape index: {}]
  %s2 = inlined_call_operand.vmem [shape: f32[1,32], index: 2, kind: input, shape index: {}]
  %s3 = inlined_call_operand.vmem [shape: f32[1,32], index: 3, kind: input, shape index: {}]
  %s4 = inlined_call_operand.vmem [shape: bf16[32,32], index: 4, kind: input, shape index: {}]
  %s5 = inlined_call_operand.vmem [shape: bf16[32,32], index: 5, kind: output, shape index: {}]
  %s6 = sld [smem:[#allocation0]]
  $region102: #{vqvae2_forward.32} parent=0
    _
  %s8 = ssub.s32 1, %s6
  %s9 = scalar_select 0, %s8, %s6
  $region1: #{vqvae2_forward.32} parent=0
    #allocation3 [shape = 'u8[16384]{0}', space=vmem, size = 0x4000, scoped, tag = 'input window, operand 0']
    loop: start=0, step=1, limit=5
    $region2: #{vqvae2_forward.32} parent=1 // loop_pre_header
      _
    $region3: #{vqvae2_forward.32} parent=1 // loop_header
      %s11 = sphi 0, %s15
      %p12 = scmp.ge.s32.totalorder %s11, 5
      %s18 = sphi 0, %s30
      %s19 = sphi 0, %s26
      %s20 = sphi 0, %s18
      %s21 = sphi 0, %s19
      %s22 = sphi 0, %s20
      %s23 = sphi 0, %s21
      %s35 = sphi 0, %s37
      %s38 = sphi 0, %s35
      %s39 = sphi 0, %s38
      %s55 = sphi 0, %s39
      %s61 = sphi 0, %s63
      %s64 = sphi 0, %s61
      %s65 = sphi 0, %s64
      %s81 = sphi 0, %s65
      %s85 = sphi 0, %s85
      %s87 = sphi 0, %s85
      %s88 = sphi 0, %s87
      %s102 = sphi 0, %s88
      %s106 = sphi 0, %s106
      %s108 = sphi 0, %s106
      %s109 = sphi 0, %s108
      %s123 = sphi 0, %s109
      %s129 = sphi 0, %s131
      %s132 = sphi 0, %s129
      %s133 = sphi 0, %s132
      %s149 = sphi 0, %s133
      %s155 = sphi 0, %s157
      %s158 = sphi 0, %s155
      %s159 = sphi 0, %s158
      %s175 = sphi 0, %s159
    $region4: #{vqvae2_forward.32} parent=1 // loop_header_branch
      %14 = sbr.rel (%p12) target = $region8
    $region5: #{vqvae2_forward.32} parent=1 // loop_body
      %s16 = ssub.s32 %s11, 1
      %s17 = ssub.s32 %s11, 2
      %s24 = sadd.s32 1, %s19
      %p25 = scmp.ge.s32.totalorder %s24, 3
      %s26 = scalar_select %p25, 0, %s24
      %s27 = sadd.s32 1, %s18
      %s28 = scalar_select %p25, %s27, %s18
      %p29 = scmp.ge.s32.totalorder %s28, 1
      %s30 = scalar_select %p29, 0, %s28
      %s31 = ssub.s32 %s18, %s30
      %s32 = ssub.s32 %s19, %s26
      %s33 = sor.u32 %s31, %s32
      %p34 = scmp.eq.s32.totalorder %s33, 0
      %s36 = sadd.s32 %s35, 1
      %s37 = scalar_select %p34, %s35, %s36
      %p40 = pneg %p34
      %p41 = scmp.eq.s32.totalorder %s11, 2
      %p42 = por %p40, %p41
      %p43 = scmp.ne.s32.totalorder %s35, %s38
      %p44 = scmp.eq.s32.totalorder %s11, 0
      %p45 = por %p43, %p44
      %p46 = scmp.ne.s32.totalorder %s35, %s38
      %p47 = scmp.eq.s32.totalorder %s16, 2
      %p48 = por %p46, %p47
      %p49 = scmp.ne.s32.totalorder %s38, %s39
      %p50 = scmp.eq.s32.totalorder %s16, 0
      %p51 = por %p49, %p50
      %p52 = scmp.ne.s32.totalorder %s38, %s39
      %p53 = scmp.eq.s32.totalorder %s17, 2
      %p54 = por %p52, %p53
      %p56 = scmp.ne.s32.totalorder %s39, %s55
      %p57 = scmp.eq.s32.totalorder %s17, 0
      %p58 = por %p56, %p57
      %s59 = ssub.s32 %s19, %s26
      %p60 = scmp.eq.s32.totalorder %s59, 0
      %s62 = sadd.s32 %s61, 1
      %s63 = scalar_select %p60, %s61, %s62
      %p66 = pneg %p60
      %p67 = scmp.eq.s32.totalorder %s11, 2
      %p68 = por %p66, %p67
      %p69 = scmp.ne.s32.totalorder %s61, %s64
      %p70 = scmp.eq.s32.totalorder %s11, 0
      %p71 = por %p69, %p70
      %p72 = scmp.ne.s32.totalorder %s61, %s64
      %p73 = scmp.eq.s32.totalorder %s16, 2
      %p74 = por %p72, %p73
      %p75 = scmp.ne.s32.totalorder %s64, %s65
      %p76 = scmp.eq.s32.totalorder %s16, 0
      %p77 = por %p75, %p76
      %p78 = scmp.ne.s32.totalorder %s64, %s65
      %p79 = scmp.eq.s32.totalorder %s17, 2
      %p80 = por %p78, %p79
      %p82 = scmp.ne.s32.totalorder %s65, %s81
      %p83 = scmp.eq.s32.totalorder %s17, 0
      %p84 = por %p82, %p83
      %s86 = sadd.s32 %s85, 1
      %p89 = scmp.eq.s32.totalorder %s11, 2
      %p90 = scmp.ne.s32.totalorder %s85, %s87
      %p91 = scmp.eq.s32.totalorder %s11, 0
      %p92 = por %p90, %p91
      %p93 = scmp.ne.s32.totalorder %s85, %s87
      %p94 = scmp.eq.s32.totalorder %s16, 2
      %p95 = por %p93, %p94
      %p96 = scmp.ne.s32.totalorder %s87, %s88
      %p97 = scmp.eq.s32.totalorder %s16, 0
      %p98 = por %p96, %p97
      %p99 = scmp.ne.s32.totalorder %s87, %s88
      %p100 = scmp.eq.s32.totalorder %s17, 2
      %p101 = por %p99, %p100
      %p103 = scmp.ne.s32.totalorder %s88, %s102
      %p104 = scmp.eq.s32.totalorder %s17, 0
      %p105 = por %p103, %p104
      %s107 = sadd.s32 %s106, 1
      %p110 = scmp.eq.s32.totalorder %s11, 2
      %p111 = scmp.ne.s32.totalorder %s106, %s108
      %p112 = scmp.eq.s32.totalorder %s11, 0
      %p113 = por %p111, %p112
      %p114 = scmp.ne.s32.totalorder %s106, %s108
      %p115 = scmp.eq.s32.totalorder %s16, 2
      %p116 = por %p114, %p115
      %p117 = scmp.ne.s32.totalorder %s108, %s109
      %p118 = scmp.eq.s32.totalorder %s16, 0
      %p119 = por %p117, %p118
      %p120 = scmp.ne.s32.totalorder %s108, %s109
      %p121 = scmp.eq.s32.totalorder %s17, 2
      %p122 = por %p120, %p121
      %p124 = scmp.ne.s32.totalorder %s109, %s123
      %p125 = scmp.eq.s32.totalorder %s17, 0
      %p126 = por %p124, %p125
      %s127 = ssub.s32 %s18, %s30
      %p128 = scmp.eq.s32.totalorder %s127, 0
      %s130 = sadd.s32 %s129, 1
      %s131 = scalar_select %p128, %s129, %s130
      %p134 = pneg %p128
      %p135 = scmp.eq.s32.totalorder %s11, 2
      %p136 = por %p134, %p135
      %p137 = scmp.ne.s32.totalorder %s129, %s132
      %p138 = scmp.eq.s32.totalorder %s11, 0
      %p139 = por %p137, %p138
      %p140 = scmp.ne.s32.totalorder %s129, %s132
      %p141 = scmp.eq.s32.totalorder %s16, 2
      %p142 = por %p140, %p141
      %p143 = scmp.ne.s32.totalorder %s132, %s133
      %p144 = scmp.eq.s32.totalorder %s16, 0
      %p145 = por %p143, %p144
      %p146 = scmp.ne.s32.totalorder %s132, %s133
      %p147 = scmp.eq.s32.totalorder %s17, 2
      %p148 = por %p146, %p147
      %p150 = scmp.ne.s32.totalorder %s133, %s149
      %p151 = scmp.eq.s32.totalorder %s17, 0
      %p152 = por %p150, %p151
      %s153 = ssub.s32 %s18, %s30
      %p154 = scmp.eq.s32.totalorder %s153, 0
      %s156 = sadd.s32 %s155, 1
      %s157 = scalar_select %p154, %s155, %s156
      %p160 = pneg %p154
      %p161 = scmp.eq.s32.totalorder %s11, 2
      %p162 = por %p160, %p161
      %p163 = scmp.ne.s32.totalorder %s155, %s158
      %p164 = scmp.eq.s32.totalorder %s11, 0
      %p165 = por %p163, %p164
      %p166 = scmp.ne.s32.totalorder %s155, %s158
      %p167 = scmp.eq.s32.totalorder %s16, 2
      %p168 = por %p166, %p167
      %p169 = scmp.ne.s32.totalorder %s158, %s159
      %p170 = scmp.eq.s32.totalorder %s16, 0
      %p171 = por %p169, %p170
      %p172 = scmp.ne.s32.totalorder %s158, %s159
      %p173 = scmp.eq.s32.totalorder %s17, 2
      %p174 = por %p172, %p173
      %p176 = scmp.ne.s32.totalorder %s159, %s175
      %p177 = scmp.eq.s32.totalorder %s17, 0
      %p178 = por %p176, %p177
      %p179 = scmp.le.s32.totalorder 1, %s11
      %p180 = scmp.lt.s32.totalorder %s11, 4
      %p181 = pnand %p179, %p180
      %p182 = pneg %p181
      // Predicated region
      $region9: #{vqvae2_forward.32} parent=5 // pred_check
        _
      $region10: #{vqvae2_forward.32} parent=5 // pred_check_branch
        %184 = sbr.rel (%p181) target = $region12
      $region11: #{vqvae2_forward.32} parent=5 // pred_region
        %s185 = ssub.s32 %s11, 1
        // Predicated region
        $region13: #{vqvae2_forward.32} parent=11 // pred_check
          %p186 = pneg %p98
        $region14: #{vqvae2_forward.32} parent=11 // pred_check_branch
          %188 = sbr.rel (%p186) target = $region16
        $region15: #{vqvae2_forward.32} parent=11 // pred_region
          _
        $region16: #{vqvae2_forward.32} parent=11 // pred_fallthru
          _
        // Predicated region
        $region17: #{vqvae2_forward.32} parent=11 // pred_check
          %p189 = pneg %p119
        $region18: #{vqvae2_forward.32} parent=11 // pred_check_branch
          %191 = sbr.rel (%p189) target = $region20
        $region19: #{vqvae2_forward.32} parent=11 // pred_region
          _
        $region20: #{vqvae2_forward.32} parent=11 // pred_fallthru
          _
        // Predicated region
        $region21: #{vqvae2_forward.32} parent=11 // pred_check
          %p192 = pneg %p145
        $region22: #{vqvae2_forward.32} parent=11 // pred_check_branch
          %194 = sbr.rel (%p192) target = $region24
        $region23: #{vqvae2_forward.32} parent=11 // pred_region
          %s195 = smul.u32 4, %s20
          %p196 = scmp.lt.s32.totalorder %s195, 3
          %s197 = scalar_select %p196, %s195, 3
          %s198 = smul.addr %s197, 4
          %s199 = scalar_lea.vmem %s4, %s198
          %s200 = smul.u32 4, %s20
        $region24: #{vqvae2_forward.32} parent=11 // pred_fallthru
          _
      $region12: #{vqvae2_forward.32} parent=5 // pred_fallthru
        _
      %p201 = scmp.lt.s32.totalorder %s11, 3
      // Predicated region
      $region25: #{vqvae2_forward.32} parent=5 // pred_check
        %p202 = pneg %p201
      $region26: #{vqvae2_forward.32} parent=5 // pred_check_branch
        %204 = sbr.rel (%p202) target = $region28
      $region27: #{vqvae2_forward.32} parent=5 // pred_region
        // Predicated region
        $region29: #{vqvae2_forward.32} parent=27 // pred_check
          %p205 = pneg %p45
        $region30: #{vqvae2_forward.32} parent=27 // pred_check_branch
          %207 = sbr.rel (%p205) target = $region32
        $region31: #{vqvae2_forward.32} parent=27 // pred_region
          %s208 = sand.u32 %s35, 1
          %s209 = sand.u32 %s35, 1
          %s210 = smul.addr %s209, 16
          %s211 = scalar_lea.vmem [#allocation3], %s210
          %s212 = smul.u32 4, %s18
          %s213 = smul.addr %s212, 3
          %s214 = sadd.s32 %s19, %s213
          %s215 = smul.addr %s214, 4
          %s216 = scalar_lea.vmem %s0, %s215
          // Predicated region
          $region33: #{vqvae2_forward.32} parent=31 // pred_check
            _
          $region34: #{vqvae2_forward.32} parent=31 // pred_check_branch
            %218 = sbr.rel (0) target = $region36
          $region35: #{vqvae2_forward.32} parent=31 // pred_region
            // Predicated region
            $region37: #{vqvae2_forward.32} parent=35 // pred_check
              _
            $region38: #{vqvae2_forward.32} parent=35 // pred_check_branch
              %220 = sbr.rel target = $region40
            $region39: #{vqvae2_forward.32} parent=35 // pred_region
              // Predicated region
              $region52: #{vqvae2_forward.32} parent=39 // pred_check
                _
              $region53: #{vqvae2_forward.32} parent=39 // pred_check_branch
                %242 = sbr.rel (0) target = $region55
              $region54: #{vqvae2_forward.32} parent=39 // pred_region
                loop: start=0, step=1, limit=1
                $region56: #{vqvae2_forward.32} parent=54 // loop_pre_header
                  _
                $region57: #{vqvae2_forward.32} parent=54 // loop_header
                  %s244 = sphi 0, %s248
                  %p245 = scmp.ge.s32.totalorder %s244, 1
                  %s249 = sphi %s216, %s216
                  %s250 = sphi %s211, %s211
                $region58: #{vqvae2_forward.32} parent=54 // loop_header_branch
                  %247 = sbr.rel (%p245) target = $region62
                $region59: #{vqvae2_forward.32} parent=54 // loop_body
                  _
                $region60: #{vqvae2_forward.32} parent=54 // loop_footer
                  %s248 = sadd.s32 1, %s244
                $region61: #{vqvae2_forward.32} parent=54 // loop_footer_branch
                  %243 = sbr.rel target = $region57
                $region62: #{vqvae2_forward.32} parent=54 // loop_exit
                  _
                %s252 = ssub.s32 16, 1
                loop: start=0, step=1, limit=1
                $region63: #{vqvae2_forward.32} parent=54 // loop_pre_header
                  _
                $region64: #{vqvae2_forward.32} parent=54 // loop_header
                  %s254 = sphi 0, %s258
                  %p255 = scmp.ge.s32.totalorder %s254, 1
                  %s259 = sphi %s216, %s216
                  %s260 = sphi %s211, %s211
                $region65: #{vqvae2_forward.32} parent=54 // loop_header_branch
                  %257 = sbr.rel (%p255) target = $region69
                $region66: #{vqvae2_forward.32} parent=54 // loop_body
                  %v261 = vld [vmem:[%s259] sm:%s252]
                  %262 = vst [vmem:[%s260] sm:%s252] %v261
                  %v263 = vld [vmem:[%s259 + $0xc] sm:%s252]
                  %264 = vst [vmem:[%s260 + $0x4] sm:%s252] %v263
                  %v265 = vld [vmem:[%s259 + $0x18] sm:%s252]
                  %266 = vst [vmem:[%s260 + $0x8] sm:%s252] %v265
                  %v267 = vld [vmem:[%s259 + $0x24] sm:%s252]
                  %268 = vst [vmem:[%s260 + $0xc] sm:%s252] %v267
                $region67: #{vqvae2_forward.32} parent=54 // loop_footer
                  %s258 = sadd.s32 1, %s254
                $region68: #{vqvae2_forward.32} parent=54 // loop_footer_branch
                  %253 = sbr.rel target = $region64
                $region69: #{vqvae2_forward.32} parent=54 // loop_exit
                  _
              $region55: #{vqvae2_forward.32} parent=39 // pred_fallthru
                _
            $region40: #{vqvae2_forward.32} parent=35 // pred_fallthru
              _
            // Predicated region
            $region41: #{vqvae2_forward.32} parent=35 // pred_check
              _
            $region42: #{vqvae2_forward.32} parent=35 // pred_check_branch
              %222 = sbr.rel (0) target = $region44
            $region43: #{vqvae2_forward.32} parent=35 // pred_region
              %s224 = ssub.s32 16, 1
              loop: start=0, step=1, limit=1
              $region45: #{vqvae2_forward.32} parent=43 // loop_pre_header
                _
              $region46: #{vqvae2_forward.32} parent=43 // loop_header
                %s226 = sphi 0, %s230
                %p227 = scmp.ge.s32.totalorder %s226, 1
                %s231 = sphi %s216, %s216
                %s232 = sphi %s211, %s211
              $region47: #{vqvae2_forward.32} parent=43 // loop_header_branch
                %229 = sbr.rel (%p227) target = $region51
              $region48: #{vqvae2_forward.32} parent=43 // loop_body
                %v233 = vld [vmem:[%s231] sm:%s224]
                %234 = vst [vmem:[%s232] sm:%s224] %v233
                %v235 = vld [vmem:[%s231 + $0xc] sm:%s224]
                %236 = vst [vmem:[%s232 + $0x4] sm:%s224] %v235
                %v237 = vld [vmem:[%s231 + $0x18] sm:%s224]
                %238 = vst [vmem:[%s232 + $0x8] sm:%s224] %v237
                %v239 = vld [vmem:[%s231 + $0x24] sm:%s224]
                %240 = vst [vmem:[%s232 + $0xc] sm:%s224] %v239
              $region49: #{vqvae2_forward.32} parent=43 // loop_footer
                %s230 = sadd.s32 1, %s226
              $region50: #{vqvae2_forward.32} parent=43 // loop_footer_branch
                %225 = sbr.rel target = $region46
              $region51: #{vqvae2_forward.32} parent=43 // loop_exit
                _
            $region44: #{vqvae2_forward.32} parent=35 // pred_fallthru
              _
          $region36: #{vqvae2_forward.32} parent=31 // pred_fallthru
            _
          %269 = vnop
        $region32: #{vqvae2_forward.32} parent=27 // pred_fallthru
          _
        // Predicated region
        $region70: #{vqvae2_forward.32} parent=27 // pred_check
          %p270 = pneg %p71
        $region71: #{vqvae2_forward.32} parent=27 // pred_check_branch
          %272 = sbr.rel (%p270) target = $region73
        $region72: #{vqvae2_forward.32} parent=27 // pred_region
          %s273 = smul.u32 16, %s19
          %p274 = scmp.lt.s32.totalorder %s273, 47
          %s275 = scalar_select %p274, %s273, 47
          %s276 = smul.addr %s275, 4
          %s277 = scalar_lea.vmem %s1, %s276
          %s278 = smul.u32 16, %s19
        $region73: #{vqvae2_forward.32} parent=27 // pred_fallthru
          _
      $region28: #{vqvae2_forward.32} parent=5 // pred_fallthru
        _
      %p279 = scmp.le.s32.totalorder 1, %s11
      %p280 = scmp.lt.s32.totalorder %s11, 4
      %p281 = pnand %p279, %p280
      %p282 = pneg %p281
      // Predicated region
      $region74: #{vqvae2_forward.32} parent=5 // pred_check
        _
      $region75: #{vqvae2_forward.32} parent=5 // pred_check_branch
        %284 = sbr.rel (%p281) target = $region77
      $region76: #{vqvae2_forward.32} parent=5 // pred_region
        %s285 = ssub.s32 %s11, 1
        %s286 = sand.u32 %s38, 1
        %s287 = sand.u32 %s38, 1
        %s288 = smul.addr %s287, 16
        %s289 = scalar_lea.vmem [#allocation3], %s288
        // Predicated region
        $region78: #{vqvae2_forward.32} parent=76 // pred_check
          %p290 = pneg %p51
        $region79: #{vqvae2_forward.32} parent=76 // pred_check_branch
          %292 = sbr.rel (%p290) target = $region81
        $region80: #{vqvae2_forward.32} parent=76 // pred_region
          _
        $region81: #{vqvae2_forward.32} parent=76 // pred_fallthru
          _
        %s293 = sand.u32 %s38, 1
        %s294 = sand.u32 %s38, 1
        %s295 = smul.addr %s294, 16
        %s296 = scalar_lea.vmem [#allocation3], %s295
        %p297 = pneg %p51
        %p298 = pneg %p48
        %s299 = smul.u32 16, %s21
        %p300 = scmp.lt.s32.totalorder %s299, 47
        %s301 = scalar_select %p300, %s299, 47
        %s302 = smul.addr %s301, 4
        %s303 = scalar_lea.vmem %s1, %s302
        %p304 = pneg %p77
        %p305 = pneg %p74
        %p306 = pneg %p98
        %p307 = pneg %p95
        %p308 = pneg %p119
        %p309 = pneg %p116
        %s310 = smul.u32 4, %s20
        %p311 = scmp.lt.s32.totalorder %s310, 3
        %s312 = scalar_select %p311, %s310, 3
        %s313 = smul.addr %s312, 4
        %s314 = scalar_lea.vmem %s4, %s313
        %p315 = pneg %p145
        %p316 = pneg %p142
        %p317 = pneg %p171
        %p318 = pneg %p168
        %s319 = smul.u32 4, %s20
        %p320 = scmp.lt.s32.totalorder %s319, 3
        %s321 = scalar_select %p320, %s319, 3
        %s322 = smul.addr %s321, 4
        %s323 = scalar_lea.vmem %s5, %s322
        %s324 = smul.u32 4, %s20
        %s325 = smul.u32 16, %s21
        %p326 = scmp.lt.s32.totalorder %s325, 47
        %s327 = scalar_select %p326, %s325, 47
        %s328 = smul.addr %s327, 4
        %s329 = scalar_lea.vmem %s1, %s328
        %s330 = smul.u32 16, %s21
        %s331 = smul.u32 4, %s20
        %p332 = scmp.lt.s32.totalorder %s331, 3
        %s333 = scalar_select %p332, %s331, 3
        %s334 = smul.addr %s333, 4
        %s335 = scalar_lea.vmem %s4, %s334
        %s336 = smul.u32 4, %s20
        %s337 = smul.u32 4, %s20
        %p338 = scmp.lt.s32.totalorder %s337, 3
        %s339 = scalar_select %p338, %s337, 3
        %s340 = smul.addr %s339, 4
        %s341 = scalar_lea.vmem %s5, %s340
        %s342 = smul.u32 4, %s20
        %p344 = scmp.eq.s32.totalorder %s21, 0
        // Predicated region
        $region82: #{vqvae2_forward.32} parent=76 // pred_check
          %p345 = pneg %p344
        $region83: #{vqvae2_forward.32} parent=76 // pred_check_branch
          %347 = sbr.rel (%p345) target = $region85
        $region84: #{vqvae2_forward.32} parent=76 // pred_region
          %vm348 = vcmask 261120
          %349 = vst.msk [vmem:[#allocation2] sm:$0xff] %vm348, 0.0
          %350 = vst.msk [vmem:[#allocation2 + $0x8] sm:$0xff] %vm348, 0.0
          %351 = vst.msk [vmem:[#allocation2 + $0x10] sm:$0xff] %vm348, 0.0
          %352 = vst.msk [vmem:[#allocation2 + $0x18] sm:$0xff] %vm348, 0.0
        $region85: #{vqvae2_forward.32} parent=76 // pred_fallthru
          _
        %v353 = vld [vmem:[#allocation2] sm:$0xff]
        %v354 = vld [vmem:[#allocation2 + $0x8] sm:$0xff]
        %v355 = vld [vmem:[#allocation2 + $0x10] sm:$0xff]
        %v356 = vld [vmem:[#allocation2 + $0x18] sm:$0xff]
        %v357 = vld [vmem:[%s289] sm:$0xf]
        %v358 = vld [vmem:[%s289 + $0x4] sm:$0xf]
        %v359 = vld [vmem:[%s289 + $0x8] sm:$0xf]
        %v360 = vld [vmem:[%s289 + $0xc] sm:$0xf]
        %v361 = vld [vmem:[%s329] sm:$0xf]
        %v362 = vld [vmem:[%s329 + $0x4] sm:$0xf]
        %v363 = vld [vmem:[%s329 + $0x8] sm:$0xf]
        %v364 = vld [vmem:[%s329 + $0xc] sm:$0xf]
        %v365 = vld [vmem:[%s329 + $0x10] sm:$0xf]
        %v366 = vld [vmem:[%s329 + $0x14] sm:$0xf]
        %v367 = vld [vmem:[%s329 + $0x18] sm:$0xf]
        %v368 = vld [vmem:[%s329 + $0x1c] sm:$0xf]
        %v369 = vld [vmem:[%s329 + $0x20] sm:$0xf]
        %v370 = vld [vmem:[%s329 + $0x24] sm:$0xf]
        %v371 = vld [vmem:[%s329 + $0x28] sm:$0xf]
        %v372 = vld [vmem:[%s329 + $0x2c] sm:$0xf]
        %v373 = vld [vmem:[%s329 + $0x30] sm:$0xf]
        %v374 = vld [vmem:[%s329 + $0x34] sm:$0xf]
        %v375 = vld [vmem:[%s329 + $0x38] sm:$0xf]
        %v376 = vld [vmem:[%s329 + $0x3c] sm:$0xf]
        %v381 = vunpack.c.l.b16 %v357
        %v382 = vunpack.c.l.b16 %v358
        %v383 = vunpack.c.l.b16 %v359
        %v384 = vunpack.c.l.b16 %v360
        %v385 = vpack.c.b16 %v382, %v381
        %v386 = vpack.c.b16 %v384, %v383
        %v405 = vunpack.c.l.b16 %v361
        %v406 = vunpack.c.l.b16 %v362
        %v407 = vunpack.c.l.b16 %v363
        %v408 = vunpack.c.l.b16 %v364
        %v409 = vunpack.c.l.b16 %v365
        %v410 = vunpack.c.l.b16 %v366
        %v411 = vunpack.c.l.b16 %v367
        %v412 = vunpack.c.l.b16 %v368
        %v413 = vunpack.c.l.b16 %v369
        %v414 = vunpack.c.l.b16 %v370
        %v415 = vunpack.c.l.b16 %v371
        %v416 = vunpack.c.l.b16 %v372
        %v417 = vunpack.c.l.b16 %v373
        %v418 = vunpack.c.l.b16 %v374
        %v419 = vunpack.c.l.b16 %v375
        %v420 = vunpack.c.l.b16 %v376
        %v421 = vpack.c.b16 %v406, %v405
        %v422 = vpack.c.b16 %v408, %v407
        %v423 = vpack.c.b16 %v410, %v409
        %v424 = vpack.c.b16 %v412, %v411
        %v425 = vpack.c.b16 %v414, %v413
        %v426 = vpack.c.b16 %v416, %v415
        %v427 = vpack.c.b16 %v418, %v417
        %v428 = vpack.c.b16 %v420, %v419
        %437 = vmatprep.subr.bf16.mxu0 0
        %438 = vmatpush1.bf16.msra.mxu0 %v428
        %439 = vmatprep.subr.bf16.mxu0 0
        %440 = vmatpush1.bf16.msra.mxu0 %v427
        %441 = vmatprep.subr.bf16.mxu0 0
        %442 = vmatpush1.bf16.msra.mxu0 %v426
        %443 = vmatprep.subr.bf16.mxu0 0
        %444 = vmatpush1.bf16.msra.mxu0 %v425
        %445 = vmatprep.subr.bf16.mxu0 0
        %446 = vmatpush1.bf16.msra.mxu0 %v424
        %447 = vmatprep.subr.bf16.mxu0 0
        %448 = vmatpush1.bf16.msra.mxu0 %v423
        %449 = vmatprep.subr.bf16.mxu0 0
        %450 = vmatpush1.bf16.msra.mxu0 %v422
        %451 = vmatprep.subr.bf16.mxu0 0
        %452 = vmatpush1.bf16.msra.mxu0 %v421
        %453 = vmatprep.subr.bf16.mxu0 0
        %454 = vmatpush2.bf16.msra.mxu0 0
        %455 = vmatprep.subr.bf16.mxu0 0
        %456 = vmatpush2.bf16.msra.mxu0 0
        %457 = vmatprep.subr.bf16.mxu0 0
        %458 = vmatpush2.bf16.msra.mxu0 0
        %459 = vmatprep.subr.bf16.mxu0 0
        %460 = vmatpush2.bf16.msra.mxu0 0
        %461 = vmatprep.subr.bf16.mxu0 0
        %462 = vmatpush2.bf16.msra.mxu0 0
        %463 = vmatprep.subr.bf16.mxu0 0
        %464 = vmatpush2.bf16.msra.mxu0 0
        %465 = vmatprep.subr.bf16.mxu0 0
        %466 = vmatpush2.bf16.msra.mxu0 0
        %467 = vmatprep.subr.bf16.mxu0 0
        %468 = vmatpush2.bf16.msra.mxu0 0
        %469 = vmatprep.mubr.bf16.mxu0 0
        %470 = vmatmul.mubr.bf16.gmra.mxu0 %v385
        %v471 = vpop.f32.mrf.mxu0
        %v472 = vadd.f32 0.0, %v471
        %v473 = vpop.f32.mrf.mxu0
        %v474 = vpop.f32.mrf.mxu0
        %v475 = vadd.f32 0.0, %v474
        %v476 = vpop.f32.mrf.mxu0
        %477 = vmatprep.mubr.bf16.mxu0 0
        %478 = vmatmul.mubr.bf16.gmra.mxu0 %v386
        %v479 = vpop.f32.mrf.mxu0
        %v480 = vadd.f32 0.0, %v479
        %v481 = vpop.f32.mrf.mxu0
        %v482 = vpop.f32.mrf.mxu0
        %v483 = vadd.f32 0.0, %v482
        %v484 = vpop.f32.mrf.mxu0
        %485 = vdwg.mxu0
        %v486 = vadd.f32 %v353, %v472
        %v487 = vadd.f32 %v354, %v475
        %v488 = vadd.f32 %v355, %v480
        %v489 = vadd.f32 %v356, %v483
        %vm490 = vcmask 261120
        %491 = vst.msk [vmem:[#allocation2] sm:$0xff] %vm490, %v486
        %492 = vst.msk [vmem:[#allocation2 + $0x8] sm:$0xff] %vm490, %v487
        %493 = vst.msk [vmem:[#allocation2 + $0x10] sm:$0xff] %vm490, %v488
        %494 = vst.msk [vmem:[#allocation2 + $0x18] sm:$0xff] %vm490, %v489
        %p495 = scmp.eq.s32.totalorder %s21, 2
        // Predicated region
        $region86: #{vqvae2_forward.32} parent=76 // pred_check
          %p496 = pneg %p495
        $region87: #{vqvae2_forward.32} parent=76 // pred_check_branch
          %498 = sbr.rel (%p496) target = $region89
        $region88: #{vqvae2_forward.32} parent=76 // pred_region
          %v499 = vld [vmem:[#allocation2] sm:$0xff]
          %v500 = vld [vmem:[#allocation2 + $0x8] sm:$0xff]
          %v501 = vld [vmem:[#allocation2 + $0x10] sm:$0xff]
          %v502 = vld [vmem:[#allocation2 + $0x18] sm:$0xff]
          %v503 = vld [vmem:[%s2] sm:$0x1]
          %v505 = vlaneseq
          %v506 = vshrl.u32 %v505, 7
          %v507 = vsub.s32 0, %v506
          %v508 = vrot.slane %v503, %v507
          %v510 = vmul.f32 %v499, %v508
          %v511 = vmul.f32 %v500, %v508
          %v512 = vmul.f32 %v501, %v508
          %v513 = vmul.f32 %v502, %v508
          %v514 = vld [vmem:[%s3] sm:$0x1]
          %v516 = vlaneseq
          %v517 = vshrl.u32 %v516, 7
          %v518 = vsub.s32 0, %v517
          %v519 = vrot.slane %v514, %v518
          %v521 = vadd.f32 %v510, %v519
          %v522 = vadd.f32 %v511, %v519
          %v523 = vadd.f32 %v512, %v519
          %v524 = vadd.f32 %v513, %v519
          %v525 = vld [vmem:[%s335] sm:$0xf]
          %v526 = vld [vmem:[%s335 + $0x4] sm:$0xf]
          %v527 = vld [vmem:[%s335 + $0x8] sm:$0xf]
          %v528 = vld [vmem:[%s335 + $0xc] sm:$0xf]
          %v529 = vunpack.c.l.bf16 %v525
          %v530 = vunpack.c.l.bf16 %v526
          %v531 = vunpack.c.l.bf16 %v527
          %v532 = vunpack.c.l.bf16 %v528
          %v533 = vadd.f32 %v521, %v529
          %v534 = vadd.f32 %v522, %v530
          %v535 = vadd.f32 %v523, %v531
          %v536 = vadd.f32 %v524, %v532
          %v537 = vmax.f32 %v533, 0.0
          %v538 = vmax.f32 %v534, 0.0
          %v539 = vmax.f32 %v535, 0.0
          %v540 = vmax.f32 %v536, 0.0
          %v541 = vpack.c.bf16 %v538, %v537
          %v542 = vpack.c.bf16 %v540, %v539
          %v545 = vunpack.c.l.b16 %v541
          %v546 = vunpack.c.h.b16 %v541
          %v547 = vunpack.c.l.b16 %v542
          %v548 = vunpack.c.h.b16 %v542
          %v549 = vpack.c.b16 %v545, %v545
          %v550 = vpack.c.b16 %v546, %v546
          %v551 = vpack.c.b16 %v547, %v547
          %v552 = vpack.c.b16 %v548, %v548
          %vm557 = vcmask 257024
          %558 = vst.msk [vmem:[%s341] sm:$0xf] %vm557, %v549
          %559 = vst.msk [vmem:[%s341 + $0x4] sm:$0xf] %vm557, %v550
          %560 = vst.msk [vmem:[%s341 + $0x8] sm:$0xf] %vm557, %v551
          %561 = vst.msk [vmem:[%s341 + $0xc] sm:$0xf] %vm557, %v552
        $region89: #{vqvae2_forward.32} parent=76 // pred_fallthru
          _
        %s562 = smul.u32 4, %s20
        %p563 = scmp.lt.s32.totalorder %s562, 3
        %s564 = scalar_select %p563, %s562, 3
        %s565 = smul.addr %s564, 4
        %s566 = scalar_lea.vmem %s5, %s565
        // Predicated region
        $region90: #{vqvae2_forward.32} parent=76 // pred_check
          %p567 = pneg %p168
        $region91: #{vqvae2_forward.32} parent=76 // pred_check_branch
          %569 = sbr.rel (%p567) target = $region93
        $region92: #{vqvae2_forward.32} parent=76 // pred_region
          %s570 = smul.u32 4, %s20
        $region93: #{vqvae2_forward.32} parent=76 // pred_fallthru
          _
        // Predicated region
        $region94: #{vqvae2_forward.32} parent=76 // pred_check
          %p571 = pneg %p168
        $region95: #{vqvae2_forward.32} parent=76 // pred_check_branch
          %573 = sbr.rel (%p571) target = $region97
        $region96: #{vqvae2_forward.32} parent=76 // pred_region
          %s574 = smul.u32 4, %s20
          %p575 = scmp.lt.s32.totalorder %s574, 3
          %s576 = scalar_select %p575, %s574, 3
          %s577 = smul.addr %s576, 4
          %s578 = scalar_lea.vmem %s5, %s577
        $region97: #{vqvae2_forward.32} parent=76 // pred_fallthru
          _
      $region77: #{vqvae2_forward.32} parent=5 // pred_fallthru
        _
      %p579 = scmp.le.s32.totalorder 2, %s11
      // Predicated region
      $region98: #{vqvae2_forward.32} parent=5 // pred_check
        %p580 = pneg %p579
      $region99: #{vqvae2_forward.32} parent=5 // pred_check_branch
        %582 = sbr.rel (%p580) target = $region101
      $region100: #{vqvae2_forward.32} parent=5 // pred_region
        %s583 = ssub.s32 %s11, 2
      $region101: #{vqvae2_forward.32} parent=5 // pred_fallthru
        _
    $region6: #{vqvae2_forward.32} parent=1 // loop_footer
      %s15 = sadd.s32 1, %s11
    $region7: #{vqvae2_forward.32} parent=1 // loop_footer_branch
      %10 = sbr.rel target = $region3
    $region8: #{vqvae2_forward.32} parent=1 // loop_exit
      _

// kernel: vqvae2_forward.33
$region0: #{vqvae2_forward.33}
  #allocation0 [shape = 'u32[]', space=smem, size = 0x4, offset = 0x4, fixed_abs, tag = 'smem constant byte address 0x4 - core index']
  #allocation1 [shape = 'u32[144,128]{1,0:T(1,128)}', space=vmem, size = 0x12000, scoped, tag = 'internal scratch']
  #allocation2 [shape = 'f32[32,32]{1,0:T(8,128)}', space=vmem, size = 0x4000, scoped, tag = 'scratch operand']
  %s0 = inlined_call_operand.vmem [shape: bf16[32,384], index: 0, kind: input, shape index: {}]
  %s1 = inlined_call_operand.vmem [shape: bf16[384,32], index: 1, kind: input, shape index: {}]
  %s2 = inlined_call_operand.vmem [shape: f32[1,32], index: 2, kind: input, shape index: {}]
  %s3 = inlined_call_operand.vmem [shape: f32[1,32], index: 3, kind: input, shape index: {}]
  %s4 = inlined_call_operand.vmem [shape: bf16[32,32], index: 4, kind: output, shape index: {}]
  %s5 = sld [smem:[#allocation0]]
  $region98: #{vqvae2_forward.33} parent=0
    _
  %s7 = ssub.s32 1, %s5
  %s8 = scalar_select 0, %s7, %s5
  $region1: #{vqvae2_forward.33} parent=0
    #allocation3 [shape = 'u8[16384]{0}', space=vmem, size = 0x4000, scoped, tag = 'input window, operand 0']
    loop: start=0, step=1, limit=5
    $region2: #{vqvae2_forward.33} parent=1 // loop_pre_header
      _
    $region3: #{vqvae2_forward.33} parent=1 // loop_header
      %s10 = sphi 0, %s14
      %p11 = scmp.ge.s32.totalorder %s10, 5
      %s17 = sphi 0, %s29
      %s18 = sphi 0, %s25
      %s19 = sphi 0, %s17
      %s20 = sphi 0, %s18
      %s21 = sphi 0, %s19
      %s22 = sphi 0, %s20
      %s34 = sphi 0, %s36
      %s37 = sphi 0, %s34
      %s38 = sphi 0, %s37
      %s54 = sphi 0, %s38
      %s60 = sphi 0, %s62
      %s63 = sphi 0, %s60
      %s64 = sphi 0, %s63
      %s80 = sphi 0, %s64
      %s84 = sphi 0, %s84
      %s86 = sphi 0, %s84
      %s87 = sphi 0, %s86
      %s101 = sphi 0, %s87
      %s105 = sphi 0, %s105
      %s107 = sphi 0, %s105
      %s108 = sphi 0, %s107
      %s122 = sphi 0, %s108
      %s128 = sphi 0, %s130
      %s131 = sphi 0, %s128
      %s132 = sphi 0, %s131
      %s148 = sphi 0, %s132
    $region4: #{vqvae2_forward.33} parent=1 // loop_header_branch
      %13 = sbr.rel (%p11) target = $region8
    $region5: #{vqvae2_forward.33} parent=1 // loop_body
      %s15 = ssub.s32 %s10, 1
      %s16 = ssub.s32 %s10, 2
      %s23 = sadd.s32 1, %s18
      %p24 = scmp.ge.s32.totalorder %s23, 3
      %s25 = scalar_select %p24, 0, %s23
      %s26 = sadd.s32 1, %s17
      %s27 = scalar_select %p24, %s26, %s17
      %p28 = scmp.ge.s32.totalorder %s27, 1
      %s29 = scalar_select %p28, 0, %s27
      %s30 = ssub.s32 %s17, %s29
      %s31 = ssub.s32 %s18, %s25
      %s32 = sor.u32 %s30, %s31
      %p33 = scmp.eq.s32.totalorder %s32, 0
      %s35 = sadd.s32 %s34, 1
      %s36 = scalar_select %p33, %s34, %s35
      %p39 = pneg %p33
      %p40 = scmp.eq.s32.totalorder %s10, 2
      %p41 = por %p39, %p40
      %p42 = scmp.ne.s32.totalorder %s34, %s37
      %p43 = scmp.eq.s32.totalorder %s10, 0
      %p44 = por %p42, %p43
      %p45 = scmp.ne.s32.totalorder %s34, %s37
      %p46 = scmp.eq.s32.totalorder %s15, 2
      %p47 = por %p45, %p46
      %p48 = scmp.ne.s32.totalorder %s37, %s38
      %p49 = scmp.eq.s32.totalorder %s15, 0
      %p50 = por %p48, %p49
      %p51 = scmp.ne.s32.totalorder %s37, %s38
      %p52 = scmp.eq.s32.totalorder %s16, 2
      %p53 = por %p51, %p52
      %p55 = scmp.ne.s32.totalorder %s38, %s54
      %p56 = scmp.eq.s32.totalorder %s16, 0
      %p57 = por %p55, %p56
      %s58 = ssub.s32 %s18, %s25
      %p59 = scmp.eq.s32.totalorder %s58, 0
      %s61 = sadd.s32 %s60, 1
      %s62 = scalar_select %p59, %s60, %s61
      %p65 = pneg %p59
      %p66 = scmp.eq.s32.totalorder %s10, 2
      %p67 = por %p65, %p66
      %p68 = scmp.ne.s32.totalorder %s60, %s63
      %p69 = scmp.eq.s32.totalorder %s10, 0
      %p70 = por %p68, %p69
      %p71 = scmp.ne.s32.totalorder %s60, %s63
      %p72 = scmp.eq.s32.totalorder %s15, 2
      %p73 = por %p71, %p72
      %p74 = scmp.ne.s32.totalorder %s63, %s64
      %p75 = scmp.eq.s32.totalorder %s15, 0
      %p76 = por %p74, %p75
      %p77 = scmp.ne.s32.totalorder %s63, %s64
      %p78 = scmp.eq.s32.totalorder %s16, 2
      %p79 = por %p77, %p78
      %p81 = scmp.ne.s32.totalorder %s64, %s80
      %p82 = scmp.eq.s32.totalorder %s16, 0
      %p83 = por %p81, %p82
      %s85 = sadd.s32 %s84, 1
      %p88 = scmp.eq.s32.totalorder %s10, 2
      %p89 = scmp.ne.s32.totalorder %s84, %s86
      %p90 = scmp.eq.s32.totalorder %s10, 0
      %p91 = por %p89, %p90
      %p92 = scmp.ne.s32.totalorder %s84, %s86
      %p93 = scmp.eq.s32.totalorder %s15, 2
      %p94 = por %p92, %p93
      %p95 = scmp.ne.s32.totalorder %s86, %s87
      %p96 = scmp.eq.s32.totalorder %s15, 0
      %p97 = por %p95, %p96
      %p98 = scmp.ne.s32.totalorder %s86, %s87
      %p99 = scmp.eq.s32.totalorder %s16, 2
      %p100 = por %p98, %p99
      %p102 = scmp.ne.s32.totalorder %s87, %s101
      %p103 = scmp.eq.s32.totalorder %s16, 0
      %p104 = por %p102, %p103
      %s106 = sadd.s32 %s105, 1
      %p109 = scmp.eq.s32.totalorder %s10, 2
      %p110 = scmp.ne.s32.totalorder %s105, %s107
      %p111 = scmp.eq.s32.totalorder %s10, 0
      %p112 = por %p110, %p111
      %p113 = scmp.ne.s32.totalorder %s105, %s107
      %p114 = scmp.eq.s32.totalorder %s15, 2
      %p115 = por %p113, %p114
      %p116 = scmp.ne.s32.totalorder %s107, %s108
      %p117 = scmp.eq.s32.totalorder %s15, 0
      %p118 = por %p116, %p117
      %p119 = scmp.ne.s32.totalorder %s107, %s108
      %p120 = scmp.eq.s32.totalorder %s16, 2
      %p121 = por %p119, %p120
      %p123 = scmp.ne.s32.totalorder %s108, %s122
      %p124 = scmp.eq.s32.totalorder %s16, 0
      %p125 = por %p123, %p124
      %s126 = ssub.s32 %s17, %s29
      %p127 = scmp.eq.s32.totalorder %s126, 0
      %s129 = sadd.s32 %s128, 1
      %s130 = scalar_select %p127, %s128, %s129
      %p133 = pneg %p127
      %p134 = scmp.eq.s32.totalorder %s10, 2
      %p135 = por %p133, %p134
      %p136 = scmp.ne.s32.totalorder %s128, %s131
      %p137 = scmp.eq.s32.totalorder %s10, 0
      %p138 = por %p136, %p137
      %p139 = scmp.ne.s32.totalorder %s128, %s131
      %p140 = scmp.eq.s32.totalorder %s15, 2
      %p141 = por %p139, %p140
      %p142 = scmp.ne.s32.totalorder %s131, %s132
      %p143 = scmp.eq.s32.totalorder %s15, 0
      %p144 = por %p142, %p143
      %p145 = scmp.ne.s32.totalorder %s131, %s132
      %p146 = scmp.eq.s32.totalorder %s16, 2
      %p147 = por %p145, %p146
      %p149 = scmp.ne.s32.totalorder %s132, %s148
      %p150 = scmp.eq.s32.totalorder %s16, 0
      %p151 = por %p149, %p150
      %p152 = scmp.le.s32.totalorder 1, %s10
      %p153 = scmp.lt.s32.totalorder %s10, 4
      %p154 = pnand %p152, %p153
      %p155 = pneg %p154
      // Predicated region
      $region9: #{vqvae2_forward.33} parent=5 // pred_check
        _
      $region10: #{vqvae2_forward.33} parent=5 // pred_check_branch
        %157 = sbr.rel (%p154) target = $region12
      $region11: #{vqvae2_forward.33} parent=5 // pred_region
        %s158 = ssub.s32 %s10, 1
        // Predicated region
        $region13: #{vqvae2_forward.33} parent=11 // pred_check
          %p159 = pneg %p97
        $region14: #{vqvae2_forward.33} parent=11 // pred_check_branch
          %161 = sbr.rel (%p159) target = $region16
        $region15: #{vqvae2_forward.33} parent=11 // pred_region
          _
        $region16: #{vqvae2_forward.33} parent=11 // pred_fallthru
          _
        // Predicated region
        $region17: #{vqvae2_forward.33} parent=11 // pred_check
          %p162 = pneg %p118
        $region18: #{vqvae2_forward.33} parent=11 // pred_check_branch
          %164 = sbr.rel (%p162) target = $region20
        $region19: #{vqvae2_forward.33} parent=11 // pred_region
          _
        $region20: #{vqvae2_forward.33} parent=11 // pred_fallthru
          _
      $region12: #{vqvae2_forward.33} parent=5 // pred_fallthru
        _
      %p165 = scmp.lt.s32.totalorder %s10, 3
      // Predicated region
      $region21: #{vqvae2_forward.33} parent=5 // pred_check
        %p166 = pneg %p165
      $region22: #{vqvae2_forward.33} parent=5 // pred_check_branch
        %168 = sbr.rel (%p166) target = $region24
      $region23: #{vqvae2_forward.33} parent=5 // pred_region
        // Predicated region
        $region25: #{vqvae2_forward.33} parent=23 // pred_check
          %p169 = pneg %p44
        $region26: #{vqvae2_forward.33} parent=23 // pred_check_branch
          %171 = sbr.rel (%p169) target = $region28
        $region27: #{vqvae2_forward.33} parent=23 // pred_region
          %s172 = sand.u32 %s34, 1
          %s173 = sand.u32 %s34, 1
          %s174 = smul.addr %s173, 16
          %s175 = scalar_lea.vmem [#allocation3], %s174
          %s176 = smul.u32 4, %s17
          %s177 = smul.addr %s176, 3
          %s178 = sadd.s32 %s18, %s177
          %s179 = smul.addr %s178, 4
          %s180 = scalar_lea.vmem %s0, %s179
          // Predicated region
          $region29: #{vqvae2_forward.33} parent=27 // pred_check
            _
          $region30: #{vqvae2_forward.33} parent=27 // pred_check_branch
            %182 = sbr.rel (0) target = $region32
          $region31: #{vqvae2_forward.33} parent=27 // pred_region
            // Predicated region
            $region33: #{vqvae2_forward.33} parent=31 // pred_check
              _
            $region34: #{vqvae2_forward.33} parent=31 // pred_check_branch
              %184 = sbr.rel target = $region36
            $region35: #{vqvae2_forward.33} parent=31 // pred_region
              // Predicated region
              $region48: #{vqvae2_forward.33} parent=35 // pred_check
                _
              $region49: #{vqvae2_forward.33} parent=35 // pred_check_branch
                %206 = sbr.rel (0) target = $region51
              $region50: #{vqvae2_forward.33} parent=35 // pred_region
                loop: start=0, step=1, limit=1
                $region52: #{vqvae2_forward.33} parent=50 // loop_pre_header
                  _
                $region53: #{vqvae2_forward.33} parent=50 // loop_header
                  %s208 = sphi 0, %s212
                  %p209 = scmp.ge.s32.totalorder %s208, 1
                  %s213 = sphi %s180, %s180
                  %s214 = sphi %s175, %s175
                $region54: #{vqvae2_forward.33} parent=50 // loop_header_branch
                  %211 = sbr.rel (%p209) target = $region58
                $region55: #{vqvae2_forward.33} parent=50 // loop_body
                  _
                $region56: #{vqvae2_forward.33} parent=50 // loop_footer
                  %s212 = sadd.s32 1, %s208
                $region57: #{vqvae2_forward.33} parent=50 // loop_footer_branch
                  %207 = sbr.rel target = $region53
                $region58: #{vqvae2_forward.33} parent=50 // loop_exit
                  _
                %s216 = ssub.s32 16, 1
                loop: start=0, step=1, limit=1
                $region59: #{vqvae2_forward.33} parent=50 // loop_pre_header
                  _
                $region60: #{vqvae2_forward.33} parent=50 // loop_header
                  %s218 = sphi 0, %s222
                  %p219 = scmp.ge.s32.totalorder %s218, 1
                  %s223 = sphi %s180, %s180
                  %s224 = sphi %s175, %s175
                $region61: #{vqvae2_forward.33} parent=50 // loop_header_branch
                  %221 = sbr.rel (%p219) target = $region65
                $region62: #{vqvae2_forward.33} parent=50 // loop_body
                  %v225 = vld [vmem:[%s223] sm:%s216]
                  %226 = vst [vmem:[%s224] sm:%s216] %v225
                  %v227 = vld [vmem:[%s223 + $0xc] sm:%s216]
                  %228 = vst [vmem:[%s224 + $0x4] sm:%s216] %v227
                  %v229 = vld [vmem:[%s223 + $0x18] sm:%s216]
                  %230 = vst [vmem:[%s224 + $0x8] sm:%s216] %v229
                  %v231 = vld [vmem:[%s223 + $0x24] sm:%s216]
                  %232 = vst [vmem:[%s224 + $0xc] sm:%s216] %v231
                $region63: #{vqvae2_forward.33} parent=50 // loop_footer
                  %s222 = sadd.s32 1, %s218
                $region64: #{vqvae2_forward.33} parent=50 // loop_footer_branch
                  %217 = sbr.rel target = $region60
                $region65: #{vqvae2_forward.33} parent=50 // loop_exit
                  _
              $region51: #{vqvae2_forward.33} parent=35 // pred_fallthru
                _
            $region36: #{vqvae2_forward.33} parent=31 // pred_fallthru
              _
            // Predicated region
            $region37: #{vqvae2_forward.33} parent=31 // pred_check
              _
            $region38: #{vqvae2_forward.33} parent=31 // pred_check_branch
              %186 = sbr.rel (0) target = $region40
            $region39: #{vqvae2_forward.33} parent=31 // pred_region
              %s188 = ssub.s32 16, 1
              loop: start=0, step=1, limit=1
              $region41: #{vqvae2_forward.33} parent=39 // loop_pre_header
                _
              $region42: #{vqvae2_forward.33} parent=39 // loop_header
                %s190 = sphi 0, %s194
                %p191 = scmp.ge.s32.totalorder %s190, 1
                %s195 = sphi %s180, %s180
                %s196 = sphi %s175, %s175
              $region43: #{vqvae2_forward.33} parent=39 // loop_header_branch
                %193 = sbr.rel (%p191) target = $region47
              $region44: #{vqvae2_forward.33} parent=39 // loop_body
                %v197 = vld [vmem:[%s195] sm:%s188]
                %198 = vst [vmem:[%s196] sm:%s188] %v197
                %v199 = vld [vmem:[%s195 + $0xc] sm:%s188]
                %200 = vst [vmem:[%s196 + $0x4] sm:%s188] %v199
                %v201 = vld [vmem:[%s195 + $0x18] sm:%s188]
                %202 = vst [vmem:[%s196 + $0x8] sm:%s188] %v201
                %v203 = vld [vmem:[%s195 + $0x24] sm:%s188]
                %204 = vst [vmem:[%s196 + $0xc] sm:%s188] %v203
              $region45: #{vqvae2_forward.33} parent=39 // loop_footer
                %s194 = sadd.s32 1, %s190
              $region46: #{vqvae2_forward.33} parent=39 // loop_footer_branch
                %189 = sbr.rel target = $region42
              $region47: #{vqvae2_forward.33} parent=39 // loop_exit
                _
            $region40: #{vqvae2_forward.33} parent=31 // pred_fallthru
              _
          $region32: #{vqvae2_forward.33} parent=27 // pred_fallthru
            _
          %233 = vnop
        $region28: #{vqvae2_forward.33} parent=23 // pred_fallthru
          _
        // Predicated region
        $region66: #{vqvae2_forward.33} parent=23 // pred_check
          %p234 = pneg %p70
        $region67: #{vqvae2_forward.33} parent=23 // pred_check_branch
          %236 = sbr.rel (%p234) target = $region69
        $region68: #{vqvae2_forward.33} parent=23 // pred_region
          %s237 = smul.u32 16, %s18
          %p238 = scmp.lt.s32.totalorder %s237, 47
          %s239 = scalar_select %p238, %s237, 47
          %s240 = smul.addr %s239, 4
          %s241 = scalar_lea.vmem %s1, %s240
          %s242 = smul.u32 16, %s18
        $region69: #{vqvae2_forward.33} parent=23 // pred_fallthru
          _
      $region24: #{vqvae2_forward.33} parent=5 // pred_fallthru
        _
      %p243 = scmp.le.s32.totalorder 1, %s10
      %p244 = scmp.lt.s32.totalorder %s10, 4
      %p245 = pnand %p243, %p244
      %p246 = pneg %p245
      // Predicated region
      $region70: #{vqvae2_forward.33} parent=5 // pred_check
        _
      $region71: #{vqvae2_forward.33} parent=5 // pred_check_branch
        %248 = sbr.rel (%p245) target = $region73
      $region72: #{vqvae2_forward.33} parent=5 // pred_region
        %s249 = ssub.s32 %s10, 1
        %s250 = sand.u32 %s37, 1
        %s251 = sand.u32 %s37, 1
        %s252 = smul.addr %s251, 16
        %s253 = scalar_lea.vmem [#allocation3], %s252
        // Predicated region
        $region74: #{vqvae2_forward.33} parent=72 // pred_check
          %p254 = pneg %p50
        $region75: #{vqvae2_forward.33} parent=72 // pred_check_branch
          %256 = sbr.rel (%p254) target = $region77
        $region76: #{vqvae2_forward.33} parent=72 // pred_region
          _
        $region77: #{vqvae2_forward.33} parent=72 // pred_fallthru
          _
        %s257 = sand.u32 %s37, 1
        %s258 = sand.u32 %s37, 1
        %s259 = smul.addr %s258, 16
        %s260 = scalar_lea.vmem [#allocation3], %s259
        %p261 = pneg %p50
        %p262 = pneg %p47
        %s263 = smul.u32 16, %s20
        %p264 = scmp.lt.s32.totalorder %s263, 47
        %s265 = scalar_select %p264, %s263, 47
        %s266 = smul.addr %s265, 4
        %s267 = scalar_lea.vmem %s1, %s266
        %p268 = pneg %p76
        %p269 = pneg %p73
        %p270 = pneg %p97
        %p271 = pneg %p94
        %p272 = pneg %p118
        %p273 = pneg %p115
        %p274 = pneg %p144
        %p275 = pneg %p141
        %s276 = smul.u32 4, %s19
        %p277 = scmp.lt.s32.totalorder %s276, 3
        %s278 = scalar_select %p277, %s276, 3
        %s279 = smul.addr %s278, 4
        %s280 = scalar_lea.vmem %s4, %s279
        %s281 = smul.u32 4, %s19
        %s282 = smul.u32 16, %s20
        %p283 = scmp.lt.s32.totalorder %s282, 47
        %s284 = scalar_select %p283, %s282, 47
        %s285 = smul.addr %s284, 4
        %s286 = scalar_lea.vmem %s1, %s285
        %s287 = smul.u32 16, %s20
        %s288 = smul.u32 4, %s19
        %p289 = scmp.lt.s32.totalorder %s288, 3
        %s290 = scalar_select %p289, %s288, 3
        %s291 = smul.addr %s290, 4
        %s292 = scalar_lea.vmem %s4, %s291
        %s293 = smul.u32 4, %s19
        %p295 = scmp.eq.s32.totalorder %s20, 0
        // Predicated region
        $region78: #{vqvae2_forward.33} parent=72 // pred_check
          %p296 = pneg %p295
        $region79: #{vqvae2_forward.33} parent=72 // pred_check_branch
          %298 = sbr.rel (%p296) target = $region81
        $region80: #{vqvae2_forward.33} parent=72 // pred_region
          %vm299 = vcmask 261120
          %300 = vst.msk [vmem:[#allocation2] sm:$0xff] %vm299, 0.0
          %301 = vst.msk [vmem:[#allocation2 + $0x8] sm:$0xff] %vm299, 0.0
          %302 = vst.msk [vmem:[#allocation2 + $0x10] sm:$0xff] %vm299, 0.0
          %303 = vst.msk [vmem:[#allocation2 + $0x18] sm:$0xff] %vm299, 0.0
        $region81: #{vqvae2_forward.33} parent=72 // pred_fallthru
          _
        %v304 = vld [vmem:[#allocation2] sm:$0xff]
        %v305 = vld [vmem:[#allocation2 + $0x8] sm:$0xff]
        %v306 = vld [vmem:[#allocation2 + $0x10] sm:$0xff]
        %v307 = vld [vmem:[#allocation2 + $0x18] sm:$0xff]
        %v308 = vld [vmem:[%s253] sm:$0xf]
        %v309 = vld [vmem:[%s253 + $0x4] sm:$0xf]
        %v310 = vld [vmem:[%s253 + $0x8] sm:$0xf]
        %v311 = vld [vmem:[%s253 + $0xc] sm:$0xf]
        %v312 = vld [vmem:[%s286] sm:$0xf]
        %v313 = vld [vmem:[%s286 + $0x4] sm:$0xf]
        %v314 = vld [vmem:[%s286 + $0x8] sm:$0xf]
        %v315 = vld [vmem:[%s286 + $0xc] sm:$0xf]
        %v316 = vld [vmem:[%s286 + $0x10] sm:$0xf]
        %v317 = vld [vmem:[%s286 + $0x14] sm:$0xf]
        %v318 = vld [vmem:[%s286 + $0x18] sm:$0xf]
        %v319 = vld [vmem:[%s286 + $0x1c] sm:$0xf]
        %v320 = vld [vmem:[%s286 + $0x20] sm:$0xf]
        %v321 = vld [vmem:[%s286 + $0x24] sm:$0xf]
        %v322 = vld [vmem:[%s286 + $0x28] sm:$0xf]
        %v323 = vld [vmem:[%s286 + $0x2c] sm:$0xf]
        %v324 = vld [vmem:[%s286 + $0x30] sm:$0xf]
        %v325 = vld [vmem:[%s286 + $0x34] sm:$0xf]
        %v326 = vld [vmem:[%s286 + $0x38] sm:$0xf]
        %v327 = vld [vmem:[%s286 + $0x3c] sm:$0xf]
        %v332 = vunpack.c.l.b16 %v308
        %v333 = vunpack.c.l.b16 %v309
        %v334 = vunpack.c.l.b16 %v310
        %v335 = vunpack.c.l.b16 %v311
        %v336 = vpack.c.b16 %v333, %v332
        %v337 = vpack.c.b16 %v335, %v334
        %v356 = vunpack.c.l.b16 %v312
        %v357 = vunpack.c.l.b16 %v313
        %v358 = vunpack.c.l.b16 %v314
        %v359 = vunpack.c.l.b16 %v315
        %v360 = vunpack.c.l.b16 %v316
        %v361 = vunpack.c.l.b16 %v317
        %v362 = vunpack.c.l.b16 %v318
        %v363 = vunpack.c.l.b16 %v319
        %v364 = vunpack.c.l.b16 %v320
        %v365 = vunpack.c.l.b16 %v321
        %v366 = vunpack.c.l.b16 %v322
        %v367 = vunpack.c.l.b16 %v323
        %v368 = vunpack.c.l.b16 %v324
        %v369 = vunpack.c.l.b16 %v325
        %v370 = vunpack.c.l.b16 %v326
        %v371 = vunpack.c.l.b16 %v327
        %v372 = vpack.c.b16 %v357, %v356
        %v373 = vpack.c.b16 %v359, %v358
        %v374 = vpack.c.b16 %v361, %v360
        %v375 = vpack.c.b16 %v363, %v362
        %v376 = vpack.c.b16 %v365, %v364
        %v377 = vpack.c.b16 %v367, %v366
        %v378 = vpack.c.b16 %v369, %v368
        %v379 = vpack.c.b16 %v371, %v370
        %388 = vmatprep.subr.bf16.mxu0 0
        %389 = vmatpush1.bf16.msra.mxu0 %v379
        %390 = vmatprep.subr.bf16.mxu0 0
        %391 = vmatpush1.bf16.msra.mxu0 %v378
        %392 = vmatprep.subr.bf16.mxu0 0
        %393 = vmatpush1.bf16.msra.mxu0 %v377
        %394 = vmatprep.subr.bf16.mxu0 0
        %395 = vmatpush1.bf16.msra.mxu0 %v376
        %396 = vmatprep.subr.bf16.mxu0 0
        %397 = vmatpush1.bf16.msra.mxu0 %v375
        %398 = vmatprep.subr.bf16.mxu0 0
        %399 = vmatpush1.bf16.msra.mxu0 %v374
        %400 = vmatprep.subr.bf16.mxu0 0
        %401 = vmatpush1.bf16.msra.mxu0 %v373
        %402 = vmatprep.subr.bf16.mxu0 0
        %403 = vmatpush1.bf16.msra.mxu0 %v372
        %404 = vmatprep.subr.bf16.mxu0 0
        %405 = vmatpush2.bf16.msra.mxu0 0
        %406 = vmatprep.subr.bf16.mxu0 0
        %407 = vmatpush2.bf16.msra.mxu0 0
        %408 = vmatprep.subr.bf16.mxu0 0
        %409 = vmatpush2.bf16.msra.mxu0 0
        %410 = vmatprep.subr.bf16.mxu0 0
        %411 = vmatpush2.bf16.msra.mxu0 0
        %412 = vmatprep.subr.bf16.mxu0 0
        %413 = vmatpush2.bf16.msra.mxu0 0
        %414 = vmatprep.subr.bf16.mxu0 0
        %415 = vmatpush2.bf16.msra.mxu0 0
        %416 = vmatprep.subr.bf16.mxu0 0
        %417 = vmatpush2.bf16.msra.mxu0 0
        %418 = vmatprep.subr.bf16.mxu0 0
        %419 = vmatpush2.bf16.msra.mxu0 0
        %420 = vmatprep.mubr.bf16.mxu0 0
        %421 = vmatmul.mubr.bf16.gmra.mxu0 %v336
        %v422 = vpop.f32.mrf.mxu0
        %v423 = vadd.f32 0.0, %v422
        %v424 = vpop.f32.mrf.mxu0
        %v425 = vpop.f32.mrf.mxu0
        %v426 = vadd.f32 0.0, %v425
        %v427 = vpop.f32.mrf.mxu0
        %428 = vmatprep.mubr.bf16.mxu0 0
        %429 = vmatmul.mubr.bf16.gmra.mxu0 %v337
        %v430 = vpop.f32.mrf.mxu0
        %v431 = vadd.f32 0.0, %v430
        %v432 = vpop.f32.mrf.mxu0
        %v433 = vpop.f32.mrf.mxu0
        %v434 = vadd.f32 0.0, %v433
        %v435 = vpop.f32.mrf.mxu0
        %436 = vdwg.mxu0
        %v437 = vadd.f32 %v304, %v423
        %v438 = vadd.f32 %v305, %v426
        %v439 = vadd.f32 %v306, %v431
        %v440 = vadd.f32 %v307, %v434
        %vm441 = vcmask 261120
        %442 = vst.msk [vmem:[#allocation2] sm:$0xff] %vm441, %v437
        %443 = vst.msk [vmem:[#allocation2 + $0x8] sm:$0xff] %vm441, %v438
        %444 = vst.msk [vmem:[#allocation2 + $0x10] sm:$0xff] %vm441, %v439
        %445 = vst.msk [vmem:[#allocation2 + $0x18] sm:$0xff] %vm441, %v440
        %p446 = scmp.eq.s32.totalorder %s20, 2
        // Predicated region
        $region82: #{vqvae2_forward.33} parent=72 // pred_check
          %p447 = pneg %p446
        $region83: #{vqvae2_forward.33} parent=72 // pred_check_branch
          %449 = sbr.rel (%p447) target = $region85
        $region84: #{vqvae2_forward.33} parent=72 // pred_region
          %v450 = vld [vmem:[#allocation2] sm:$0xff]
          %v451 = vld [vmem:[#allocation2 + $0x8] sm:$0xff]
          %v452 = vld [vmem:[#allocation2 + $0x10] sm:$0xff]
          %v453 = vld [vmem:[#allocation2 + $0x18] sm:$0xff]
          %v454 = vld [vmem:[%s2] sm:$0x1]
          %v456 = vlaneseq
          %v457 = vshrl.u32 %v456, 7
          %v458 = vsub.s32 0, %v457
          %v459 = vrot.slane %v454, %v458
          %v461 = vmul.f32 %v450, %v459
          %v462 = vmul.f32 %v451, %v459
          %v463 = vmul.f32 %v452, %v459
          %v464 = vmul.f32 %v453, %v459
          %v465 = vld [vmem:[%s3] sm:$0x1]
          %v467 = vlaneseq
          %v468 = vshrl.u32 %v467, 7
          %v469 = vsub.s32 0, %v468
          %v470 = vrot.slane %v465, %v469
          %v472 = vadd.f32 %v461, %v470
          %v473 = vadd.f32 %v462, %v470
          %v474 = vadd.f32 %v463, %v470
          %v475 = vadd.f32 %v464, %v470
          %v476 = vmax.f32 %v472, 0.0
          %v477 = vmax.f32 %v473, 0.0
          %v478 = vmax.f32 %v474, 0.0
          %v479 = vmax.f32 %v475, 0.0
          %v480 = vpack.c.bf16 %v477, %v476
          %v481 = vpack.c.bf16 %v479, %v478
          %v484 = vunpack.c.l.b16 %v480
          %v485 = vunpack.c.h.b16 %v480
          %v486 = vunpack.c.l.b16 %v481
          %v487 = vunpack.c.h.b16 %v481
          %v488 = vpack.c.b16 %v484, %v484
          %v489 = vpack.c.b16 %v485, %v485
          %v490 = vpack.c.b16 %v486, %v486
          %v491 = vpack.c.b16 %v487, %v487
          %vm496 = vcmask 257024
          %497 = vst.msk [vmem:[%s292] sm:$0xf] %vm496, %v488
          %498 = vst.msk [vmem:[%s292 + $0x4] sm:$0xf] %vm496, %v489
          %499 = vst.msk [vmem:[%s292 + $0x8] sm:$0xf] %vm496, %v490
          %500 = vst.msk [vmem:[%s292 + $0xc] sm:$0xf] %vm496, %v491
        $region85: #{vqvae2_forward.33} parent=72 // pred_fallthru
          _
        %s501 = smul.u32 4, %s19
        %p502 = scmp.lt.s32.totalorder %s501, 3
        %s503 = scalar_select %p502, %s501, 3
        %s504 = smul.addr %s503, 4
        %s505 = scalar_lea.vmem %s4, %s504
        // Predicated region
        $region86: #{vqvae2_forward.33} parent=72 // pred_check
          %p506 = pneg %p141
        $region87: #{vqvae2_forward.33} parent=72 // pred_check_branch
          %508 = sbr.rel (%p506) target = $region89
        $region88: #{vqvae2_forward.33} parent=72 // pred_region
          %s509 = smul.u32 4, %s19
        $region89: #{vqvae2_forward.33} parent=72 // pred_fallthru
          _
        // Predicated region
        $region90: #{vqvae2_forward.33} parent=72 // pred_check
          %p510 = pneg %p141
        $region91: #{vqvae2_forward.33} parent=72 // pred_check_branch
          %512 = sbr.rel (%p510) target = $region93
        $region92: #{vqvae2_forward.33} parent=72 // pred_region
          %s513 = smul.u32 4, %s19
          %p514 = scmp.lt.s32.totalorder %s513, 3
          %s515 = scalar_select %p514, %s513, 3
          %s516 = smul.addr %s515, 4
          %s517 = scalar_lea.vmem %s4, %s516
        $region93: #{vqvae2_forward.33} parent=72 // pred_fallthru
          _
      $region73: #{vqvae2_forward.33} parent=5 // pred_fallthru
        _
      %p518 = scmp.le.s32.totalorder 2, %s10
      // Predicated region
      $region94: #{vqvae2_forward.33} parent=5 // pred_check
        %p519 = pneg %p518
      $region95: #{vqvae2_forward.33} parent=5 // pred_check_branch
        %521 = sbr.rel (%p519) target = $region97
      $region96: #{vqvae2_forward.33} parent=5 // pred_region
        %s522 = ssub.s32 %s10, 2
      $region97: #{vqvae2_forward.33} parent=5 // pred_fallthru
        _
    $region6: #{vqvae2_forward.33} parent=1 // loop_footer
      %s14 = sadd.s32 1, %s10
    $region7: #{vqvae2_forward.33} parent=1 // loop_footer_branch
      %9 = sbr.rel target = $region3
    $region8: #{vqvae2_forward.33} parent=1 // loop_exit
      _

// kernel: vqvae2_forward.35
$region0: #{vqvae2_forward.35}
  #allocation0 [shape = 'u32[]', space=smem, size = 0x4, offset = 0x4, fixed_abs, tag = 'smem constant byte address 0x4 - core index']
  #allocation1 [shape = 'u32[144,128]{1,0:T(1,128)}', space=vmem, size = 0x12000, scoped, tag = 'internal scratch']
  #allocation2 [shape = 'f32[8,32]{1,0:T(8,128)}', space=vmem, size = 0x1000, scoped, tag = 'scratch operand']
  %s0 = inlined_call_operand.vmem [shape: bf16[8,384], index: 0, kind: input, shape index: {}]
  %s1 = inlined_call_operand.vmem [shape: bf16[384,32], index: 1, kind: input, shape index: {}]
  %s2 = inlined_call_operand.vmem [shape: f32[1,32], index: 2, kind: input, shape index: {}]
  %s3 = inlined_call_operand.vmem [shape: f32[1,32], index: 3, kind: input, shape index: {}]
  %s4 = inlined_call_operand.vmem [shape: bf16[8,32], index: 4, kind: output, shape index: {}]
  %s5 = sld [smem:[#allocation0]]
  $region57: #{vqvae2_forward.35} parent=0
    _
  %s7 = ssub.s32 1, %s5
  %s8 = scalar_select 0, %s7, %s5
  loop: start=0, step=1, limit=5
  $region2: #{vqvae2_forward.35} parent=0 // loop_pre_header
    _
  $region3: #{vqvae2_forward.35} parent=0 // loop_header
    %s10 = sphi 0, %s14
    %p11 = scmp.ge.s32.totalorder %s10, 5
    %s17 = sphi 0, %s29
    %s18 = sphi 0, %s25
    %s19 = sphi 0, %s17
    %s20 = sphi 0, %s18
    %s21 = sphi 0, %s19
    %s22 = sphi 0, %s20
    %s34 = sphi 0, %s36
    %s37 = sphi 0, %s34
    %s38 = sphi 0, %s37
    %s54 = sphi 0, %s38
    %s60 = sphi 0, %s62
    %s63 = sphi 0, %s60
    %s64 = sphi 0, %s63
    %s80 = sphi 0, %s64
    %s84 = sphi 0, %s84
    %s86 = sphi 0, %s84
    %s87 = sphi 0, %s86
    %s101 = sphi 0, %s87
    %s105 = sphi 0, %s105
    %s107 = sphi 0, %s105
    %s108 = sphi 0, %s107
    %s122 = sphi 0, %s108
    %s128 = sphi 0, %s130
    %s131 = sphi 0, %s128
    %s132 = sphi 0, %s131
    %s148 = sphi 0, %s132
  $region4: #{vqvae2_forward.35} parent=0 // loop_header_branch
    %13 = sbr.rel (%p11) target = $region8
  $region5: #{vqvae2_forward.35} parent=0 // loop_body
    %s15 = ssub.s32 %s10, 1
    %s16 = ssub.s32 %s10, 2
    %s23 = sadd.s32 1, %s18
    %p24 = scmp.ge.s32.totalorder %s23, 3
    %s25 = scalar_select %p24, 0, %s23
    %s26 = sadd.s32 1, %s17
    %s27 = scalar_select %p24, %s26, %s17
    %p28 = scmp.ge.s32.totalorder %s27, 1
    %s29 = scalar_select %p28, 0, %s27
    %s30 = ssub.s32 %s17, %s29
    %s31 = ssub.s32 %s18, %s25
    %s32 = sor.u32 %s30, %s31
    %p33 = scmp.eq.s32.totalorder %s32, 0
    %s35 = sadd.s32 %s34, 1
    %s36 = scalar_select %p33, %s34, %s35
    %p39 = pneg %p33
    %p40 = scmp.eq.s32.totalorder %s10, 2
    %p41 = por %p39, %p40
    %p42 = scmp.ne.s32.totalorder %s34, %s37
    %p43 = scmp.eq.s32.totalorder %s10, 0
    %p44 = por %p42, %p43
    %p45 = scmp.ne.s32.totalorder %s34, %s37
    %p46 = scmp.eq.s32.totalorder %s15, 2
    %p47 = por %p45, %p46
    %p48 = scmp.ne.s32.totalorder %s37, %s38
    %p49 = scmp.eq.s32.totalorder %s15, 0
    %p50 = por %p48, %p49
    %p51 = scmp.ne.s32.totalorder %s37, %s38
    %p52 = scmp.eq.s32.totalorder %s16, 2
    %p53 = por %p51, %p52
    %p55 = scmp.ne.s32.totalorder %s38, %s54
    %p56 = scmp.eq.s32.totalorder %s16, 0
    %p57 = por %p55, %p56
    %s58 = ssub.s32 %s18, %s25
    %p59 = scmp.eq.s32.totalorder %s58, 0
    %s61 = sadd.s32 %s60, 1
    %s62 = scalar_select %p59, %s60, %s61
    %p65 = pneg %p59
    %p66 = scmp.eq.s32.totalorder %s10, 2
    %p67 = por %p65, %p66
    %p68 = scmp.ne.s32.totalorder %s60, %s63
    %p69 = scmp.eq.s32.totalorder %s10, 0
    %p70 = por %p68, %p69
    %p71 = scmp.ne.s32.totalorder %s60, %s63
    %p72 = scmp.eq.s32.totalorder %s15, 2
    %p73 = por %p71, %p72
    %p74 = scmp.ne.s32.totalorder %s63, %s64
    %p75 = scmp.eq.s32.totalorder %s15, 0
    %p76 = por %p74, %p75
    %p77 = scmp.ne.s32.totalorder %s63, %s64
    %p78 = scmp.eq.s32.totalorder %s16, 2
    %p79 = por %p77, %p78
    %p81 = scmp.ne.s32.totalorder %s64, %s80
    %p82 = scmp.eq.s32.totalorder %s16, 0
    %p83 = por %p81, %p82
    %s85 = sadd.s32 %s84, 1
    %p88 = scmp.eq.s32.totalorder %s10, 2
    %p89 = scmp.ne.s32.totalorder %s84, %s86
    %p90 = scmp.eq.s32.totalorder %s10, 0
    %p91 = por %p89, %p90
    %p92 = scmp.ne.s32.totalorder %s84, %s86
    %p93 = scmp.eq.s32.totalorder %s15, 2
    %p94 = por %p92, %p93
    %p95 = scmp.ne.s32.totalorder %s86, %s87
    %p96 = scmp.eq.s32.totalorder %s15, 0
    %p97 = por %p95, %p96
    %p98 = scmp.ne.s32.totalorder %s86, %s87
    %p99 = scmp.eq.s32.totalorder %s16, 2
    %p100 = por %p98, %p99
    %p102 = scmp.ne.s32.totalorder %s87, %s101
    %p103 = scmp.eq.s32.totalorder %s16, 0
    %p104 = por %p102, %p103
    %s106 = sadd.s32 %s105, 1
    %p109 = scmp.eq.s32.totalorder %s10, 2
    %p110 = scmp.ne.s32.totalorder %s105, %s107
    %p111 = scmp.eq.s32.totalorder %s10, 0
    %p112 = por %p110, %p111
    %p113 = scmp.ne.s32.totalorder %s105, %s107
    %p114 = scmp.eq.s32.totalorder %s15, 2
    %p115 = por %p113, %p114
    %p116 = scmp.ne.s32.totalorder %s107, %s108
    %p117 = scmp.eq.s32.totalorder %s15, 0
    %p118 = por %p116, %p117
    %p119 = scmp.ne.s32.totalorder %s107, %s108
    %p120 = scmp.eq.s32.totalorder %s16, 2
    %p121 = por %p119, %p120
    %p123 = scmp.ne.s32.totalorder %s108, %s122
    %p124 = scmp.eq.s32.totalorder %s16, 0
    %p125 = por %p123, %p124
    %s126 = ssub.s32 %s17, %s29
    %p127 = scmp.eq.s32.totalorder %s126, 0
    %s129 = sadd.s32 %s128, 1
    %s130 = scalar_select %p127, %s128, %s129
    %p133 = pneg %p127
    %p134 = scmp.eq.s32.totalorder %s10, 2
    %p135 = por %p133, %p134
    %p136 = scmp.ne.s32.totalorder %s128, %s131
    %p137 = scmp.eq.s32.totalorder %s10, 0
    %p138 = por %p136, %p137
    %p139 = scmp.ne.s32.totalorder %s128, %s131
    %p140 = scmp.eq.s32.totalorder %s15, 2
    %p141 = por %p139, %p140
    %p142 = scmp.ne.s32.totalorder %s131, %s132
    %p143 = scmp.eq.s32.totalorder %s15, 0
    %p144 = por %p142, %p143
    %p145 = scmp.ne.s32.totalorder %s131, %s132
    %p146 = scmp.eq.s32.totalorder %s16, 2
    %p147 = por %p145, %p146
    %p149 = scmp.ne.s32.totalorder %s132, %s148
    %p150 = scmp.eq.s32.totalorder %s16, 0
    %p151 = por %p149, %p150
    %p152 = scmp.le.s32.totalorder 1, %s10
    %p153 = scmp.lt.s32.totalorder %s10, 4
    %p154 = pnand %p152, %p153
    %p155 = pneg %p154
    // Predicated region
    $region9: #{vqvae2_forward.35} parent=5 // pred_check
      _
    $region10: #{vqvae2_forward.35} parent=5 // pred_check_branch
      %157 = sbr.rel (%p154) target = $region12
    $region11: #{vqvae2_forward.35} parent=5 // pred_region
      %s158 = ssub.s32 %s10, 1
      // Predicated region
      $region13: #{vqvae2_forward.35} parent=11 // pred_check
        %p159 = pneg %p97
      $region14: #{vqvae2_forward.35} parent=11 // pred_check_branch
        %161 = sbr.rel (%p159) target = $region16
      $region15: #{vqvae2_forward.35} parent=11 // pred_region
        _
      $region16: #{vqvae2_forward.35} parent=11 // pred_fallthru
        _
      // Predicated region
      $region17: #{vqvae2_forward.35} parent=11 // pred_check
        %p162 = pneg %p118
      $region18: #{vqvae2_forward.35} parent=11 // pred_check_branch
        %164 = sbr.rel (%p162) target = $region20
      $region19: #{vqvae2_forward.35} parent=11 // pred_region
        _
      $region20: #{vqvae2_forward.35} parent=11 // pred_fallthru
        _
    $region12: #{vqvae2_forward.35} parent=5 // pred_fallthru
      _
    %p165 = scmp.lt.s32.totalorder %s10, 3
    // Predicated region
    $region21: #{vqvae2_forward.35} parent=5 // pred_check
      %p166 = pneg %p165
    $region22: #{vqvae2_forward.35} parent=5 // pred_check_branch
      %168 = sbr.rel (%p166) target = $region24
    $region23: #{vqvae2_forward.35} parent=5 // pred_region
      // Predicated region
      $region25: #{vqvae2_forward.35} parent=23 // pred_check
        %p169 = pneg %p44
      $region26: #{vqvae2_forward.35} parent=23 // pred_check_branch
        %171 = sbr.rel (%p169) target = $region28
      $region27: #{vqvae2_forward.35} parent=23 // pred_region
        %p172 = scmp.lt.s32.totalorder %s17, 0
        %s173 = scalar_select %p172, %s17, 0
        %p174 = scmp.lt.s32.totalorder %s18, 2
        %s175 = scalar_select %p174, %s18, 2
        %s176 = smul.addr %s173, 3
        %s177 = sadd.s32 %s175, %s176
        %s178 = smul.addr %s177, 4
        %s179 = scalar_lea.vmem %s0, %s178
      $region28: #{vqvae2_forward.35} parent=23 // pred_fallthru
        _
      // Predicated region
      $region29: #{vqvae2_forward.35} parent=23 // pred_check
        %p180 = pneg %p70
      $region30: #{vqvae2_forward.35} parent=23 // pred_check_branch
        %182 = sbr.rel (%p180) target = $region32
      $region31: #{vqvae2_forward.35} parent=23 // pred_region
        %s183 = smul.u32 16, %s18
        %p184 = scmp.lt.s32.totalorder %s183, 47
        %s185 = scalar_select %p184, %s183, 47
        %s186 = smul.addr %s185, 4
        %s187 = scalar_lea.vmem %s1, %s186
        %s188 = smul.u32 16, %s18
      $region32: #{vqvae2_forward.35} parent=23 // pred_fallthru
        _
    $region24: #{vqvae2_forward.35} parent=5 // pred_fallthru
      _
    %p189 = scmp.le.s32.totalorder 1, %s10
    %p190 = scmp.lt.s32.totalorder %s10, 4
    %p191 = pnand %p189, %p190
    %p192 = pneg %p191
    // Predicated region
    $region33: #{vqvae2_forward.35} parent=5 // pred_check
      _
    $region34: #{vqvae2_forward.35} parent=5 // pred_check_branch
      %194 = sbr.rel (%p191) target = $region36
    $region35: #{vqvae2_forward.35} parent=5 // pred_region
      %s195 = ssub.s32 %s10, 1
      %p196 = scmp.lt.s32.totalorder %s19, 0
      %s197 = scalar_select %p196, %s19, 0
      %p198 = scmp.lt.s32.totalorder %s20, 2
      %s199 = scalar_select %p198, %s20, 2
      %s200 = smul.addr %s197, 3
      %s201 = sadd.s32 %s199, %s200
      %s202 = smul.addr %s201, 4
      %s203 = scalar_lea.vmem %s0, %s202
      %p204 = pneg %p50
      %p205 = pneg %p47
      %s206 = smul.u32 16, %s20
      %p207 = scmp.lt.s32.totalorder %s206, 47
      %s208 = scalar_select %p207, %s206, 47
      %s209 = smul.addr %s208, 4
      %s210 = scalar_lea.vmem %s1, %s209
      %p211 = pneg %p76
      %p212 = pneg %p73
      %p213 = pneg %p97
      %p214 = pneg %p94
      %p215 = pneg %p118
      %p216 = pneg %p115
      %p217 = pneg %p144
      %p218 = pneg %p141
      %p219 = scmp.lt.s32.totalorder %s19, 0
      %s220 = scalar_select %p219, %s19, 0
      %s221 = smul.addr %s220, 4
      %s222 = scalar_lea.vmem %s4, %s221
      %p223 = scmp.lt.s32.totalorder %s19, 0
      %s224 = scalar_select %p223, %s19, 0
      %p225 = scmp.lt.s32.totalorder %s20, 2
      %s226 = scalar_select %p225, %s20, 2
      %s227 = smul.addr %s224, 3
      %s228 = sadd.s32 %s226, %s227
      %s229 = smul.addr %s228, 4
      %s230 = scalar_lea.vmem %s0, %s229
      %s231 = smul.u32 16, %s20
      %p232 = scmp.lt.s32.totalorder %s231, 47
      %s233 = scalar_select %p232, %s231, 47
      %s234 = smul.addr %s233, 4
      %s235 = scalar_lea.vmem %s1, %s234
      %s236 = smul.u32 16, %s20
      %p237 = scmp.lt.s32.totalorder %s19, 0
      %s238 = scalar_select %p237, %s19, 0
      %s239 = smul.addr %s238, 4
      %s240 = scalar_lea.vmem %s4, %s239
      %p242 = scmp.eq.s32.totalorder %s20, 0
      // Predicated region
      $region37: #{vqvae2_forward.35} parent=35 // pred_check
        %p243 = pneg %p242
      $region38: #{vqvae2_forward.35} parent=35 // pred_check_branch
        %245 = sbr.rel (%p243) target = $region40
      $region39: #{vqvae2_forward.35} parent=35 // pred_region
        %vm246 = vcmask 261120
        %247 = vst.msk [vmem:[#allocation2] sm:$0xff] %vm246, 0.0
      $region40: #{vqvae2_forward.35} parent=35 // pred_fallthru
        _
      %v248 = vld [vmem:[#allocation2] sm:$0xff]
      %v249 = vld [vmem:[%s230] sm:$0xf]
      %v250 = vld [vmem:[%s235] sm:$0xf]
      %v251 = vld [vmem:[%s235 + $0x4] sm:$0xf]
      %v252 = vld [vmem:[%s235 + $0x8] sm:$0xf]
      %v253 = vld [vmem:[%s235 + $0xc] sm:$0xf]
      %v254 = vld [vmem:[%s235 + $0x10] sm:$0xf]
      %v255 = vld [vmem:[%s235 + $0x14] sm:$0xf]
      %v256 = vld [vmem:[%s235 + $0x18] sm:$0xf]
      %v257 = vld [vmem:[%s235 + $0x1c] sm:$0xf]
      %v258 = vld [vmem:[%s235 + $0x20] sm:$0xf]
      %v259 = vld [vmem:[%s235 + $0x24] sm:$0xf]
      %v260 = vld [vmem:[%s235 + $0x28] sm:$0xf]
      %v261 = vld [vmem:[%s235 + $0x2c] sm:$0xf]
      %v262 = vld [vmem:[%s235 + $0x30] sm:$0xf]
      %v263 = vld [vmem:[%s235 + $0x34] sm:$0xf]
      %v264 = vld [vmem:[%s235 + $0x38] sm:$0xf]
      %v265 = vld [vmem:[%s235 + $0x3c] sm:$0xf]
      %v282 = vunpack.c.l.b16 %v250
      %v283 = vunpack.c.l.b16 %v251
      %v284 = vunpack.c.l.b16 %v252
      %v285 = vunpack.c.l.b16 %v253
      %v286 = vunpack.c.l.b16 %v254
      %v287 = vunpack.c.l.b16 %v255
      %v288 = vunpack.c.l.b16 %v256
      %v289 = vunpack.c.l.b16 %v257
      %v290 = vunpack.c.l.b16 %v258
      %v291 = vunpack.c.l.b16 %v259
      %v292 = vunpack.c.l.b16 %v260
      %v293 = vunpack.c.l.b16 %v261
      %v294 = vunpack.c.l.b16 %v262
      %v295 = vunpack.c.l.b16 %v263
      %v296 = vunpack.c.l.b16 %v264
      %v297 = vunpack.c.l.b16 %v265
      %v298 = vpack.c.b16 %v283, %v282
      %v299 = vpack.c.b16 %v285, %v284
      %v300 = vpack.c.b16 %v287, %v286
      %v301 = vpack.c.b16 %v289, %v288
      %v302 = vpack.c.b16 %v291, %v290
      %v303 = vpack.c.b16 %v293, %v292
      %v304 = vpack.c.b16 %v295, %v294
      %v305 = vpack.c.b16 %v297, %v296
      %314 = vmatprep.subr.bf16.mxu0 0
      %315 = vmatpush1.bf16.msra.mxu0 %v305
      %316 = vmatprep.subr.bf16.mxu0 0
      %317 = vmatpush1.bf16.msra.mxu0 %v304
      %318 = vmatprep.subr.bf16.mxu0 0
      %319 = vmatpush1.bf16.msra.mxu0 %v303
      %320 = vmatprep.subr.bf16.mxu0 0
      %321 = vmatpush1.bf16.msra.mxu0 %v302
      %322 = vmatprep.subr.bf16.mxu0 0
      %323 = vmatpush1.bf16.msra.mxu0 %v301
      %324 = vmatprep.subr.bf16.mxu0 0
      %325 = vmatpush1.bf16.msra.mxu0 %v300
      %326 = vmatprep.subr.bf16.mxu0 0
      %327 = vmatpush1.bf16.msra.mxu0 %v299
      %328 = vmatprep.subr.bf16.mxu0 0
      %329 = vmatpush1.bf16.msra.mxu0 %v298
      %330 = vmatprep.subr.bf16.mxu0 0
      %331 = vmatpush2.bf16.msra.mxu0 0
      %332 = vmatprep.subr.bf16.mxu0 0
      %333 = vmatpush2.bf16.msra.mxu0 0
      %334 = vmatprep.subr.bf16.mxu0 0
      %335 = vmatpush2.bf16.msra.mxu0 0
      %336 = vmatprep.subr.bf16.mxu0 0
      %337 = vmatpush2.bf16.msra.mxu0 0
      %338 = vmatprep.subr.bf16.mxu0 0
      %339 = vmatpush2.bf16.msra.mxu0 0
      %340 = vmatprep.subr.bf16.mxu0 0
      %341 = vmatpush2.bf16.msra.mxu0 0
      %342 = vmatprep.subr.bf16.mxu0 0
      %343 = vmatpush2.bf16.msra.mxu0 0
      %344 = vmatprep.subr.bf16.mxu0 0
      %345 = vmatpush2.bf16.msra.mxu0 0
      %346 = vmatprep.mubr.bf16.mxu0 0
      %347 = vmatmul.mubr.bf16.gmra.mxu0 %v249
      %v348 = vpop.f32.mrf.mxu0
      %v349 = vadd.f32 0.0, %v348
      %v350 = vpop.f32.mrf.mxu0
      %v351 = vpop.f32.mrf.mxu0
      %v352 = vpop.f32.mrf.mxu0
      %353 = vdwg.mxu0
      %v354 = vadd.f32 %v248, %v349
      %vm355 = vcmask 261120
      %356 = vst.msk [vmem:[#allocation2] sm:$0xff] %vm355, %v354
      %p357 = scmp.eq.s32.totalorder %s20, 2
      // Predicated region
      $region41: #{vqvae2_forward.35} parent=35 // pred_check
        %p358 = pneg %p357
      $region42: #{vqvae2_forward.35} parent=35 // pred_check_branch
        %360 = sbr.rel (%p358) target = $region44
      $region43: #{vqvae2_forward.35} parent=35 // pred_region
        %v361 = vld [vmem:[#allocation2] sm:$0xff]
        %v362 = vld [vmem:[%s2] sm:$0x1]
        %v364 = vlaneseq
        %v365 = vshrl.u32 %v364, 7
        %v366 = vsub.s32 0, %v365
        %v367 = vrot.slane %v362, %v366
        %v369 = vmul.f32 %v361, %v367
        %v370 = vld [vmem:[%s3] sm:$0x1]
        %v372 = vlaneseq
        %v373 = vshrl.u32 %v372, 7
        %v374 = vsub.s32 0, %v373
        %v375 = vrot.slane %v370, %v374
        %v377 = vadd.f32 %v369, %v375
        %v378 = vmax.f32 %v377, 0.0
        %v379 = vpack.c.bf16 %v378, %v378
        %vm380 = vcmask 257024
        %381 = vst.msk [vmem:[%s240] sm:$0xf] %vm380, %v379
      $region44: #{vqvae2_forward.35} parent=35 // pred_fallthru
        _
      %p382 = scmp.lt.s32.totalorder %s19, 0
      %s383 = scalar_select %p382, %s19, 0
      %s384 = smul.addr %s383, 4
      %s385 = scalar_lea.vmem %s4, %s384
      // Predicated region
      $region45: #{vqvae2_forward.35} parent=35 // pred_check
        %p386 = pneg %p141
      $region46: #{vqvae2_forward.35} parent=35 // pred_check_branch
        %388 = sbr.rel (%p386) target = $region48
      $region47: #{vqvae2_forward.35} parent=35 // pred_region
        _
      $region48: #{vqvae2_forward.35} parent=35 // pred_fallthru
        _
      // Predicated region
      $region49: #{vqvae2_forward.35} parent=35 // pred_check
        %p389 = pneg %p141
      $region50: #{vqvae2_forward.35} parent=35 // pred_check_branch
        %391 = sbr.rel (%p389) target = $region52
      $region51: #{vqvae2_forward.35} parent=35 // pred_region
        %p392 = scmp.lt.s32.totalorder %s19, 0
        %s393 = scalar_select %p392, %s19, 0
        %s394 = smul.addr %s393, 4
        %s395 = scalar_lea.vmem %s4, %s394
      $region52: #{vqvae2_forward.35} parent=35 // pred_fallthru
        _
    $region36: #{vqvae2_forward.35} parent=5 // pred_fallthru
      _
    %p396 = scmp.le.s32.totalorder 2, %s10
    // Predicated region
    $region53: #{vqvae2_forward.35} parent=5 // pred_check
      %p397 = pneg %p396
    $region54: #{vqvae2_forward.35} parent=5 // pred_check_branch
      %399 = sbr.rel (%p397) target = $region56
    $region55: #{vqvae2_forward.35} parent=5 // pred_region
      %s400 = ssub.s32 %s10, 2
    $region56: #{vqvae2_forward.35} parent=5 // pred_fallthru
      _
  $region6: #{vqvae2_forward.35} parent=0 // loop_footer
    %s14 = sadd.s32 1, %s10
  $region7: #{vqvae2_forward.35} parent=0 // loop_footer_branch
    %9 = sbr.rel target = $region3
  $region8: #{vqvae2_forward.35} parent=0 // loop_exit
    _

// kernel: vqvae2_forward.36
$region0: #{vqvae2_forward.36}
  #allocation0 [shape = 'u32[]', space=smem, size = 0x4, offset = 0x4, fixed_abs, tag = 'smem constant byte address 0x4 - core index']
  #allocation1 [shape = 'u32[144,128]{1,0:T(1,128)}', space=vmem, size = 0x12000, scoped, tag = 'internal scratch']
  #allocation2 [shape = 'f32[8,32]{1,0:T(8,128)}', space=vmem, size = 0x1000, scoped, tag = 'scratch operand']
  %s0 = inlined_call_operand.vmem [shape: bf16[8,32], index: 0, kind: input, shape index: {}]
  %s1 = inlined_call_operand.vmem [shape: bf16[32,32], index: 1, kind: input, shape index: {}]
  %s2 = inlined_call_operand.vmem [shape: f32[1,32], index: 2, kind: input, shape index: {}]
  %s3 = inlined_call_operand.vmem [shape: f32[1,32], index: 3, kind: input, shape index: {}]
  %s4 = inlined_call_operand.vmem [shape: bf16[8,32], index: 4, kind: output, shape index: {}]
  %s5 = sld [smem:[#allocation0]]
  $region34: #{vqvae2_forward.36} parent=0
    _
  %s7 = ssub.s32 1, %s5
  %s8 = scalar_select 0, %s7, %s5
  // Predicated region
  $region2: #{vqvae2_forward.36} parent=0 // pred_check
    _
  $region3: #{vqvae2_forward.36} parent=0 // pred_check_branch
    %10 = sbr.rel (0) target = $region5
  $region4: #{vqvae2_forward.36} parent=0 // pred_region
    _
  $region5: #{vqvae2_forward.36} parent=0 // pred_fallthru
    _
  // Predicated region
  $region6: #{vqvae2_forward.36} parent=0 // pred_check
    _
  $region7: #{vqvae2_forward.36} parent=0 // pred_check_branch
    %12 = sbr.rel (0) target = $region9
  $region8: #{vqvae2_forward.36} parent=0 // pred_region
    _
  $region9: #{vqvae2_forward.36} parent=0 // pred_fallthru
    _
  // Predicated region
  $region10: #{vqvae2_forward.36} parent=0 // pred_check
    _
  $region11: #{vqvae2_forward.36} parent=0 // pred_check_branch
    %14 = sbr.rel (0) target = $region13
  $region12: #{vqvae2_forward.36} parent=0 // pred_region
    _
  $region13: #{vqvae2_forward.36} parent=0 // pred_fallthru
    _
  // Predicated region
  $region14: #{vqvae2_forward.36} parent=0 // pred_check
    _
  $region15: #{vqvae2_forward.36} parent=0 // pred_check_branch
    %16 = sbr.rel (0) target = $region17
  $region16: #{vqvae2_forward.36} parent=0 // pred_region
    _
  $region17: #{vqvae2_forward.36} parent=0 // pred_fallthru
    _
  %p18 = scmp.eq.s32.totalorder 0, 0
  // Predicated region
  $region18: #{vqvae2_forward.36} parent=0 // pred_check
    %p19 = pneg %p18
  $region19: #{vqvae2_forward.36} parent=0 // pred_check_branch
    %21 = sbr.rel (%p19) target = $region21
  $region20: #{vqvae2_forward.36} parent=0 // pred_region
    %vm22 = vcmask 261120
    %23 = vst.msk [vmem:[#allocation2] sm:$0xff] %vm22, 0.0
  $region21: #{vqvae2_forward.36} parent=0 // pred_fallthru
    _
  %v24 = vld [vmem:[#allocation2] sm:$0xff]
  %v25 = vld [vmem:[%s0] sm:$0xf]
  %v26 = vld [vmem:[%s1] sm:$0xf]
  %v27 = vld [vmem:[%s1 + $0x4] sm:$0xf]
  %v28 = vld [vmem:[%s1 + $0x8] sm:$0xf]
  %v29 = vld [vmem:[%s1 + $0xc] sm:$0xf]
  %v34 = vunpack.c.l.b16 %v26
  %v35 = vunpack.c.l.b16 %v27
  %v36 = vunpack.c.l.b16 %v28
  %v37 = vunpack.c.l.b16 %v29
  %v38 = vpack.c.b16 %v35, %v34
  %v39 = vpack.c.b16 %v37, %v36
  %vm42 = vcmask 261120
  %v44 = vsel %vm42, %v25, 0
  %46 = vmatprep.subr.bf16.mxu0 0
  %47 = vmatpush1.bf16.msra.mxu0 0
  %48 = vmatprep.subr.bf16.mxu0 0
  %49 = vmatpush1.bf16.msra.mxu0 0
  %50 = vmatprep.subr.bf16.mxu0 0
  %51 = vmatpush1.bf16.msra.mxu0 0
  %52 = vmatprep.subr.bf16.mxu0 0
  %53 = vmatpush1.bf16.msra.mxu0 0
  %54 = vmatprep.subr.bf16.mxu0 0
  %55 = vmatpush1.bf16.msra.mxu0 0
  %56 = vmatprep.subr.bf16.mxu0 0
  %57 = vmatpush1.bf16.msra.mxu0 0
  %58 = vmatprep.subr.bf16.mxu0 0
  %59 = vmatpush1.bf16.msra.mxu0 %v39
  %60 = vmatprep.subr.bf16.mxu0 0
  %61 = vmatpush1.bf16.msra.mxu0 %v38
  %62 = vmatprep.subr.bf16.mxu0 0
  %63 = vmatpush2.bf16.msra.mxu0 0
  %64 = vmatprep.subr.bf16.mxu0 0
  %65 = vmatpush2.bf16.msra.mxu0 0
  %66 = vmatprep.subr.bf16.mxu0 0
  %67 = vmatpush2.bf16.msra.mxu0 0
  %68 = vmatprep.subr.bf16.mxu0 0
  %69 = vmatpush2.bf16.msra.mxu0 0
  %70 = vmatprep.subr.bf16.mxu0 0
  %71 = vmatpush2.bf16.msra.mxu0 0
  %72 = vmatprep.subr.bf16.mxu0 0
  %73 = vmatpush2.bf16.msra.mxu0 0
  %74 = vmatprep.subr.bf16.mxu0 0
  %75 = vmatpush2.bf16.msra.mxu0 0
  %76 = vmatprep.subr.bf16.mxu0 0
  %77 = vmatpush2.bf16.msra.mxu0 0
  %78 = vmatprep.mubr.bf16.mxu0 0
  %79 = vmatmul.mubr.bf16.gmra.mxu0 %v44
  %v80 = vpop.f32.mrf.mxu0
  %v81 = vadd.f32 0.0, %v80
  %v82 = vpop.f32.mrf.mxu0
  %v83 = vpop.f32.mrf.mxu0
  %v84 = vpop.f32.mrf.mxu0
  %85 = vdwg.mxu0
  %v86 = vadd.f32 %v24, %v81
  %87 = vst.msk [vmem:[#allocation2] sm:$0xff] %vm42, %v86
  // Predicated region
  $region22: #{vqvae2_forward.36} parent=0 // pred_check
    %p88 = pneg %p18
  $region23: #{vqvae2_forward.36} parent=0 // pred_check_branch
    %90 = sbr.rel (%p88) target = $region25
  $region24: #{vqvae2_forward.36} parent=0 // pred_region
    %v91 = vld [vmem:[#allocation2] sm:$0xff]
    %v92 = vld [vmem:[%s2] sm:$0x1]
    %v94 = vlaneseq
    %v95 = vshrl.u32 %v94, 7
    %v96 = vsub.s32 0, %v95
    %v97 = vrot.slane %v92, %v96
    %v99 = vmul.f32 %v91, %v97
    %v100 = vld [vmem:[%s3] sm:$0x1]
    %v102 = vlaneseq
    %v103 = vshrl.u32 %v102, 7
    %v104 = vsub.s32 0, %v103
    %v105 = vrot.slane %v100, %v104
    %v107 = vadd.f32 %v99, %v105
    %v108 = vpack.c.bf16 %v107, %v107
    %vm109 = vcmask 257024
    %110 = vst.msk [vmem:[%s4] sm:$0xf] %vm109, %v108
  $region25: #{vqvae2_forward.36} parent=0 // pred_fallthru
    _
  // Predicated region
  $region26: #{vqvae2_forward.36} parent=0 // pred_check
    _
  $region27: #{vqvae2_forward.36} parent=0 // pred_check_branch
    %112 = sbr.rel (0) target = $region29
  $region28: #{vqvae2_forward.36} parent=0 // pred_region
    _
  $region29: #{vqvae2_forward.36} parent=0 // pred_fallthru
    _
  // Predicated region
  $region30: #{vqvae2_forward.36} parent=0 // pred_check
    _
  $region31: #{vqvae2_forward.36} parent=0 // pred_check_branch
    %114 = sbr.rel (0) target = $region33
  $region32: #{vqvae2_forward.36} parent=0 // pred_region
    _
  $region33: #{vqvae2_forward.36} parent=0 // pred_fallthru
    _

// kernel: vqvae2_forward.37
$region0: #{vqvae2_forward.37}
  #allocation0 [shape = 'u32[]', space=smem, size = 0x4, offset = 0x4, fixed_abs, tag = 'smem constant byte address 0x4 - core index']
  #allocation1 [shape = 'u32[144,128]{1,0:T(1,128)}', space=vmem, size = 0x12000, scoped, tag = 'internal scratch']
  #allocation2 [shape = 'f32[8,32]{1,0:T(8,128)}', space=vmem, size = 0x1000, scoped, tag = 'scratch operand']
  %s0 = inlined_call_operand.vmem [shape: bf16[8,384], index: 0, kind: input, shape index: {}]
  %s1 = inlined_call_operand.vmem [shape: bf16[384,32], index: 1, kind: input, shape index: {}]
  %s2 = inlined_call_operand.vmem [shape: f32[1,32], index: 2, kind: input, shape index: {}]
  %s3 = inlined_call_operand.vmem [shape: f32[1,32], index: 3, kind: input, shape index: {}]
  %s4 = inlined_call_operand.vmem [shape: bf16[8,32], index: 4, kind: input, shape index: {}]
  %s5 = inlined_call_operand.vmem [shape: bf16[8,32], index: 5, kind: output, shape index: {}]
  %s6 = sld [smem:[#allocation0]]
  $region61: #{vqvae2_forward.37} parent=0
    _
  %s8 = ssub.s32 1, %s6
  %s9 = scalar_select 0, %s8, %s6
  loop: start=0, step=1, limit=5
  $region2: #{vqvae2_forward.37} parent=0 // loop_pre_header
    _
  $region3: #{vqvae2_forward.37} parent=0 // loop_header
    %s11 = sphi 0, %s15
    %p12 = scmp.ge.s32.totalorder %s11, 5
    %s18 = sphi 0, %s30
    %s19 = sphi 0, %s26
    %s20 = sphi 0, %s18
    %s21 = sphi 0, %s19
    %s22 = sphi 0, %s20
    %s23 = sphi 0, %s21
    %s35 = sphi 0, %s37
    %s38 = sphi 0, %s35
    %s39 = sphi 0, %s38
    %s55 = sphi 0, %s39
    %s61 = sphi 0, %s63
    %s64 = sphi 0, %s61
    %s65 = sphi 0, %s64
    %s81 = sphi 0, %s65
    %s85 = sphi 0, %s85
    %s87 = sphi 0, %s85
    %s88 = sphi 0, %s87
    %s102 = sphi 0, %s88
    %s106 = sphi 0, %s106
    %s108 = sphi 0, %s106
    %s109 = sphi 0, %s108
    %s123 = sphi 0, %s109
    %s129 = sphi 0, %s131
    %s132 = sphi 0, %s129
    %s133 = sphi 0, %s132
    %s149 = sphi 0, %s133
    %s155 = sphi 0, %s157
    %s158 = sphi 0, %s155
    %s159 = sphi 0, %s158
    %s175 = sphi 0, %s159
  $region4: #{vqvae2_forward.37} parent=0 // loop_header_branch
    %14 = sbr.rel (%p12) target = $region8
  $region5: #{vqvae2_forward.37} parent=0 // loop_body
    %s16 = ssub.s32 %s11, 1
    %s17 = ssub.s32 %s11, 2
    %s24 = sadd.s32 1, %s19
    %p25 = scmp.ge.s32.totalorder %s24, 3
    %s26 = scalar_select %p25, 0, %s24
    %s27 = sadd.s32 1, %s18
    %s28 = scalar_select %p25, %s27, %s18
    %p29 = scmp.ge.s32.totalorder %s28, 1
    %s30 = scalar_select %p29, 0, %s28
    %s31 = ssub.s32 %s18, %s30
    %s32 = ssub.s32 %s19, %s26
    %s33 = sor.u32 %s31, %s32
    %p34 = scmp.eq.s32.totalorder %s33, 0
    %s36 = sadd.s32 %s35, 1
    %s37 = scalar_select %p34, %s35, %s36
    %p40 = pneg %p34
    %p41 = scmp.eq.s32.totalorder %s11, 2
    %p42 = por %p40, %p41
    %p43 = scmp.ne.s32.totalorder %s35, %s38
    %p44 = scmp.eq.s32.totalorder %s11, 0
    %p45 = por %p43, %p44
    %p46 = scmp.ne.s32.totalorder %s35, %s38
    %p47 = scmp.eq.s32.totalorder %s16, 2
    %p48 = por %p46, %p47
    %p49 = scmp.ne.s32.totalorder %s38, %s39
    %p50 = scmp.eq.s32.totalorder %s16, 0
    %p51 = por %p49, %p50
    %p52 = scmp.ne.s32.totalorder %s38, %s39
    %p53 = scmp.eq.s32.totalorder %s17, 2
    %p54 = por %p52, %p53
    %p56 = scmp.ne.s32.totalorder %s39, %s55
    %p57 = scmp.eq.s32.totalorder %s17, 0
    %p58 = por %p56, %p57
    %s59 = ssub.s32 %s19, %s26
    %p60 = scmp.eq.s32.totalorder %s59, 0
    %s62 = sadd.s32 %s61, 1
    %s63 = scalar_select %p60, %s61, %s62
    %p66 = pneg %p60
    %p67 = scmp.eq.s32.totalorder %s11, 2
    %p68 = por %p66, %p67
    %p69 = scmp.ne.s32.totalorder %s61, %s64
    %p70 = scmp.eq.s32.totalorder %s11, 0
    %p71 = por %p69, %p70
    %p72 = scmp.ne.s32.totalorder %s61, %s64
    %p73 = scmp.eq.s32.totalorder %s16, 2
    %p74 = por %p72, %p73
    %p75 = scmp.ne.s32.totalorder %s64, %s65
    %p76 = scmp.eq.s32.totalorder %s16, 0
    %p77 = por %p75, %p76
    %p78 = scmp.ne.s32.totalorder %s64, %s65
    %p79 = scmp.eq.s32.totalorder %s17, 2
    %p80 = por %p78, %p79
    %p82 = scmp.ne.s32.totalorder %s65, %s81
    %p83 = scmp.eq.s32.totalorder %s17, 0
    %p84 = por %p82, %p83
    %s86 = sadd.s32 %s85, 1
    %p89 = scmp.eq.s32.totalorder %s11, 2
    %p90 = scmp.ne.s32.totalorder %s85, %s87
    %p91 = scmp.eq.s32.totalorder %s11, 0
    %p92 = por %p90, %p91
    %p93 = scmp.ne.s32.totalorder %s85, %s87
    %p94 = scmp.eq.s32.totalorder %s16, 2
    %p95 = por %p93, %p94
    %p96 = scmp.ne.s32.totalorder %s87, %s88
    %p97 = scmp.eq.s32.totalorder %s16, 0
    %p98 = por %p96, %p97
    %p99 = scmp.ne.s32.totalorder %s87, %s88
    %p100 = scmp.eq.s32.totalorder %s17, 2
    %p101 = por %p99, %p100
    %p103 = scmp.ne.s32.totalorder %s88, %s102
    %p104 = scmp.eq.s32.totalorder %s17, 0
    %p105 = por %p103, %p104
    %s107 = sadd.s32 %s106, 1
    %p110 = scmp.eq.s32.totalorder %s11, 2
    %p111 = scmp.ne.s32.totalorder %s106, %s108
    %p112 = scmp.eq.s32.totalorder %s11, 0
    %p113 = por %p111, %p112
    %p114 = scmp.ne.s32.totalorder %s106, %s108
    %p115 = scmp.eq.s32.totalorder %s16, 2
    %p116 = por %p114, %p115
    %p117 = scmp.ne.s32.totalorder %s108, %s109
    %p118 = scmp.eq.s32.totalorder %s16, 0
    %p119 = por %p117, %p118
    %p120 = scmp.ne.s32.totalorder %s108, %s109
    %p121 = scmp.eq.s32.totalorder %s17, 2
    %p122 = por %p120, %p121
    %p124 = scmp.ne.s32.totalorder %s109, %s123
    %p125 = scmp.eq.s32.totalorder %s17, 0
    %p126 = por %p124, %p125
    %s127 = ssub.s32 %s18, %s30
    %p128 = scmp.eq.s32.totalorder %s127, 0
    %s130 = sadd.s32 %s129, 1
    %s131 = scalar_select %p128, %s129, %s130
    %p134 = pneg %p128
    %p135 = scmp.eq.s32.totalorder %s11, 2
    %p136 = por %p134, %p135
    %p137 = scmp.ne.s32.totalorder %s129, %s132
    %p138 = scmp.eq.s32.totalorder %s11, 0
    %p139 = por %p137, %p138
    %p140 = scmp.ne.s32.totalorder %s129, %s132
    %p141 = scmp.eq.s32.totalorder %s16, 2
    %p142 = por %p140, %p141
    %p143 = scmp.ne.s32.totalorder %s132, %s133
    %p144 = scmp.eq.s32.totalorder %s16, 0
    %p145 = por %p143, %p144
    %p146 = scmp.ne.s32.totalorder %s132, %s133
    %p147 = scmp.eq.s32.totalorder %s17, 2
    %p148 = por %p146, %p147
    %p150 = scmp.ne.s32.totalorder %s133, %s149
    %p151 = scmp.eq.s32.totalorder %s17, 0
    %p152 = por %p150, %p151
    %s153 = ssub.s32 %s18, %s30
    %p154 = scmp.eq.s32.totalorder %s153, 0
    %s156 = sadd.s32 %s155, 1
    %s157 = scalar_select %p154, %s155, %s156
    %p160 = pneg %p154
    %p161 = scmp.eq.s32.totalorder %s11, 2
    %p162 = por %p160, %p161
    %p163 = scmp.ne.s32.totalorder %s155, %s158
    %p164 = scmp.eq.s32.totalorder %s11, 0
    %p165 = por %p163, %p164
    %p166 = scmp.ne.s32.totalorder %s155, %s158
    %p167 = scmp.eq.s32.totalorder %s16, 2
    %p168 = por %p166, %p167
    %p169 = scmp.ne.s32.totalorder %s158, %s159
    %p170 = scmp.eq.s32.totalorder %s16, 0
    %p171 = por %p169, %p170
    %p172 = scmp.ne.s32.totalorder %s158, %s159
    %p173 = scmp.eq.s32.totalorder %s17, 2
    %p174 = por %p172, %p173
    %p176 = scmp.ne.s32.totalorder %s159, %s175
    %p177 = scmp.eq.s32.totalorder %s17, 0
    %p178 = por %p176, %p177
    %p179 = scmp.le.s32.totalorder 1, %s11
    %p180 = scmp.lt.s32.totalorder %s11, 4
    %p181 = pnand %p179, %p180
    %p182 = pneg %p181
    // Predicated region
    $region9: #{vqvae2_forward.37} parent=5 // pred_check
      _
    $region10: #{vqvae2_forward.37} parent=5 // pred_check_branch
      %184 = sbr.rel (%p181) target = $region12
    $region11: #{vqvae2_forward.37} parent=5 // pred_region
      %s185 = ssub.s32 %s11, 1
      // Predicated region
      $region13: #{vqvae2_forward.37} parent=11 // pred_check
        %p186 = pneg %p98
      $region14: #{vqvae2_forward.37} parent=11 // pred_check_branch
        %188 = sbr.rel (%p186) target = $region16
      $region15: #{vqvae2_forward.37} parent=11 // pred_region
        _
      $region16: #{vqvae2_forward.37} parent=11 // pred_fallthru
        _
      // Predicated region
      $region17: #{vqvae2_forward.37} parent=11 // pred_check
        %p189 = pneg %p119
      $region18: #{vqvae2_forward.37} parent=11 // pred_check_branch
        %191 = sbr.rel (%p189) target = $region20
      $region19: #{vqvae2_forward.37} parent=11 // pred_region
        _
      $region20: #{vqvae2_forward.37} parent=11 // pred_fallthru
        _
      // Predicated region
      $region21: #{vqvae2_forward.37} parent=11 // pred_check
        %p192 = pneg %p145
      $region22: #{vqvae2_forward.37} parent=11 // pred_check_branch
        %194 = sbr.rel (%p192) target = $region24
      $region23: #{vqvae2_forward.37} parent=11 // pred_region
        %p195 = scmp.lt.s32.totalorder %s20, 0
        %s196 = scalar_select %p195, %s20, 0
        %s197 = smul.addr %s196, 4
        %s198 = scalar_lea.vmem %s4, %s197
      $region24: #{vqvae2_forward.37} parent=11 // pred_fallthru
        _
    $region12: #{vqvae2_forward.37} parent=5 // pred_fallthru
      _
    %p199 = scmp.lt.s32.totalorder %s11, 3
    // Predicated region
    $region25: #{vqvae2_forward.37} parent=5 // pred_check
      %p200 = pneg %p199
    $region26: #{vqvae2_forward.37} parent=5 // pred_check_branch
      %202 = sbr.rel (%p200) target = $region28
    $region27: #{vqvae2_forward.37} parent=5 // pred_region
      // Predicated region
      $region29: #{vqvae2_forward.37} parent=27 // pred_check
        %p203 = pneg %p45
      $region30: #{vqvae2_forward.37} parent=27 // pred_check_branch
        %205 = sbr.rel (%p203) target = $region32
      $region31: #{vqvae2_forward.37} parent=27 // pred_region
        %p206 = scmp.lt.s32.totalorder %s18, 0
        %s207 = scalar_select %p206, %s18, 0
        %p208 = scmp.lt.s32.totalorder %s19, 2
        %s209 = scalar_select %p208, %s19, 2
        %s210 = smul.addr %s207, 3
        %s211 = sadd.s32 %s209, %s210
        %s212 = smul.addr %s211, 4
        %s213 = scalar_lea.vmem %s0, %s212
      $region32: #{vqvae2_forward.37} parent=27 // pred_fallthru
        _
      // Predicated region
      $region33: #{vqvae2_forward.37} parent=27 // pred_check
        %p214 = pneg %p71
      $region34: #{vqvae2_forward.37} parent=27 // pred_check_branch
        %216 = sbr.rel (%p214) target = $region36
      $region35: #{vqvae2_forward.37} parent=27 // pred_region
        %s217 = smul.u32 16, %s19
        %p218 = scmp.lt.s32.totalorder %s217, 47
        %s219 = scalar_select %p218, %s217, 47
        %s220 = smul.addr %s219, 4
        %s221 = scalar_lea.vmem %s1, %s220
        %s222 = smul.u32 16, %s19
      $region36: #{vqvae2_forward.37} parent=27 // pred_fallthru
        _
    $region28: #{vqvae2_forward.37} parent=5 // pred_fallthru
      _
    %p223 = scmp.le.s32.totalorder 1, %s11
    %p224 = scmp.lt.s32.totalorder %s11, 4
    %p225 = pnand %p223, %p224
    %p226 = pneg %p225
    // Predicated region
    $region37: #{vqvae2_forward.37} parent=5 // pred_check
      _
    $region38: #{vqvae2_forward.37} parent=5 // pred_check_branch
      %228 = sbr.rel (%p225) target = $region40
    $region39: #{vqvae2_forward.37} parent=5 // pred_region
      %s229 = ssub.s32 %s11, 1
      %p230 = scmp.lt.s32.totalorder %s20, 0
      %s231 = scalar_select %p230, %s20, 0
      %p232 = scmp.lt.s32.totalorder %s21, 2
      %s233 = scalar_select %p232, %s21, 2
      %s234 = smul.addr %s231, 3
      %s235 = sadd.s32 %s233, %s234
      %s236 = smul.addr %s235, 4
      %s237 = scalar_lea.vmem %s0, %s236
      %p238 = pneg %p51
      %p239 = pneg %p48
      %s240 = smul.u32 16, %s21
      %p241 = scmp.lt.s32.totalorder %s240, 47
      %s242 = scalar_select %p241, %s240, 47
      %s243 = smul.addr %s242, 4
      %s244 = scalar_lea.vmem %s1, %s243
      %p245 = pneg %p77
      %p246 = pneg %p74
      %p247 = pneg %p98
      %p248 = pneg %p95
      %p249 = pneg %p119
      %p250 = pneg %p116
      %p251 = scmp.lt.s32.totalorder %s20, 0
      %s252 = scalar_select %p251, %s20, 0
      %s253 = smul.addr %s252, 4
      %s254 = scalar_lea.vmem %s4, %s253
      %p255 = pneg %p145
      %p256 = pneg %p142
      %p257 = pneg %p171
      %p258 = pneg %p168
      %p259 = scmp.lt.s32.totalorder %s20, 0
      %s260 = scalar_select %p259, %s20, 0
      %s261 = smul.addr %s260, 4
      %s262 = scalar_lea.vmem %s5, %s261
      %p263 = scmp.lt.s32.totalorder %s20, 0
      %s264 = scalar_select %p263, %s20, 0
      %p265 = scmp.lt.s32.totalorder %s21, 2
      %s266 = scalar_select %p265, %s21, 2
      %s267 = smul.addr %s264, 3
      %s268 = sadd.s32 %s266, %s267
      %s269 = smul.addr %s268, 4
      %s270 = scalar_lea.vmem %s0, %s269
      %s271 = smul.u32 16, %s21
      %p272 = scmp.lt.s32.totalorder %s271, 47
      %s273 = scalar_select %p272, %s271, 47
      %s274 = smul.addr %s273, 4
      %s275 = scalar_lea.vmem %s1, %s274
      %s276 = smul.u32 16, %s21
      %p277 = scmp.lt.s32.totalorder %s20, 0
      %s278 = scalar_select %p277, %s20, 0
      %s279 = smul.addr %s278, 4
      %s280 = scalar_lea.vmem %s4, %s279
      %p281 = scmp.lt.s32.totalorder %s20, 0
      %s282 = scalar_select %p281, %s20, 0
      %s283 = smul.addr %s282, 4
      %s284 = scalar_lea.vmem %s5, %s283
      %p286 = scmp.eq.s32.totalorder %s21, 0
      // Predicated region
      $region41: #{vqvae2_forward.37} parent=39 // pred_check
        %p287 = pneg %p286
      $region42: #{vqvae2_forward.37} parent=39 // pred_check_branch
        %289 = sbr.rel (%p287) target = $region44
      $region43: #{vqvae2_forward.37} parent=39 // pred_region
        %vm290 = vcmask 261120
        %291 = vst.msk [vmem:[#allocation2] sm:$0xff] %vm290, 0.0
      $region44: #{vqvae2_forward.37} parent=39 // pred_fallthru
        _
      %v292 = vld [vmem:[#allocation2] sm:$0xff]
      %v293 = vld [vmem:[%s270] sm:$0xf]
      %v294 = vld [vmem:[%s275] sm:$0xf]
      %v295 = vld [vmem:[%s275 + $0x4] sm:$0xf]
      %v296 = vld [vmem:[%s275 + $0x8] sm:$0xf]
      %v297 = vld [vmem:[%s275 + $0xc] sm:$0xf]
      %v298 = vld [vmem:[%s275 + $0x10] sm:$0xf]
      %v299 = vld [vmem:[%s275 + $0x14] sm:$0xf]
      %v300 = vld [vmem:[%s275 + $0x18] sm:$0xf]
      %v301 = vld [vmem:[%s275 + $0x1c] sm:$0xf]
      %v302 = vld [vmem:[%s275 + $0x20] sm:$0xf]
      %v303 = vld [vmem:[%s275 + $0x24] sm:$0xf]
      %v304 = vld [vmem:[%s275 + $0x28] sm:$0xf]
      %v305 = vld [vmem:[%s275 + $0x2c] sm:$0xf]
      %v306 = vld [vmem:[%s275 + $0x30] sm:$0xf]
      %v307 = vld [vmem:[%s275 + $0x34] sm:$0xf]
      %v308 = vld [vmem:[%s275 + $0x38] sm:$0xf]
      %v309 = vld [vmem:[%s275 + $0x3c] sm:$0xf]
      %v326 = vunpack.c.l.b16 %v294
      %v327 = vunpack.c.l.b16 %v295
      %v328 = vunpack.c.l.b16 %v296
      %v329 = vunpack.c.l.b16 %v297
      %v330 = vunpack.c.l.b16 %v298
      %v331 = vunpack.c.l.b16 %v299
      %v332 = vunpack.c.l.b16 %v300
      %v333 = vunpack.c.l.b16 %v301
      %v334 = vunpack.c.l.b16 %v302
      %v335 = vunpack.c.l.b16 %v303
      %v336 = vunpack.c.l.b16 %v304
      %v337 = vunpack.c.l.b16 %v305
      %v338 = vunpack.c.l.b16 %v306
      %v339 = vunpack.c.l.b16 %v307
      %v340 = vunpack.c.l.b16 %v308
      %v341 = vunpack.c.l.b16 %v309
      %v342 = vpack.c.b16 %v327, %v326
      %v343 = vpack.c.b16 %v329, %v328
      %v344 = vpack.c.b16 %v331, %v330
      %v345 = vpack.c.b16 %v333, %v332
      %v346 = vpack.c.b16 %v335, %v334
      %v347 = vpack.c.b16 %v337, %v336
      %v348 = vpack.c.b16 %v339, %v338
      %v349 = vpack.c.b16 %v341, %v340
      %358 = vmatprep.subr.bf16.mxu0 0
      %359 = vmatpush1.bf16.msra.mxu0 %v349
      %360 = vmatprep.subr.bf16.mxu0 0
      %361 = vmatpush1.bf16.msra.mxu0 %v348
      %362 = vmatprep.subr.bf16.mxu0 0
      %363 = vmatpush1.bf16.msra.mxu0 %v347
      %364 = vmatprep.subr.bf16.mxu0 0
      %365 = vmatpush1.bf16.msra.mxu0 %v346
      %366 = vmatprep.subr.bf16.mxu0 0
      %367 = vmatpush1.bf16.msra.mxu0 %v345
      %368 = vmatprep.subr.bf16.mxu0 0
      %369 = vmatpush1.bf16.msra.mxu0 %v344
      %370 = vmatprep.subr.bf16.mxu0 0
      %371 = vmatpush1.bf16.msra.mxu0 %v343
      %372 = vmatprep.subr.bf16.mxu0 0
      %373 = vmatpush1.bf16.msra.mxu0 %v342
      %374 = vmatprep.subr.bf16.mxu0 0
      %375 = vmatpush2.bf16.msra.mxu0 0
      %376 = vmatprep.subr.bf16.mxu0 0
      %377 = vmatpush2.bf16.msra.mxu0 0
      %378 = vmatprep.subr.bf16.mxu0 0
      %379 = vmatpush2.bf16.msra.mxu0 0
      %380 = vmatprep.subr.bf16.mxu0 0
      %381 = vmatpush2.bf16.msra.mxu0 0
      %382 = vmatprep.subr.bf16.mxu0 0
      %383 = vmatpush2.bf16.msra.mxu0 0
      %384 = vmatprep.subr.bf16.mxu0 0
      %385 = vmatpush2.bf16.msra.mxu0 0
      %386 = vmatprep.subr.bf16.mxu0 0
      %387 = vmatpush2.bf16.msra.mxu0 0
      %388 = vmatprep.subr.bf16.mxu0 0
      %389 = vmatpush2.bf16.msra.mxu0 0
      %390 = vmatprep.mubr.bf16.mxu0 0
      %391 = vmatmul.mubr.bf16.gmra.mxu0 %v293
      %v392 = vpop.f32.mrf.mxu0
      %v393 = vadd.f32 0.0, %v392
      %v394 = vpop.f32.mrf.mxu0
      %v395 = vpop.f32.mrf.mxu0
      %v396 = vpop.f32.mrf.mxu0
      %397 = vdwg.mxu0
      %v398 = vadd.f32 %v292, %v393
      %vm399 = vcmask 261120
      %400 = vst.msk [vmem:[#allocation2] sm:$0xff] %vm399, %v398
      %p401 = scmp.eq.s32.totalorder %s21, 2
      // Predicated region
      $region45: #{vqvae2_forward.37} parent=39 // pred_check
        %p402 = pneg %p401
      $region46: #{vqvae2_forward.37} parent=39 // pred_check_branch
        %404 = sbr.rel (%p402) target = $region48
      $region47: #{vqvae2_forward.37} parent=39 // pred_region
        %v405 = vld [vmem:[#allocation2] sm:$0xff]
        %v406 = vld [vmem:[%s2] sm:$0x1]
        %v408 = vlaneseq
        %v409 = vshrl.u32 %v408, 7
        %v410 = vsub.s32 0, %v409
        %v411 = vrot.slane %v406, %v410
        %v413 = vmul.f32 %v405, %v411
        %v414 = vld [vmem:[%s3] sm:$0x1]
        %v416 = vlaneseq
        %v417 = vshrl.u32 %v416, 7
        %v418 = vsub.s32 0, %v417
        %v419 = vrot.slane %v414, %v418
        %v421 = vadd.f32 %v413, %v419
        %v422 = vld [vmem:[%s280] sm:$0xf]
        %v423 = vunpack.c.l.bf16 %v422
        %v424 = vadd.f32 %v421, %v423
        %v425 = vmax.f32 %v424, 0.0
        %v426 = vpack.c.bf16 %v425, %v425
        %vm427 = vcmask 257024
        %428 = vst.msk [vmem:[%s284] sm:$0xf] %vm427, %v426
      $region48: #{vqvae2_forward.37} parent=39 // pred_fallthru
        _
      %p429 = scmp.lt.s32.totalorder %s20, 0
      %s430 = scalar_select %p429, %s20, 0
      %s431 = smul.addr %s430, 4
      %s432 = scalar_lea.vmem %s5, %s431
      // Predicated region
      $region49: #{vqvae2_forward.37} parent=39 // pred_check
        %p433 = pneg %p168
      $region50: #{vqvae2_forward.37} parent=39 // pred_check_branch
        %435 = sbr.rel (%p433) target = $region52
      $region51: #{vqvae2_forward.37} parent=39 // pred_region
        _
      $region52: #{vqvae2_forward.37} parent=39 // pred_fallthru
        _
      // Predicated region
      $region53: #{vqvae2_forward.37} parent=39 // pred_check
        %p436 = pneg %p168
      $region54: #{vqvae2_forward.37} parent=39 // pred_check_branch
        %438 = sbr.rel (%p436) target = $region56
      $region55: #{vqvae2_forward.37} parent=39 // pred_region
        %p439 = scmp.lt.s32.totalorder %s20, 0
        %s440 = scalar_select %p439, %s20, 0
        %s441 = smul.addr %s440, 4
        %s442 = scalar_lea.vmem %s5, %s441
      $region56: #{vqvae2_forward.37} parent=39 // pred_fallthru
        _
    $region40: #{vqvae2_forward.37} parent=5 // pred_fallthru
      _
    %p443 = scmp.le.s32.totalorder 2, %s11
    // Predicated region
    $region57: #{vqvae2_forward.37} parent=5 // pred_check
      %p444 = pneg %p443
    $region58: #{vqvae2_forward.37} parent=5 // pred_check_branch
      %446 = sbr.rel (%p444) target = $region60
    $region59: #{vqvae2_forward.37} parent=5 // pred_region
      %s447 = ssub.s32 %s11, 2
    $region60: #{vqvae2_forward.37} parent=5 // pred_fallthru
      _
  $region6: #{vqvae2_forward.37} parent=0 // loop_footer
    %s15 = sadd.s32 1, %s11
  $region7: #{vqvae2_forward.37} parent=0 // loop_footer_branch
    %10 = sbr.rel target = $region3
  $region8: #{vqvae2_forward.37} parent=0 // loop_exit
    _

// kernel: tile.38
$region0: #{tile.38}
  #allocation0 [shape = 's32[1]{0}', space=sflag, size = 0x4, scoped, tag = 'scoped memory for tile.38']
  %s0 = inlined_call_operand.vmem [shape: f32[32], index: 0, kind: input, shape index: {}]
  %s1 = inlined_call_operand.vmem [shape: f32[4,32], index: 1, kind: output, shape index: {}]
  // Predicated region
  $region2: #{tile.38} parent=0 // pred_check
    _
  $region3: #{tile.38} parent=0 // pred_check_branch
    %3 = sbr.rel (0) target = $region5
  $region4: #{tile.38} parent=0 // pred_region
    _
  $region5: #{tile.38} parent=0 // pred_fallthru
    _
  %v4 = vld [vmem:[%s0] ss:$0 sm:$0xff]
  %5 = vst [vmem:[%s1] sm:$0xf] %v4

// kernel: tile.43
$region0: #{tile.43}
  %s0 = inlined_call_operand.vmem [shape: f32[4,32], index: 0, kind: input, shape index: {}]
  %s1 = inlined_call_operand.vmem [shape: f32[1,128], index: 1, kind: output, shape index: {}]
  $region1: #{tile.43} parent=0
    #allocation0 [shape = 'u8[4096]{0}', space=vmem, size = 0x1000, scoped, tag = 'scoped mem for output reshape']
    #allocation1 [shape = 'u8[4096]{0}', space=vmem, size = 0x1000, scoped, tag = 'scoped mem for input reshape']
    %s3 = sshll.u32 1, 4
    %s4 = ssub.s32 %s3, 1
    %v5 = vld [vmem:[%s0] sm:%s4]
    %6 = vst [vmem:[#allocation1] sm:%s4] %v5
    %v7 = vld [vmem:[#allocation1] sm:$0x1]
    %vm8 = vcmask 261120
    %9 = vst.msk [vmem:[#allocation0] sm:$0x1] %vm8, %v7
    %s10 = scalar_lea.vmem [#allocation1], 3
    %v11 = vld [vmem:[%s10] sm:$0x1]
    %12 = vrot.lane.b32.xlu0 %v11, 96
    %v13 = vpop.permute.xlu0 %12
    %vm14 = vcmask 1048320
    %15 = vst.msk [vmem:[#allocation0] sm:$0x1] %vm14, %v13
    %s16 = scalar_lea.vmem [#allocation1], 2
    %v17 = vld [vmem:[%s16] sm:$0x1]
    %18 = vrot.lane.b32.xlu0 %v17, 64
    %v19 = vpop.permute.xlu0 %18
    %vm20 = vcmask 785920
    %21 = vst.msk [vmem:[#allocation0] sm:$0x1] %vm20, %v19
    %s22 = scalar_lea.vmem [#allocation1], 1
    %v23 = vld [vmem:[%s22] sm:$0x1]
    %24 = vrot.lane.b32.xlu0 %v23, 32
    %v25 = vpop.permute.xlu0 %24
    %vm26 = vcmask 523520
    %27 = vst.msk [vmem:[#allocation0] sm:$0x1] %vm26, %v25
    %s29 = sshll.u32 1, 1
    %s30 = ssub.s32 %s29, 1
    %v32 = vld [vmem:[#allocation0] sm:%s30]
    %s33 = sshll.u32 1, 1
    %s34 = ssub.s32 %s33, 1
    %35 = vst [vmem:[%s1] sm:%s34] %v32

// kernel: vqvae2_forward.40
$region0: #{vqvae2_forward.40}
  #allocation0 [shape = 'u32[]', space=smem, size = 0x4, offset = 0x4, fixed_abs, tag = 'smem constant byte address 0x4 - core index']
  #allocation1 [shape = 'u32[144,128]{1,0:T(1,128)}', space=vmem, size = 0x12000, scoped, tag = 'internal scratch']
  %s0 = inlined_call_operand.vmem [shape: bf16[8,32], index: 0, kind: input, shape index: {}]
  %s1 = inlined_call_operand.vmem [shape: f32[128,32], index: 1, kind: input, shape index: {}]
  %s2 = inlined_call_operand.vmem [shape: f32[1,128], index: 2, kind: input, shape index: {}]
  %s3 = inlined_call_operand.vmem [shape: f32[8,32], index: 3, kind: output, shape index: {}]
  %s4 = sld [smem:[#allocation0]]
  $region22: #{vqvae2_forward.40} parent=0
    _
  %s6 = ssub.s32 1, %s4
  %s7 = scalar_select 0, %s6, %s4
  // Predicated region
  $region2: #{vqvae2_forward.40} parent=0 // pred_check
    _
  $region3: #{vqvae2_forward.40} parent=0 // pred_check_branch
    %9 = sbr.rel (0) target = $region5
  $region4: #{vqvae2_forward.40} parent=0 // pred_region
    _
  $region5: #{vqvae2_forward.40} parent=0 // pred_fallthru
    _
  // Predicated region
  $region6: #{vqvae2_forward.40} parent=0 // pred_check
    _
  $region7: #{vqvae2_forward.40} parent=0 // pred_check_branch
    %11 = sbr.rel (0) target = $region9
  $region8: #{vqvae2_forward.40} parent=0 // pred_region
    _
  $region9: #{vqvae2_forward.40} parent=0 // pred_fallthru
    _
  // Predicated region
  $region10: #{vqvae2_forward.40} parent=0 // pred_check
    _
  $region11: #{vqvae2_forward.40} parent=0 // pred_check_branch
    %13 = sbr.rel (0) target = $region13
  $region12: #{vqvae2_forward.40} parent=0 // pred_region
    _
  $region13: #{vqvae2_forward.40} parent=0 // pred_fallthru
    _
  %v14 = vld [vmem:[%s0] sm:$0xf]
  %v15 = vunpack.c.l.bf16 %v14
  %v16 = vld [vmem:[%s1] sm:$0xff]
  %v17 = vld [vmem:[%s1 + $0x8] sm:$0xff]
  %v18 = vld [vmem:[%s1 + $0x10] sm:$0xff]
  %v19 = vld [vmem:[%s1 + $0x18] sm:$0xff]
  %v20 = vld [vmem:[%s1 + $0x20] sm:$0xff]
  %v21 = vld [vmem:[%s1 + $0x28] sm:$0xff]
  %v22 = vld [vmem:[%s1 + $0x30] sm:$0xff]
  %v23 = vld [vmem:[%s1 + $0x38] sm:$0xff]
  %v24 = vld [vmem:[%s1 + $0x40] sm:$0xff]
  %v25 = vld [vmem:[%s1 + $0x48] sm:$0xff]
  %v26 = vld [vmem:[%s1 + $0x50] sm:$0xff]
  %v27 = vld [vmem:[%s1 + $0x58] sm:$0xff]
  %v28 = vld [vmem:[%s1 + $0x60] sm:$0xff]
  %v29 = vld [vmem:[%s1 + $0x68] sm:$0xff]
  %v30 = vld [vmem:[%s1 + $0x70] sm:$0xff]
  %v31 = vld [vmem:[%s1 + $0x78] sm:$0xff]
  %vm32 = vcmask 261120
  %v34 = vsel %vm32, %v15, 0
  %v37 = vsel %vm32, %v16, 0
  %v40 = vsel %vm32, %v17, 0
  %v43 = vsel %vm32, %v18, 0
  %v46 = vsel %vm32, %v19, 0
  %v49 = vsel %vm32, %v20, 0
  %v52 = vsel %vm32, %v21, 0
  %v55 = vsel %vm32, %v22, 0
  %v58 = vsel %vm32, %v23, 0
  %v61 = vsel %vm32, %v24, 0
  %v64 = vsel %vm32, %v25, 0
  %v67 = vsel %vm32, %v26, 0
  %v70 = vsel %vm32, %v27, 0
  %v73 = vsel %vm32, %v28, 0
  %v76 = vsel %vm32, %v29, 0
  %v79 = vsel %vm32, %v30, 0
  %v82 = vsel %vm32, %v31, 0
  %84 = vmatprep.subr.mxu0 0.0
  %85 = vmatpush1.xpose.msra.mxu0 %v82
  %86 = vmatprep.subr.mxu0 0.0
  %87 = vmatpush1.xpose.msra.mxu0 %v79
  %88 = vmatprep.subr.mxu0 0.0
  %89 = vmatpush1.xpose.msra.mxu0 %v76
  %90 = vmatprep.subr.mxu0 0.0
  %91 = vmatpush1.xpose.msra.mxu0 %v73
  %92 = vmatprep.subr.mxu0 0.0
  %93 = vmatpush1.xpose.msra.mxu0 %v70
  %94 = vmatprep.subr.mxu0 0.0
  %95 = vmatpush1.xpose.msra.mxu0 %v67
  %96 = vmatprep.subr.mxu0 0.0
  %97 = vmatpush1.xpose.msra.mxu0 %v64
  %98 = vmatprep.subr.mxu0 0.0
  %99 = vmatpush1.xpose.msra.mxu0 %v61
  %100 = vmatprep.subr.mxu0 0.0
  %101 = vmatpush1.xpose.msra.mxu0 %v58
  %102 = vmatprep.subr.mxu0 0.0
  %103 = vmatpush1.xpose.msra.mxu0 %v55
  %104 = vmatprep.subr.mxu0 0.0
  %105 = vmatpush1.xpose.msra.mxu0 %v52
  %106 = vmatprep.subr.mxu0 0.0
  %107 = vmatpush1.xpose.msra.mxu0 %v49
  %108 = vmatprep.subr.mxu0 0.0
  %109 = vmatpush1.xpose.msra.mxu0 %v46
  %110 = vmatprep.subr.mxu0 0.0
  %111 = vmatpush1.xpose.msra.mxu0 %v43
  %112 = vmatprep.subr.mxu0 0.0
  %113 = vmatpush1.xpose.msra.mxu0 %v40
  %114 = vmatprep.subr.mxu0 0.0
  %115 = vmatpush1.xpose.msra.mxu0 %v37
  %116 = vmatprep.subr.mxu0 0.0
  %117 = vmatpush2.xpose.msra.mxu0 0.0
  %118 = vmatprep.subr.mxu0 0.0
  %119 = vmatpush2.xpose.msra.mxu0 0.0
  %120 = vmatprep.subr.mxu0 0.0
  %121 = vmatpush2.xpose.msra.mxu0 0.0
  %122 = vmatprep.subr.mxu0 0.0
  %123 = vmatpush2.xpose.msra.mxu0 0.0
  %124 = vmatprep.subr.mxu0 0.0
  %125 = vmatpush2.xpose.msra.mxu0 0.0
  %126 = vmatprep.subr.mxu0 0.0
  %127 = vmatpush2.xpose.msra.mxu0 0.0
  %128 = vmatprep.subr.mxu0 0.0
  %129 = vmatpush2.xpose.msra.mxu0 0.0
  %130 = vmatprep.subr.mxu0 0.0
  %131 = vmatpush2.xpose.msra.mxu0 0.0
  %132 = vmatprep.subr.mxu0 0.0
  %133 = vmatpush2.xpose.msra.mxu0 0.0
  %134 = vmatprep.subr.mxu0 0.0
  %135 = vmatpush2.xpose.msra.mxu0 0.0
  %136 = vmatprep.subr.mxu0 0.0
  %137 = vmatpush2.xpose.msra.mxu0 0.0
  %138 = vmatprep.subr.mxu0 0.0
  %139 = vmatpush2.xpose.msra.mxu0 0.0
  %140 = vmatprep.subr.mxu0 0.0
  %141 = vmatpush2.xpose.msra.mxu0 0.0
  %142 = vmatprep.subr.mxu0 0.0
  %143 = vmatpush2.xpose.msra.mxu0 0.0
  %144 = vmatprep.subr.mxu0 0.0
  %145 = vmatpush2.xpose.msra.mxu0 0.0
  %146 = vmatprep.subr.mxu0 0.0
  %147 = vmatpush2.xpose.msra.mxu0 0.0
  %148 = vmatprep.mubr.f32.mxu0 0.0
  %149 = vmatmul.mubr.f32.gmra.mxu0 %v34
  %v150 = vpop.f32.mrf.mxu0
  %v151 = vadd.f32 0.0, %v150
  %v152 = vpop.f32.mrf.mxu0
  %153 = vdwg.mxu0
  %v154 = vld [vmem:[%s2] sm:$0x1]
  %v155 = vmul.f32 %v151, 2.0
  %v157 = vlaneseq
  %v158 = vshrl.u32 %v157, 7
  %v159 = vsub.s32 0, %v158
  %v160 = vrot.slane %v154, %v159
  %v162 = vsub.f32 %v160, %v155
  %v163 = vlaneseq
  %v164 = vand.u32 %v163, 127
  %165 = vmin.xlane.f32.xlu0 %v162
  %v166 = vpop.xlane.xlu0 %165
  %vm167 = vcmp.le.f32.partialorder %v162, %v166
  %v168 = vsel %vm167, %v164, 128
  %v169 = vand.u32 %v168, 65535
  %v170 = vshra.s32 %v168, 16
  %v171 = vcvt.s32.f32 %v169
  %v172 = vcvt.s32.f32 %v170
  %173 = vmin.xlane.f32.xlu0 %v172
  %v174 = vpop.xlane.xlu0 %173
  %vm175 = vcmp.eq.f32.partialorder %v172, %v174
  %v176 = vsel %vm175, %v171, inf
  %177 = vmin.xlane.f32.xlu0 %v176
  %v178 = vpop.xlane.xlu0 %177
  %v179 = vcvt.f32.s32 %v178
  %v180 = vcvt.f32.s32 %v174
  %v181 = vshll.u32 %v180, 16
  %v182 = vadd.s32 %v181, %v179
  %vm183 = vcmp.eq.s32.totalorder %v164, %v182
  %v184 = vsel %vm183, 1, 0
  %v185 = vcvt.s32.f32 %v184
  %186 = vmatprep.subr.mxu0 0.0
  %187 = vmatpush1.msra.mxu0 %v31
  %188 = vmatprep.subr.mxu0 0.0
  %189 = vmatpush1.msra.mxu0 %v30
  %190 = vmatprep.subr.mxu0 0.0
  %191 = vmatpush1.msra.mxu0 %v29
  %192 = vmatprep.subr.mxu0 0.0
  %193 = vmatpush1.msra.mxu0 %v28
  %194 = vmatprep.subr.mxu0 0.0
  %195 = vmatpush1.msra.mxu0 %v27
  %196 = vmatprep.subr.mxu0 0.0
  %197 = vmatpush1.msra.mxu0 %v26
  %198 = vmatprep.subr.mxu0 0.0
  %199 = vmatpush1.msra.mxu0 %v25
  %200 = vmatprep.subr.mxu0 0.0
  %201 = vmatpush1.msra.mxu0 %v24
  %202 = vmatprep.subr.mxu0 0.0
  %203 = vmatpush1.msra.mxu0 %v23
  %204 = vmatprep.subr.mxu0 0.0
  %205 = vmatpush1.msra.mxu0 %v22
  %206 = vmatprep.subr.mxu0 0.0
  %207 = vmatpush1.msra.mxu0 %v21
  %208 = vmatprep.subr.mxu0 0.0
  %209 = vmatpush1.msra.mxu0 %v20
  %210 = vmatprep.subr.mxu0 0.0
  %211 = vmatpush1.msra.mxu0 %v19
  %212 = vmatprep.subr.mxu0 0.0
  %213 = vmatpush1.msra.mxu0 %v18
  %214 = vmatprep.subr.mxu0 0.0
  %215 = vmatpush1.msra.mxu0 %v17
  %216 = vmatprep.subr.mxu0 0.0
  %217 = vmatpush1.msra.mxu0 %v16
  %218 = vmatprep.subr.mxu0 0.0
  %219 = vmatpush2.msra.mxu0 0.0
  %220 = vmatprep.subr.mxu0 0.0
  %221 = vmatpush2.msra.mxu0 0.0
  %222 = vmatprep.subr.mxu0 0.0
  %223 = vmatpush2.msra.mxu0 0.0
  %224 = vmatprep.subr.mxu0 0.0
  %225 = vmatpush2.msra.mxu0 0.0
  %226 = vmatprep.subr.mxu0 0.0
  %227 = vmatpush2.msra.mxu0 0.0
  %228 = vmatprep.subr.mxu0 0.0
  %229 = vmatpush2.msra.mxu0 0.0
  %230 = vmatprep.subr.mxu0 0.0
  %231 = vmatpush2.msra.mxu0 0.0
  %232 = vmatprep.subr.mxu0 0.0
  %233 = vmatpush2.msra.mxu0 0.0
  %234 = vmatprep.subr.mxu0 0.0
  %235 = vmatpush2.msra.mxu0 0.0
  %236 = vmatprep.subr.mxu0 0.0
  %237 = vmatpush2.msra.mxu0 0.0
  %238 = vmatprep.subr.mxu0 0.0
  %239 = vmatpush2.msra.mxu0 0.0
  %240 = vmatprep.subr.mxu0 0.0
  %241 = vmatpush2.msra.mxu0 0.0
  %242 = vmatprep.subr.mxu0 0.0
  %243 = vmatpush2.msra.mxu0 0.0
  %244 = vmatprep.subr.mxu0 0.0
  %245 = vmatpush2.msra.mxu0 0.0
  %246 = vmatprep.subr.mxu0 0.0
  %247 = vmatpush2.msra.mxu0 0.0
  %248 = vmatprep.subr.mxu0 0.0
  %249 = vmatpush2.msra.mxu0 0.0
  %250 = vmatprep.mubr.f32.mxu0 0.0
  %251 = vmatmul.mubr.f32.gmra.mxu0 %v185
  %v252 = vpop.f32.mrf.mxu0
  %v253 = vadd.f32 0.0, %v252
  %v254 = vpop.f32.mrf.mxu0
  %255 = vdwg.mxu0
  %256 = vst.msk [vmem:[%s3] sm:$0xff] %vm32, %v253
  // Predicated region
  $region14: #{vqvae2_forward.40} parent=0 // pred_check
    _
  $region15: #{vqvae2_forward.40} parent=0 // pred_check_branch
    %258 = sbr.rel (0) target = $region17
  $region16: #{vqvae2_forward.40} parent=0 // pred_region
    _
  $region17: #{vqvae2_forward.40} parent=0 // pred_fallthru
    _
  // Predicated region
  $region18: #{vqvae2_forward.40} parent=0 // pred_check
    _
  $region19: #{vqvae2_forward.40} parent=0 // pred_check_branch
    %260 = sbr.rel (0) target = $region21
  $region20: #{vqvae2_forward.40} parent=0 // pred_region
    _
  $region21: #{vqvae2_forward.40} parent=0 // pred_fallthru
    _

// kernel: vqvae2_forward.42
$region0: #{vqvae2_forward.42}
  #allocation0 [shape = 'u32[]', space=smem, size = 0x4, offset = 0x4, fixed_abs, tag = 'smem constant byte address 0x4 - core index']
  #allocation1 [shape = 'u32[144,128]{1,0:T(1,128)}', space=vmem, size = 0x12000, scoped, tag = 'internal scratch']
  #allocation2 [shape = 'f32[8,32]{1,0:T(8,128)}', space=vmem, size = 0x1000, scoped, tag = 'scratch operand']
  %s0 = inlined_call_operand.vmem [shape: bf16[8,384], index: 0, kind: input, shape index: {}]
  %s1 = inlined_call_operand.vmem [shape: bf16[384,32], index: 1, kind: input, shape index: {}]
  %s2 = inlined_call_operand.vmem [shape: f32[1,32], index: 2, kind: input, shape index: {}]
  %s3 = inlined_call_operand.vmem [shape: f32[1,32], index: 3, kind: input, shape index: {}]
  %s4 = inlined_call_operand.vmem [shape: f32[8,32], index: 4, kind: input, shape index: {}]
  %s5 = inlined_call_operand.vmem [shape: bf16[8,32], index: 5, kind: output, shape index: {}]
  %s6 = sld [smem:[#allocation0]]
  $region61: #{vqvae2_forward.42} parent=0
    _
  %s8 = ssub.s32 1, %s6
  %s9 = scalar_select 0, %s8, %s6
  loop: start=0, step=1, limit=5
  $region2: #{vqvae2_forward.42} parent=0 // loop_pre_header
    _
  $region3: #{vqvae2_forward.42} parent=0 // loop_header
    %s11 = sphi 0, %s15
    %p12 = scmp.ge.s32.totalorder %s11, 5
    %s18 = sphi 0, %s30
    %s19 = sphi 0, %s26
    %s20 = sphi 0, %s18
    %s21 = sphi 0, %s19
    %s22 = sphi 0, %s20
    %s23 = sphi 0, %s21
    %s35 = sphi 0, %s37
    %s38 = sphi 0, %s35
    %s39 = sphi 0, %s38
    %s55 = sphi 0, %s39
    %s61 = sphi 0, %s63
    %s64 = sphi 0, %s61
    %s65 = sphi 0, %s64
    %s81 = sphi 0, %s65
    %s85 = sphi 0, %s85
    %s87 = sphi 0, %s85
    %s88 = sphi 0, %s87
    %s102 = sphi 0, %s88
    %s106 = sphi 0, %s106
    %s108 = sphi 0, %s106
    %s109 = sphi 0, %s108
    %s123 = sphi 0, %s109
    %s129 = sphi 0, %s131
    %s132 = sphi 0, %s129
    %s133 = sphi 0, %s132
    %s149 = sphi 0, %s133
    %s155 = sphi 0, %s157
    %s158 = sphi 0, %s155
    %s159 = sphi 0, %s158
    %s175 = sphi 0, %s159
  $region4: #{vqvae2_forward.42} parent=0 // loop_header_branch
    %14 = sbr.rel (%p12) target = $region8
  $region5: #{vqvae2_forward.42} parent=0 // loop_body
    %s16 = ssub.s32 %s11, 1
    %s17 = ssub.s32 %s11, 2
    %s24 = sadd.s32 1, %s19
    %p25 = scmp.ge.s32.totalorder %s24, 3
    %s26 = scalar_select %p25, 0, %s24
    %s27 = sadd.s32 1, %s18
    %s28 = scalar_select %p25, %s27, %s18
    %p29 = scmp.ge.s32.totalorder %s28, 1
    %s30 = scalar_select %p29, 0, %s28
    %s31 = ssub.s32 %s18, %s30
    %s32 = ssub.s32 %s19, %s26
    %s33 = sor.u32 %s31, %s32
    %p34 = scmp.eq.s32.totalorder %s33, 0
    %s36 = sadd.s32 %s35, 1
    %s37 = scalar_select %p34, %s35, %s36
    %p40 = pneg %p34
    %p41 = scmp.eq.s32.totalorder %s11, 2
    %p42 = por %p40, %p41
    %p43 = scmp.ne.s32.totalorder %s35, %s38
    %p44 = scmp.eq.s32.totalorder %s11, 0
    %p45 = por %p43, %p44
    %p46 = scmp.ne.s32.totalorder %s35, %s38
    %p47 = scmp.eq.s32.totalorder %s16, 2
    %p48 = por %p46, %p47
    %p49 = scmp.ne.s32.totalorder %s38, %s39
    %p50 = scmp.eq.s32.totalorder %s16, 0
    %p51 = por %p49, %p50
    %p52 = scmp.ne.s32.totalorder %s38, %s39
    %p53 = scmp.eq.s32.totalorder %s17, 2
    %p54 = por %p52, %p53
    %p56 = scmp.ne.s32.totalorder %s39, %s55
    %p57 = scmp.eq.s32.totalorder %s17, 0
    %p58 = por %p56, %p57
    %s59 = ssub.s32 %s19, %s26
    %p60 = scmp.eq.s32.totalorder %s59, 0
    %s62 = sadd.s32 %s61, 1
    %s63 = scalar_select %p60, %s61, %s62
    %p66 = pneg %p60
    %p67 = scmp.eq.s32.totalorder %s11, 2
    %p68 = por %p66, %p67
    %p69 = scmp.ne.s32.totalorder %s61, %s64
    %p70 = scmp.eq.s32.totalorder %s11, 0
    %p71 = por %p69, %p70
    %p72 = scmp.ne.s32.totalorder %s61, %s64
    %p73 = scmp.eq.s32.totalorder %s16, 2
    %p74 = por %p72, %p73
    %p75 = scmp.ne.s32.totalorder %s64, %s65
    %p76 = scmp.eq.s32.totalorder %s16, 0
    %p77 = por %p75, %p76
    %p78 = scmp.ne.s32.totalorder %s64, %s65
    %p79 = scmp.eq.s32.totalorder %s17, 2
    %p80 = por %p78, %p79
    %p82 = scmp.ne.s32.totalorder %s65, %s81
    %p83 = scmp.eq.s32.totalorder %s17, 0
    %p84 = por %p82, %p83
    %s86 = sadd.s32 %s85, 1
    %p89 = scmp.eq.s32.totalorder %s11, 2
    %p90 = scmp.ne.s32.totalorder %s85, %s87
    %p91 = scmp.eq.s32.totalorder %s11, 0
    %p92 = por %p90, %p91
    %p93 = scmp.ne.s32.totalorder %s85, %s87
    %p94 = scmp.eq.s32.totalorder %s16, 2
    %p95 = por %p93, %p94
    %p96 = scmp.ne.s32.totalorder %s87, %s88
    %p97 = scmp.eq.s32.totalorder %s16, 0
    %p98 = por %p96, %p97
    %p99 = scmp.ne.s32.totalorder %s87, %s88
    %p100 = scmp.eq.s32.totalorder %s17, 2
    %p101 = por %p99, %p100
    %p103 = scmp.ne.s32.totalorder %s88, %s102
    %p104 = scmp.eq.s32.totalorder %s17, 0
    %p105 = por %p103, %p104
    %s107 = sadd.s32 %s106, 1
    %p110 = scmp.eq.s32.totalorder %s11, 2
    %p111 = scmp.ne.s32.totalorder %s106, %s108
    %p112 = scmp.eq.s32.totalorder %s11, 0
    %p113 = por %p111, %p112
    %p114 = scmp.ne.s32.totalorder %s106, %s108
    %p115 = scmp.eq.s32.totalorder %s16, 2
    %p116 = por %p114, %p115
    %p117 = scmp.ne.s32.totalorder %s108, %s109
    %p118 = scmp.eq.s32.totalorder %s16, 0
    %p119 = por %p117, %p118
    %p120 = scmp.ne.s32.totalorder %s108, %s109
    %p121 = scmp.eq.s32.totalorder %s17, 2
    %p122 = por %p120, %p121
    %p124 = scmp.ne.s32.totalorder %s109, %s123
    %p125 = scmp.eq.s32.totalorder %s17, 0
    %p126 = por %p124, %p125
    %s127 = ssub.s32 %s18, %s30
    %p128 = scmp.eq.s32.totalorder %s127, 0
    %s130 = sadd.s32 %s129, 1
    %s131 = scalar_select %p128, %s129, %s130
    %p134 = pneg %p128
    %p135 = scmp.eq.s32.totalorder %s11, 2
    %p136 = por %p134, %p135
    %p137 = scmp.ne.s32.totalorder %s129, %s132
    %p138 = scmp.eq.s32.totalorder %s11, 0
    %p139 = por %p137, %p138
    %p140 = scmp.ne.s32.totalorder %s129, %s132
    %p141 = scmp.eq.s32.totalorder %s16, 2
    %p142 = por %p140, %p141
    %p143 = scmp.ne.s32.totalorder %s132, %s133
    %p144 = scmp.eq.s32.totalorder %s16, 0
    %p145 = por %p143, %p144
    %p146 = scmp.ne.s32.totalorder %s132, %s133
    %p147 = scmp.eq.s32.totalorder %s17, 2
    %p148 = por %p146, %p147
    %p150 = scmp.ne.s32.totalorder %s133, %s149
    %p151 = scmp.eq.s32.totalorder %s17, 0
    %p152 = por %p150, %p151
    %s153 = ssub.s32 %s18, %s30
    %p154 = scmp.eq.s32.totalorder %s153, 0
    %s156 = sadd.s32 %s155, 1
    %s157 = scalar_select %p154, %s155, %s156
    %p160 = pneg %p154
    %p161 = scmp.eq.s32.totalorder %s11, 2
    %p162 = por %p160, %p161
    %p163 = scmp.ne.s32.totalorder %s155, %s158
    %p164 = scmp.eq.s32.totalorder %s11, 0
    %p165 = por %p163, %p164
    %p166 = scmp.ne.s32.totalorder %s155, %s158
    %p167 = scmp.eq.s32.totalorder %s16, 2
    %p168 = por %p166, %p167
    %p169 = scmp.ne.s32.totalorder %s158, %s159
    %p170 = scmp.eq.s32.totalorder %s16, 0
    %p171 = por %p169, %p170
    %p172 = scmp.ne.s32.totalorder %s158, %s159
    %p173 = scmp.eq.s32.totalorder %s17, 2
    %p174 = por %p172, %p173
    %p176 = scmp.ne.s32.totalorder %s159, %s175
    %p177 = scmp.eq.s32.totalorder %s17, 0
    %p178 = por %p176, %p177
    %p179 = scmp.le.s32.totalorder 1, %s11
    %p180 = scmp.lt.s32.totalorder %s11, 4
    %p181 = pnand %p179, %p180
    %p182 = pneg %p181
    // Predicated region
    $region9: #{vqvae2_forward.42} parent=5 // pred_check
      _
    $region10: #{vqvae2_forward.42} parent=5 // pred_check_branch
      %184 = sbr.rel (%p181) target = $region12
    $region11: #{vqvae2_forward.42} parent=5 // pred_region
      %s185 = ssub.s32 %s11, 1
      // Predicated region
      $region13: #{vqvae2_forward.42} parent=11 // pred_check
        %p186 = pneg %p98
      $region14: #{vqvae2_forward.42} parent=11 // pred_check_branch
        %188 = sbr.rel (%p186) target = $region16
      $region15: #{vqvae2_forward.42} parent=11 // pred_region
        _
      $region16: #{vqvae2_forward.42} parent=11 // pred_fallthru
        _
      // Predicated region
      $region17: #{vqvae2_forward.42} parent=11 // pred_check
        %p189 = pneg %p119
      $region18: #{vqvae2_forward.42} parent=11 // pred_check_branch
        %191 = sbr.rel (%p189) target = $region20
      $region19: #{vqvae2_forward.42} parent=11 // pred_region
        _
      $region20: #{vqvae2_forward.42} parent=11 // pred_fallthru
        _
      // Predicated region
      $region21: #{vqvae2_forward.42} parent=11 // pred_check
        %p192 = pneg %p145
      $region22: #{vqvae2_forward.42} parent=11 // pred_check_branch
        %194 = sbr.rel (%p192) target = $region24
      $region23: #{vqvae2_forward.42} parent=11 // pred_region
        %p195 = scmp.lt.s32.totalorder %s20, 0
        %s196 = scalar_select %p195, %s20, 0
        %s197 = smul.addr %s196, 8
        %s198 = scalar_lea.vmem %s4, %s197
      $region24: #{vqvae2_forward.42} parent=11 // pred_fallthru
        _
    $region12: #{vqvae2_forward.42} parent=5 // pred_fallthru
      _
    %p199 = scmp.lt.s32.totalorder %s11, 3
    // Predicated region
    $region25: #{vqvae2_forward.42} parent=5 // pred_check
      %p200 = pneg %p199
    $region26: #{vqvae2_forward.42} parent=5 // pred_check_branch
      %202 = sbr.rel (%p200) target = $region28
    $region27: #{vqvae2_forward.42} parent=5 // pred_region
      // Predicated region
      $region29: #{vqvae2_forward.42} parent=27 // pred_check
        %p203 = pneg %p45
      $region30: #{vqvae2_forward.42} parent=27 // pred_check_branch
        %205 = sbr.rel (%p203) target = $region32
      $region31: #{vqvae2_forward.42} parent=27 // pred_region
        %p206 = scmp.lt.s32.totalorder %s18, 0
        %s207 = scalar_select %p206, %s18, 0
        %p208 = scmp.lt.s32.totalorder %s19, 2
        %s209 = scalar_select %p208, %s19, 2
        %s210 = smul.addr %s207, 3
        %s211 = sadd.s32 %s209, %s210
        %s212 = smul.addr %s211, 4
        %s213 = scalar_lea.vmem %s0, %s212
      $region32: #{vqvae2_forward.42} parent=27 // pred_fallthru
        _
      // Predicated region
      $region33: #{vqvae2_forward.42} parent=27 // pred_check
        %p214 = pneg %p71
      $region34: #{vqvae2_forward.42} parent=27 // pred_check_branch
        %216 = sbr.rel (%p214) target = $region36
      $region35: #{vqvae2_forward.42} parent=27 // pred_region
        %s217 = smul.u32 16, %s19
        %p218 = scmp.lt.s32.totalorder %s217, 47
        %s219 = scalar_select %p218, %s217, 47
        %s220 = smul.addr %s219, 4
        %s221 = scalar_lea.vmem %s1, %s220
        %s222 = smul.u32 16, %s19
      $region36: #{vqvae2_forward.42} parent=27 // pred_fallthru
        _
    $region28: #{vqvae2_forward.42} parent=5 // pred_fallthru
      _
    %p223 = scmp.le.s32.totalorder 1, %s11
    %p224 = scmp.lt.s32.totalorder %s11, 4
    %p225 = pnand %p223, %p224
    %p226 = pneg %p225
    // Predicated region
    $region37: #{vqvae2_forward.42} parent=5 // pred_check
      _
    $region38: #{vqvae2_forward.42} parent=5 // pred_check_branch
      %228 = sbr.rel (%p225) target = $region40
    $region39: #{vqvae2_forward.42} parent=5 // pred_region
      %s229 = ssub.s32 %s11, 1
      %p230 = scmp.lt.s32.totalorder %s20, 0
      %s231 = scalar_select %p230, %s20, 0
      %p232 = scmp.lt.s32.totalorder %s21, 2
      %s233 = scalar_select %p232, %s21, 2
      %s234 = smul.addr %s231, 3
      %s235 = sadd.s32 %s233, %s234
      %s236 = smul.addr %s235, 4
      %s237 = scalar_lea.vmem %s0, %s236
      %p238 = pneg %p51
      %p239 = pneg %p48
      %s240 = smul.u32 16, %s21
      %p241 = scmp.lt.s32.totalorder %s240, 47
      %s242 = scalar_select %p241, %s240, 47
      %s243 = smul.addr %s242, 4
      %s244 = scalar_lea.vmem %s1, %s243
      %p245 = pneg %p77
      %p246 = pneg %p74
      %p247 = pneg %p98
      %p248 = pneg %p95
      %p249 = pneg %p119
      %p250 = pneg %p116
      %p251 = scmp.lt.s32.totalorder %s20, 0
      %s252 = scalar_select %p251, %s20, 0
      %s253 = smul.addr %s252, 8
      %s254 = scalar_lea.vmem %s4, %s253
      %p255 = pneg %p145
      %p256 = pneg %p142
      %p257 = pneg %p171
      %p258 = pneg %p168
      %p259 = scmp.lt.s32.totalorder %s20, 0
      %s260 = scalar_select %p259, %s20, 0
      %s261 = smul.addr %s260, 4
      %s262 = scalar_lea.vmem %s5, %s261
      %p263 = scmp.lt.s32.totalorder %s20, 0
      %s264 = scalar_select %p263, %s20, 0
      %p265 = scmp.lt.s32.totalorder %s21, 2
      %s266 = scalar_select %p265, %s21, 2
      %s267 = smul.addr %s264, 3
      %s268 = sadd.s32 %s266, %s267
      %s269 = smul.addr %s268, 4
      %s270 = scalar_lea.vmem %s0, %s269
      %s271 = smul.u32 16, %s21
      %p272 = scmp.lt.s32.totalorder %s271, 47
      %s273 = scalar_select %p272, %s271, 47
      %s274 = smul.addr %s273, 4
      %s275 = scalar_lea.vmem %s1, %s274
      %s276 = smul.u32 16, %s21
      %p277 = scmp.lt.s32.totalorder %s20, 0
      %s278 = scalar_select %p277, %s20, 0
      %s279 = smul.addr %s278, 8
      %s280 = scalar_lea.vmem %s4, %s279
      %p281 = scmp.lt.s32.totalorder %s20, 0
      %s282 = scalar_select %p281, %s20, 0
      %s283 = smul.addr %s282, 4
      %s284 = scalar_lea.vmem %s5, %s283
      %p286 = scmp.eq.s32.totalorder %s21, 0
      // Predicated region
      $region41: #{vqvae2_forward.42} parent=39 // pred_check
        %p287 = pneg %p286
      $region42: #{vqvae2_forward.42} parent=39 // pred_check_branch
        %289 = sbr.rel (%p287) target = $region44
      $region43: #{vqvae2_forward.42} parent=39 // pred_region
        %vm290 = vcmask 261120
        %291 = vst.msk [vmem:[#allocation2] sm:$0xff] %vm290, 0.0
      $region44: #{vqvae2_forward.42} parent=39 // pred_fallthru
        _
      %v292 = vld [vmem:[#allocation2] sm:$0xff]
      %v293 = vld [vmem:[%s270] sm:$0xf]
      %v294 = vld [vmem:[%s275] sm:$0xf]
      %v295 = vld [vmem:[%s275 + $0x4] sm:$0xf]
      %v296 = vld [vmem:[%s275 + $0x8] sm:$0xf]
      %v297 = vld [vmem:[%s275 + $0xc] sm:$0xf]
      %v298 = vld [vmem:[%s275 + $0x10] sm:$0xf]
      %v299 = vld [vmem:[%s275 + $0x14] sm:$0xf]
      %v300 = vld [vmem:[%s275 + $0x18] sm:$0xf]
      %v301 = vld [vmem:[%s275 + $0x1c] sm:$0xf]
      %v302 = vld [vmem:[%s275 + $0x20] sm:$0xf]
      %v303 = vld [vmem:[%s275 + $0x24] sm:$0xf]
      %v304 = vld [vmem:[%s275 + $0x28] sm:$0xf]
      %v305 = vld [vmem:[%s275 + $0x2c] sm:$0xf]
      %v306 = vld [vmem:[%s275 + $0x30] sm:$0xf]
      %v307 = vld [vmem:[%s275 + $0x34] sm:$0xf]
      %v308 = vld [vmem:[%s275 + $0x38] sm:$0xf]
      %v309 = vld [vmem:[%s275 + $0x3c] sm:$0xf]
      %v326 = vunpack.c.l.b16 %v294
      %v327 = vunpack.c.l.b16 %v295
      %v328 = vunpack.c.l.b16 %v296
      %v329 = vunpack.c.l.b16 %v297
      %v330 = vunpack.c.l.b16 %v298
      %v331 = vunpack.c.l.b16 %v299
      %v332 = vunpack.c.l.b16 %v300
      %v333 = vunpack.c.l.b16 %v301
      %v334 = vunpack.c.l.b16 %v302
      %v335 = vunpack.c.l.b16 %v303
      %v336 = vunpack.c.l.b16 %v304
      %v337 = vunpack.c.l.b16 %v305
      %v338 = vunpack.c.l.b16 %v306
      %v339 = vunpack.c.l.b16 %v307
      %v340 = vunpack.c.l.b16 %v308
      %v341 = vunpack.c.l.b16 %v309
      %v342 = vpack.c.b16 %v327, %v326
      %v343 = vpack.c.b16 %v329, %v328
      %v344 = vpack.c.b16 %v331, %v330
      %v345 = vpack.c.b16 %v333, %v332
      %v346 = vpack.c.b16 %v335, %v334
      %v347 = vpack.c.b16 %v337, %v336
      %v348 = vpack.c.b16 %v339, %v338
      %v349 = vpack.c.b16 %v341, %v340
      %358 = vmatprep.subr.bf16.mxu0 0
      %359 = vmatpush1.bf16.msra.mxu0 %v349
      %360 = vmatprep.subr.bf16.mxu0 0
      %361 = vmatpush1.bf16.msra.mxu0 %v348
      %362 = vmatprep.subr.bf16.mxu0 0
      %363 = vmatpush1.bf16.msra.mxu0 %v347
      %364 = vmatprep.subr.bf16.mxu0 0
      %365 = vmatpush1.bf16.msra.mxu0 %v346
      %366 = vmatprep.subr.bf16.mxu0 0
      %367 = vmatpush1.bf16.msra.mxu0 %v345
      %368 = vmatprep.subr.bf16.mxu0 0
      %369 = vmatpush1.bf16.msra.mxu0 %v344
      %370 = vmatprep.subr.bf16.mxu0 0
      %371 = vmatpush1.bf16.msra.mxu0 %v343
      %372 = vmatprep.subr.bf16.mxu0 0
      %373 = vmatpush1.bf16.msra.mxu0 %v342
      %374 = vmatprep.subr.bf16.mxu0 0
      %375 = vmatpush2.bf16.msra.mxu0 0
      %376 = vmatprep.subr.bf16.mxu0 0
      %377 = vmatpush2.bf16.msra.mxu0 0
      %378 = vmatprep.subr.bf16.mxu0 0
      %379 = vmatpush2.bf16.msra.mxu0 0
      %380 = vmatprep.subr.bf16.mxu0 0
      %381 = vmatpush2.bf16.msra.mxu0 0
      %382 = vmatprep.subr.bf16.mxu0 0
      %383 = vmatpush2.bf16.msra.mxu0 0
      %384 = vmatprep.subr.bf16.mxu0 0
      %385 = vmatpush2.bf16.msra.mxu0 0
      %386 = vmatprep.subr.bf16.mxu0 0
      %387 = vmatpush2.bf16.msra.mxu0 0
      %388 = vmatprep.subr.bf16.mxu0 0
      %389 = vmatpush2.bf16.msra.mxu0 0
      %390 = vmatprep.mubr.bf16.mxu0 0
      %391 = vmatmul.mubr.bf16.gmra.mxu0 %v293
      %v392 = vpop.f32.mrf.mxu0
      %v393 = vadd.f32 0.0, %v392
      %v394 = vpop.f32.mrf.mxu0
      %v395 = vpop.f32.mrf.mxu0
      %v396 = vpop.f32.mrf.mxu0
      %397 = vdwg.mxu0
      %v398 = vadd.f32 %v292, %v393
      %vm399 = vcmask 261120
      %400 = vst.msk [vmem:[#allocation2] sm:$0xff] %vm399, %v398
      %p401 = scmp.eq.s32.totalorder %s21, 2
      // Predicated region
      $region45: #{vqvae2_forward.42} parent=39 // pred_check
        %p402 = pneg %p401
      $region46: #{vqvae2_forward.42} parent=39 // pred_check_branch
        %404 = sbr.rel (%p402) target = $region48
      $region47: #{vqvae2_forward.42} parent=39 // pred_region
        %v405 = vld [vmem:[#allocation2] sm:$0xff]
        %v406 = vld [vmem:[%s2] sm:$0x1]
        %v408 = vlaneseq
        %v409 = vshrl.u32 %v408, 7
        %v410 = vsub.s32 0, %v409
        %v411 = vrot.slane %v406, %v410
        %v413 = vmul.f32 %v405, %v411
        %v414 = vld [vmem:[%s3] sm:$0x1]
        %v416 = vlaneseq
        %v417 = vshrl.u32 %v416, 7
        %v418 = vsub.s32 0, %v417
        %v419 = vrot.slane %v414, %v418
        %v421 = vadd.f32 %v413, %v419
        %v422 = vld [vmem:[%s280] sm:$0xff]
        %v423 = vadd.f32 %v421, %v422
        %v424 = vmax.f32 %v423, 0.0
        %v425 = vpack.c.bf16 %v424, %v424
        %vm426 = vcmask 257024
        %427 = vst.msk [vmem:[%s284] sm:$0xf] %vm426, %v425
      $region48: #{vqvae2_forward.42} parent=39 // pred_fallthru
        _
      %p428 = scmp.lt.s32.totalorder %s20, 0
      %s429 = scalar_select %p428, %s20, 0
      %s430 = smul.addr %s429, 4
      %s431 = scalar_lea.vmem %s5, %s430
      // Predicated region
      $region49: #{vqvae2_forward.42} parent=39 // pred_check
        %p432 = pneg %p168
      $region50: #{vqvae2_forward.42} parent=39 // pred_check_branch
        %434 = sbr.rel (%p432) target = $region52
      $region51: #{vqvae2_forward.42} parent=39 // pred_region
        _
      $region52: #{vqvae2_forward.42} parent=39 // pred_fallthru
        _
      // Predicated region
      $region53: #{vqvae2_forward.42} parent=39 // pred_check
        %p435 = pneg %p168
      $region54: #{vqvae2_forward.42} parent=39 // pred_check_branch
        %437 = sbr.rel (%p435) target = $region56
      $region55: #{vqvae2_forward.42} parent=39 // pred_region
        %p438 = scmp.lt.s32.totalorder %s20, 0
        %s439 = scalar_select %p438, %s20, 0
        %s440 = smul.addr %s439, 4
        %s441 = scalar_lea.vmem %s5, %s440
      $region56: #{vqvae2_forward.42} parent=39 // pred_fallthru
        _
    $region40: #{vqvae2_forward.42} parent=5 // pred_fallthru
      _
    %p442 = scmp.le.s32.totalorder 2, %s11
    // Predicated region
    $region57: #{vqvae2_forward.42} parent=5 // pred_check
      %p443 = pneg %p442
    $region58: #{vqvae2_forward.42} parent=5 // pred_check_branch
      %445 = sbr.rel (%p443) target = $region60
    $region59: #{vqvae2_forward.42} parent=5 // pred_region
      %s446 = ssub.s32 %s11, 2
    $region60: #{vqvae2_forward.42} parent=5 // pred_fallthru
      _
  $region6: #{vqvae2_forward.42} parent=0 // loop_footer
    %s15 = sadd.s32 1, %s11
  $region7: #{vqvae2_forward.42} parent=0 // loop_footer_branch
    %10 = sbr.rel target = $region3
  $region8: #{vqvae2_forward.42} parent=0 // loop_exit
    _

// kernel: vqvae2_forward.43
$region0: #{vqvae2_forward.43}
  #allocation0 [shape = 'u32[]', space=smem, size = 0x4, offset = 0x4, fixed_abs, tag = 'smem constant byte address 0x4 - core index']
  #allocation1 [shape = 'u32[144,128]{1,0:T(1,128)}', space=vmem, size = 0x12000, scoped, tag = 'internal scratch']
  #allocation2 [shape = 'f32[8,128]{1,0:T(8,128)}', space=vmem, size = 0x1000, scoped, tag = 'scratch operand']
  %s0 = inlined_call_operand.vmem [shape: bf16[8,128], index: 0, kind: input, shape index: {}]
  %s1 = inlined_call_operand.vmem [shape: bf16[128,128], index: 1, kind: input, shape index: {}]
  %s2 = inlined_call_operand.vmem [shape: f32[1,128], index: 2, kind: input, shape index: {}]
  %s3 = inlined_call_operand.vmem [shape: f32[1,128], index: 3, kind: input, shape index: {}]
  %s4 = inlined_call_operand.vmem [shape: bf16[8,128], index: 4, kind: output, shape index: {}]
  %s5 = sld [smem:[#allocation0]]
  $region34: #{vqvae2_forward.43} parent=0
    _
  %s7 = ssub.s32 1, %s5
  %s8 = scalar_select 0, %s7, %s5
  // Predicated region
  $region2: #{vqvae2_forward.43} parent=0 // pred_check
    _
  $region3: #{vqvae2_forward.43} parent=0 // pred_check_branch
    %10 = sbr.rel (0) target = $region5
  $region4: #{vqvae2_forward.43} parent=0 // pred_region
    _
  $region5: #{vqvae2_forward.43} parent=0 // pred_fallthru
    _
  // Predicated region
  $region6: #{vqvae2_forward.43} parent=0 // pred_check
    _
  $region7: #{vqvae2_forward.43} parent=0 // pred_check_branch
    %12 = sbr.rel (0) target = $region9
  $region8: #{vqvae2_forward.43} parent=0 // pred_region
    _
  $region9: #{vqvae2_forward.43} parent=0 // pred_fallthru
    _
  // Predicated region
  $region10: #{vqvae2_forward.43} parent=0 // pred_check
    _
  $region11: #{vqvae2_forward.43} parent=0 // pred_check_branch
    %14 = sbr.rel (0) target = $region13
  $region12: #{vqvae2_forward.43} parent=0 // pred_region
    _
  $region13: #{vqvae2_forward.43} parent=0 // pred_fallthru
    _
  // Predicated region
  $region14: #{vqvae2_forward.43} parent=0 // pred_check
    _
  $region15: #{vqvae2_forward.43} parent=0 // pred_check_branch
    %16 = sbr.rel (0) target = $region17
  $region16: #{vqvae2_forward.43} parent=0 // pred_region
    _
  $region17: #{vqvae2_forward.43} parent=0 // pred_fallthru
    _
  %p18 = scmp.eq.s32.totalorder 0, 0
  // Predicated region
  $region18: #{vqvae2_forward.43} parent=0 // pred_check
    %p19 = pneg %p18
  $region19: #{vqvae2_forward.43} parent=0 // pred_check_branch
    %21 = sbr.rel (%p19) target = $region21
  $region20: #{vqvae2_forward.43} parent=0 // pred_region
    %22 = vst [vmem:[#allocation2] sm:$0xff] 0.0
  $region21: #{vqvae2_forward.43} parent=0 // pred_fallthru
    _
  %v23 = vld [vmem:[#allocation2] sm:$0xff]
  %v24 = vld [vmem:[%s0] sm:$0xf]
  %v25 = vld [vmem:[%s1] sm:$0xf]
  %v26 = vld [vmem:[%s1 + $0x4] sm:$0xf]
  %v27 = vld [vmem:[%s1 + $0x8] sm:$0xf]
  %v28 = vld [vmem:[%s1 + $0xc] sm:$0xf]
  %v29 = vld [vmem:[%s1 + $0x10] sm:$0xf]
  %v30 = vld [vmem:[%s1 + $0x14] sm:$0xf]
  %v31 = vld [vmem:[%s1 + $0x18] sm:$0xf]
  %v32 = vld [vmem:[%s1 + $0x1c] sm:$0xf]
  %v33 = vld [vmem:[%s1 + $0x20] sm:$0xf]
  %v34 = vld [vmem:[%s1 + $0x24] sm:$0xf]
  %v35 = vld [vmem:[%s1 + $0x28] sm:$0xf]
  %v36 = vld [vmem:[%s1 + $0x2c] sm:$0xf]
  %v37 = vld [vmem:[%s1 + $0x30] sm:$0xf]
  %v38 = vld [vmem:[%s1 + $0x34] sm:$0xf]
  %v39 = vld [vmem:[%s1 + $0x38] sm:$0xf]
  %v40 = vld [vmem:[%s1 + $0x3c] sm:$0xf]
  %v57 = vunpack.c.l.b16 %v25
  %v58 = vunpack.c.l.b16 %v26
  %v59 = vunpack.c.l.b16 %v27
  %v60 = vunpack.c.l.b16 %v28
  %v61 = vunpack.c.l.b16 %v29
  %v62 = vunpack.c.l.b16 %v30
  %v63 = vunpack.c.l.b16 %v31
  %v64 = vunpack.c.l.b16 %v32
  %v65 = vunpack.c.l.b16 %v33
  %v66 = vunpack.c.l.b16 %v34
  %v67 = vunpack.c.l.b16 %v35
  %v68 = vunpack.c.l.b16 %v36
  %v69 = vunpack.c.l.b16 %v37
  %v70 = vunpack.c.l.b16 %v38
  %v71 = vunpack.c.l.b16 %v39
  %v72 = vunpack.c.l.b16 %v40
  %v73 = vpack.c.b16 %v58, %v57
  %v74 = vpack.c.b16 %v60, %v59
  %v75 = vpack.c.b16 %v62, %v61
  %v76 = vpack.c.b16 %v64, %v63
  %v77 = vpack.c.b16 %v66, %v65
  %v78 = vpack.c.b16 %v68, %v67
  %v79 = vpack.c.b16 %v70, %v69
  %v80 = vpack.c.b16 %v72, %v71
  %89 = vmatprep.subr.bf16.mxu0 0
  %90 = vmatpush1.bf16.msra.mxu0 %v80
  %91 = vmatprep.subr.bf16.mxu0 0
  %92 = vmatpush1.bf16.msra.mxu0 %v79
  %93 = vmatprep.subr.bf16.mxu0 0
  %94 = vmatpush1.bf16.msra.mxu0 %v78
  %95 = vmatprep.subr.bf16.mxu0 0
  %96 = vmatpush1.bf16.msra.mxu0 %v77
  %97 = vmatprep.subr.bf16.mxu0 0
  %98 = vmatpush1.bf16.msra.mxu0 %v76
  %99 = vmatprep.subr.bf16.mxu0 0
  %100 = vmatpush1.bf16.msra.mxu0 %v75
  %101 = vmatprep.subr.bf16.mxu0 0
  %102 = vmatpush1.bf16.msra.mxu0 %v74
  %103 = vmatprep.subr.bf16.mxu0 0
  %104 = vmatpush1.bf16.msra.mxu0 %v73
  %105 = vmatprep.subr.bf16.mxu0 0
  %106 = vmatpush2.bf16.msra.mxu0 0
  %107 = vmatprep.subr.bf16.mxu0 0
  %108 = vmatpush2.bf16.msra.mxu0 0
  %109 = vmatprep.subr.bf16.mxu0 0
  %110 = vmatpush2.bf16.msra.mxu0 0
  %111 = vmatprep.subr.bf16.mxu0 0
  %112 = vmatpush2.bf16.msra.mxu0 0
  %113 = vmatprep.subr.bf16.mxu0 0
  %114 = vmatpush2.bf16.msra.mxu0 0
  %115 = vmatprep.subr.bf16.mxu0 0
  %116 = vmatpush2.bf16.msra.mxu0 0
  %117 = vmatprep.subr.bf16.mxu0 0
  %118 = vmatpush2.bf16.msra.mxu0 0
  %119 = vmatprep.subr.bf16.mxu0 0
  %120 = vmatpush2.bf16.msra.mxu0 0
  %121 = vmatprep.mubr.bf16.mxu0 0
  %122 = vmatmul.mubr.bf16.gmra.mxu0 %v24
  %v123 = vpop.f32.mrf.mxu0
  %v124 = vadd.f32 0.0, %v123
  %v125 = vpop.f32.mrf.mxu0
  %v126 = vpop.f32.mrf.mxu0
  %v127 = vpop.f32.mrf.mxu0
  %128 = vdwg.mxu0
  %v129 = vadd.f32 %v23, %v124
  %130 = vst [vmem:[#allocation2] sm:$0xff] %v129
  // Predicated region
  $region22: #{vqvae2_forward.43} parent=0 // pred_check
    %p131 = pneg %p18
  $region23: #{vqvae2_forward.43} parent=0 // pred_check_branch
    %133 = sbr.rel (%p131) target = $region25
  $region24: #{vqvae2_forward.43} parent=0 // pred_region
    %v134 = vld [vmem:[#allocation2] sm:$0xff]
    %v135 = vld [vmem:[%s2] sm:$0x1]
    %v137 = vlaneseq
    %v138 = vshrl.u32 %v137, 7
    %v139 = vsub.s32 0, %v138
    %v140 = vrot.slane %v135, %v139
    %v142 = vmul.f32 %v134, %v140
    %v143 = vld [vmem:[%s3] sm:$0x1]
    %v145 = vlaneseq
    %v146 = vshrl.u32 %v145, 7
    %v147 = vsub.s32 0, %v146
    %v148 = vrot.slane %v143, %v147
    %v150 = vadd.f32 %v142, %v148
    %v151 = vmax.f32 %v150, 0.0
    %v152 = vpack.c.bf16 %v151, %v151
    %153 = vst [vmem:[%s4] sm:$0xf] %v152
  $region25: #{vqvae2_forward.43} parent=0 // pred_fallthru
    _
  // Predicated region
  $region26: #{vqvae2_forward.43} parent=0 // pred_check
    _
  $region27: #{vqvae2_forward.43} parent=0 // pred_check_branch
    %155 = sbr.rel (0) target = $region29
  $region28: #{vqvae2_forward.43} parent=0 // pred_region
    _
  $region29: #{vqvae2_forward.43} parent=0 // pred_fallthru
    _
  // Predicated region
  $region30: #{vqvae2_forward.43} parent=0 // pred_check
    _
  $region31: #{vqvae2_forward.43} parent=0 // pred_check_branch
    %157 = sbr.rel (0) target = $region33
  $region32: #{vqvae2_forward.43} parent=0 // pred_region
    _
  $region33: #{vqvae2_forward.43} parent=0 // pred_fallthru
    _

// kernel: vqvae2_forward.44
$region0: #{vqvae2_forward.44}
  #allocation0 [shape = 'u32[]', space=smem, size = 0x4, offset = 0x4, fixed_abs, tag = 'smem constant byte address 0x4 - core index']
  #allocation1 [shape = 'u32[144,128]{1,0:T(1,128)}', space=vmem, size = 0x12000, scoped, tag = 'internal scratch']
  #allocation2 [shape = 'f32[8,128]{1,0:T(8,128)}', space=vmem, size = 0x1000, scoped, tag = 'scratch operand']
  %s0 = inlined_call_operand.vmem [shape: bf16[8,32], index: 0, kind: input, shape index: {}]
  %s1 = inlined_call_operand.vmem [shape: bf16[32,128], index: 1, kind: input, shape index: {}]
  %s2 = inlined_call_operand.vmem [shape: f32[1,128], index: 2, kind: input, shape index: {}]
  %s3 = inlined_call_operand.vmem [shape: f32[1,128], index: 3, kind: input, shape index: {}]
  %s4 = inlined_call_operand.vmem [shape: bf16[8,128], index: 4, kind: output, shape index: {}]
  %s5 = sld [smem:[#allocation0]]
  $region34: #{vqvae2_forward.44} parent=0
    _
  %s7 = ssub.s32 1, %s5
  %s8 = scalar_select 0, %s7, %s5
  // Predicated region
  $region2: #{vqvae2_forward.44} parent=0 // pred_check
    _
  $region3: #{vqvae2_forward.44} parent=0 // pred_check_branch
    %10 = sbr.rel (0) target = $region5
  $region4: #{vqvae2_forward.44} parent=0 // pred_region
    _
  $region5: #{vqvae2_forward.44} parent=0 // pred_fallthru
    _
  // Predicated region
  $region6: #{vqvae2_forward.44} parent=0 // pred_check
    _
  $region7: #{vqvae2_forward.44} parent=0 // pred_check_branch
    %12 = sbr.rel (0) target = $region9
  $region8: #{vqvae2_forward.44} parent=0 // pred_region
    _
  $region9: #{vqvae2_forward.44} parent=0 // pred_fallthru
    _
  // Predicated region
  $region10: #{vqvae2_forward.44} parent=0 // pred_check
    _
  $region11: #{vqvae2_forward.44} parent=0 // pred_check_branch
    %14 = sbr.rel (0) target = $region13
  $region12: #{vqvae2_forward.44} parent=0 // pred_region
    _
  $region13: #{vqvae2_forward.44} parent=0 // pred_fallthru
    _
  // Predicated region
  $region14: #{vqvae2_forward.44} parent=0 // pred_check
    _
  $region15: #{vqvae2_forward.44} parent=0 // pred_check_branch
    %16 = sbr.rel (0) target = $region17
  $region16: #{vqvae2_forward.44} parent=0 // pred_region
    _
  $region17: #{vqvae2_forward.44} parent=0 // pred_fallthru
    _
  %p18 = scmp.eq.s32.totalorder 0, 0
  // Predicated region
  $region18: #{vqvae2_forward.44} parent=0 // pred_check
    %p19 = pneg %p18
  $region19: #{vqvae2_forward.44} parent=0 // pred_check_branch
    %21 = sbr.rel (%p19) target = $region21
  $region20: #{vqvae2_forward.44} parent=0 // pred_region
    %22 = vst [vmem:[#allocation2] sm:$0xff] 0.0
  $region21: #{vqvae2_forward.44} parent=0 // pred_fallthru
    _
  %v23 = vld [vmem:[#allocation2] sm:$0xff]
  %v24 = vld [vmem:[%s0] sm:$0xf]
  %v25 = vld [vmem:[%s1] sm:$0xf]
  %v26 = vld [vmem:[%s1 + $0x4] sm:$0xf]
  %v27 = vld [vmem:[%s1 + $0x8] sm:$0xf]
  %v28 = vld [vmem:[%s1 + $0xc] sm:$0xf]
  %v33 = vunpack.c.l.b16 %v25
  %v34 = vunpack.c.l.b16 %v26
  %v35 = vunpack.c.l.b16 %v27
  %v36 = vunpack.c.l.b16 %v28
  %v37 = vpack.c.b16 %v34, %v33
  %v38 = vpack.c.b16 %v36, %v35
  %vm41 = vcmask 261120
  %v43 = vsel %vm41, %v24, 0
  %45 = vmatprep.subr.bf16.mxu0 0
  %46 = vmatpush1.bf16.msra.mxu0 0
  %47 = vmatprep.subr.bf16.mxu0 0
  %48 = vmatpush1.bf16.msra.mxu0 0
  %49 = vmatprep.subr.bf16.mxu0 0
  %50 = vmatpush1.bf16.msra.mxu0 0
  %51 = vmatprep.subr.bf16.mxu0 0
  %52 = vmatpush1.bf16.msra.mxu0 0
  %53 = vmatprep.subr.bf16.mxu0 0
  %54 = vmatpush1.bf16.msra.mxu0 0
  %55 = vmatprep.subr.bf16.mxu0 0
  %56 = vmatpush1.bf16.msra.mxu0 0
  %57 = vmatprep.subr.bf16.mxu0 0
  %58 = vmatpush1.bf16.msra.mxu0 %v38
  %59 = vmatprep.subr.bf16.mxu0 0
  %60 = vmatpush1.bf16.msra.mxu0 %v37
  %61 = vmatprep.subr.bf16.mxu0 0
  %62 = vmatpush2.bf16.msra.mxu0 0
  %63 = vmatprep.subr.bf16.mxu0 0
  %64 = vmatpush2.bf16.msra.mxu0 0
  %65 = vmatprep.subr.bf16.mxu0 0
  %66 = vmatpush2.bf16.msra.mxu0 0
  %67 = vmatprep.subr.bf16.mxu0 0
  %68 = vmatpush2.bf16.msra.mxu0 0
  %69 = vmatprep.subr.bf16.mxu0 0
  %70 = vmatpush2.bf16.msra.mxu0 0
  %71 = vmatprep.subr.bf16.mxu0 0
  %72 = vmatpush2.bf16.msra.mxu0 0
  %73 = vmatprep.subr.bf16.mxu0 0
  %74 = vmatpush2.bf16.msra.mxu0 0
  %75 = vmatprep.subr.bf16.mxu0 0
  %76 = vmatpush2.bf16.msra.mxu0 0
  %77 = vmatprep.mubr.bf16.mxu0 0
  %78 = vmatmul.mubr.bf16.gmra.mxu0 %v43
  %v79 = vpop.f32.mrf.mxu0
  %v80 = vadd.f32 0.0, %v79
  %v81 = vpop.f32.mrf.mxu0
  %v82 = vpop.f32.mrf.mxu0
  %v83 = vpop.f32.mrf.mxu0
  %84 = vdwg.mxu0
  %v85 = vadd.f32 %v23, %v80
  %86 = vst [vmem:[#allocation2] sm:$0xff] %v85
  // Predicated region
  $region22: #{vqvae2_forward.44} parent=0 // pred_check
    %p87 = pneg %p18
  $region23: #{vqvae2_forward.44} parent=0 // pred_check_branch
    %89 = sbr.rel (%p87) target = $region25
  $region24: #{vqvae2_forward.44} parent=0 // pred_region
    %v90 = vld [vmem:[#allocation2] sm:$0xff]
    %v91 = vld [vmem:[%s2] sm:$0x1]
    %v93 = vlaneseq
    %v94 = vshrl.u32 %v93, 7
    %v95 = vsub.s32 0, %v94
    %v96 = vrot.slane %v91, %v95
    %v98 = vmul.f32 %v90, %v96
    %v99 = vld [vmem:[%s3] sm:$0x1]
    %v101 = vlaneseq
    %v102 = vshrl.u32 %v101, 7
    %v103 = vsub.s32 0, %v102
    %v104 = vrot.slane %v99, %v103
    %v106 = vadd.f32 %v98, %v104
    %v107 = vpack.c.bf16 %v106, %v106
    %108 = vst [vmem:[%s4] sm:$0xf] %v107
  $region25: #{vqvae2_forward.44} parent=0 // pred_fallthru
    _
  // Predicated region
  $region26: #{vqvae2_forward.44} parent=0 // pred_check
    _
  $region27: #{vqvae2_forward.44} parent=0 // pred_check_branch
    %110 = sbr.rel (0) target = $region29
  $region28: #{vqvae2_forward.44} parent=0 // pred_region
    _
  $region29: #{vqvae2_forward.44} parent=0 // pred_fallthru
    _
  // Predicated region
  $region30: #{vqvae2_forward.44} parent=0 // pred_check
    _
  $region31: #{vqvae2_forward.44} parent=0 // pred_check_branch
    %112 = sbr.rel (0) target = $region33
  $region32: #{vqvae2_forward.44} parent=0 // pred_region
    _
  $region33: #{vqvae2_forward.44} parent=0 // pred_fallthru
    _

// kernel: vqvae2_forward.46
$region0: #{vqvae2_forward.46}
  #allocation0 [shape = 'u32[]', space=smem, size = 0x4, offset = 0x4, fixed_abs, tag = 'smem constant byte address 0x4 - core index']
  #allocation1 [shape = 'u32[144,128]{1,0:T(1,128)}', space=vmem, size = 0x12000, scoped, tag = 'internal scratch']
  #allocation2 [shape = 'f32[32,32]{1,0:T(8,128)}', space=vmem, size = 0x4000, scoped, tag = 'scratch operand']
  %s0 = inlined_call_operand.vmem [shape: bf16[32,32], index: 0, kind: input, shape index: {}]
  %s1 = inlined_call_operand.vmem [shape: bf16[32,32], index: 1, kind: input, shape index: {}]
  %s2 = inlined_call_operand.vmem [shape: bf16[32,32], index: 2, kind: input, shape index: {}]
  %s3 = inlined_call_operand.vmem [shape: bf16[32,32], index: 3, kind: input, shape index: {}]
  %s4 = inlined_call_operand.vmem [shape: f32[1,32], index: 4, kind: input, shape index: {}]
  %s5 = inlined_call_operand.vmem [shape: f32[1,32], index: 5, kind: input, shape index: {}]
  %s6 = inlined_call_operand.vmem [shape: bf16[32,32], index: 6, kind: output, shape index: {}]
  %s7 = sld [smem:[#allocation0]]
  $region42: #{vqvae2_forward.46} parent=0
    _
  %s9 = ssub.s32 1, %s7
  %s10 = scalar_select 0, %s9, %s7
  // Predicated region
  $region2: #{vqvae2_forward.46} parent=0 // pred_check
    _
  $region3: #{vqvae2_forward.46} parent=0 // pred_check_branch
    %12 = sbr.rel (0) target = $region5
  $region4: #{vqvae2_forward.46} parent=0 // pred_region
    _
  $region5: #{vqvae2_forward.46} parent=0 // pred_fallthru
    _
  // Predicated region
  $region6: #{vqvae2_forward.46} parent=0 // pred_check
    _
  $region7: #{vqvae2_forward.46} parent=0 // pred_check_branch
    %14 = sbr.rel (0) target = $region9
  $region8: #{vqvae2_forward.46} parent=0 // pred_region
    _
  $region9: #{vqvae2_forward.46} parent=0 // pred_fallthru
    _
  // Predicated region
  $region10: #{vqvae2_forward.46} parent=0 // pred_check
    _
  $region11: #{vqvae2_forward.46} parent=0 // pred_check_branch
    %16 = sbr.rel (0) target = $region13
  $region12: #{vqvae2_forward.46} parent=0 // pred_region
    _
  $region13: #{vqvae2_forward.46} parent=0 // pred_fallthru
    _
  // Predicated region
  $region14: #{vqvae2_forward.46} parent=0 // pred_check
    _
  $region15: #{vqvae2_forward.46} parent=0 // pred_check_branch
    %18 = sbr.rel (0) target = $region17
  $region16: #{vqvae2_forward.46} parent=0 // pred_region
    _
  $region17: #{vqvae2_forward.46} parent=0 // pred_fallthru
    _
  // Predicated region
  $region18: #{vqvae2_forward.46} parent=0 // pred_check
    _
  $region19: #{vqvae2_forward.46} parent=0 // pred_check_branch
    %20 = sbr.rel (0) target = $region21
  $region20: #{vqvae2_forward.46} parent=0 // pred_region
    _
  $region21: #{vqvae2_forward.46} parent=0 // pred_fallthru
    _
  // Predicated region
  $region22: #{vqvae2_forward.46} parent=0 // pred_check
    _
  $region23: #{vqvae2_forward.46} parent=0 // pred_check_branch
    %22 = sbr.rel (0) target = $region25
  $region24: #{vqvae2_forward.46} parent=0 // pred_region
    _
  $region25: #{vqvae2_forward.46} parent=0 // pred_fallthru
    _
  %p24 = scmp.eq.s32.totalorder 0, 0
  // Predicated region
  $region26: #{vqvae2_forward.46} parent=0 // pred_check
    %p25 = pneg %p24
  $region27: #{vqvae2_forward.46} parent=0 // pred_check_branch
    %27 = sbr.rel (%p25) target = $region29
  $region28: #{vqvae2_forward.46} parent=0 // pred_region
    %vm28 = vcmask 261120
    %29 = vst.msk [vmem:[#allocation2] sm:$0xff] %vm28, 0.0
    %30 = vst.msk [vmem:[#allocation2 + $0x8] sm:$0xff] %vm28, 0.0
    %31 = vst.msk [vmem:[#allocation2 + $0x10] sm:$0xff] %vm28, 0.0
    %32 = vst.msk [vmem:[#allocation2 + $0x18] sm:$0xff] %vm28, 0.0
  $region29: #{vqvae2_forward.46} parent=0 // pred_fallthru
    _
  %v33 = vld [vmem:[#allocation2] sm:$0xff]
  %v34 = vld [vmem:[#allocation2 + $0x8] sm:$0xff]
  %v35 = vld [vmem:[#allocation2 + $0x10] sm:$0xff]
  %v36 = vld [vmem:[#allocation2 + $0x18] sm:$0xff]
  %v37 = vld [vmem:[%s0] sm:$0xf]
  %v38 = vld [vmem:[%s0 + $0x4] sm:$0xf]
  %v39 = vld [vmem:[%s0 + $0x8] sm:$0xf]
  %v40 = vld [vmem:[%s0 + $0xc] sm:$0xf]
  %v41 = vld [vmem:[%s1] sm:$0xf]
  %v42 = vld [vmem:[%s1 + $0x4] sm:$0xf]
  %v43 = vld [vmem:[%s1 + $0x8] sm:$0xf]
  %v44 = vld [vmem:[%s1 + $0xc] sm:$0xf]
  %v49 = vunpack.c.l.b16 %v37
  %v50 = vunpack.c.l.b16 %v38
  %v51 = vunpack.c.l.b16 %v39
  %v52 = vunpack.c.l.b16 %v40
  %v53 = vpack.c.b16 %v50, %v49
  %v54 = vpack.c.b16 %v52, %v51
  %v59 = vunpack.c.l.b16 %v41
  %v60 = vunpack.c.l.b16 %v42
  %v61 = vunpack.c.l.b16 %v43
  %v62 = vunpack.c.l.b16 %v44
  %v63 = vpack.c.b16 %v60, %v59
  %v64 = vpack.c.b16 %v62, %v61
  %vm67 = vcmask 261120
  %v69 = vsel %vm67, %v53, 0
  %v72 = vsel %vm67, %v54, 0
  %74 = vmatprep.subr.bf16.mxu0 0
  %75 = vmatpush1.bf16.msra.mxu0 0
  %76 = vmatprep.subr.bf16.mxu0 0
  %77 = vmatpush1.bf16.msra.mxu0 0
  %78 = vmatprep.subr.bf16.mxu0 0
  %79 = vmatpush1.bf16.msra.mxu0 0
  %80 = vmatprep.subr.bf16.mxu0 0
  %81 = vmatpush1.bf16.msra.mxu0 0
  %82 = vmatprep.subr.bf16.mxu0 0
  %83 = vmatpush1.bf16.msra.mxu0 0
  %84 = vmatprep.subr.bf16.mxu0 0
  %85 = vmatpush1.bf16.msra.mxu0 0
  %86 = vmatprep.subr.bf16.mxu0 0
  %87 = vmatpush1.bf16.msra.mxu0 %v64
  %88 = vmatprep.subr.bf16.mxu0 0
  %89 = vmatpush1.bf16.msra.mxu0 %v63
  %90 = vmatprep.subr.bf16.mxu0 0
  %91 = vmatpush2.bf16.msra.mxu0 0
  %92 = vmatprep.subr.bf16.mxu0 0
  %93 = vmatpush2.bf16.msra.mxu0 0
  %94 = vmatprep.subr.bf16.mxu0 0
  %95 = vmatpush2.bf16.msra.mxu0 0
  %96 = vmatprep.subr.bf16.mxu0 0
  %97 = vmatpush2.bf16.msra.mxu0 0
  %98 = vmatprep.subr.bf16.mxu0 0
  %99 = vmatpush2.bf16.msra.mxu0 0
  %100 = vmatprep.subr.bf16.mxu0 0
  %101 = vmatpush2.bf16.msra.mxu0 0
  %102 = vmatprep.subr.bf16.mxu0 0
  %103 = vmatpush2.bf16.msra.mxu0 0
  %104 = vmatprep.subr.bf16.mxu0 0
  %105 = vmatpush2.bf16.msra.mxu0 0
  %106 = vmatprep.mubr.bf16.mxu0 0
  %107 = vmatmul.mubr.bf16.gmra.mxu0 %v69
  %v108 = vpop.f32.mrf.mxu0
  %v109 = vadd.f32 0.0, %v108
  %v110 = vpop.f32.mrf.mxu0
  %v111 = vpop.f32.mrf.mxu0
  %v112 = vadd.f32 0.0, %v111
  %v113 = vpop.f32.mrf.mxu0
  %114 = vmatprep.mubr.bf16.mxu0 0
  %115 = vmatmul.mubr.bf16.gmra.mxu0 %v72
  %v116 = vpop.f32.mrf.mxu0
  %v117 = vadd.f32 0.0, %v116
  %v118 = vpop.f32.mrf.mxu0
  %v119 = vpop.f32.mrf.mxu0
  %v120 = vadd.f32 0.0, %v119
  %v121 = vpop.f32.mrf.mxu0
  %122 = vdwg.mxu0
  %v123 = vadd.f32 %v33, %v109
  %v124 = vadd.f32 %v34, %v112
  %v125 = vadd.f32 %v35, %v117
  %v126 = vadd.f32 %v36, %v120
  %127 = vst.msk [vmem:[#allocation2] sm:$0xff] %vm67, %v123
  %128 = vst.msk [vmem:[#allocation2 + $0x8] sm:$0xff] %vm67, %v124
  %129 = vst.msk [vmem:[#allocation2 + $0x10] sm:$0xff] %vm67, %v125
  %130 = vst.msk [vmem:[#allocation2 + $0x18] sm:$0xff] %vm67, %v126
  // Predicated region
  $region30: #{vqvae2_forward.46} parent=0 // pred_check
    %p131 = pneg %p24
  $region31: #{vqvae2_forward.46} parent=0 // pred_check_branch
    %133 = sbr.rel (%p131) target = $region33
  $region32: #{vqvae2_forward.46} parent=0 // pred_region
    %v134 = vld [vmem:[#allocation2] sm:$0xff]
    %v135 = vld [vmem:[#allocation2 + $0x8] sm:$0xff]
    %v136 = vld [vmem:[#allocation2 + $0x10] sm:$0xff]
    %v137 = vld [vmem:[#allocation2 + $0x18] sm:$0xff]
    %v138 = vld [vmem:[%s2] sm:$0xf]
    %v139 = vld [vmem:[%s2 + $0x4] sm:$0xf]
    %v140 = vld [vmem:[%s2 + $0x8] sm:$0xf]
    %v141 = vld [vmem:[%s2 + $0xc] sm:$0xf]
    %v142 = vld [vmem:[%s3] sm:$0xf]
    %v143 = vld [vmem:[%s3 + $0x4] sm:$0xf]
    %v144 = vld [vmem:[%s3 + $0x8] sm:$0xf]
    %v145 = vld [vmem:[%s3 + $0xc] sm:$0xf]
    %v150 = vunpack.c.l.b16 %v138
    %v151 = vunpack.c.l.b16 %v139
    %v152 = vunpack.c.l.b16 %v140
    %v153 = vunpack.c.l.b16 %v141
    %v154 = vpack.c.b16 %v151, %v150
    %v155 = vpack.c.b16 %v153, %v152
    %v160 = vunpack.c.l.b16 %v142
    %v161 = vunpack.c.l.b16 %v143
    %v162 = vunpack.c.l.b16 %v144
    %v163 = vunpack.c.l.b16 %v145
    %v164 = vpack.c.b16 %v161, %v160
    %v165 = vpack.c.b16 %v163, %v162
    %v169 = vsel %vm67, %v154, 0
    %v172 = vsel %vm67, %v155, 0
    %174 = vmatprep.subr.bf16.mxu0 0
    %175 = vmatpush1.bf16.msra.mxu0 0
    %176 = vmatprep.subr.bf16.mxu0 0
    %177 = vmatpush1.bf16.msra.mxu0 0
    %178 = vmatprep.subr.bf16.mxu0 0
    %179 = vmatpush1.bf16.msra.mxu0 0
    %180 = vmatprep.subr.bf16.mxu0 0
    %181 = vmatpush1.bf16.msra.mxu0 0
    %182 = vmatprep.subr.bf16.mxu0 0
    %183 = vmatpush1.bf16.msra.mxu0 0
    %184 = vmatprep.subr.bf16.mxu0 0
    %185 = vmatpush1.bf16.msra.mxu0 0
    %186 = vmatprep.subr.bf16.mxu0 0
    %187 = vmatpush1.bf16.msra.mxu0 %v165
    %188 = vmatprep.subr.bf16.mxu0 0
    %189 = vmatpush1.bf16.msra.mxu0 %v164
    %190 = vmatprep.subr.bf16.mxu0 0
    %191 = vmatpush2.bf16.msra.mxu0 0
    %192 = vmatprep.subr.bf16.mxu0 0
    %193 = vmatpush2.bf16.msra.mxu0 0
    %194 = vmatprep.subr.bf16.mxu0 0
    %195 = vmatpush2.bf16.msra.mxu0 0
    %196 = vmatprep.subr.bf16.mxu0 0
    %197 = vmatpush2.bf16.msra.mxu0 0
    %198 = vmatprep.subr.bf16.mxu0 0
    %199 = vmatpush2.bf16.msra.mxu0 0
    %200 = vmatprep.subr.bf16.mxu0 0
    %201 = vmatpush2.bf16.msra.mxu0 0
    %202 = vmatprep.subr.bf16.mxu0 0
    %203 = vmatpush2.bf16.msra.mxu0 0
    %204 = vmatprep.subr.bf16.mxu0 0
    %205 = vmatpush2.bf16.msra.mxu0 0
    %206 = vmatprep.mubr.bf16.mxu0 0
    %207 = vmatmul.mubr.bf16.gmra.mxu0 %v169
    %v208 = vpop.f32.mrf.mxu0
    %v209 = vadd.f32 0.0, %v208
    %v210 = vpop.f32.mrf.mxu0
    %v211 = vpop.f32.mrf.mxu0
    %v212 = vadd.f32 0.0, %v211
    %v213 = vpop.f32.mrf.mxu0
    %214 = vmatprep.mubr.bf16.mxu0 0
    %215 = vmatmul.mubr.bf16.gmra.mxu0 %v172
    %v216 = vpop.f32.mrf.mxu0
    %v217 = vadd.f32 0.0, %v216
    %v218 = vpop.f32.mrf.mxu0
    %v219 = vpop.f32.mrf.mxu0
    %v220 = vadd.f32 0.0, %v219
    %v221 = vpop.f32.mrf.mxu0
    %222 = vdwg.mxu0
    %v223 = vadd.f32 %v134, %v209
    %v224 = vadd.f32 %v135, %v212
    %v225 = vadd.f32 %v136, %v217
    %v226 = vadd.f32 %v137, %v220
    %227 = vst.msk [vmem:[#allocation2] sm:$0xff] %vm67, %v223
    %228 = vst.msk [vmem:[#allocation2 + $0x8] sm:$0xff] %vm67, %v224
    %229 = vst.msk [vmem:[#allocation2 + $0x10] sm:$0xff] %vm67, %v225
    %230 = vst.msk [vmem:[#allocation2 + $0x18] sm:$0xff] %vm67, %v226
    %v231 = vld [vmem:[#allocation2] sm:$0xff]
    %v232 = vld [vmem:[#allocation2 + $0x8] sm:$0xff]
    %v233 = vld [vmem:[#allocation2 + $0x10] sm:$0xff]
    %v234 = vld [vmem:[#allocation2 + $0x18] sm:$0xff]
    %v235 = vld [vmem:[%s4] sm:$0x1]
    %v237 = vlaneseq
    %v238 = vshrl.u32 %v237, 7
    %v239 = vsub.s32 0, %v238
    %v240 = vrot.slane %v235, %v239
    %v242 = vmul.f32 %v231, %v240
    %v243 = vmul.f32 %v232, %v240
    %v244 = vmul.f32 %v233, %v240
    %v245 = vmul.f32 %v234, %v240
    %v246 = vld [vmem:[%s5] sm:$0x1]
    %v248 = vlaneseq
    %v249 = vshrl.u32 %v248, 7
    %v250 = vsub.s32 0, %v249
    %v251 = vrot.slane %v246, %v250
    %v253 = vadd.f32 %v242, %v251
    %v254 = vadd.f32 %v243, %v251
    %v255 = vadd.f32 %v244, %v251
    %v256 = vadd.f32 %v245, %v251
    %v257 = vmax.f32 %v253, 0.0
    %v258 = vmax.f32 %v254, 0.0
    %v259 = vmax.f32 %v255, 0.0
    %v260 = vmax.f32 %v256, 0.0
    %v261 = vpack.c.bf16 %v258, %v257
    %v262 = vpack.c.bf16 %v260, %v259
    %v265 = vunpack.c.l.b16 %v261
    %v266 = vunpack.c.h.b16 %v261
    %v267 = vunpack.c.l.b16 %v262
    %v268 = vunpack.c.h.b16 %v262
    %v269 = vpack.c.b16 %v265, %v265
    %v270 = vpack.c.b16 %v266, %v266
    %v271 = vpack.c.b16 %v267, %v267
    %v272 = vpack.c.b16 %v268, %v268
    %vm277 = vcmask 257024
    %278 = vst.msk [vmem:[%s6] sm:$0xf] %vm277, %v269
    %279 = vst.msk [vmem:[%s6 + $0x4] sm:$0xf] %vm277, %v270
    %280 = vst.msk [vmem:[%s6 + $0x8] sm:$0xf] %vm277, %v271
    %281 = vst.msk [vmem:[%s6 + $0xc] sm:$0xf] %vm277, %v272
  $region33: #{vqvae2_forward.46} parent=0 // pred_fallthru
    _
  // Predicated region
  $region34: #{vqvae2_forward.46} parent=0 // pred_check
    _
  $region35: #{vqvae2_forward.46} parent=0 // pred_check_branch
    %283 = sbr.rel (0) target = $region37
  $region36: #{vqvae2_forward.46} parent=0 // pred_region
    _
  $region37: #{vqvae2_forward.46} parent=0 // pred_fallthru
    _
  // Predicated region
  $region38: #{vqvae2_forward.46} parent=0 // pred_check
    _
  $region39: #{vqvae2_forward.46} parent=0 // pred_check_branch
    %285 = sbr.rel (0) target = $region41
  $region40: #{vqvae2_forward.46} parent=0 // pred_region
    _
  $region41: #{vqvae2_forward.46} parent=0 // pred_fallthru
    _

// kernel: vqvae2_forward.47
$region0: #{vqvae2_forward.47}
  #allocation0 [shape = 'u32[]', space=smem, size = 0x4, offset = 0x4, fixed_abs, tag = 'smem constant byte address 0x4 - core index']
  #allocation1 [shape = 'u32[144,128]{1,0:T(1,128)}', space=vmem, size = 0x12000, scoped, tag = 'internal scratch']
  %s0 = inlined_call_operand.vmem [shape: bf16[32,32], index: 0, kind: input, shape index: {}]
  %s1 = inlined_call_operand.vmem [shape: f32[128,32], index: 1, kind: input, shape index: {}]
  %s2 = inlined_call_operand.vmem [shape: f32[1,128], index: 2, kind: input, shape index: {}]
  %s3 = inlined_call_operand.vmem [shape: f32[32,32], index: 3, kind: output, shape index: {}]
  %s4 = sld [smem:[#allocation0]]
  $region22: #{vqvae2_forward.47} parent=0
    _
  %s6 = ssub.s32 1, %s4
  %s7 = scalar_select 0, %s6, %s4
  // Predicated region
  $region2: #{vqvae2_forward.47} parent=0 // pred_check
    _
  $region3: #{vqvae2_forward.47} parent=0 // pred_check_branch
    %9 = sbr.rel (0) target = $region5
  $region4: #{vqvae2_forward.47} parent=0 // pred_region
    _
  $region5: #{vqvae2_forward.47} parent=0 // pred_fallthru
    _
  // Predicated region
  $region6: #{vqvae2_forward.47} parent=0 // pred_check
    _
  $region7: #{vqvae2_forward.47} parent=0 // pred_check_branch
    %11 = sbr.rel (0) target = $region9
  $region8: #{vqvae2_forward.47} parent=0 // pred_region
    _
  $region9: #{vqvae2_forward.47} parent=0 // pred_fallthru
    _
  // Predicated region
  $region10: #{vqvae2_forward.47} parent=0 // pred_check
    _
  $region11: #{vqvae2_forward.47} parent=0 // pred_check_branch
    %13 = sbr.rel (0) target = $region13
  $region12: #{vqvae2_forward.47} parent=0 // pred_region
    _
  $region13: #{vqvae2_forward.47} parent=0 // pred_fallthru
    _
  %v14 = vld [vmem:[%s0] sm:$0xf]
  %v15 = vld [vmem:[%s0 + $0x4] sm:$0xf]
  %v16 = vld [vmem:[%s0 + $0x8] sm:$0xf]
  %v17 = vld [vmem:[%s0 + $0xc] sm:$0xf]
  %v18 = vunpack.c.l.bf16 %v14
  %v19 = vunpack.c.l.bf16 %v15
  %v20 = vunpack.c.l.bf16 %v16
  %v21 = vunpack.c.l.bf16 %v17
  %v22 = vld [vmem:[%s1] sm:$0xff]
  %v23 = vld [vmem:[%s1 + $0x8] sm:$0xff]
  %v24 = vld [vmem:[%s1 + $0x10] sm:$0xff]
  %v25 = vld [vmem:[%s1 + $0x18] sm:$0xff]
  %v26 = vld [vmem:[%s1 + $0x20] sm:$0xff]
  %v27 = vld [vmem:[%s1 + $0x28] sm:$0xff]
  %v28 = vld [vmem:[%s1 + $0x30] sm:$0xff]
  %v29 = vld [vmem:[%s1 + $0x38] sm:$0xff]
  %v30 = vld [vmem:[%s1 + $0x40] sm:$0xff]
  %v31 = vld [vmem:[%s1 + $0x48] sm:$0xff]
  %v32 = vld [vmem:[%s1 + $0x50] sm:$0xff]
  %v33 = vld [vmem:[%s1 + $0x58] sm:$0xff]
  %v34 = vld [vmem:[%s1 + $0x60] sm:$0xff]
  %v35 = vld [vmem:[%s1 + $0x68] sm:$0xff]
  %v36 = vld [vmem:[%s1 + $0x70] sm:$0xff]
  %v37 = vld [vmem:[%s1 + $0x78] sm:$0xff]
  %vm38 = vcmask 261120
  %v40 = vsel %vm38, %v18, 0
  %v43 = vsel %vm38, %v19, 0
  %v46 = vsel %vm38, %v20, 0
  %v49 = vsel %vm38, %v21, 0
  %v52 = vsel %vm38, %v22, 0
  %v55 = vsel %vm38, %v23, 0
  %v58 = vsel %vm38, %v24, 0
  %v61 = vsel %vm38, %v25, 0
  %v64 = vsel %vm38, %v26, 0
  %v67 = vsel %vm38, %v27, 0
  %v70 = vsel %vm38, %v28, 0
  %v73 = vsel %vm38, %v29, 0
  %v76 = vsel %vm38, %v30, 0
  %v79 = vsel %vm38, %v31, 0
  %v82 = vsel %vm38, %v32, 0
  %v85 = vsel %vm38, %v33, 0
  %v88 = vsel %vm38, %v34, 0
  %v91 = vsel %vm38, %v35, 0
  %v94 = vsel %vm38, %v36, 0
  %v97 = vsel %vm38, %v37, 0
  %99 = vmatprep.subr.mxu0 0.0
  %100 = vmatpush1.xpose.msra.mxu0 %v97
  %101 = vmatprep.subr.mxu0 0.0
  %102 = vmatpush1.xpose.msra.mxu0 %v94
  %103 = vmatprep.subr.mxu0 0.0
  %104 = vmatpush1.xpose.msra.mxu0 %v91
  %105 = vmatprep.subr.mxu0 0.0
  %106 = vmatpush1.xpose.msra.mxu0 %v88
  %107 = vmatprep.subr.mxu0 0.0
  %108 = vmatpush1.xpose.msra.mxu0 %v85
  %109 = vmatprep.subr.mxu0 0.0
  %110 = vmatpush1.xpose.msra.mxu0 %v82
  %111 = vmatprep.subr.mxu0 0.0
  %112 = vmatpush1.xpose.msra.mxu0 %v79
  %113 = vmatprep.subr.mxu0 0.0
  %114 = vmatpush1.xpose.msra.mxu0 %v76
  %115 = vmatprep.subr.mxu0 0.0
  %116 = vmatpush1.xpose.msra.mxu0 %v73
  %117 = vmatprep.subr.mxu0 0.0
  %118 = vmatpush1.xpose.msra.mxu0 %v70
  %119 = vmatprep.subr.mxu0 0.0
  %120 = vmatpush1.xpose.msra.mxu0 %v67
  %121 = vmatprep.subr.mxu0 0.0
  %122 = vmatpush1.xpose.msra.mxu0 %v64
  %123 = vmatprep.subr.mxu0 0.0
  %124 = vmatpush1.xpose.msra.mxu0 %v61
  %125 = vmatprep.subr.mxu0 0.0
  %126 = vmatpush1.xpose.msra.mxu0 %v58
  %127 = vmatprep.subr.mxu0 0.0
  %128 = vmatpush1.xpose.msra.mxu0 %v55
  %129 = vmatprep.subr.mxu0 0.0
  %130 = vmatpush1.xpose.msra.mxu0 %v52
  %131 = vmatprep.subr.mxu0 0.0
  %132 = vmatpush2.xpose.msra.mxu0 0.0
  %133 = vmatprep.subr.mxu0 0.0
  %134 = vmatpush2.xpose.msra.mxu0 0.0
  %135 = vmatprep.subr.mxu0 0.0
  %136 = vmatpush2.xpose.msra.mxu0 0.0
  %137 = vmatprep.subr.mxu0 0.0
  %138 = vmatpush2.xpose.msra.mxu0 0.0
  %139 = vmatprep.subr.mxu0 0.0
  %140 = vmatpush2.xpose.msra.mxu0 0.0
  %141 = vmatprep.subr.mxu0 0.0
  %142 = vmatpush2.xpose.msra.mxu0 0.0
  %143 = vmatprep.subr.mxu0 0.0
  %144 = vmatpush2.xpose.msra.mxu0 0.0
  %145 = vmatprep.subr.mxu0 0.0
  %146 = vmatpush2.xpose.msra.mxu0 0.0
  %147 = vmatprep.subr.mxu0 0.0
  %148 = vmatpush2.xpose.msra.mxu0 0.0
  %149 = vmatprep.subr.mxu0 0.0
  %150 = vmatpush2.xpose.msra.mxu0 0.0
  %151 = vmatprep.subr.mxu0 0.0
  %152 = vmatpush2.xpose.msra.mxu0 0.0
  %153 = vmatprep.subr.mxu0 0.0
  %154 = vmatpush2.xpose.msra.mxu0 0.0
  %155 = vmatprep.subr.mxu0 0.0
  %156 = vmatpush2.xpose.msra.mxu0 0.0
  %157 = vmatprep.subr.mxu0 0.0
  %158 = vmatpush2.xpose.msra.mxu0 0.0
  %159 = vmatprep.subr.mxu0 0.0
  %160 = vmatpush2.xpose.msra.mxu0 0.0
  %161 = vmatprep.subr.mxu0 0.0
  %162 = vmatpush2.xpose.msra.mxu0 0.0
  %163 = vmatprep.mubr.f32.mxu0 0.0
  %164 = vmatmul.mubr.f32.gmra.mxu0 %v40
  %v165 = vpop.f32.mrf.mxu0
  %v166 = vadd.f32 0.0, %v165
  %v167 = vpop.f32.mrf.mxu0
  %168 = vmatprep.mubr.f32.mxu0 0.0
  %169 = vmatmul.mubr.f32.gmra.mxu0 %v43
  %v170 = vpop.f32.mrf.mxu0
  %v171 = vadd.f32 0.0, %v170
  %v172 = vpop.f32.mrf.mxu0
  %173 = vmatprep.mubr.f32.mxu0 0.0
  %174 = vmatmul.mubr.f32.gmra.mxu0 %v46
  %v175 = vpop.f32.mrf.mxu0
  %v176 = vadd.f32 0.0, %v175
  %v177 = vpop.f32.mrf.mxu0
  %178 = vmatprep.mubr.f32.mxu0 0.0
  %179 = vmatmul.mubr.f32.gmra.mxu0 %v49
  %v180 = vpop.f32.mrf.mxu0
  %v181 = vadd.f32 0.0, %v180
  %v182 = vpop.f32.mrf.mxu0
  %183 = vdwg.mxu0
  %v184 = vld [vmem:[%s2] sm:$0x1]
  %v185 = vmul.f32 %v166, 2.0
  %v186 = vmul.f32 %v171, 2.0
  %v187 = vmul.f32 %v176, 2.0
  %v188 = vmul.f32 %v181, 2.0
  %v190 = vlaneseq
  %v191 = vshrl.u32 %v190, 7
  %v192 = vsub.s32 0, %v191
  %v193 = vrot.slane %v184, %v192
  %v195 = vsub.f32 %v193, %v185
  %v196 = vsub.f32 %v193, %v186
  %v197 = vsub.f32 %v193, %v187
  %v198 = vsub.f32 %v193, %v188
  %v199 = vlaneseq
  %v200 = vand.u32 %v199, 127
  %201 = vmin.xlane.f32.xlu0 %v195
  %v202 = vpop.xlane.xlu0 %201
  %203 = vmin.xlane.f32.xlu0 %v196
  %v204 = vpop.xlane.xlu0 %203
  %205 = vmin.xlane.f32.xlu0 %v197
  %v206 = vpop.xlane.xlu0 %205
  %207 = vmin.xlane.f32.xlu0 %v198
  %v208 = vpop.xlane.xlu0 %207
  %vm209 = vcmp.le.f32.partialorder %v195, %v202
  %vm210 = vcmp.le.f32.partialorder %v196, %v204
  %vm211 = vcmp.le.f32.partialorder %v197, %v206
  %vm212 = vcmp.le.f32.partialorder %v198, %v208
  %v213 = vsel %vm209, %v200, 128
  %v214 = vsel %vm210, %v200, 128
  %v215 = vsel %vm211, %v200, 128
  %v216 = vsel %vm212, %v200, 128
  %v217 = vand.u32 %v213, 65535
  %v218 = vshra.s32 %v213, 16
  %v219 = vcvt.s32.f32 %v217
  %v220 = vcvt.s32.f32 %v218
  %221 = vmin.xlane.f32.xlu0 %v220
  %v222 = vpop.xlane.xlu0 %221
  %vm223 = vcmp.eq.f32.partialorder %v220, %v222
  %v224 = vsel %vm223, %v219, inf
  %225 = vmin.xlane.f32.xlu0 %v224
  %v226 = vpop.xlane.xlu0 %225
  %v227 = vcvt.f32.s32 %v226
  %v228 = vcvt.f32.s32 %v222
  %v229 = vshll.u32 %v228, 16
  %v230 = vadd.s32 %v229, %v227
  %v231 = vand.u32 %v214, 65535
  %v232 = vshra.s32 %v214, 16
  %v233 = vcvt.s32.f32 %v231
  %v234 = vcvt.s32.f32 %v232
  %235 = vmin.xlane.f32.xlu0 %v234
  %v236 = vpop.xlane.xlu0 %235
  %vm237 = vcmp.eq.f32.partialorder %v234, %v236
  %v238 = vsel %vm237, %v233, inf
  %239 = vmin.xlane.f32.xlu0 %v238
  %v240 = vpop.xlane.xlu0 %239
  %v241 = vcvt.f32.s32 %v240
  %v242 = vcvt.f32.s32 %v236
  %v243 = vshll.u32 %v242, 16
  %v244 = vadd.s32 %v243, %v241
  %v245 = vand.u32 %v215, 65535
  %v246 = vshra.s32 %v215, 16
  %v247 = vcvt.s32.f32 %v245
  %v248 = vcvt.s32.f32 %v246
  %249 = vmin.xlane.f32.xlu0 %v248
  %v250 = vpop.xlane.xlu0 %249
  %vm251 = vcmp.eq.f32.partialorder %v248, %v250
  %v252 = vsel %vm251, %v247, inf
  %253 = vmin.xlane.f32.xlu0 %v252
  %v254 = vpop.xlane.xlu0 %253
  %v255 = vcvt.f32.s32 %v254
  %v256 = vcvt.f32.s32 %v250
  %v257 = vshll.u32 %v256, 16
  %v258 = vadd.s32 %v257, %v255
  %v259 = vand.u32 %v216, 65535
  %v260 = vshra.s32 %v216, 16
  %v261 = vcvt.s32.f32 %v259
  %v262 = vcvt.s32.f32 %v260
  %263 = vmin.xlane.f32.xlu0 %v262
  %v264 = vpop.xlane.xlu0 %263
  %vm265 = vcmp.eq.f32.partialorder %v262, %v264
  %v266 = vsel %vm265, %v261, inf
  %267 = vmin.xlane.f32.xlu0 %v266
  %v268 = vpop.xlane.xlu0 %267
  %v269 = vcvt.f32.s32 %v268
  %v270 = vcvt.f32.s32 %v264
  %v271 = vshll.u32 %v270, 16
  %v272 = vadd.s32 %v271, %v269
  %vm273 = vcmp.eq.s32.totalorder %v200, %v230
  %vm274 = vcmp.eq.s32.totalorder %v200, %v244
  %vm275 = vcmp.eq.s32.totalorder %v200, %v258
  %vm276 = vcmp.eq.s32.totalorder %v200, %v272
  %v277 = vsel %vm273, 1, 0
  %v278 = vsel %vm274, 1, 0
  %v279 = vsel %vm275, 1, 0
  %v280 = vsel %vm276, 1, 0
  %v281 = vcvt.s32.f32 %v277
  %v282 = vcvt.s32.f32 %v278
  %v283 = vcvt.s32.f32 %v279
  %v284 = vcvt.s32.f32 %v280
  %285 = vmatprep.subr.mxu0 0.0
  %286 = vmatpush1.msra.mxu0 %v37
  %287 = vmatprep.subr.mxu0 0.0
  %288 = vmatpush1.msra.mxu0 %v36
  %289 = vmatprep.subr.mxu0 0.0
  %290 = vmatpush1.msra.mxu0 %v35
  %291 = vmatprep.subr.mxu0 0.0
  %292 = vmatpush1.msra.mxu0 %v34
  %293 = vmatprep.subr.mxu0 0.0
  %294 = vmatpush1.msra.mxu0 %v33
  %295 = vmatprep.subr.mxu0 0.0
  %296 = vmatpush1.msra.mxu0 %v32
  %297 = vmatprep.subr.mxu0 0.0
  %298 = vmatpush1.msra.mxu0 %v31
  %299 = vmatprep.subr.mxu0 0.0
  %300 = vmatpush1.msra.mxu0 %v30
  %301 = vmatprep.subr.mxu0 0.0
  %302 = vmatpush1.msra.mxu0 %v29
  %303 = vmatprep.subr.mxu0 0.0
  %304 = vmatpush1.msra.mxu0 %v28
  %305 = vmatprep.subr.mxu0 0.0
  %306 = vmatpush1.msra.mxu0 %v27
  %307 = vmatprep.subr.mxu0 0.0
  %308 = vmatpush1.msra.mxu0 %v26
  %309 = vmatprep.subr.mxu0 0.0
  %310 = vmatpush1.msra.mxu0 %v25
  %311 = vmatprep.subr.mxu0 0.0
  %312 = vmatpush1.msra.mxu0 %v24
  %313 = vmatprep.subr.mxu0 0.0
  %314 = vmatpush1.msra.mxu0 %v23
  %315 = vmatprep.subr.mxu0 0.0
  %316 = vmatpush1.msra.mxu0 %v22
  %317 = vmatprep.subr.mxu0 0.0
  %318 = vmatpush2.msra.mxu0 0.0
  %319 = vmatprep.subr.mxu0 0.0
  %320 = vmatpush2.msra.mxu0 0.0
  %321 = vmatprep.subr.mxu0 0.0
  %322 = vmatpush2.msra.mxu0 0.0
  %323 = vmatprep.subr.mxu0 0.0
  %324 = vmatpush2.msra.mxu0 0.0
  %325 = vmatprep.subr.mxu0 0.0
  %326 = vmatpush2.msra.mxu0 0.0
  %327 = vmatprep.subr.mxu0 0.0
  %328 = vmatpush2.msra.mxu0 0.0
  %329 = vmatprep.subr.mxu0 0.0
  %330 = vmatpush2.msra.mxu0 0.0
  %331 = vmatprep.subr.mxu0 0.0
  %332 = vmatpush2.msra.mxu0 0.0
  %333 = vmatprep.subr.mxu0 0.0
  %334 = vmatpush2.msra.mxu0 0.0
  %335 = vmatprep.subr.mxu0 0.0
  %336 = vmatpush2.msra.mxu0 0.0
  %337 = vmatprep.subr.mxu0 0.0
  %338 = vmatpush2.msra.mxu0 0.0
  %339 = vmatprep.subr.mxu0 0.0
  %340 = vmatpush2.msra.mxu0 0.0
  %341 = vmatprep.subr.mxu0 0.0
  %342 = vmatpush2.msra.mxu0 0.0
  %343 = vmatprep.subr.mxu0 0.0
  %344 = vmatpush2.msra.mxu0 0.0
  %345 = vmatprep.subr.mxu0 0.0
  %346 = vmatpush2.msra.mxu0 0.0
  %347 = vmatprep.subr.mxu0 0.0
  %348 = vmatpush2.msra.mxu0 0.0
  %349 = vmatprep.mubr.f32.mxu0 0.0
  %350 = vmatmul.mubr.f32.gmra.mxu0 %v281
  %v351 = vpop.f32.mrf.mxu0
  %v352 = vadd.f32 0.0, %v351
  %v353 = vpop.f32.mrf.mxu0
  %354 = vmatprep.mubr.f32.mxu0 0.0
  %355 = vmatmul.mubr.f32.gmra.mxu0 %v282
  %v356 = vpop.f32.mrf.mxu0
  %v357 = vadd.f32 0.0, %v356
  %v358 = vpop.f32.mrf.mxu0
  %359 = vmatprep.mubr.f32.mxu0 0.0
  %360 = vmatmul.mubr.f32.gmra.mxu0 %v283
  %v361 = vpop.f32.mrf.mxu0
  %v362 = vadd.f32 0.0, %v361
  %v363 = vpop.f32.mrf.mxu0
  %364 = vmatprep.mubr.f32.mxu0 0.0
  %365 = vmatmul.mubr.f32.gmra.mxu0 %v284
  %v366 = vpop.f32.mrf.mxu0
  %v367 = vadd.f32 0.0, %v366
  %v368 = vpop.f32.mrf.mxu0
  %369 = vdwg.mxu0
  %370 = vst.msk [vmem:[%s3] sm:$0xff] %vm38, %v352
  %371 = vst.msk [vmem:[%s3 + $0x8] sm:$0xff] %vm38, %v357
  %372 = vst.msk [vmem:[%s3 + $0x10] sm:$0xff] %vm38, %v362
  %373 = vst.msk [vmem:[%s3 + $0x18] sm:$0xff] %vm38, %v367
  // Predicated region
  $region14: #{vqvae2_forward.47} parent=0 // pred_check
    _
  $region15: #{vqvae2_forward.47} parent=0 // pred_check_branch
    %375 = sbr.rel (0) target = $region17
  $region16: #{vqvae2_forward.47} parent=0 // pred_region
    _
  $region17: #{vqvae2_forward.47} parent=0 // pred_fallthru
    _
  // Predicated region
  $region18: #{vqvae2_forward.47} parent=0 // pred_check
    _
  $region19: #{vqvae2_forward.47} parent=0 // pred_check_branch
    %377 = sbr.rel (0) target = $region21
  $region20: #{vqvae2_forward.47} parent=0 // pred_region
    _
  $region21: #{vqvae2_forward.47} parent=0 // pred_fallthru
    _

// kernel: vqvae2_forward.51
$region0: #{vqvae2_forward.51}
  #allocation0 [shape = 'u32[]', space=smem, size = 0x4, offset = 0x4, fixed_abs, tag = 'smem constant byte address 0x4 - core index']
  #allocation1 [shape = 'u32[144,128]{1,0:T(1,128)}', space=vmem, size = 0x12000, scoped, tag = 'internal scratch']
  #allocation2 [shape = 'f32[32,16]{1,0:T(8,128)}', space=vmem, size = 0x4000, scoped, tag = 'scratch operand']
  %s0 = inlined_call_operand.vmem [shape: bf16[32,384], index: 0, kind: input, shape index: {}]
  %s1 = inlined_call_operand.vmem [shape: bf16[384,16], index: 1, kind: input, shape index: {}]
  %s2 = inlined_call_operand.vmem [shape: f32[1,16], index: 2, kind: input, shape index: {}]
  %s3 = inlined_call_operand.vmem [shape: f32[1,16], index: 3, kind: input, shape index: {}]
  %s4 = inlined_call_operand.vmem [shape: bf16[32,16], index: 4, kind: output, shape index: {}]
  %s5 = sld [smem:[#allocation0]]
  $region98: #{vqvae2_forward.51} parent=0
    _
  %s7 = ssub.s32 1, %s5
  %s8 = scalar_select 0, %s7, %s5
  $region1: #{vqvae2_forward.51} parent=0
    #allocation3 [shape = 'u8[16384]{0}', space=vmem, size = 0x4000, scoped, tag = 'input window, operand 0']
    loop: start=0, step=1, limit=5
    $region2: #{vqvae2_forward.51} parent=1 // loop_pre_header
      _
    $region3: #{vqvae2_forward.51} parent=1 // loop_header
      %s10 = sphi 0, %s14
      %p11 = scmp.ge.s32.totalorder %s10, 5
      %s17 = sphi 0, %s29
      %s18 = sphi 0, %s25
      %s19 = sphi 0, %s17
      %s20 = sphi 0, %s18
      %s21 = sphi 0, %s19
      %s22 = sphi 0, %s20
      %s34 = sphi 0, %s36
      %s37 = sphi 0, %s34
      %s38 = sphi 0, %s37
      %s54 = sphi 0, %s38
      %s60 = sphi 0, %s62
      %s63 = sphi 0, %s60
      %s64 = sphi 0, %s63
      %s80 = sphi 0, %s64
      %s84 = sphi 0, %s84
      %s86 = sphi 0, %s84
      %s87 = sphi 0, %s86
      %s101 = sphi 0, %s87
      %s105 = sphi 0, %s105
      %s107 = sphi 0, %s105
      %s108 = sphi 0, %s107
      %s122 = sphi 0, %s108
      %s128 = sphi 0, %s130
      %s131 = sphi 0, %s128
      %s132 = sphi 0, %s131
      %s148 = sphi 0, %s132
    $region4: #{vqvae2_forward.51} parent=1 // loop_header_branch
      %13 = sbr.rel (%p11) target = $region8
    $region5: #{vqvae2_forward.51} parent=1 // loop_body
      %s15 = ssub.s32 %s10, 1
      %s16 = ssub.s32 %s10, 2
      %s23 = sadd.s32 1, %s18
      %p24 = scmp.ge.s32.totalorder %s23, 3
      %s25 = scalar_select %p24, 0, %s23
      %s26 = sadd.s32 1, %s17
      %s27 = scalar_select %p24, %s26, %s17
      %p28 = scmp.ge.s32.totalorder %s27, 1
      %s29 = scalar_select %p28, 0, %s27
      %s30 = ssub.s32 %s17, %s29
      %s31 = ssub.s32 %s18, %s25
      %s32 = sor.u32 %s30, %s31
      %p33 = scmp.eq.s32.totalorder %s32, 0
      %s35 = sadd.s32 %s34, 1
      %s36 = scalar_select %p33, %s34, %s35
      %p39 = pneg %p33
      %p40 = scmp.eq.s32.totalorder %s10, 2
      %p41 = por %p39, %p40
      %p42 = scmp.ne.s32.totalorder %s34, %s37
      %p43 = scmp.eq.s32.totalorder %s10, 0
      %p44 = por %p42, %p43
      %p45 = scmp.ne.s32.totalorder %s34, %s37
      %p46 = scmp.eq.s32.totalorder %s15, 2
      %p47 = por %p45, %p46
      %p48 = scmp.ne.s32.totalorder %s37, %s38
      %p49 = scmp.eq.s32.totalorder %s15, 0
      %p50 = por %p48, %p49
      %p51 = scmp.ne.s32.totalorder %s37, %s38
      %p52 = scmp.eq.s32.totalorder %s16, 2
      %p53 = por %p51, %p52
      %p55 = scmp.ne.s32.totalorder %s38, %s54
      %p56 = scmp.eq.s32.totalorder %s16, 0
      %p57 = por %p55, %p56
      %s58 = ssub.s32 %s18, %s25
      %p59 = scmp.eq.s32.totalorder %s58, 0
      %s61 = sadd.s32 %s60, 1
      %s62 = scalar_select %p59, %s60, %s61
      %p65 = pneg %p59
      %p66 = scmp.eq.s32.totalorder %s10, 2
      %p67 = por %p65, %p66
      %p68 = scmp.ne.s32.totalorder %s60, %s63
      %p69 = scmp.eq.s32.totalorder %s10, 0
      %p70 = por %p68, %p69
      %p71 = scmp.ne.s32.totalorder %s60, %s63
      %p72 = scmp.eq.s32.totalorder %s15, 2
      %p73 = por %p71, %p72
      %p74 = scmp.ne.s32.totalorder %s63, %s64
      %p75 = scmp.eq.s32.totalorder %s15, 0
      %p76 = por %p74, %p75
      %p77 = scmp.ne.s32.totalorder %s63, %s64
      %p78 = scmp.eq.s32.totalorder %s16, 2
      %p79 = por %p77, %p78
      %p81 = scmp.ne.s32.totalorder %s64, %s80
      %p82 = scmp.eq.s32.totalorder %s16, 0
      %p83 = por %p81, %p82
      %s85 = sadd.s32 %s84, 1
      %p88 = scmp.eq.s32.totalorder %s10, 2
      %p89 = scmp.ne.s32.totalorder %s84, %s86
      %p90 = scmp.eq.s32.totalorder %s10, 0
      %p91 = por %p89, %p90
      %p92 = scmp.ne.s32.totalorder %s84, %s86
      %p93 = scmp.eq.s32.totalorder %s15, 2
      %p94 = por %p92, %p93
      %p95 = scmp.ne.s32.totalorder %s86, %s87
      %p96 = scmp.eq.s32.totalorder %s15, 0
      %p97 = por %p95, %p96
      %p98 = scmp.ne.s32.totalorder %s86, %s87
      %p99 = scmp.eq.s32.totalorder %s16, 2
      %p100 = por %p98, %p99
      %p102 = scmp.ne.s32.totalorder %s87, %s101
      %p103 = scmp.eq.s32.totalorder %s16, 0
      %p104 = por %p102, %p103
      %s106 = sadd.s32 %s105, 1
      %p109 = scmp.eq.s32.totalorder %s10, 2
      %p110 = scmp.ne.s32.totalorder %s105, %s107
      %p111 = scmp.eq.s32.totalorder %s10, 0
      %p112 = por %p110, %p111
      %p113 = scmp.ne.s32.totalorder %s105, %s107
      %p114 = scmp.eq.s32.totalorder %s15, 2
      %p115 = por %p113, %p114
      %p116 = scmp.ne.s32.totalorder %s107, %s108
      %p117 = scmp.eq.s32.totalorder %s15, 0
      %p118 = por %p116, %p117
      %p119 = scmp.ne.s32.totalorder %s107, %s108
      %p120 = scmp.eq.s32.totalorder %s16, 2
      %p121 = por %p119, %p120
      %p123 = scmp.ne.s32.totalorder %s108, %s122
      %p124 = scmp.eq.s32.totalorder %s16, 0
      %p125 = por %p123, %p124
      %s126 = ssub.s32 %s17, %s29
      %p127 = scmp.eq.s32.totalorder %s126, 0
      %s129 = sadd.s32 %s128, 1
      %s130 = scalar_select %p127, %s128, %s129
      %p133 = pneg %p127
      %p134 = scmp.eq.s32.totalorder %s10, 2
      %p135 = por %p133, %p134
      %p136 = scmp.ne.s32.totalorder %s128, %s131
      %p137 = scmp.eq.s32.totalorder %s10, 0
      %p138 = por %p136, %p137
      %p139 = scmp.ne.s32.totalorder %s128, %s131
      %p140 = scmp.eq.s32.totalorder %s15, 2
      %p141 = por %p139, %p140
      %p142 = scmp.ne.s32.totalorder %s131, %s132
      %p143 = scmp.eq.s32.totalorder %s15, 0
      %p144 = por %p142, %p143
      %p145 = scmp.ne.s32.totalorder %s131, %s132
      %p146 = scmp.eq.s32.totalorder %s16, 2
      %p147 = por %p145, %p146
      %p149 = scmp.ne.s32.totalorder %s132, %s148
      %p150 = scmp.eq.s32.totalorder %s16, 0
      %p151 = por %p149, %p150
      %p152 = scmp.le.s32.totalorder 1, %s10
      %p153 = scmp.lt.s32.totalorder %s10, 4
      %p154 = pnand %p152, %p153
      %p155 = pneg %p154
      // Predicated region
      $region9: #{vqvae2_forward.51} parent=5 // pred_check
        _
      $region10: #{vqvae2_forward.51} parent=5 // pred_check_branch
        %157 = sbr.rel (%p154) target = $region12
      $region11: #{vqvae2_forward.51} parent=5 // pred_region
        %s158 = ssub.s32 %s10, 1
        // Predicated region
        $region13: #{vqvae2_forward.51} parent=11 // pred_check
          %p159 = pneg %p97
        $region14: #{vqvae2_forward.51} parent=11 // pred_check_branch
          %161 = sbr.rel (%p159) target = $region16
        $region15: #{vqvae2_forward.51} parent=11 // pred_region
          _
        $region16: #{vqvae2_forward.51} parent=11 // pred_fallthru
          _
        // Predicated region
        $region17: #{vqvae2_forward.51} parent=11 // pred_check
          %p162 = pneg %p118
        $region18: #{vqvae2_forward.51} parent=11 // pred_check_branch
          %164 = sbr.rel (%p162) target = $region20
        $region19: #{vqvae2_forward.51} parent=11 // pred_region
          _
        $region20: #{vqvae2_forward.51} parent=11 // pred_fallthru
          _
      $region12: #{vqvae2_forward.51} parent=5 // pred_fallthru
        _
      %p165 = scmp.lt.s32.totalorder %s10, 3
      // Predicated region
      $region21: #{vqvae2_forward.51} parent=5 // pred_check
        %p166 = pneg %p165
      $region22: #{vqvae2_forward.51} parent=5 // pred_check_branch
        %168 = sbr.rel (%p166) target = $region24
      $region23: #{vqvae2_forward.51} parent=5 // pred_region
        // Predicated region
        $region25: #{vqvae2_forward.51} parent=23 // pred_check
          %p169 = pneg %p44
        $region26: #{vqvae2_forward.51} parent=23 // pred_check_branch
          %171 = sbr.rel (%p169) target = $region28
        $region27: #{vqvae2_forward.51} parent=23 // pred_region
          %s172 = sand.u32 %s34, 1
          %s173 = sand.u32 %s34, 1
          %s174 = smul.addr %s173, 16
          %s175 = scalar_lea.vmem [#allocation3], %s174
          %s176 = smul.u32 4, %s17
          %s177 = smul.addr %s176, 3
          %s178 = sadd.s32 %s18, %s177
          %s179 = smul.addr %s178, 4
          %s180 = scalar_lea.vmem %s0, %s179
          // Predicated region
          $region29: #{vqvae2_forward.51} parent=27 // pred_check
            _
          $region30: #{vqvae2_forward.51} parent=27 // pred_check_branch
            %182 = sbr.rel (0) target = $region32
          $region31: #{vqvae2_forward.51} parent=27 // pred_region
            // Predicated region
            $region33: #{vqvae2_forward.51} parent=31 // pred_check
              _
            $region34: #{vqvae2_forward.51} parent=31 // pred_check_branch
              %184 = sbr.rel target = $region36
            $region35: #{vqvae2_forward.51} parent=31 // pred_region
              // Predicated region
              $region48: #{vqvae2_forward.51} parent=35 // pred_check
                _
              $region49: #{vqvae2_forward.51} parent=35 // pred_check_branch
                %206 = sbr.rel (0) target = $region51
              $region50: #{vqvae2_forward.51} parent=35 // pred_region
                loop: start=0, step=1, limit=1
                $region52: #{vqvae2_forward.51} parent=50 // loop_pre_header
                  _
                $region53: #{vqvae2_forward.51} parent=50 // loop_header
                  %s208 = sphi 0, %s212
                  %p209 = scmp.ge.s32.totalorder %s208, 1
                  %s213 = sphi %s180, %s180
                  %s214 = sphi %s175, %s175
                $region54: #{vqvae2_forward.51} parent=50 // loop_header_branch
                  %211 = sbr.rel (%p209) target = $region58
                $region55: #{vqvae2_forward.51} parent=50 // loop_body
                  _
                $region56: #{vqvae2_forward.51} parent=50 // loop_footer
                  %s212 = sadd.s32 1, %s208
                $region57: #{vqvae2_forward.51} parent=50 // loop_footer_branch
                  %207 = sbr.rel target = $region53
                $region58: #{vqvae2_forward.51} parent=50 // loop_exit
                  _
                %s216 = ssub.s32 16, 1
                loop: start=0, step=1, limit=1
                $region59: #{vqvae2_forward.51} parent=50 // loop_pre_header
                  _
                $region60: #{vqvae2_forward.51} parent=50 // loop_header
                  %s218 = sphi 0, %s222
                  %p219 = scmp.ge.s32.totalorder %s218, 1
                  %s223 = sphi %s180, %s180
                  %s224 = sphi %s175, %s175
                $region61: #{vqvae2_forward.51} parent=50 // loop_header_branch
                  %221 = sbr.rel (%p219) target = $region65
                $region62: #{vqvae2_forward.51} parent=50 // loop_body
                  %v225 = vld [vmem:[%s223] sm:%s216]
                  %226 = vst [vmem:[%s224] sm:%s216] %v225
                  %v227 = vld [vmem:[%s223 + $0xc] sm:%s216]
                  %228 = vst [vmem:[%s224 + $0x4] sm:%s216] %v227
                  %v229 = vld [vmem:[%s223 + $0x18] sm:%s216]
                  %230 = vst [vmem:[%s224 + $0x8] sm:%s216] %v229
                  %v231 = vld [vmem:[%s223 + $0x24] sm:%s216]
                  %232 = vst [vmem:[%s224 + $0xc] sm:%s216] %v231
                $region63: #{vqvae2_forward.51} parent=50 // loop_footer
                  %s222 = sadd.s32 1, %s218
                $region64: #{vqvae2_forward.51} parent=50 // loop_footer_branch
                  %217 = sbr.rel target = $region60
                $region65: #{vqvae2_forward.51} parent=50 // loop_exit
                  _
              $region51: #{vqvae2_forward.51} parent=35 // pred_fallthru
                _
            $region36: #{vqvae2_forward.51} parent=31 // pred_fallthru
              _
            // Predicated region
            $region37: #{vqvae2_forward.51} parent=31 // pred_check
              _
            $region38: #{vqvae2_forward.51} parent=31 // pred_check_branch
              %186 = sbr.rel (0) target = $region40
            $region39: #{vqvae2_forward.51} parent=31 // pred_region
              %s188 = ssub.s32 16, 1
              loop: start=0, step=1, limit=1
              $region41: #{vqvae2_forward.51} parent=39 // loop_pre_header
                _
              $region42: #{vqvae2_forward.51} parent=39 // loop_header
                %s190 = sphi 0, %s194
                %p191 = scmp.ge.s32.totalorder %s190, 1
                %s195 = sphi %s180, %s180
                %s196 = sphi %s175, %s175
              $region43: #{vqvae2_forward.51} parent=39 // loop_header_branch
                %193 = sbr.rel (%p191) target = $region47
              $region44: #{vqvae2_forward.51} parent=39 // loop_body
                %v197 = vld [vmem:[%s195] sm:%s188]
                %198 = vst [vmem:[%s196] sm:%s188] %v197
                %v199 = vld [vmem:[%s195 + $0xc] sm:%s188]
                %200 = vst [vmem:[%s196 + $0x4] sm:%s188] %v199
                %v201 = vld [vmem:[%s195 + $0x18] sm:%s188]
                %202 = vst [vmem:[%s196 + $0x8] sm:%s188] %v201
                %v203 = vld [vmem:[%s195 + $0x24] sm:%s188]
                %204 = vst [vmem:[%s196 + $0xc] sm:%s188] %v203
              $region45: #{vqvae2_forward.51} parent=39 // loop_footer
                %s194 = sadd.s32 1, %s190
              $region46: #{vqvae2_forward.51} parent=39 // loop_footer_branch
                %189 = sbr.rel target = $region42
              $region47: #{vqvae2_forward.51} parent=39 // loop_exit
                _
            $region40: #{vqvae2_forward.51} parent=31 // pred_fallthru
              _
          $region32: #{vqvae2_forward.51} parent=27 // pred_fallthru
            _
          %233 = vnop
        $region28: #{vqvae2_forward.51} parent=23 // pred_fallthru
          _
        // Predicated region
        $region66: #{vqvae2_forward.51} parent=23 // pred_check
          %p234 = pneg %p70
        $region67: #{vqvae2_forward.51} parent=23 // pred_check_branch
          %236 = sbr.rel (%p234) target = $region69
        $region68: #{vqvae2_forward.51} parent=23 // pred_region
          %s237 = smul.u32 16, %s18
          %p238 = scmp.lt.s32.totalorder %s237, 47
          %s239 = scalar_select %p238, %s237, 47
          %s240 = smul.addr %s239, 4
          %s241 = scalar_lea.vmem %s1, %s240
          %s242 = smul.u32 16, %s18
        $region69: #{vqvae2_forward.51} parent=23 // pred_fallthru
          _
      $region24: #{vqvae2_forward.51} parent=5 // pred_fallthru
        _
      %p243 = scmp.le.s32.totalorder 1, %s10
      %p244 = scmp.lt.s32.totalorder %s10, 4
      %p245 = pnand %p243, %p244
      %p246 = pneg %p245
      // Predicated region
      $region70: #{vqvae2_forward.51} parent=5 // pred_check
        _
      $region71: #{vqvae2_forward.51} parent=5 // pred_check_branch
        %248 = sbr.rel (%p245) target = $region73
      $region72: #{vqvae2_forward.51} parent=5 // pred_region
        %s249 = ssub.s32 %s10, 1
        %s250 = sand.u32 %s37, 1
        %s251 = sand.u32 %s37, 1
        %s252 = smul.addr %s251, 16
        %s253 = scalar_lea.vmem [#allocation3], %s252
        // Predicated region
        $region74: #{vqvae2_forward.51} parent=72 // pred_check
          %p254 = pneg %p50
        $region75: #{vqvae2_forward.51} parent=72 // pred_check_branch
          %256 = sbr.rel (%p254) target = $region77
        $region76: #{vqvae2_forward.51} parent=72 // pred_region
          _
        $region77: #{vqvae2_forward.51} parent=72 // pred_fallthru
          _
        %s257 = sand.u32 %s37, 1
        %s258 = sand.u32 %s37, 1
        %s259 = smul.addr %s258, 16
        %s260 = scalar_lea.vmem [#allocation3], %s259
        %p261 = pneg %p50
        %p262 = pneg %p47
        %s263 = smul.u32 16, %s20
        %p264 = scmp.lt.s32.totalorder %s263, 47
        %s265 = scalar_select %p264, %s263, 47
        %s266 = smul.addr %s265, 4
        %s267 = scalar_lea.vmem %s1, %s266
        %p268 = pneg %p76
        %p269 = pneg %p73
        %p270 = pneg %p97
        %p271 = pneg %p94
        %p272 = pneg %p118
        %p273 = pneg %p115
        %p274 = pneg %p144
        %p275 = pneg %p141
        %s276 = smul.u32 4, %s19
        %p277 = scmp.lt.s32.totalorder %s276, 3
        %s278 = scalar_select %p277, %s276, 3
        %s279 = smul.addr %s278, 4
        %s280 = scalar_lea.vmem %s4, %s279
        %s281 = smul.u32 4, %s19
        %s282 = smul.u32 16, %s20
        %p283 = scmp.lt.s32.totalorder %s282, 47
        %s284 = scalar_select %p283, %s282, 47
        %s285 = smul.addr %s284, 4
        %s286 = scalar_lea.vmem %s1, %s285
        %s287 = smul.u32 16, %s20
        %s288 = smul.u32 4, %s19
        %p289 = scmp.lt.s32.totalorder %s288, 3
        %s290 = scalar_select %p289, %s288, 3
        %s291 = smul.addr %s290, 4
        %s292 = scalar_lea.vmem %s4, %s291
        %s293 = smul.u32 4, %s19
        %p295 = scmp.eq.s32.totalorder %s20, 0
        // Predicated region
        $region78: #{vqvae2_forward.51} parent=72 // pred_check
          %p296 = pneg %p295
        $region79: #{vqvae2_forward.51} parent=72 // pred_check_branch
          %298 = sbr.rel (%p296) target = $region81
        $region80: #{vqvae2_forward.51} parent=72 // pred_region
          %vm299 = vcmask 130048
          %300 = vst.msk [vmem:[#allocation2] sm:$0xff] %vm299, 0.0
          %301 = vst.msk [vmem:[#allocation2 + $0x8] sm:$0xff] %vm299, 0.0
          %302 = vst.msk [vmem:[#allocation2 + $0x10] sm:$0xff] %vm299, 0.0
          %303 = vst.msk [vmem:[#allocation2 + $0x18] sm:$0xff] %vm299, 0.0
        $region81: #{vqvae2_forward.51} parent=72 // pred_fallthru
          _
        %v304 = vld [vmem:[#allocation2] sm:$0xff]
        %v305 = vld [vmem:[#allocation2 + $0x8] sm:$0xff]
        %v306 = vld [vmem:[#allocation2 + $0x10] sm:$0xff]
        %v307 = vld [vmem:[#allocation2 + $0x18] sm:$0xff]
        %v308 = vld [vmem:[%s253] sm:$0xf]
        %v309 = vld [vmem:[%s253 + $0x4] sm:$0xf]
        %v310 = vld [vmem:[%s253 + $0x8] sm:$0xf]
        %v311 = vld [vmem:[%s253 + $0xc] sm:$0xf]
        %v312 = vld [vmem:[%s286] sm:$0xf]
        %v313 = vld [vmem:[%s286 + $0x4] sm:$0xf]
        %v314 = vld [vmem:[%s286 + $0x8] sm:$0xf]
        %v315 = vld [vmem:[%s286 + $0xc] sm:$0xf]
        %v316 = vld [vmem:[%s286 + $0x10] sm:$0xf]
        %v317 = vld [vmem:[%s286 + $0x14] sm:$0xf]
        %v318 = vld [vmem:[%s286 + $0x18] sm:$0xf]
        %v319 = vld [vmem:[%s286 + $0x1c] sm:$0xf]
        %v320 = vld [vmem:[%s286 + $0x20] sm:$0xf]
        %v321 = vld [vmem:[%s286 + $0x24] sm:$0xf]
        %v322 = vld [vmem:[%s286 + $0x28] sm:$0xf]
        %v323 = vld [vmem:[%s286 + $0x2c] sm:$0xf]
        %v324 = vld [vmem:[%s286 + $0x30] sm:$0xf]
        %v325 = vld [vmem:[%s286 + $0x34] sm:$0xf]
        %v326 = vld [vmem:[%s286 + $0x38] sm:$0xf]
        %v327 = vld [vmem:[%s286 + $0x3c] sm:$0xf]
        %v332 = vunpack.c.l.b16 %v308
        %v333 = vunpack.c.l.b16 %v309
        %v334 = vunpack.c.l.b16 %v310
        %v335 = vunpack.c.l.b16 %v311
        %v336 = vpack.c.b16 %v333, %v332
        %v337 = vpack.c.b16 %v335, %v334
        %v356 = vunpack.c.l.b16 %v312
        %v357 = vunpack.c.l.b16 %v313
        %v358 = vunpack.c.l.b16 %v314
        %v359 = vunpack.c.l.b16 %v315
        %v360 = vunpack.c.l.b16 %v316
        %v361 = vunpack.c.l.b16 %v317
        %v362 = vunpack.c.l.b16 %v318
        %v363 = vunpack.c.l.b16 %v319
        %v364 = vunpack.c.l.b16 %v320
        %v365 = vunpack.c.l.b16 %v321
        %v366 = vunpack.c.l.b16 %v322
        %v367 = vunpack.c.l.b16 %v323
        %v368 = vunpack.c.l.b16 %v324
        %v369 = vunpack.c.l.b16 %v325
        %v370 = vunpack.c.l.b16 %v326
        %v371 = vunpack.c.l.b16 %v327
        %v372 = vpack.c.b16 %v357, %v356
        %v373 = vpack.c.b16 %v359, %v358
        %v374 = vpack.c.b16 %v361, %v360
        %v375 = vpack.c.b16 %v363, %v362
        %v376 = vpack.c.b16 %v365, %v364
        %v377 = vpack.c.b16 %v367, %v366
        %v378 = vpack.c.b16 %v369, %v368
        %v379 = vpack.c.b16 %v371, %v370
        %388 = vmatprep.subr.bf16.mxu0 0
        %389 = vmatpush1.bf16.msra.mxu0 %v379
        %390 = vmatprep.subr.bf16.mxu0 0
        %391 = vmatpush1.bf16.msra.mxu0 %v378
        %392 = vmatprep.subr.bf16.mxu0 0
        %393 = vmatpush1.bf16.msra.mxu0 %v377
        %394 = vmatprep.subr.bf16.mxu0 0
        %395 = vmatpush1.bf16.msra.mxu0 %v376
        %396 = vmatprep.subr.bf16.mxu0 0
        %397 = vmatpush1.bf16.msra.mxu0 %v375
        %398 = vmatprep.subr.bf16.mxu0 0
        %399 = vmatpush1.bf16.msra.mxu0 %v374
        %400 = vmatprep.subr.bf16.mxu0 0
        %401 = vmatpush1.bf16.msra.mxu0 %v373
        %402 = vmatprep.subr.bf16.mxu0 0
        %403 = vmatpush1.bf16.msra.mxu0 %v372
        %404 = vmatprep.subr.bf16.mxu0 0
        %405 = vmatpush2.bf16.msra.mxu0 0
        %406 = vmatprep.subr.bf16.mxu0 0
        %407 = vmatpush2.bf16.msra.mxu0 0
        %408 = vmatprep.subr.bf16.mxu0 0
        %409 = vmatpush2.bf16.msra.mxu0 0
        %410 = vmatprep.subr.bf16.mxu0 0
        %411 = vmatpush2.bf16.msra.mxu0 0
        %412 = vmatprep.subr.bf16.mxu0 0
        %413 = vmatpush2.bf16.msra.mxu0 0
        %414 = vmatprep.subr.bf16.mxu0 0
        %415 = vmatpush2.bf16.msra.mxu0 0
        %416 = vmatprep.subr.bf16.mxu0 0
        %417 = vmatpush2.bf16.msra.mxu0 0
        %418 = vmatprep.subr.bf16.mxu0 0
        %419 = vmatpush2.bf16.msra.mxu0 0
        %420 = vmatprep.mubr.bf16.mxu0 0
        %421 = vmatmul.mubr.bf16.gmra.mxu0 %v336
        %v422 = vpop.f32.mrf.mxu0
        %v423 = vadd.f32 0.0, %v422
        %v424 = vpop.f32.mrf.mxu0
        %v425 = vpop.f32.mrf.mxu0
        %v426 = vadd.f32 0.0, %v425
        %v427 = vpop.f32.mrf.mxu0
        %428 = vmatprep.mubr.bf16.mxu0 0
        %429 = vmatmul.mubr.bf16.gmra.mxu0 %v337
        %v430 = vpop.f32.mrf.mxu0
        %v431 = vadd.f32 0.0, %v430
        %v432 = vpop.f32.mrf.mxu0
        %v433 = vpop.f32.mrf.mxu0
        %v434 = vadd.f32 0.0, %v433
        %v435 = vpop.f32.mrf.mxu0
        %436 = vdwg.mxu0
        %v437 = vadd.f32 %v304, %v423
        %v438 = vadd.f32 %v305, %v426
        %v439 = vadd.f32 %v306, %v431
        %v440 = vadd.f32 %v307, %v434
        %vm441 = vcmask 130048
        %442 = vst.msk [vmem:[#allocation2] sm:$0xff] %vm441, %v437
        %443 = vst.msk [vmem:[#allocation2 + $0x8] sm:$0xff] %vm441, %v438
        %444 = vst.msk [vmem:[#allocation2 + $0x10] sm:$0xff] %vm441, %v439
        %445 = vst.msk [vmem:[#allocation2 + $0x18] sm:$0xff] %vm441, %v440
        %p446 = scmp.eq.s32.totalorder %s20, 2
        // Predicated region
        $region82: #{vqvae2_forward.51} parent=72 // pred_check
          %p447 = pneg %p446
        $region83: #{vqvae2_forward.51} parent=72 // pred_check_branch
          %449 = sbr.rel (%p447) target = $region85
        $region84: #{vqvae2_forward.51} parent=72 // pred_region
          %v450 = vld [vmem:[#allocation2] sm:$0xff]
          %v451 = vld [vmem:[#allocation2 + $0x8] sm:$0xff]
          %v452 = vld [vmem:[#allocation2 + $0x10] sm:$0xff]
          %v453 = vld [vmem:[#allocation2 + $0x18] sm:$0xff]
          %v454 = vld [vmem:[%s2] sm:$0x1]
          %v456 = vlaneseq
          %v457 = vshrl.u32 %v456, 7
          %v458 = vsub.s32 0, %v457
          %v459 = vrot.slane %v454, %v458
          %v461 = vmul.f32 %v450, %v459
          %v462 = vmul.f32 %v451, %v459
          %v463 = vmul.f32 %v452, %v459
          %v464 = vmul.f32 %v453, %v459
          %v465 = vld [vmem:[%s3] sm:$0x1]
          %v467 = vlaneseq
          %v468 = vshrl.u32 %v467, 7
          %v469 = vsub.s32 0, %v468
          %v470 = vrot.slane %v465, %v469
          %v472 = vadd.f32 %v461, %v470
          %v473 = vadd.f32 %v462, %v470
          %v474 = vadd.f32 %v463, %v470
          %v475 = vadd.f32 %v464, %v470
          %v476 = vmax.f32 %v472, 0.0
          %v477 = vmax.f32 %v473, 0.0
          %v478 = vmax.f32 %v474, 0.0
          %v479 = vmax.f32 %v475, 0.0
          %v480 = vpack.c.bf16 %v477, %v476
          %v481 = vpack.c.bf16 %v479, %v478
          %v484 = vunpack.c.l.b16 %v480
          %v485 = vunpack.c.h.b16 %v480
          %v486 = vunpack.c.l.b16 %v481
          %v487 = vunpack.c.h.b16 %v481
          %v488 = vpack.c.b16 %v484, %v484
          %v489 = vpack.c.b16 %v485, %v485
          %v490 = vpack.c.b16 %v486, %v486
          %v491 = vpack.c.b16 %v487, %v487
          %vm496 = vcmask 125952
          %497 = vst.msk [vmem:[%s292] sm:$0xf] %vm496, %v488
          %498 = vst.msk [vmem:[%s292 + $0x4] sm:$0xf] %vm496, %v489
          %499 = vst.msk [vmem:[%s292 + $0x8] sm:$0xf] %vm496, %v490
          %500 = vst.msk [vmem:[%s292 + $0xc] sm:$0xf] %vm496, %v491
        $region85: #{vqvae2_forward.51} parent=72 // pred_fallthru
          _
        %s501 = smul.u32 4, %s19
        %p502 = scmp.lt.s32.totalorder %s501, 3
        %s503 = scalar_select %p502, %s501, 3
        %s504 = smul.addr %s503, 4
        %s505 = scalar_lea.vmem %s4, %s504
        // Predicated region
        $region86: #{vqvae2_forward.51} parent=72 // pred_check
          %p506 = pneg %p141
        $region87: #{vqvae2_forward.51} parent=72 // pred_check_branch
          %508 = sbr.rel (%p506) target = $region89
        $region88: #{vqvae2_forward.51} parent=72 // pred_region
          %s509 = smul.u32 4, %s19
        $region89: #{vqvae2_forward.51} parent=72 // pred_fallthru
          _
        // Predicated region
        $region90: #{vqvae2_forward.51} parent=72 // pred_check
          %p510 = pneg %p141
        $region91: #{vqvae2_forward.51} parent=72 // pred_check_branch
          %512 = sbr.rel (%p510) target = $region93
        $region92: #{vqvae2_forward.51} parent=72 // pred_region
          %s513 = smul.u32 4, %s19
          %p514 = scmp.lt.s32.totalorder %s513, 3
          %s515 = scalar_select %p514, %s513, 3
          %s516 = smul.addr %s515, 4
          %s517 = scalar_lea.vmem %s4, %s516
        $region93: #{vqvae2_forward.51} parent=72 // pred_fallthru
          _
      $region73: #{vqvae2_forward.51} parent=5 // pred_fallthru
        _
      %p518 = scmp.le.s32.totalorder 2, %s10
      // Predicated region
      $region94: #{vqvae2_forward.51} parent=5 // pred_check
        %p519 = pneg %p518
      $region95: #{vqvae2_forward.51} parent=5 // pred_check_branch
        %521 = sbr.rel (%p519) target = $region97
      $region96: #{vqvae2_forward.51} parent=5 // pred_region
        %s522 = ssub.s32 %s10, 2
      $region97: #{vqvae2_forward.51} parent=5 // pred_fallthru
        _
    $region6: #{vqvae2_forward.51} parent=1 // loop_footer
      %s14 = sadd.s32 1, %s10
    $region7: #{vqvae2_forward.51} parent=1 // loop_footer_branch
      %9 = sbr.rel target = $region3
    $region8: #{vqvae2_forward.51} parent=1 // loop_exit
      _

// kernel: tile.58
$region0: #{tile.58}
  #allocation0 [shape = 's32[1]{0}', space=sflag, size = 0x4, scoped, tag = 'scoped memory for tile.58']
  %s0 = inlined_call_operand.vmem [shape: f32[8], index: 0, kind: input, shape index: {}]
  %s1 = inlined_call_operand.vmem [shape: f32[4,8], index: 1, kind: output, shape index: {}]
  // Predicated region
  $region2: #{tile.58} parent=0 // pred_check
    _
  $region3: #{tile.58} parent=0 // pred_check_branch
    %3 = sbr.rel (0) target = $region5
  $region4: #{tile.58} parent=0 // pred_region
    _
  $region5: #{tile.58} parent=0 // pred_fallthru
    _
  %v4 = vld [vmem:[%s0] ss:$0 sm:$0xff]
  %5 = vst [vmem:[%s1] sm:$0xf] %v4

// kernel: tile.63
$region0: #{tile.63}
  %s0 = inlined_call_operand.vmem [shape: f32[4,8], index: 0, kind: input, shape index: {}]
  %s1 = inlined_call_operand.vmem [shape: f32[1,32], index: 1, kind: output, shape index: {}]
  $region1: #{tile.63} parent=0
    #allocation0 [shape = 'u8[4096]{0}', space=vmem, size = 0x1000, scoped, tag = 'scoped mem for output reshape']
    #allocation1 [shape = 'u8[4096]{0}', space=vmem, size = 0x1000, scoped, tag = 'scoped mem for input reshape']
    %s3 = sshll.u32 1, 4
    %s4 = ssub.s32 %s3, 1
    %v5 = vld [vmem:[%s0] sm:%s4]
    %6 = vst [vmem:[#allocation1] sm:%s4] %v5
    %v7 = vld [vmem:[#allocation1] sm:$0x1]
    %vm8 = vcmask 64512
    %9 = vst.msk [vmem:[#allocation0] sm:$0x1] %vm8, %v7
    %s10 = scalar_lea.vmem [#allocation1], 3
    %v11 = vld [vmem:[%s10] sm:$0x1]
    %12 = vrot.lane.b32.xlu0 %v11, 24
    %v13 = vpop.permute.xlu0 %12
    %vm14 = vcmask 261312
    %15 = vst.msk [vmem:[#allocation0] sm:$0x1] %vm14, %v13
    %s16 = scalar_lea.vmem [#allocation1], 2
    %v17 = vld [vmem:[%s16] sm:$0x1]
    %18 = vrot.lane.b32.xlu0 %v17, 16
    %v19 = vpop.permute.xlu0 %18
    %vm20 = vcmask 195712
    %21 = vst.msk [vmem:[#allocation0] sm:$0x1] %vm20, %v19
    %s22 = scalar_lea.vmem [#allocation1], 1
    %v23 = vld [vmem:[%s22] sm:$0x1]
    %24 = vrot.lane.b32.xlu0 %v23, 8
    %v25 = vpop.permute.xlu0 %24
    %vm26 = vcmask 130112
    %27 = vst.msk [vmem:[#allocation0] sm:$0x1] %vm26, %v25
    %s29 = sshll.u32 1, 1
    %s30 = ssub.s32 %s29, 1
    %v32 = vld [vmem:[#allocation0] sm:%s30]
    %s33 = sshll.u32 1, 1
    %s34 = ssub.s32 %s33, 1
    %35 = vst [vmem:[%s1] sm:%s34] %v32

// kernel: vqvae2_forward.52
$region0: #{vqvae2_forward.52}
  #allocation0 [shape = 'u32[]', space=smem, size = 0x4, offset = 0x4, fixed_abs, tag = 'smem constant byte address 0x4 - core index']
  #allocation1 [shape = 'u32[144,128]{1,0:T(1,128)}', space=vmem, size = 0x12000, scoped, tag = 'internal scratch']
  #allocation2 [shape = 'f32[32,16]{1,0:T(8,128)}', space=vmem, size = 0x4000, scoped, tag = 'scratch operand']
  %s0 = inlined_call_operand.vmem [shape: bf16[32,32], index: 0, kind: input, shape index: {}]
  %s1 = inlined_call_operand.vmem [shape: bf16[32,16], index: 1, kind: input, shape index: {}]
  %s2 = inlined_call_operand.vmem [shape: f32[1,16], index: 2, kind: input, shape index: {}]
  %s3 = inlined_call_operand.vmem [shape: f32[1,16], index: 3, kind: input, shape index: {}]
  %s4 = inlined_call_operand.vmem [shape: bf16[32,16], index: 4, kind: output, shape index: {}]
  %s5 = sld [smem:[#allocation0]]
  $region34: #{vqvae2_forward.52} parent=0
    _
  %s7 = ssub.s32 1, %s5
  %s8 = scalar_select 0, %s7, %s5
  // Predicated region
  $region2: #{vqvae2_forward.52} parent=0 // pred_check
    _
  $region3: #{vqvae2_forward.52} parent=0 // pred_check_branch
    %10 = sbr.rel (0) target = $region5
  $region4: #{vqvae2_forward.52} parent=0 // pred_region
    _
  $region5: #{vqvae2_forward.52} parent=0 // pred_fallthru
    _
  // Predicated region
  $region6: #{vqvae2_forward.52} parent=0 // pred_check
    _
  $region7: #{vqvae2_forward.52} parent=0 // pred_check_branch
    %12 = sbr.rel (0) target = $region9
  $region8: #{vqvae2_forward.52} parent=0 // pred_region
    _
  $region9: #{vqvae2_forward.52} parent=0 // pred_fallthru
    _
  // Predicated region
  $region10: #{vqvae2_forward.52} parent=0 // pred_check
    _
  $region11: #{vqvae2_forward.52} parent=0 // pred_check_branch
    %14 = sbr.rel (0) target = $region13
  $region12: #{vqvae2_forward.52} parent=0 // pred_region
    _
  $region13: #{vqvae2_forward.52} parent=0 // pred_fallthru
    _
  // Predicated region
  $region14: #{vqvae2_forward.52} parent=0 // pred_check
    _
  $region15: #{vqvae2_forward.52} parent=0 // pred_check_branch
    %16 = sbr.rel (0) target = $region17
  $region16: #{vqvae2_forward.52} parent=0 // pred_region
    _
  $region17: #{vqvae2_forward.52} parent=0 // pred_fallthru
    _
  %p18 = scmp.eq.s32.totalorder 0, 0
  // Predicated region
  $region18: #{vqvae2_forward.52} parent=0 // pred_check
    %p19 = pneg %p18
  $region19: #{vqvae2_forward.52} parent=0 // pred_check_branch
    %21 = sbr.rel (%p19) target = $region21
  $region20: #{vqvae2_forward.52} parent=0 // pred_region
    %vm22 = vcmask 130048
    %23 = vst.msk [vmem:[#allocation2] sm:$0xff] %vm22, 0.0
    %24 = vst.msk [vmem:[#allocation2 + $0x8] sm:$0xff] %vm22, 0.0
    %25 = vst.msk [vmem:[#allocation2 + $0x10] sm:$0xff] %vm22, 0.0
    %26 = vst.msk [vmem:[#allocation2 + $0x18] sm:$0xff] %vm22, 0.0
  $region21: #{vqvae2_forward.52} parent=0 // pred_fallthru
    _
  %v27 = vld [vmem:[#allocation2] sm:$0xff]
  %v28 = vld [vmem:[#allocation2 + $0x8] sm:$0xff]
  %v29 = vld [vmem:[#allocation2 + $0x10] sm:$0xff]
  %v30 = vld [vmem:[#allocation2 + $0x18] sm:$0xff]
  %v31 = vld [vmem:[%s0] sm:$0xf]
  %v32 = vld [vmem:[%s0 + $0x4] sm:$0xf]
  %v33 = vld [vmem:[%s0 + $0x8] sm:$0xf]
  %v34 = vld [vmem:[%s0 + $0xc] sm:$0xf]
  %v35 = vld [vmem:[%s1] sm:$0xf]
  %v36 = vld [vmem:[%s1 + $0x4] sm:$0xf]
  %v37 = vld [vmem:[%s1 + $0x8] sm:$0xf]
  %v38 = vld [vmem:[%s1 + $0xc] sm:$0xf]
  %v43 = vunpack.c.l.b16 %v31
  %v44 = vunpack.c.l.b16 %v32
  %v45 = vunpack.c.l.b16 %v33
  %v46 = vunpack.c.l.b16 %v34
  %v47 = vpack.c.b16 %v44, %v43
  %v48 = vpack.c.b16 %v46, %v45
  %v53 = vunpack.c.l.b16 %v35
  %v54 = vunpack.c.l.b16 %v36
  %v55 = vunpack.c.l.b16 %v37
  %v56 = vunpack.c.l.b16 %v38
  %v57 = vpack.c.b16 %v54, %v53
  %v58 = vpack.c.b16 %v56, %v55
  %vm61 = vcmask 261120
  %v63 = vsel %vm61, %v47, 0
  %v66 = vsel %vm61, %v48, 0
  %68 = vmatprep.subr.bf16.mxu0 0
  %69 = vmatpush1.bf16.msra.mxu0 0
  %70 = vmatprep.subr.bf16.mxu0 0
  %71 = vmatpush1.bf16.msra.mxu0 0
  %72 = vmatprep.subr.bf16.mxu0 0
  %73 = vmatpush1.bf16.msra.mxu0 0
  %74 = vmatprep.subr.bf16.mxu0 0
  %75 = vmatpush1.bf16.msra.mxu0 0
  %76 = vmatprep.subr.bf16.mxu0 0
  %77 = vmatpush1.bf16.msra.mxu0 0
  %78 = vmatprep.subr.bf16.mxu0 0
  %79 = vmatpush1.bf16.msra.mxu0 0
  %80 = vmatprep.subr.bf16.mxu0 0
  %81 = vmatpush1.bf16.msra.mxu0 %v58
  %82 = vmatprep.subr.bf16.mxu0 0
  %83 = vmatpush1.bf16.msra.mxu0 %v57
  %84 = vmatprep.subr.bf16.mxu0 0
  %85 = vmatpush2.bf16.msra.mxu0 0
  %86 = vmatprep.subr.bf16.mxu0 0
  %87 = vmatpush2.bf16.msra.mxu0 0
  %88 = vmatprep.subr.bf16.mxu0 0
  %89 = vmatpush2.bf16.msra.mxu0 0
  %90 = vmatprep.subr.bf16.mxu0 0
  %91 = vmatpush2.bf16.msra.mxu0 0
  %92 = vmatprep.subr.bf16.mxu0 0
  %93 = vmatpush2.bf16.msra.mxu0 0
  %94 = vmatprep.subr.bf16.mxu0 0
  %95 = vmatpush2.bf16.msra.mxu0 0
  %96 = vmatprep.subr.bf16.mxu0 0
  %97 = vmatpush2.bf16.msra.mxu0 0
  %98 = vmatprep.subr.bf16.mxu0 0
  %99 = vmatpush2.bf16.msra.mxu0 0
  %100 = vmatprep.mubr.bf16.mxu0 0
  %101 = vmatmul.mubr.bf16.gmra.mxu0 %v63
  %v102 = vpop.f32.mrf.mxu0
  %v103 = vadd.f32 0.0, %v102
  %v104 = vpop.f32.mrf.mxu0
  %v105 = vpop.f32.mrf.mxu0
  %v106 = vadd.f32 0.0, %v105
  %v107 = vpop.f32.mrf.mxu0
  %108 = vmatprep.mubr.bf16.mxu0 0
  %109 = vmatmul.mubr.bf16.gmra.mxu0 %v66
  %v110 = vpop.f32.mrf.mxu0
  %v111 = vadd.f32 0.0, %v110
  %v112 = vpop.f32.mrf.mxu0
  %v113 = vpop.f32.mrf.mxu0
  %v114 = vadd.f32 0.0, %v113
  %v115 = vpop.f32.mrf.mxu0
  %116 = vdwg.mxu0
  %v117 = vadd.f32 %v27, %v103
  %v118 = vadd.f32 %v28, %v106
  %v119 = vadd.f32 %v29, %v111
  %v120 = vadd.f32 %v30, %v114
  %vm121 = vcmask 130048
  %122 = vst.msk [vmem:[#allocation2] sm:$0xff] %vm121, %v117
  %123 = vst.msk [vmem:[#allocation2 + $0x8] sm:$0xff] %vm121, %v118
  %124 = vst.msk [vmem:[#allocation2 + $0x10] sm:$0xff] %vm121, %v119
  %125 = vst.msk [vmem:[#allocation2 + $0x18] sm:$0xff] %vm121, %v120
  // Predicated region
  $region22: #{vqvae2_forward.52} parent=0 // pred_check
    %p126 = pneg %p18
  $region23: #{vqvae2_forward.52} parent=0 // pred_check_branch
    %128 = sbr.rel (%p126) target = $region25
  $region24: #{vqvae2_forward.52} parent=0 // pred_region
    %v129 = vld [vmem:[#allocation2] sm:$0xff]
    %v130 = vld [vmem:[#allocation2 + $0x8] sm:$0xff]
    %v131 = vld [vmem:[#allocation2 + $0x10] sm:$0xff]
    %v132 = vld [vmem:[#allocation2 + $0x18] sm:$0xff]
    %v133 = vld [vmem:[%s2] sm:$0x1]
    %v135 = vlaneseq
    %v136 = vshrl.u32 %v135, 7
    %v137 = vsub.s32 0, %v136
    %v138 = vrot.slane %v133, %v137
    %v140 = vmul.f32 %v129, %v138
    %v141 = vmul.f32 %v130, %v138
    %v142 = vmul.f32 %v131, %v138
    %v143 = vmul.f32 %v132, %v138
    %v144 = vld [vmem:[%s3] sm:$0x1]
    %v146 = vlaneseq
    %v147 = vshrl.u32 %v146, 7
    %v148 = vsub.s32 0, %v147
    %v149 = vrot.slane %v144, %v148
    %v151 = vadd.f32 %v140, %v149
    %v152 = vadd.f32 %v141, %v149
    %v153 = vadd.f32 %v142, %v149
    %v154 = vadd.f32 %v143, %v149
    %v155 = vpack.c.bf16 %v152, %v151
    %v156 = vpack.c.bf16 %v154, %v153
    %v159 = vunpack.c.l.b16 %v155
    %v160 = vunpack.c.h.b16 %v155
    %v161 = vunpack.c.l.b16 %v156
    %v162 = vunpack.c.h.b16 %v156
    %v163 = vpack.c.b16 %v159, %v159
    %v164 = vpack.c.b16 %v160, %v160
    %v165 = vpack.c.b16 %v161, %v161
    %v166 = vpack.c.b16 %v162, %v162
    %vm171 = vcmask 125952
    %172 = vst.msk [vmem:[%s4] sm:$0xf] %vm171, %v163
    %173 = vst.msk [vmem:[%s4 + $0x4] sm:$0xf] %vm171, %v164
    %174 = vst.msk [vmem:[%s4 + $0x8] sm:$0xf] %vm171, %v165
    %175 = vst.msk [vmem:[%s4 + $0xc] sm:$0xf] %vm171, %v166
  $region25: #{vqvae2_forward.52} parent=0 // pred_fallthru
    _
  // Predicated region
  $region26: #{vqvae2_forward.52} parent=0 // pred_check
    _
  $region27: #{vqvae2_forward.52} parent=0 // pred_check_branch
    %177 = sbr.rel (0) target = $region29
  $region28: #{vqvae2_forward.52} parent=0 // pred_region
    _
  $region29: #{vqvae2_forward.52} parent=0 // pred_fallthru
    _
  // Predicated region
  $region30: #{vqvae2_forward.52} parent=0 // pred_check
    _
  $region31: #{vqvae2_forward.52} parent=0 // pred_check_branch
    %179 = sbr.rel (0) target = $region33
  $region32: #{vqvae2_forward.52} parent=0 // pred_region
    _
  $region33: #{vqvae2_forward.52} parent=0 // pred_fallthru
    _

// kernel: vqvae2_forward.53
$region0: #{vqvae2_forward.53}
  #allocation0 [shape = 'u32[]', space=smem, size = 0x4, offset = 0x4, fixed_abs, tag = 'smem constant byte address 0x4 - core index']
  #allocation1 [shape = 'u32[144,128]{1,0:T(1,128)}', space=vmem, size = 0x12000, scoped, tag = 'internal scratch']
  #allocation2 [shape = 'f32[32,16]{1,0:T(8,128)}', space=vmem, size = 0x4000, scoped, tag = 'scratch operand']
  %s0 = inlined_call_operand.vmem [shape: bf16[32,256], index: 0, kind: input, shape index: {}]
  %s1 = inlined_call_operand.vmem [shape: bf16[256,16], index: 1, kind: input, shape index: {}]
  %s2 = inlined_call_operand.vmem [shape: f32[1,16], index: 2, kind: input, shape index: {}]
  %s3 = inlined_call_operand.vmem [shape: f32[1,16], index: 3, kind: input, shape index: {}]
  %s4 = inlined_call_operand.vmem [shape: bf16[32,16], index: 4, kind: input, shape index: {}]
  %s5 = inlined_call_operand.vmem [shape: bf16[32,16], index: 5, kind: output, shape index: {}]
  %s6 = sld [smem:[#allocation0]]
  $region102: #{vqvae2_forward.53} parent=0
    _
  %s8 = ssub.s32 1, %s6
  %s9 = scalar_select 0, %s8, %s6
  $region1: #{vqvae2_forward.53} parent=0
    #allocation3 [shape = 'u8[16384]{0}', space=vmem, size = 0x4000, scoped, tag = 'input window, operand 0']
    loop: start=0, step=1, limit=4
    $region2: #{vqvae2_forward.53} parent=1 // loop_pre_header
      _
    $region3: #{vqvae2_forward.53} parent=1 // loop_header
      %s11 = sphi 0, %s15
      %p12 = scmp.ge.s32.totalorder %s11, 4
      %s18 = sphi 0, %s30
      %s19 = sphi 0, %s26
      %s20 = sphi 0, %s18
      %s21 = sphi 0, %s19
      %s22 = sphi 0, %s20
      %s23 = sphi 0, %s21
      %s35 = sphi 0, %s37
      %s38 = sphi 0, %s35
      %s39 = sphi 0, %s38
      %s55 = sphi 0, %s39
      %s61 = sphi 0, %s63
      %s64 = sphi 0, %s61
      %s65 = sphi 0, %s64
      %s81 = sphi 0, %s65
      %s85 = sphi 0, %s85
      %s87 = sphi 0, %s85
      %s88 = sphi 0, %s87
      %s102 = sphi 0, %s88
      %s106 = sphi 0, %s106
      %s108 = sphi 0, %s106
      %s109 = sphi 0, %s108
      %s123 = sphi 0, %s109
      %s129 = sphi 0, %s131
      %s132 = sphi 0, %s129
      %s133 = sphi 0, %s132
      %s149 = sphi 0, %s133
      %s155 = sphi 0, %s157
      %s158 = sphi 0, %s155
      %s159 = sphi 0, %s158
      %s175 = sphi 0, %s159
    $region4: #{vqvae2_forward.53} parent=1 // loop_header_branch
      %14 = sbr.rel (%p12) target = $region8
    $region5: #{vqvae2_forward.53} parent=1 // loop_body
      %s16 = ssub.s32 %s11, 1
      %s17 = ssub.s32 %s11, 2
      %s24 = sadd.s32 1, %s19
      %p25 = scmp.ge.s32.totalorder %s24, 2
      %s26 = scalar_select %p25, 0, %s24
      %s27 = sadd.s32 1, %s18
      %s28 = scalar_select %p25, %s27, %s18
      %p29 = scmp.ge.s32.totalorder %s28, 1
      %s30 = scalar_select %p29, 0, %s28
      %s31 = ssub.s32 %s18, %s30
      %s32 = ssub.s32 %s19, %s26
      %s33 = sor.u32 %s31, %s32
      %p34 = scmp.eq.s32.totalorder %s33, 0
      %s36 = sadd.s32 %s35, 1
      %s37 = scalar_select %p34, %s35, %s36
      %p40 = pneg %p34
      %p41 = scmp.eq.s32.totalorder %s11, 1
      %p42 = por %p40, %p41
      %p43 = scmp.ne.s32.totalorder %s35, %s38
      %p44 = scmp.eq.s32.totalorder %s11, 0
      %p45 = por %p43, %p44
      %p46 = scmp.ne.s32.totalorder %s35, %s38
      %p47 = scmp.eq.s32.totalorder %s16, 1
      %p48 = por %p46, %p47
      %p49 = scmp.ne.s32.totalorder %s38, %s39
      %p50 = scmp.eq.s32.totalorder %s16, 0
      %p51 = por %p49, %p50
      %p52 = scmp.ne.s32.totalorder %s38, %s39
      %p53 = scmp.eq.s32.totalorder %s17, 1
      %p54 = por %p52, %p53
      %p56 = scmp.ne.s32.totalorder %s39, %s55
      %p57 = scmp.eq.s32.totalorder %s17, 0
      %p58 = por %p56, %p57
      %s59 = ssub.s32 %s19, %s26
      %p60 = scmp.eq.s32.totalorder %s59, 0
      %s62 = sadd.s32 %s61, 1
      %s63 = scalar_select %p60, %s61, %s62
      %p66 = pneg %p60
      %p67 = scmp.eq.s32.totalorder %s11, 1
      %p68 = por %p66, %p67
      %p69 = scmp.ne.s32.totalorder %s61, %s64
      %p70 = scmp.eq.s32.totalorder %s11, 0
      %p71 = por %p69, %p70
      %p72 = scmp.ne.s32.totalorder %s61, %s64
      %p73 = scmp.eq.s32.totalorder %s16, 1
      %p74 = por %p72, %p73
      %p75 = scmp.ne.s32.totalorder %s64, %s65
      %p76 = scmp.eq.s32.totalorder %s16, 0
      %p77 = por %p75, %p76
      %p78 = scmp.ne.s32.totalorder %s64, %s65
      %p79 = scmp.eq.s32.totalorder %s17, 1
      %p80 = por %p78, %p79
      %p82 = scmp.ne.s32.totalorder %s65, %s81
      %p83 = scmp.eq.s32.totalorder %s17, 0
      %p84 = por %p82, %p83
      %s86 = sadd.s32 %s85, 1
      %p89 = scmp.eq.s32.totalorder %s11, 1
      %p90 = scmp.ne.s32.totalorder %s85, %s87
      %p91 = scmp.eq.s32.totalorder %s11, 0
      %p92 = por %p90, %p91
      %p93 = scmp.ne.s32.totalorder %s85, %s87
      %p94 = scmp.eq.s32.totalorder %s16, 1
      %p95 = por %p93, %p94
      %p96 = scmp.ne.s32.totalorder %s87, %s88
      %p97 = scmp.eq.s32.totalorder %s16, 0
      %p98 = por %p96, %p97
      %p99 = scmp.ne.s32.totalorder %s87, %s88
      %p100 = scmp.eq.s32.totalorder %s17, 1
      %p101 = por %p99, %p100
      %p103 = scmp.ne.s32.totalorder %s88, %s102
      %p104 = scmp.eq.s32.totalorder %s17, 0
      %p105 = por %p103, %p104
      %s107 = sadd.s32 %s106, 1
      %p110 = scmp.eq.s32.totalorder %s11, 1
      %p111 = scmp.ne.s32.totalorder %s106, %s108
      %p112 = scmp.eq.s32.totalorder %s11, 0
      %p113 = por %p111, %p112
      %p114 = scmp.ne.s32.totalorder %s106, %s108
      %p115 = scmp.eq.s32.totalorder %s16, 1
      %p116 = por %p114, %p115
      %p117 = scmp.ne.s32.totalorder %s108, %s109
      %p118 = scmp.eq.s32.totalorder %s16, 0
      %p119 = por %p117, %p118
      %p120 = scmp.ne.s32.totalorder %s108, %s109
      %p121 = scmp.eq.s32.totalorder %s17, 1
      %p122 = por %p120, %p121
      %p124 = scmp.ne.s32.totalorder %s109, %s123
      %p125 = scmp.eq.s32.totalorder %s17, 0
      %p126 = por %p124, %p125
      %s127 = ssub.s32 %s18, %s30
      %p128 = scmp.eq.s32.totalorder %s127, 0
      %s130 = sadd.s32 %s129, 1
      %s131 = scalar_select %p128, %s129, %s130
      %p134 = pneg %p128
      %p135 = scmp.eq.s32.totalorder %s11, 1
      %p136 = por %p134, %p135
      %p137 = scmp.ne.s32.totalorder %s129, %s132
      %p138 = scmp.eq.s32.totalorder %s11, 0
      %p139 = por %p137, %p138
      %p140 = scmp.ne.s32.totalorder %s129, %s132
      %p141 = scmp.eq.s32.totalorder %s16, 1
      %p142 = por %p140, %p141
      %p143 = scmp.ne.s32.totalorder %s132, %s133
      %p144 = scmp.eq.s32.totalorder %s16, 0
      %p145 = por %p143, %p144
      %p146 = scmp.ne.s32.totalorder %s132, %s133
      %p147 = scmp.eq.s32.totalorder %s17, 1
      %p148 = por %p146, %p147
      %p150 = scmp.ne.s32.totalorder %s133, %s149
      %p151 = scmp.eq.s32.totalorder %s17, 0
      %p152 = por %p150, %p151
      %s153 = ssub.s32 %s18, %s30
      %p154 = scmp.eq.s32.totalorder %s153, 0
      %s156 = sadd.s32 %s155, 1
      %s157 = scalar_select %p154, %s155, %s156
      %p160 = pneg %p154
      %p161 = scmp.eq.s32.totalorder %s11, 1
      %p162 = por %p160, %p161
      %p163 = scmp.ne.s32.totalorder %s155, %s158
      %p164 = scmp.eq.s32.totalorder %s11, 0
      %p165 = por %p163, %p164
      %p166 = scmp.ne.s32.totalorder %s155, %s158
      %p167 = scmp.eq.s32.totalorder %s16, 1
      %p168 = por %p166, %p167
      %p169 = scmp.ne.s32.totalorder %s158, %s159
      %p170 = scmp.eq.s32.totalorder %s16, 0
      %p171 = por %p169, %p170
      %p172 = scmp.ne.s32.totalorder %s158, %s159
      %p173 = scmp.eq.s32.totalorder %s17, 1
      %p174 = por %p172, %p173
      %p176 = scmp.ne.s32.totalorder %s159, %s175
      %p177 = scmp.eq.s32.totalorder %s17, 0
      %p178 = por %p176, %p177
      %p179 = scmp.le.s32.totalorder 1, %s11
      %p180 = scmp.lt.s32.totalorder %s11, 3
      %p181 = pnand %p179, %p180
      %p182 = pneg %p181
      // Predicated region
      $region9: #{vqvae2_forward.53} parent=5 // pred_check
        _
      $region10: #{vqvae2_forward.53} parent=5 // pred_check_branch
        %184 = sbr.rel (%p181) target = $region12
      $region11: #{vqvae2_forward.53} parent=5 // pred_region
        %s185 = ssub.s32 %s11, 1
        // Predicated region
        $region13: #{vqvae2_forward.53} parent=11 // pred_check
          %p186 = pneg %p98
        $region14: #{vqvae2_forward.53} parent=11 // pred_check_branch
          %188 = sbr.rel (%p186) target = $region16
        $region15: #{vqvae2_forward.53} parent=11 // pred_region
          _
        $region16: #{vqvae2_forward.53} parent=11 // pred_fallthru
          _
        // Predicated region
        $region17: #{vqvae2_forward.53} parent=11 // pred_check
          %p189 = pneg %p119
        $region18: #{vqvae2_forward.53} parent=11 // pred_check_branch
          %191 = sbr.rel (%p189) target = $region20
        $region19: #{vqvae2_forward.53} parent=11 // pred_region
          _
        $region20: #{vqvae2_forward.53} parent=11 // pred_fallthru
          _
        // Predicated region
        $region21: #{vqvae2_forward.53} parent=11 // pred_check
          %p192 = pneg %p145
        $region22: #{vqvae2_forward.53} parent=11 // pred_check_branch
          %194 = sbr.rel (%p192) target = $region24
        $region23: #{vqvae2_forward.53} parent=11 // pred_region
          %s195 = smul.u32 4, %s20
          %p196 = scmp.lt.s32.totalorder %s195, 3
          %s197 = scalar_select %p196, %s195, 3
          %s198 = smul.addr %s197, 4
          %s199 = scalar_lea.vmem %s4, %s198
          %s200 = smul.u32 4, %s20
        $region24: #{vqvae2_forward.53} parent=11 // pred_fallthru
          _
      $region12: #{vqvae2_forward.53} parent=5 // pred_fallthru
        _
      %p201 = scmp.lt.s32.totalorder %s11, 2
      // Predicated region
      $region25: #{vqvae2_forward.53} parent=5 // pred_check
        %p202 = pneg %p201
      $region26: #{vqvae2_forward.53} parent=5 // pred_check_branch
        %204 = sbr.rel (%p202) target = $region28
      $region27: #{vqvae2_forward.53} parent=5 // pred_region
        // Predicated region
        $region29: #{vqvae2_forward.53} parent=27 // pred_check
          %p205 = pneg %p45
        $region30: #{vqvae2_forward.53} parent=27 // pred_check_branch
          %207 = sbr.rel (%p205) target = $region32
        $region31: #{vqvae2_forward.53} parent=27 // pred_region
          %s208 = sand.u32 %s35, 1
          %s209 = sand.u32 %s35, 1
          %s210 = smul.addr %s209, 16
          %s211 = scalar_lea.vmem [#allocation3], %s210
          %s212 = smul.u32 4, %s18
          %s213 = smul.addr %s212, 2
          %s214 = sadd.s32 %s19, %s213
          %s215 = smul.addr %s214, 4
          %s216 = scalar_lea.vmem %s0, %s215
          // Predicated region
          $region33: #{vqvae2_forward.53} parent=31 // pred_check
            _
          $region34: #{vqvae2_forward.53} parent=31 // pred_check_branch
            %218 = sbr.rel (0) target = $region36
          $region35: #{vqvae2_forward.53} parent=31 // pred_region
            // Predicated region
            $region37: #{vqvae2_forward.53} parent=35 // pred_check
              _
            $region38: #{vqvae2_forward.53} parent=35 // pred_check_branch
              %220 = sbr.rel target = $region40
            $region39: #{vqvae2_forward.53} parent=35 // pred_region
              // Predicated region
              $region52: #{vqvae2_forward.53} parent=39 // pred_check
                _
              $region53: #{vqvae2_forward.53} parent=39 // pred_check_branch
                %242 = sbr.rel (0) target = $region55
              $region54: #{vqvae2_forward.53} parent=39 // pred_region
                loop: start=0, step=1, limit=1
                $region56: #{vqvae2_forward.53} parent=54 // loop_pre_header
                  _
                $region57: #{vqvae2_forward.53} parent=54 // loop_header
                  %s244 = sphi 0, %s248
                  %p245 = scmp.ge.s32.totalorder %s244, 1
                  %s249 = sphi %s216, %s216
                  %s250 = sphi %s211, %s211
                $region58: #{vqvae2_forward.53} parent=54 // loop_header_branch
                  %247 = sbr.rel (%p245) target = $region62
                $region59: #{vqvae2_forward.53} parent=54 // loop_body
                  _
                $region60: #{vqvae2_forward.53} parent=54 // loop_footer
                  %s248 = sadd.s32 1, %s244
                $region61: #{vqvae2_forward.53} parent=54 // loop_footer_branch
                  %243 = sbr.rel target = $region57
                $region62: #{vqvae2_forward.53} parent=54 // loop_exit
                  _
                %s252 = ssub.s32 16, 1
                loop: start=0, step=1, limit=1
                $region63: #{vqvae2_forward.53} parent=54 // loop_pre_header
                  _
                $region64: #{vqvae2_forward.53} parent=54 // loop_header
                  %s254 = sphi 0, %s258
                  %p255 = scmp.ge.s32.totalorder %s254, 1
                  %s259 = sphi %s216, %s216
                  %s260 = sphi %s211, %s211
                $region65: #{vqvae2_forward.53} parent=54 // loop_header_branch
                  %257 = sbr.rel (%p255) target = $region69
                $region66: #{vqvae2_forward.53} parent=54 // loop_body
                  %v261 = vld [vmem:[%s259] sm:%s252]
                  %262 = vst [vmem:[%s260] sm:%s252] %v261
                  %v263 = vld [vmem:[%s259 + $0x8] sm:%s252]
                  %264 = vst [vmem:[%s260 + $0x4] sm:%s252] %v263
                  %v265 = vld [vmem:[%s259 + $0x10] sm:%s252]
                  %266 = vst [vmem:[%s260 + $0x8] sm:%s252] %v265
                  %v267 = vld [vmem:[%s259 + $0x18] sm:%s252]
                  %268 = vst [vmem:[%s260 + $0xc] sm:%s252] %v267
                $region67: #{vqvae2_forward.53} parent=54 // loop_footer
                  %s258 = sadd.s32 1, %s254
                $region68: #{vqvae2_forward.53} parent=54 // loop_footer_branch
                  %253 = sbr.rel target = $region64
                $region69: #{vqvae2_forward.53} parent=54 // loop_exit
                  _
              $region55: #{vqvae2_forward.53} parent=39 // pred_fallthru
                _
            $region40: #{vqvae2_forward.53} parent=35 // pred_fallthru
              _
            // Predicated region
            $region41: #{vqvae2_forward.53} parent=35 // pred_check
              _
            $region42: #{vqvae2_forward.53} parent=35 // pred_check_branch
              %222 = sbr.rel (0) target = $region44
            $region43: #{vqvae2_forward.53} parent=35 // pred_region
              %s224 = ssub.s32 16, 1
              loop: start=0, step=1, limit=1
              $region45: #{vqvae2_forward.53} parent=43 // loop_pre_header
                _
              $region46: #{vqvae2_forward.53} parent=43 // loop_header
                %s226 = sphi 0, %s230
                %p227 = scmp.ge.s32.totalorder %s226, 1
                %s231 = sphi %s216, %s216
                %s232 = sphi %s211, %s211
              $region47: #{vqvae2_forward.53} parent=43 // loop_header_branch
                %229 = sbr.rel (%p227) target = $region51
              $region48: #{vqvae2_forward.53} parent=43 // loop_body
                %v233 = vld [vmem:[%s231] sm:%s224]
                %234 = vst [vmem:[%s232] sm:%s224] %v233
                %v235 = vld [vmem:[%s231 + $0x8] sm:%s224]
                %236 = vst [vmem:[%s232 + $0x4] sm:%s224] %v235
                %v237 = vld [vmem:[%s231 + $0x10] sm:%s224]
                %238 = vst [vmem:[%s232 + $0x8] sm:%s224] %v237
                %v239 = vld [vmem:[%s231 + $0x18] sm:%s224]
                %240 = vst [vmem:[%s232 + $0xc] sm:%s224] %v239
              $region49: #{vqvae2_forward.53} parent=43 // loop_footer
                %s230 = sadd.s32 1, %s226
              $region50: #{vqvae2_forward.53} parent=43 // loop_footer_branch
                %225 = sbr.rel target = $region46
              $region51: #{vqvae2_forward.53} parent=43 // loop_exit
                _
            $region44: #{vqvae2_forward.53} parent=35 // pred_fallthru
              _
          $region36: #{vqvae2_forward.53} parent=31 // pred_fallthru
            _
          %269 = vnop
        $region32: #{vqvae2_forward.53} parent=27 // pred_fallthru
          _
        // Predicated region
        $region70: #{vqvae2_forward.53} parent=27 // pred_check
          %p270 = pneg %p71
        $region71: #{vqvae2_forward.53} parent=27 // pred_check_branch
          %272 = sbr.rel (%p270) target = $region73
        $region72: #{vqvae2_forward.53} parent=27 // pred_region
          %s273 = smul.u32 16, %s19
          %p274 = scmp.lt.s32.totalorder %s273, 31
          %s275 = scalar_select %p274, %s273, 31
          %s276 = smul.addr %s275, 4
          %s277 = scalar_lea.vmem %s1, %s276
          %s278 = smul.u32 16, %s19
        $region73: #{vqvae2_forward.53} parent=27 // pred_fallthru
          _
      $region28: #{vqvae2_forward.53} parent=5 // pred_fallthru
        _
      %p279 = scmp.le.s32.totalorder 1, %s11
      %p280 = scmp.lt.s32.totalorder %s11, 3
      %p281 = pnand %p279, %p280
      %p282 = pneg %p281
      // Predicated region
      $region74: #{vqvae2_forward.53} parent=5 // pred_check
        _
      $region75: #{vqvae2_forward.53} parent=5 // pred_check_branch
        %284 = sbr.rel (%p281) target = $region77
      $region76: #{vqvae2_forward.53} parent=5 // pred_region
        %s285 = ssub.s32 %s11, 1
        %s286 = sand.u32 %s38, 1
        %s287 = sand.u32 %s38, 1
        %s288 = smul.addr %s287, 16
        %s289 = scalar_lea.vmem [#allocation3], %s288
        // Predicated region
        $region78: #{vqvae2_forward.53} parent=76 // pred_check
          %p290 = pneg %p51
        $region79: #{vqvae2_forward.53} parent=76 // pred_check_branch
          %292 = sbr.rel (%p290) target = $region81
        $region80: #{vqvae2_forward.53} parent=76 // pred_region
          _
        $region81: #{vqvae2_forward.53} parent=76 // pred_fallthru
          _
        %s293 = sand.u32 %s38, 1
        %s294 = sand.u32 %s38, 1
        %s295 = smul.addr %s294, 16
        %s296 = scalar_lea.vmem [#allocation3], %s295
        %p297 = pneg %p51
        %p298 = pneg %p48
        %s299 = smul.u32 16, %s21
        %p300 = scmp.lt.s32.totalorder %s299, 31
        %s301 = scalar_select %p300, %s299, 31
        %s302 = smul.addr %s301, 4
        %s303 = scalar_lea.vmem %s1, %s302
        %p304 = pneg %p77
        %p305 = pneg %p74
        %p306 = pneg %p98
        %p307 = pneg %p95
        %p308 = pneg %p119
        %p309 = pneg %p116
        %s310 = smul.u32 4, %s20
        %p311 = scmp.lt.s32.totalorder %s310, 3
        %s312 = scalar_select %p311, %s310, 3
        %s313 = smul.addr %s312, 4
        %s314 = scalar_lea.vmem %s4, %s313
        %p315 = pneg %p145
        %p316 = pneg %p142
        %p317 = pneg %p171
        %p318 = pneg %p168
        %s319 = smul.u32 4, %s20
        %p320 = scmp.lt.s32.totalorder %s319, 3
        %s321 = scalar_select %p320, %s319, 3
        %s322 = smul.addr %s321, 4
        %s323 = scalar_lea.vmem %s5, %s322
        %s324 = smul.u32 4, %s20
        %s325 = smul.u32 16, %s21
        %p326 = scmp.lt.s32.totalorder %s325, 31
        %s327 = scalar_select %p326, %s325, 31
        %s328 = smul.addr %s327, 4
        %s329 = scalar_lea.vmem %s1, %s328
        %s330 = smul.u32 16, %s21
        %s331 = smul.u32 4, %s20
        %p332 = scmp.lt.s32.totalorder %s331, 3
        %s333 = scalar_select %p332, %s331, 3
        %s334 = smul.addr %s333, 4
        %s335 = scalar_lea.vmem %s4, %s334
        %s336 = smul.u32 4, %s20
        %s337 = smul.u32 4, %s20
        %p338 = scmp.lt.s32.totalorder %s337, 3
        %s339 = scalar_select %p338, %s337, 3
        %s340 = smul.addr %s339, 4
        %s341 = scalar_lea.vmem %s5, %s340
        %s342 = smul.u32 4, %s20
        %p344 = scmp.eq.s32.totalorder %s21, 0
        // Predicated region
        $region82: #{vqvae2_forward.53} parent=76 // pred_check
          %p345 = pneg %p344
        $region83: #{vqvae2_forward.53} parent=76 // pred_check_branch
          %347 = sbr.rel (%p345) target = $region85
        $region84: #{vqvae2_forward.53} parent=76 // pred_region
          %vm348 = vcmask 130048
          %349 = vst.msk [vmem:[#allocation2] sm:$0xff] %vm348, 0.0
          %350 = vst.msk [vmem:[#allocation2 + $0x8] sm:$0xff] %vm348, 0.0
          %351 = vst.msk [vmem:[#allocation2 + $0x10] sm:$0xff] %vm348, 0.0
          %352 = vst.msk [vmem:[#allocation2 + $0x18] sm:$0xff] %vm348, 0.0
        $region85: #{vqvae2_forward.53} parent=76 // pred_fallthru
          _
        %v353 = vld [vmem:[#allocation2] sm:$0xff]
        %v354 = vld [vmem:[#allocation2 + $0x8] sm:$0xff]
        %v355 = vld [vmem:[#allocation2 + $0x10] sm:$0xff]
        %v356 = vld [vmem:[#allocation2 + $0x18] sm:$0xff]
        %v357 = vld [vmem:[%s289] sm:$0xf]
        %v358 = vld [vmem:[%s289 + $0x4] sm:$0xf]
        %v359 = vld [vmem:[%s289 + $0x8] sm:$0xf]
        %v360 = vld [vmem:[%s289 + $0xc] sm:$0xf]
        %v361 = vld [vmem:[%s329] sm:$0xf]
        %v362 = vld [vmem:[%s329 + $0x4] sm:$0xf]
        %v363 = vld [vmem:[%s329 + $0x8] sm:$0xf]
        %v364 = vld [vmem:[%s329 + $0xc] sm:$0xf]
        %v365 = vld [vmem:[%s329 + $0x10] sm:$0xf]
        %v366 = vld [vmem:[%s329 + $0x14] sm:$0xf]
        %v367 = vld [vmem:[%s329 + $0x18] sm:$0xf]
        %v368 = vld [vmem:[%s329 + $0x1c] sm:$0xf]
        %v369 = vld [vmem:[%s329 + $0x20] sm:$0xf]
        %v370 = vld [vmem:[%s329 + $0x24] sm:$0xf]
        %v371 = vld [vmem:[%s329 + $0x28] sm:$0xf]
        %v372 = vld [vmem:[%s329 + $0x2c] sm:$0xf]
        %v373 = vld [vmem:[%s329 + $0x30] sm:$0xf]
        %v374 = vld [vmem:[%s329 + $0x34] sm:$0xf]
        %v375 = vld [vmem:[%s329 + $0x38] sm:$0xf]
        %v376 = vld [vmem:[%s329 + $0x3c] sm:$0xf]
        %v381 = vunpack.c.l.b16 %v357
        %v382 = vunpack.c.l.b16 %v358
        %v383 = vunpack.c.l.b16 %v359
        %v384 = vunpack.c.l.b16 %v360
        %v385 = vpack.c.b16 %v382, %v381
        %v386 = vpack.c.b16 %v384, %v383
        %v405 = vunpack.c.l.b16 %v361
        %v406 = vunpack.c.l.b16 %v362
        %v407 = vunpack.c.l.b16 %v363
        %v408 = vunpack.c.l.b16 %v364
        %v409 = vunpack.c.l.b16 %v365
        %v410 = vunpack.c.l.b16 %v366
        %v411 = vunpack.c.l.b16 %v367
        %v412 = vunpack.c.l.b16 %v368
        %v413 = vunpack.c.l.b16 %v369
        %v414 = vunpack.c.l.b16 %v370
        %v415 = vunpack.c.l.b16 %v371
        %v416 = vunpack.c.l.b16 %v372
        %v417 = vunpack.c.l.b16 %v373
        %v418 = vunpack.c.l.b16 %v374
        %v419 = vunpack.c.l.b16 %v375
        %v420 = vunpack.c.l.b16 %v376
        %v421 = vpack.c.b16 %v406, %v405
        %v422 = vpack.c.b16 %v408, %v407
        %v423 = vpack.c.b16 %v410, %v409
        %v424 = vpack.c.b16 %v412, %v411
        %v425 = vpack.c.b16 %v414, %v413
        %v426 = vpack.c.b16 %v416, %v415
        %v427 = vpack.c.b16 %v418, %v417
        %v428 = vpack.c.b16 %v420, %v419
        %437 = vmatprep.subr.bf16.mxu0 0
        %438 = vmatpush1.bf16.msra.mxu0 %v428
        %439 = vmatprep.subr.bf16.mxu0 0
        %440 = vmatpush1.bf16.msra.mxu0 %v427
        %441 = vmatprep.subr.bf16.mxu0 0
        %442 = vmatpush1.bf16.msra.mxu0 %v426
        %443 = vmatprep.subr.bf16.mxu0 0
        %444 = vmatpush1.bf16.msra.mxu0 %v425
        %445 = vmatprep.subr.bf16.mxu0 0
        %446 = vmatpush1.bf16.msra.mxu0 %v424
        %447 = vmatprep.subr.bf16.mxu0 0
        %448 = vmatpush1.bf16.msra.mxu0 %v423
        %449 = vmatprep.subr.bf16.mxu0 0
        %450 = vmatpush1.bf16.msra.mxu0 %v422
        %451 = vmatprep.subr.bf16.mxu0 0
        %452 = vmatpush1.bf16.msra.mxu0 %v421
        %453 = vmatprep.subr.bf16.mxu0 0
        %454 = vmatpush2.bf16.msra.mxu0 0
        %455 = vmatprep.subr.bf16.mxu0 0
        %456 = vmatpush2.bf16.msra.mxu0 0
        %457 = vmatprep.subr.bf16.mxu0 0
        %458 = vmatpush2.bf16.msra.mxu0 0
        %459 = vmatprep.subr.bf16.mxu0 0
        %460 = vmatpush2.bf16.msra.mxu0 0
        %461 = vmatprep.subr.bf16.mxu0 0
        %462 = vmatpush2.bf16.msra.mxu0 0
        %463 = vmatprep.subr.bf16.mxu0 0
        %464 = vmatpush2.bf16.msra.mxu0 0
        %465 = vmatprep.subr.bf16.mxu0 0
        %466 = vmatpush2.bf16.msra.mxu0 0
        %467 = vmatprep.subr.bf16.mxu0 0
        %468 = vmatpush2.bf16.msra.mxu0 0
        %469 = vmatprep.mubr.bf16.mxu0 0
        %470 = vmatmul.mubr.bf16.gmra.mxu0 %v385
        %v471 = vpop.f32.mrf.mxu0
        %v472 = vadd.f32 0.0, %v471
        %v473 = vpop.f32.mrf.mxu0
        %v474 = vpop.f32.mrf.mxu0
        %v475 = vadd.f32 0.0, %v474
        %v476 = vpop.f32.mrf.mxu0
        %477 = vmatprep.mubr.bf16.mxu0 0
        %478 = vmatmul.mubr.bf16.gmra.mxu0 %v386
        %v479 = vpop.f32.mrf.mxu0
        %v480 = vadd.f32 0.0, %v479
        %v481 = vpop.f32.mrf.mxu0
        %v482 = vpop.f32.mrf.mxu0
        %v483 = vadd.f32 0.0, %v482
        %v484 = vpop.f32.mrf.mxu0
        %485 = vdwg.mxu0
        %v486 = vadd.f32 %v353, %v472
        %v487 = vadd.f32 %v354, %v475
        %v488 = vadd.f32 %v355, %v480
        %v489 = vadd.f32 %v356, %v483
        %vm490 = vcmask 130048
        %491 = vst.msk [vmem:[#allocation2] sm:$0xff] %vm490, %v486
        %492 = vst.msk [vmem:[#allocation2 + $0x8] sm:$0xff] %vm490, %v487
        %493 = vst.msk [vmem:[#allocation2 + $0x10] sm:$0xff] %vm490, %v488
        %494 = vst.msk [vmem:[#allocation2 + $0x18] sm:$0xff] %vm490, %v489
        %p495 = scmp.eq.s32.totalorder %s21, 1
        // Predicated region
        $region86: #{vqvae2_forward.53} parent=76 // pred_check
          %p496 = pneg %p495
        $region87: #{vqvae2_forward.53} parent=76 // pred_check_branch
          %498 = sbr.rel (%p496) target = $region89
        $region88: #{vqvae2_forward.53} parent=76 // pred_region
          %v499 = vld [vmem:[#allocation2] sm:$0xff]
          %v500 = vld [vmem:[#allocation2 + $0x8] sm:$0xff]
          %v501 = vld [vmem:[#allocation2 + $0x10] sm:$0xff]
          %v502 = vld [vmem:[#allocation2 + $0x18] sm:$0xff]
          %v503 = vld [vmem:[%s2] sm:$0x1]
          %v505 = vlaneseq
          %v506 = vshrl.u32 %v505, 7
          %v507 = vsub.s32 0, %v506
          %v508 = vrot.slane %v503, %v507
          %v510 = vmul.f32 %v499, %v508
          %v511 = vmul.f32 %v500, %v508
          %v512 = vmul.f32 %v501, %v508
          %v513 = vmul.f32 %v502, %v508
          %v514 = vld [vmem:[%s3] sm:$0x1]
          %v516 = vlaneseq
          %v517 = vshrl.u32 %v516, 7
          %v518 = vsub.s32 0, %v517
          %v519 = vrot.slane %v514, %v518
          %v521 = vadd.f32 %v510, %v519
          %v522 = vadd.f32 %v511, %v519
          %v523 = vadd.f32 %v512, %v519
          %v524 = vadd.f32 %v513, %v519
          %v525 = vld [vmem:[%s335] sm:$0xf]
          %v526 = vld [vmem:[%s335 + $0x4] sm:$0xf]
          %v527 = vld [vmem:[%s335 + $0x8] sm:$0xf]
          %v528 = vld [vmem:[%s335 + $0xc] sm:$0xf]
          %v529 = vunpack.c.l.bf16 %v525
          %v530 = vunpack.c.l.bf16 %v526
          %v531 = vunpack.c.l.bf16 %v527
          %v532 = vunpack.c.l.bf16 %v528
          %v533 = vadd.f32 %v521, %v529
          %v534 = vadd.f32 %v522, %v530
          %v535 = vadd.f32 %v523, %v531
          %v536 = vadd.f32 %v524, %v532
          %v537 = vmax.f32 %v533, 0.0
          %v538 = vmax.f32 %v534, 0.0
          %v539 = vmax.f32 %v535, 0.0
          %v540 = vmax.f32 %v536, 0.0
          %v541 = vpack.c.bf16 %v538, %v537
          %v542 = vpack.c.bf16 %v540, %v539
          %v545 = vunpack.c.l.b16 %v541
          %v546 = vunpack.c.h.b16 %v541
          %v547 = vunpack.c.l.b16 %v542
          %v548 = vunpack.c.h.b16 %v542
          %v549 = vpack.c.b16 %v545, %v545
          %v550 = vpack.c.b16 %v546, %v546
          %v551 = vpack.c.b16 %v547, %v547
          %v552 = vpack.c.b16 %v548, %v548
          %vm557 = vcmask 125952
          %558 = vst.msk [vmem:[%s341] sm:$0xf] %vm557, %v549
          %559 = vst.msk [vmem:[%s341 + $0x4] sm:$0xf] %vm557, %v550
          %560 = vst.msk [vmem:[%s341 + $0x8] sm:$0xf] %vm557, %v551
          %561 = vst.msk [vmem:[%s341 + $0xc] sm:$0xf] %vm557, %v552
        $region89: #{vqvae2_forward.53} parent=76 // pred_fallthru
          _
        %s562 = smul.u32 4, %s20
        %p563 = scmp.lt.s32.totalorder %s562, 3
        %s564 = scalar_select %p563, %s562, 3
        %s565 = smul.addr %s564, 4
        %s566 = scalar_lea.vmem %s5, %s565
        // Predicated region
        $region90: #{vqvae2_forward.53} parent=76 // pred_check
          %p567 = pneg %p168
        $region91: #{vqvae2_forward.53} parent=76 // pred_check_branch
          %569 = sbr.rel (%p567) target = $region93
        $region92: #{vqvae2_forward.53} parent=76 // pred_region
          %s570 = smul.u32 4, %s20
        $region93: #{vqvae2_forward.53} parent=76 // pred_fallthru
          _
        // Predicated region
        $region94: #{vqvae2_forward.53} parent=76 // pred_check
          %p571 = pneg %p168
        $region95: #{vqvae2_forward.53} parent=76 // pred_check_branch
          %573 = sbr.rel (%p571) target = $region97
        $region96: #{vqvae2_forward.53} parent=76 // pred_region
          %s574 = smul.u32 4, %s20
          %p575 = scmp.lt.s32.totalorder %s574, 3
          %s576 = scalar_select %p575, %s574, 3
          %s577 = smul.addr %s576, 4
          %s578 = scalar_lea.vmem %s5, %s577
        $region97: #{vqvae2_forward.53} parent=76 // pred_fallthru
          _
      $region77: #{vqvae2_forward.53} parent=5 // pred_fallthru
        _
      %p579 = scmp.le.s32.totalorder 2, %s11
      // Predicated region
      $region98: #{vqvae2_forward.53} parent=5 // pred_check
        %p580 = pneg %p579
      $region99: #{vqvae2_forward.53} parent=5 // pred_check_branch
        %582 = sbr.rel (%p580) target = $region101
      $region100: #{vqvae2_forward.53} parent=5 // pred_region
        %s583 = ssub.s32 %s11, 2
      $region101: #{vqvae2_forward.53} parent=5 // pred_fallthru
        _
    $region6: #{vqvae2_forward.53} parent=1 // loop_footer
      %s15 = sadd.s32 1, %s11
    $region7: #{vqvae2_forward.53} parent=1 // loop_footer_branch
      %10 = sbr.rel target = $region3
    $region8: #{vqvae2_forward.53} parent=1 // loop_exit
      _

// kernel: vqvae2_forward.54
$region0: #{vqvae2_forward.54}
  #allocation0 [shape = 'u32[]', space=smem, size = 0x4, offset = 0x4, fixed_abs, tag = 'smem constant byte address 0x4 - core index']
  #allocation1 [shape = 'u32[144,128]{1,0:T(1,128)}', space=vmem, size = 0x12000, scoped, tag = 'internal scratch']
  #allocation2 [shape = 'f32[32,32]{1,0:T(8,128)}', space=vmem, size = 0x4000, scoped, tag = 'scratch operand']
  %s0 = inlined_call_operand.vmem [shape: bf16[32,64], index: 0, kind: input, shape index: {}]
  %s1 = inlined_call_operand.vmem [shape: bf16[64,32], index: 1, kind: input, shape index: {}]
  %s2 = inlined_call_operand.vmem [shape: f32[1,32], index: 2, kind: input, shape index: {}]
  %s3 = inlined_call_operand.vmem [shape: f32[1,32], index: 3, kind: input, shape index: {}]
  %s4 = inlined_call_operand.vmem [shape: bf16[32,32], index: 4, kind: output, shape index: {}]
  %s5 = sld [smem:[#allocation0]]
  $region34: #{vqvae2_forward.54} parent=0
    _
  %s7 = ssub.s32 1, %s5
  %s8 = scalar_select 0, %s7, %s5
  // Predicated region
  $region2: #{vqvae2_forward.54} parent=0 // pred_check
    _
  $region3: #{vqvae2_forward.54} parent=0 // pred_check_branch
    %10 = sbr.rel (0) target = $region5
  $region4: #{vqvae2_forward.54} parent=0 // pred_region
    _
  $region5: #{vqvae2_forward.54} parent=0 // pred_fallthru
    _
  // Predicated region
  $region6: #{vqvae2_forward.54} parent=0 // pred_check
    _
  $region7: #{vqvae2_forward.54} parent=0 // pred_check_branch
    %12 = sbr.rel (0) target = $region9
  $region8: #{vqvae2_forward.54} parent=0 // pred_region
    _
  $region9: #{vqvae2_forward.54} parent=0 // pred_fallthru
    _
  // Predicated region
  $region10: #{vqvae2_forward.54} parent=0 // pred_check
    _
  $region11: #{vqvae2_forward.54} parent=0 // pred_check_branch
    %14 = sbr.rel (0) target = $region13
  $region12: #{vqvae2_forward.54} parent=0 // pred_region
    _
  $region13: #{vqvae2_forward.54} parent=0 // pred_fallthru
    _
  // Predicated region
  $region14: #{vqvae2_forward.54} parent=0 // pred_check
    _
  $region15: #{vqvae2_forward.54} parent=0 // pred_check_branch
    %16 = sbr.rel (0) target = $region17
  $region16: #{vqvae2_forward.54} parent=0 // pred_region
    _
  $region17: #{vqvae2_forward.54} parent=0 // pred_fallthru
    _
  %p18 = scmp.eq.s32.totalorder 0, 0
  // Predicated region
  $region18: #{vqvae2_forward.54} parent=0 // pred_check
    %p19 = pneg %p18
  $region19: #{vqvae2_forward.54} parent=0 // pred_check_branch
    %21 = sbr.rel (%p19) target = $region21
  $region20: #{vqvae2_forward.54} parent=0 // pred_region
    %vm22 = vcmask 261120
    %23 = vst.msk [vmem:[#allocation2] sm:$0xff] %vm22, 0.0
    %24 = vst.msk [vmem:[#allocation2 + $0x8] sm:$0xff] %vm22, 0.0
    %25 = vst.msk [vmem:[#allocation2 + $0x10] sm:$0xff] %vm22, 0.0
    %26 = vst.msk [vmem:[#allocation2 + $0x18] sm:$0xff] %vm22, 0.0
  $region21: #{vqvae2_forward.54} parent=0 // pred_fallthru
    _
  %v27 = vld [vmem:[#allocation2] sm:$0xff]
  %v28 = vld [vmem:[#allocation2 + $0x8] sm:$0xff]
  %v29 = vld [vmem:[#allocation2 + $0x10] sm:$0xff]
  %v30 = vld [vmem:[#allocation2 + $0x18] sm:$0xff]
  %v31 = vld [vmem:[%s0] sm:$0xf]
  %v32 = vld [vmem:[%s0 + $0x4] sm:$0xf]
  %v33 = vld [vmem:[%s0 + $0x8] sm:$0xf]
  %v34 = vld [vmem:[%s0 + $0xc] sm:$0xf]
  %v35 = vld [vmem:[%s1] sm:$0xf]
  %v36 = vld [vmem:[%s1 + $0x4] sm:$0xf]
  %v37 = vld [vmem:[%s1 + $0x8] sm:$0xf]
  %v38 = vld [vmem:[%s1 + $0xc] sm:$0xf]
  %v39 = vld [vmem:[%s1 + $0x10] sm:$0xf]
  %v40 = vld [vmem:[%s1 + $0x14] sm:$0xf]
  %v41 = vld [vmem:[%s1 + $0x18] sm:$0xf]
  %v42 = vld [vmem:[%s1 + $0x1c] sm:$0xf]
  %v47 = vunpack.c.l.b16 %v31
  %v48 = vunpack.c.l.b16 %v32
  %v49 = vunpack.c.l.b16 %v33
  %v50 = vunpack.c.l.b16 %v34
  %v51 = vpack.c.b16 %v48, %v47
  %v52 = vpack.c.b16 %v50, %v49
  %v61 = vunpack.c.l.b16 %v35
  %v62 = vunpack.c.l.b16 %v36
  %v63 = vunpack.c.l.b16 %v37
  %v64 = vunpack.c.l.b16 %v38
  %v65 = vunpack.c.l.b16 %v39
  %v66 = vunpack.c.l.b16 %v40
  %v67 = vunpack.c.l.b16 %v41
  %v68 = vunpack.c.l.b16 %v42
  %v69 = vpack.c.b16 %v62, %v61
  %v70 = vpack.c.b16 %v64, %v63
  %v71 = vpack.c.b16 %v66, %v65
  %v72 = vpack.c.b16 %v68, %v67
  %vm77 = vcmask 523264
  %v79 = vsel %vm77, %v51, 0
  %v82 = vsel %vm77, %v52, 0
  %84 = vmatprep.subr.bf16.mxu0 0
  %85 = vmatpush1.bf16.msra.mxu0 0
  %86 = vmatprep.subr.bf16.mxu0 0
  %87 = vmatpush1.bf16.msra.mxu0 0
  %88 = vmatprep.subr.bf16.mxu0 0
  %89 = vmatpush1.bf16.msra.mxu0 0
  %90 = vmatprep.subr.bf16.mxu0 0
  %91 = vmatpush1.bf16.msra.mxu0 0
  %92 = vmatprep.subr.bf16.mxu0 0
  %93 = vmatpush1.bf16.msra.mxu0 %v72
  %94 = vmatprep.subr.bf16.mxu0 0
  %95 = vmatpush1.bf16.msra.mxu0 %v71
  %96 = vmatprep.subr.bf16.mxu0 0
  %97 = vmatpush1.bf16.msra.mxu0 %v70
  %98 = vmatprep.subr.bf16.mxu0 0
  %99 = vmatpush1.bf16.msra.mxu0 %v69
  %100 = vmatprep.subr.bf16.mxu0 0
  %101 = vmatpush2.bf16.msra.mxu0 0
  %102 = vmatprep.subr.bf16.mxu0 0
  %103 = vmatpush2.bf16.msra.mxu0 0
  %104 = vmatprep.subr.bf16.mxu0 0
  %105 = vmatpush2.bf16.msra.mxu0 0
  %106 = vmatprep.subr.bf16.mxu0 0
  %107 = vmatpush2.bf16.msra.mxu0 0
  %108 = vmatprep.subr.bf16.mxu0 0
  %109 = vmatpush2.bf16.msra.mxu0 0
  %110 = vmatprep.subr.bf16.mxu0 0
  %111 = vmatpush2.bf16.msra.mxu0 0
  %112 = vmatprep.subr.bf16.mxu0 0
  %113 = vmatpush2.bf16.msra.mxu0 0
  %114 = vmatprep.subr.bf16.mxu0 0
  %115 = vmatpush2.bf16.msra.mxu0 0
  %116 = vmatprep.mubr.bf16.mxu0 0
  %117 = vmatmul.mubr.bf16.gmra.mxu0 %v79
  %v118 = vpop.f32.mrf.mxu0
  %v119 = vadd.f32 0.0, %v118
  %v120 = vpop.f32.mrf.mxu0
  %v121 = vpop.f32.mrf.mxu0
  %v122 = vadd.f32 0.0, %v121
  %v123 = vpop.f32.mrf.mxu0
  %124 = vmatprep.mubr.bf16.mxu0 0
  %125 = vmatmul.mubr.bf16.gmra.mxu0 %v82
  %v126 = vpop.f32.mrf.mxu0
  %v127 = vadd.f32 0.0, %v126
  %v128 = vpop.f32.mrf.mxu0
  %v129 = vpop.f32.mrf.mxu0
  %v130 = vadd.f32 0.0, %v129
  %v131 = vpop.f32.mrf.mxu0
  %132 = vdwg.mxu0
  %v133 = vadd.f32 %v27, %v119
  %v134 = vadd.f32 %v28, %v122
  %v135 = vadd.f32 %v29, %v127
  %v136 = vadd.f32 %v30, %v130
  %vm137 = vcmask 261120
  %138 = vst.msk [vmem:[#allocation2] sm:$0xff] %vm137, %v133
  %139 = vst.msk [vmem:[#allocation2 + $0x8] sm:$0xff] %vm137, %v134
  %140 = vst.msk [vmem:[#allocation2 + $0x10] sm:$0xff] %vm137, %v135
  %141 = vst.msk [vmem:[#allocation2 + $0x18] sm:$0xff] %vm137, %v136
  // Predicated region
  $region22: #{vqvae2_forward.54} parent=0 // pred_check
    %p142 = pneg %p18
  $region23: #{vqvae2_forward.54} parent=0 // pred_check_branch
    %144 = sbr.rel (%p142) target = $region25
  $region24: #{vqvae2_forward.54} parent=0 // pred_region
    %v145 = vld [vmem:[#allocation2] sm:$0xff]
    %v146 = vld [vmem:[#allocation2 + $0x8] sm:$0xff]
    %v147 = vld [vmem:[#allocation2 + $0x10] sm:$0xff]
    %v148 = vld [vmem:[#allocation2 + $0x18] sm:$0xff]
    %v149 = vld [vmem:[%s2] sm:$0x1]
    %v151 = vlaneseq
    %v152 = vshrl.u32 %v151, 7
    %v153 = vsub.s32 0, %v152
    %v154 = vrot.slane %v149, %v153
    %v156 = vmul.f32 %v145, %v154
    %v157 = vmul.f32 %v146, %v154
    %v158 = vmul.f32 %v147, %v154
    %v159 = vmul.f32 %v148, %v154
    %v160 = vld [vmem:[%s3] sm:$0x1]
    %v162 = vlaneseq
    %v163 = vshrl.u32 %v162, 7
    %v164 = vsub.s32 0, %v163
    %v165 = vrot.slane %v160, %v164
    %v167 = vadd.f32 %v156, %v165
    %v168 = vadd.f32 %v157, %v165
    %v169 = vadd.f32 %v158, %v165
    %v170 = vadd.f32 %v159, %v165
    %v171 = vmax.f32 %v167, 0.0
    %v172 = vmax.f32 %v168, 0.0
    %v173 = vmax.f32 %v169, 0.0
    %v174 = vmax.f32 %v170, 0.0
    %v175 = vpack.c.bf16 %v172, %v171
    %v176 = vpack.c.bf16 %v174, %v173
    %v179 = vunpack.c.l.b16 %v175
    %v180 = vunpack.c.h.b16 %v175
    %v181 = vunpack.c.l.b16 %v176
    %v182 = vunpack.c.h.b16 %v176
    %v183 = vpack.c.b16 %v179, %v179
    %v184 = vpack.c.b16 %v180, %v180
    %v185 = vpack.c.b16 %v181, %v181
    %v186 = vpack.c.b16 %v182, %v182
    %vm191 = vcmask 257024
    %192 = vst.msk [vmem:[%s4] sm:$0xf] %vm191, %v183
    %193 = vst.msk [vmem:[%s4 + $0x4] sm:$0xf] %vm191, %v184
    %194 = vst.msk [vmem:[%s4 + $0x8] sm:$0xf] %vm191, %v185
    %195 = vst.msk [vmem:[%s4 + $0xc] sm:$0xf] %vm191, %v186
  $region25: #{vqvae2_forward.54} parent=0 // pred_fallthru
    _
  // Predicated region
  $region26: #{vqvae2_forward.54} parent=0 // pred_check
    _
  $region27: #{vqvae2_forward.54} parent=0 // pred_check_branch
    %197 = sbr.rel (0) target = $region29
  $region28: #{vqvae2_forward.54} parent=0 // pred_region
    _
  $region29: #{vqvae2_forward.54} parent=0 // pred_fallthru
    _
  // Predicated region
  $region30: #{vqvae2_forward.54} parent=0 // pred_check
    _
  $region31: #{vqvae2_forward.54} parent=0 // pred_check_branch
    %199 = sbr.rel (0) target = $region33
  $region32: #{vqvae2_forward.54} parent=0 // pred_region
    _
  $region33: #{vqvae2_forward.54} parent=0 // pred_fallthru
    _

// kernel: tile.68
$region0: #{tile.68}
  #allocation0 [shape = 's32[1]{0}', space=sflag, size = 0x4, scoped, tag = 'scoped memory for tile.68']
  %s0 = inlined_call_operand.vmem [shape: f32[4], index: 0, kind: input, shape index: {}]
  %s1 = inlined_call_operand.vmem [shape: f32[4,4], index: 1, kind: output, shape index: {}]
  // Predicated region
  $region2: #{tile.68} parent=0 // pred_check
    _
  $region3: #{tile.68} parent=0 // pred_check_branch
    %3 = sbr.rel (0) target = $region5
  $region4: #{tile.68} parent=0 // pred_region
    _
  $region5: #{tile.68} parent=0 // pred_fallthru
    _
  %v4 = vld [vmem:[%s0] ss:$0 sm:$0xff]
  %5 = vst [vmem:[%s1] sm:$0xf] %v4

// kernel: tile.69
$region0: #{tile.69}
  %s0 = inlined_call_operand.vmem [shape: f32[4,4], index: 0, kind: input, shape index: {}]
  %s1 = inlined_call_operand.vmem [shape: f32[1,16], index: 1, kind: output, shape index: {}]
  $region1: #{tile.69} parent=0
    #allocation0 [shape = 'u8[4096]{0}', space=vmem, size = 0x1000, scoped, tag = 'scoped mem for output reshape']
    #allocation1 [shape = 'u8[4096]{0}', space=vmem, size = 0x1000, scoped, tag = 'scoped mem for input reshape']
    %s3 = sshll.u32 1, 4
    %s4 = ssub.s32 %s3, 1
    %v5 = vld [vmem:[%s0] sm:%s4]
    %6 = vst [vmem:[#allocation1] sm:%s4] %v5
    %v7 = vld [vmem:[#allocation1] sm:$0x1]
    %vm8 = vcmask 31744
    %9 = vst.msk [vmem:[#allocation0] sm:$0x1] %vm8, %v7
    %s10 = scalar_lea.vmem [#allocation1], 3
    %v11 = vld [vmem:[%s10] sm:$0x1]
    %12 = vrot.lane.b32.xlu0 %v11, 12
    %v13 = vpop.permute.xlu0 %12
    %vm14 = vcmask 130144
    %15 = vst.msk [vmem:[#allocation0] sm:$0x1] %vm14, %v13
    %s16 = scalar_lea.vmem [#allocation1], 2
    %v17 = vld [vmem:[%s16] sm:$0x1]
    %18 = vrot.lane.b32.xlu0 %v17, 8
    %v19 = vpop.permute.xlu0 %18
    %vm20 = vcmask 97344
    %21 = vst.msk [vmem:[#allocation0] sm:$0x1] %vm20, %v19
    %s22 = scalar_lea.vmem [#allocation1], 1
    %v23 = vld [vmem:[%s22] sm:$0x1]
    %24 = vrot.lane.b32.xlu0 %v23, 4
    %v25 = vpop.permute.xlu0 %24
    %vm26 = vcmask 64544
    %27 = vst.msk [vmem:[#allocation0] sm:$0x1] %vm26, %v25
    %s29 = sshll.u32 1, 1
    %s30 = ssub.s32 %s29, 1
    %v32 = vld [vmem:[#allocation0] sm:%s30]
    %s33 = sshll.u32 1, 1
    %s34 = ssub.s32 %s33, 1
    %35 = vst [vmem:[%s1] sm:%s34] %v32

// kernel: vqvae2_forward.55
$region0: #{vqvae2_forward.55}
  #allocation0 [shape = 'u32[]', space=smem, size = 0x4, offset = 0x4, fixed_abs, tag = 'smem constant byte address 0x4 - core index']
  #allocation1 [shape = 'u32[144,128]{1,0:T(1,128)}', space=vmem, size = 0x12000, scoped, tag = 'internal scratch']
  #allocation2 [shape = 'f32[64,16]{1,0:T(8,128)}', space=vmem, size = 0x8000, scoped, tag = 'scratch operand']
  %s0 = inlined_call_operand.vmem [shape: bf16[128,32], index: 0, kind: input, shape index: {}]
  %s1 = inlined_call_operand.vmem [shape: bf16[32,16], index: 1, kind: input, shape index: {}]
  %s2 = inlined_call_operand.vmem [shape: f32[1,16], index: 2, kind: input, shape index: {}]
  %s3 = inlined_call_operand.vmem [shape: f32[1,16], index: 3, kind: input, shape index: {}]
  %s4 = inlined_call_operand.vmem [shape: bf16[128,16], index: 4, kind: output, shape index: {}]
  %s5 = sld [smem:[#allocation0]]
  $region57: #{vqvae2_forward.55} parent=0
    _
  %s7 = ssub.s32 1, %s5
  %s8 = scalar_select 0, %s7, %s5
  loop: start=0, step=1, limit=4
  $region2: #{vqvae2_forward.55} parent=0 // loop_pre_header
    _
  $region3: #{vqvae2_forward.55} parent=0 // loop_header
    %s10 = sphi 0, %s14
    %p11 = scmp.ge.s32.totalorder %s10, 4
    %s17 = sphi 0, %s29
    %s18 = sphi 0, %s25
    %s19 = sphi 0, %s17
    %s20 = sphi 0, %s18
    %s21 = sphi 0, %s19
    %s22 = sphi 0, %s20
    %s34 = sphi 0, %s36
    %s37 = sphi 0, %s34
    %s38 = sphi 0, %s37
    %s54 = sphi 0, %s38
    %s60 = sphi 0, %s62
    %s63 = sphi 0, %s60
    %s64 = sphi 0, %s63
    %s80 = sphi 0, %s64
    %s84 = sphi 0, %s84
    %s86 = sphi 0, %s84
    %s87 = sphi 0, %s86
    %s101 = sphi 0, %s87
    %s105 = sphi 0, %s105
    %s107 = sphi 0, %s105
    %s108 = sphi 0, %s107
    %s122 = sphi 0, %s108
    %s128 = sphi 0, %s130
    %s131 = sphi 0, %s128
    %s132 = sphi 0, %s131
    %s148 = sphi 0, %s132
  $region4: #{vqvae2_forward.55} parent=0 // loop_header_branch
    %13 = sbr.rel (%p11) target = $region8
  $region5: #{vqvae2_forward.55} parent=0 // loop_body
    %s15 = ssub.s32 %s10, 1
    %s16 = ssub.s32 %s10, 2
    %s23 = sadd.s32 1, %s18
    %p24 = scmp.ge.s32.totalorder %s23, 1
    %s25 = scalar_select %p24, 0, %s23
    %s26 = sadd.s32 1, %s17
    %s27 = scalar_select %p24, %s26, %s17
    %p28 = scmp.ge.s32.totalorder %s27, 2
    %s29 = scalar_select %p28, 0, %s27
    %s30 = ssub.s32 %s17, %s29
    %s31 = ssub.s32 %s18, %s25
    %s32 = sor.u32 %s30, %s31
    %p33 = scmp.eq.s32.totalorder %s32, 0
    %s35 = sadd.s32 %s34, 1
    %s36 = scalar_select %p33, %s34, %s35
    %p39 = pneg %p33
    %p40 = scmp.eq.s32.totalorder %s10, 1
    %p41 = por %p39, %p40
    %p42 = scmp.ne.s32.totalorder %s34, %s37
    %p43 = scmp.eq.s32.totalorder %s10, 0
    %p44 = por %p42, %p43
    %p45 = scmp.ne.s32.totalorder %s34, %s37
    %p46 = scmp.eq.s32.totalorder %s15, 1
    %p47 = por %p45, %p46
    %p48 = scmp.ne.s32.totalorder %s37, %s38
    %p49 = scmp.eq.s32.totalorder %s15, 0
    %p50 = por %p48, %p49
    %p51 = scmp.ne.s32.totalorder %s37, %s38
    %p52 = scmp.eq.s32.totalorder %s16, 1
    %p53 = por %p51, %p52
    %p55 = scmp.ne.s32.totalorder %s38, %s54
    %p56 = scmp.eq.s32.totalorder %s16, 0
    %p57 = por %p55, %p56
    %s58 = ssub.s32 %s18, %s25
    %p59 = scmp.eq.s32.totalorder %s58, 0
    %s61 = sadd.s32 %s60, 1
    %s62 = scalar_select %p59, %s60, %s61
    %p65 = pneg %p59
    %p66 = scmp.eq.s32.totalorder %s10, 1
    %p67 = por %p65, %p66
    %p68 = scmp.ne.s32.totalorder %s60, %s63
    %p69 = scmp.eq.s32.totalorder %s10, 0
    %p70 = por %p68, %p69
    %p71 = scmp.ne.s32.totalorder %s60, %s63
    %p72 = scmp.eq.s32.totalorder %s15, 1
    %p73 = por %p71, %p72
    %p74 = scmp.ne.s32.totalorder %s63, %s64
    %p75 = scmp.eq.s32.totalorder %s15, 0
    %p76 = por %p74, %p75
    %p77 = scmp.ne.s32.totalorder %s63, %s64
    %p78 = scmp.eq.s32.totalorder %s16, 1
    %p79 = por %p77, %p78
    %p81 = scmp.ne.s32.totalorder %s64, %s80
    %p82 = scmp.eq.s32.totalorder %s16, 0
    %p83 = por %p81, %p82
    %s85 = sadd.s32 %s84, 1
    %p88 = scmp.eq.s32.totalorder %s10, 1
    %p89 = scmp.ne.s32.totalorder %s84, %s86
    %p90 = scmp.eq.s32.totalorder %s10, 0
    %p91 = por %p89, %p90
    %p92 = scmp.ne.s32.totalorder %s84, %s86
    %p93 = scmp.eq.s32.totalorder %s15, 1
    %p94 = por %p92, %p93
    %p95 = scmp.ne.s32.totalorder %s86, %s87
    %p96 = scmp.eq.s32.totalorder %s15, 0
    %p97 = por %p95, %p96
    %p98 = scmp.ne.s32.totalorder %s86, %s87
    %p99 = scmp.eq.s32.totalorder %s16, 1
    %p100 = por %p98, %p99
    %p102 = scmp.ne.s32.totalorder %s87, %s101
    %p103 = scmp.eq.s32.totalorder %s16, 0
    %p104 = por %p102, %p103
    %s106 = sadd.s32 %s105, 1
    %p109 = scmp.eq.s32.totalorder %s10, 1
    %p110 = scmp.ne.s32.totalorder %s105, %s107
    %p111 = scmp.eq.s32.totalorder %s10, 0
    %p112 = por %p110, %p111
    %p113 = scmp.ne.s32.totalorder %s105, %s107
    %p114 = scmp.eq.s32.totalorder %s15, 1
    %p115 = por %p113, %p114
    %p116 = scmp.ne.s32.totalorder %s107, %s108
    %p117 = scmp.eq.s32.totalorder %s15, 0
    %p118 = por %p116, %p117
    %p119 = scmp.ne.s32.totalorder %s107, %s108
    %p120 = scmp.eq.s32.totalorder %s16, 1
    %p121 = por %p119, %p120
    %p123 = scmp.ne.s32.totalorder %s108, %s122
    %p124 = scmp.eq.s32.totalorder %s16, 0
    %p125 = por %p123, %p124
    %s126 = ssub.s32 %s17, %s29
    %p127 = scmp.eq.s32.totalorder %s126, 0
    %s129 = sadd.s32 %s128, 1
    %s130 = scalar_select %p127, %s128, %s129
    %p133 = pneg %p127
    %p134 = scmp.eq.s32.totalorder %s10, 1
    %p135 = por %p133, %p134
    %p136 = scmp.ne.s32.totalorder %s128, %s131
    %p137 = scmp.eq.s32.totalorder %s10, 0
    %p138 = por %p136, %p137
    %p139 = scmp.ne.s32.totalorder %s128, %s131
    %p140 = scmp.eq.s32.totalorder %s15, 1
    %p141 = por %p139, %p140
    %p142 = scmp.ne.s32.totalorder %s131, %s132
    %p143 = scmp.eq.s32.totalorder %s15, 0
    %p144 = por %p142, %p143
    %p145 = scmp.ne.s32.totalorder %s131, %s132
    %p146 = scmp.eq.s32.totalorder %s16, 1
    %p147 = por %p145, %p146
    %p149 = scmp.ne.s32.totalorder %s132, %s148
    %p150 = scmp.eq.s32.totalorder %s16, 0
    %p151 = por %p149, %p150
    %p152 = scmp.le.s32.totalorder 1, %s10
    %p153 = scmp.lt.s32.totalorder %s10, 3
    %p154 = pnand %p152, %p153
    %p155 = pneg %p154
    // Predicated region
    $region9: #{vqvae2_forward.55} parent=5 // pred_check
      _
    $region10: #{vqvae2_forward.55} parent=5 // pred_check_branch
      %157 = sbr.rel (%p154) target = $region12
    $region11: #{vqvae2_forward.55} parent=5 // pred_region
      %s158 = ssub.s32 %s10, 1
      // Predicated region
      $region13: #{vqvae2_forward.55} parent=11 // pred_check
        %p159 = pneg %p76
      $region14: #{vqvae2_forward.55} parent=11 // pred_check_branch
        %161 = sbr.rel (%p159) target = $region16
      $region15: #{vqvae2_forward.55} parent=11 // pred_region
        %s162 = smul.u32 4, %s20
        %p163 = scmp.lt.s32.totalorder %s162, 3
        %s164 = scalar_select %p163, %s162, 3
        %s165 = smul.addr %s164, 4
        %s166 = scalar_lea.vmem %s1, %s165
        %s167 = smul.u32 4, %s20
      $region16: #{vqvae2_forward.55} parent=11 // pred_fallthru
        _
      // Predicated region
      $region17: #{vqvae2_forward.55} parent=11 // pred_check
        %p168 = pneg %p97
      $region18: #{vqvae2_forward.55} parent=11 // pred_check_branch
        %170 = sbr.rel (%p168) target = $region20
      $region19: #{vqvae2_forward.55} parent=11 // pred_region
        _
      $region20: #{vqvae2_forward.55} parent=11 // pred_fallthru
        _
      // Predicated region
      $region21: #{vqvae2_forward.55} parent=11 // pred_check
        %p171 = pneg %p118
      $region22: #{vqvae2_forward.55} parent=11 // pred_check_branch
        %173 = sbr.rel (%p171) target = $region24
      $region23: #{vqvae2_forward.55} parent=11 // pred_region
        _
      $region24: #{vqvae2_forward.55} parent=11 // pred_fallthru
        _
    $region12: #{vqvae2_forward.55} parent=5 // pred_fallthru
      _
    %p174 = scmp.lt.s32.totalorder %s10, 2
    // Predicated region
    $region25: #{vqvae2_forward.55} parent=5 // pred_check
      %p175 = pneg %p174
    $region26: #{vqvae2_forward.55} parent=5 // pred_check_branch
      %177 = sbr.rel (%p175) target = $region28
    $region27: #{vqvae2_forward.55} parent=5 // pred_region
      // Predicated region
      $region29: #{vqvae2_forward.55} parent=27 // pred_check
        %p178 = pneg %p44
      $region30: #{vqvae2_forward.55} parent=27 // pred_check_branch
        %180 = sbr.rel (%p178) target = $region32
      $region31: #{vqvae2_forward.55} parent=27 // pred_region
        %s181 = smul.u32 8, %s17
        %p182 = scmp.lt.s32.totalorder %s181, 15
        %s183 = scalar_select %p182, %s181, 15
        %p184 = scmp.lt.s32.totalorder %s18, 0
        %s185 = scalar_select %p184, %s18, 0
        %s186 = sadd.s32 %s185, %s183
        %s187 = smul.addr %s186, 4
        %s188 = scalar_lea.vmem %s0, %s187
        %s189 = smul.u32 8, %s17
      $region32: #{vqvae2_forward.55} parent=27 // pred_fallthru
        _
    $region28: #{vqvae2_forward.55} parent=5 // pred_fallthru
      _
    %p190 = scmp.le.s32.totalorder 1, %s10
    %p191 = scmp.lt.s32.totalorder %s10, 3
    %p192 = pnand %p190, %p191
    %p193 = pneg %p192
    // Predicated region
    $region33: #{vqvae2_forward.55} parent=5 // pred_check
      _
    $region34: #{vqvae2_forward.55} parent=5 // pred_check_branch
      %195 = sbr.rel (%p192) target = $region36
    $region35: #{vqvae2_forward.55} parent=5 // pred_region
      %s196 = ssub.s32 %s10, 1
      %s197 = smul.u32 8, %s19
      %p198 = scmp.lt.s32.totalorder %s197, 15
      %s199 = scalar_select %p198, %s197, 15
      %p200 = scmp.lt.s32.totalorder %s20, 0
      %s201 = scalar_select %p200, %s20, 0
      %s202 = sadd.s32 %s201, %s199
      %s203 = smul.addr %s202, 4
      %s204 = scalar_lea.vmem %s0, %s203
      %p205 = pneg %p50
      %p206 = pneg %p47
      %s207 = smul.u32 4, %s20
      %p208 = scmp.lt.s32.totalorder %s207, 3
      %s209 = scalar_select %p208, %s207, 3
      %s210 = smul.addr %s209, 4
      %s211 = scalar_lea.vmem %s1, %s210
      %p212 = pneg %p76
      %p213 = pneg %p73
      %p214 = pneg %p97
      %p215 = pneg %p94
      %p216 = pneg %p118
      %p217 = pneg %p115
      %p218 = pneg %p144
      %p219 = pneg %p141
      %s220 = smul.u32 8, %s19
      %p221 = scmp.lt.s32.totalorder %s220, 15
      %s222 = scalar_select %p221, %s220, 15
      %s223 = smul.addr %s222, 4
      %s224 = scalar_lea.vmem %s4, %s223
      %s225 = smul.u32 8, %s19
      %p226 = scmp.lt.s32.totalorder %s225, 15
      %s227 = scalar_select %p226, %s225, 15
      %p228 = scmp.lt.s32.totalorder %s20, 0
      %s229 = scalar_select %p228, %s20, 0
      %s230 = sadd.s32 %s229, %s227
      %s231 = smul.addr %s230, 4
      %s232 = scalar_lea.vmem %s0, %s231
      %s233 = smul.u32 8, %s19
      %s234 = smul.u32 4, %s20
      %p235 = scmp.lt.s32.totalorder %s234, 3
      %s236 = scalar_select %p235, %s234, 3
      %s237 = smul.addr %s236, 4
      %s238 = scalar_lea.vmem %s1, %s237
      %s239 = smul.u32 4, %s20
      %s240 = smul.u32 8, %s19
      %p241 = scmp.lt.s32.totalorder %s240, 15
      %s242 = scalar_select %p241, %s240, 15
      %s243 = smul.addr %s242, 4
      %s244 = scalar_lea.vmem %s4, %s243
      %s245 = smul.u32 8, %s19
      %p247 = scmp.eq.s32.totalorder %s20, 0
      // Predicated region
      $region37: #{vqvae2_forward.55} parent=35 // pred_check
        %p248 = pneg %p247
      $region38: #{vqvae2_forward.55} parent=35 // pred_check_branch
        %250 = sbr.rel (%p248) target = $region40
      $region39: #{vqvae2_forward.55} parent=35 // pred_region
        %vm251 = vcmask 130048
        %252 = vst.msk [vmem:[#allocation2] sm:$0xff] %vm251, 0.0
        %253 = vst.msk [vmem:[#allocation2 + $0x8] sm:$0xff] %vm251, 0.0
        %254 = vst.msk [vmem:[#allocation2 + $0x10] sm:$0xff] %vm251, 0.0
        %255 = vst.msk [vmem:[#allocation2 + $0x18] sm:$0xff] %vm251, 0.0
        %256 = vst.msk [vmem:[#allocation2 + $0x20] sm:$0xff] %vm251, 0.0
        %257 = vst.msk [vmem:[#allocation2 + $0x28] sm:$0xff] %vm251, 0.0
        %258 = vst.msk [vmem:[#allocation2 + $0x30] sm:$0xff] %vm251, 0.0
        %259 = vst.msk [vmem:[#allocation2 + $0x38] sm:$0xff] %vm251, 0.0
      $region40: #{vqvae2_forward.55} parent=35 // pred_fallthru
        _
      %v260 = vld [vmem:[#allocation2] sm:$0xff]
      %v261 = vld [vmem:[#allocation2 + $0x8] sm:$0xff]
      %v262 = vld [vmem:[#allocation2 + $0x10] sm:$0xff]
      %v263 = vld [vmem:[#allocation2 + $0x18] sm:$0xff]
      %v264 = vld [vmem:[#allocation2 + $0x20] sm:$0xff]
      %v265 = vld [vmem:[#allocation2 + $0x28] sm:$0xff]
      %v266 = vld [vmem:[#allocation2 + $0x30] sm:$0xff]
      %v267 = vld [vmem:[#allocation2 + $0x38] sm:$0xff]
      %v268 = vld [vmem:[%s232] sm:$0xf]
      %v269 = vld [vmem:[%s232 + $0x4] sm:$0xf]
      %v270 = vld [vmem:[%s232 + $0x8] sm:$0xf]
      %v271 = vld [vmem:[%s232 + $0xc] sm:$0xf]
      %v272 = vld [vmem:[%s232 + $0x10] sm:$0xf]
      %v273 = vld [vmem:[%s232 + $0x14] sm:$0xf]
      %v274 = vld [vmem:[%s232 + $0x18] sm:$0xf]
      %v275 = vld [vmem:[%s232 + $0x1c] sm:$0xf]
      %v276 = vld [vmem:[%s238] sm:$0xf]
      %v277 = vld [vmem:[%s238 + $0x4] sm:$0xf]
      %v278 = vld [vmem:[%s238 + $0x8] sm:$0xf]
      %v279 = vld [vmem:[%s238 + $0xc] sm:$0xf]
      %v288 = vunpack.c.l.b16 %v268
      %v289 = vunpack.c.l.b16 %v269
      %v290 = vunpack.c.l.b16 %v270
      %v291 = vunpack.c.l.b16 %v271
      %v292 = vunpack.c.l.b16 %v272
      %v293 = vunpack.c.l.b16 %v273
      %v294 = vunpack.c.l.b16 %v274
      %v295 = vunpack.c.l.b16 %v275
      %v296 = vpack.c.b16 %v289, %v288
      %v297 = vpack.c.b16 %v291, %v290
      %v298 = vpack.c.b16 %v293, %v292
      %v299 = vpack.c.b16 %v295, %v294
      %v304 = vunpack.c.l.b16 %v276
      %v305 = vunpack.c.l.b16 %v277
      %v306 = vunpack.c.l.b16 %v278
      %v307 = vunpack.c.l.b16 %v279
      %v308 = vpack.c.b16 %v305, %v304
      %v309 = vpack.c.b16 %v307, %v306
      %vm312 = vcmask 261120
      %v314 = vsel %vm312, %v296, 0
      %v317 = vsel %vm312, %v297, 0
      %v320 = vsel %vm312, %v298, 0
      %v323 = vsel %vm312, %v299, 0
      %325 = vmatprep.subr.bf16.mxu0 0
      %326 = vmatpush1.bf16.msra.mxu0 0
      %327 = vmatprep.subr.bf16.mxu0 0
      %328 = vmatpush1.bf16.msra.mxu0 0
      %329 = vmatprep.subr.bf16.mxu0 0
      %330 = vmatpush1.bf16.msra.mxu0 0
      %331 = vmatprep.subr.bf16.mxu0 0
      %332 = vmatpush1.bf16.msra.mxu0 0
      %333 = vmatprep.subr.bf16.mxu0 0
      %334 = vmatpush1.bf16.msra.mxu0 0
      %335 = vmatprep.subr.bf16.mxu0 0
      %336 = vmatpush1.bf16.msra.mxu0 0
      %337 = vmatprep.subr.bf16.mxu0 0
      %338 = vmatpush1.bf16.msra.mxu0 %v309
      %339 = vmatprep.subr.bf16.mxu0 0
      %340 = vmatpush1.bf16.msra.mxu0 %v308
      %341 = vmatprep.subr.bf16.mxu0 0
      %342 = vmatpush2.bf16.msra.mxu0 0
      %343 = vmatprep.subr.bf16.mxu0 0
      %344 = vmatpush2.bf16.msra.mxu0 0
      %345 = vmatprep.subr.bf16.mxu0 0
      %346 = vmatpush2.bf16.msra.mxu0 0
      %347 = vmatprep.subr.bf16.mxu0 0
      %348 = vmatpush2.bf16.msra.mxu0 0
      %349 = vmatprep.subr.bf16.mxu0 0
      %350 = vmatpush2.bf16.msra.mxu0 0
      %351 = vmatprep.subr.bf16.mxu0 0
      %352 = vmatpush2.bf16.msra.mxu0 0
      %353 = vmatprep.subr.bf16.mxu0 0
      %354 = vmatpush2.bf16.msra.mxu0 0
      %355 = vmatprep.subr.bf16.mxu0 0
      %356 = vmatpush2.bf16.msra.mxu0 0
      %357 = vmatprep.mubr.bf16.mxu0 0
      %358 = vmatmul.mubr.bf16.gmra.mxu0 %v314
      %v359 = vpop.f32.mrf.mxu0
      %v360 = vadd.f32 0.0, %v359
      %v361 = vpop.f32.mrf.mxu0
      %v362 = vpop.f32.mrf.mxu0
      %v363 = vadd.f32 0.0, %v362
      %v364 = vpop.f32.mrf.mxu0
      %365 = vmatprep.mubr.bf16.mxu0 0
      %366 = vmatmul.mubr.bf16.gmra.mxu0 %v317
      %v367 = vpop.f32.mrf.mxu0
      %v368 = vadd.f32 0.0, %v367
      %v369 = vpop.f32.mrf.mxu0
      %v370 = vpop.f32.mrf.mxu0
      %v371 = vadd.f32 0.0, %v370
      %v372 = vpop.f32.mrf.mxu0
      %373 = vmatprep.mubr.bf16.mxu0 0
      %374 = vmatmul.mubr.bf16.gmra.mxu0 %v320
      %v375 = vpop.f32.mrf.mxu0
      %v376 = vadd.f32 0.0, %v375
      %v377 = vpop.f32.mrf.mxu0
      %v378 = vpop.f32.mrf.mxu0
      %v379 = vadd.f32 0.0, %v378
      %v380 = vpop.f32.mrf.mxu0
      %381 = vmatprep.mubr.bf16.mxu0 0
      %382 = vmatmul.mubr.bf16.gmra.mxu0 %v323
      %v383 = vpop.f32.mrf.mxu0
      %v384 = vadd.f32 0.0, %v383
      %v385 = vpop.f32.mrf.mxu0
      %v386 = vpop.f32.mrf.mxu0
      %v387 = vadd.f32 0.0, %v386
      %v388 = vpop.f32.mrf.mxu0
      %389 = vdwg.mxu0
      %v390 = vadd.f32 %v260, %v360
      %v391 = vadd.f32 %v261, %v363
      %v392 = vadd.f32 %v262, %v368
      %v393 = vadd.f32 %v263, %v371
      %v394 = vadd.f32 %v264, %v376
      %v395 = vadd.f32 %v265, %v379
      %v396 = vadd.f32 %v266, %v384
      %v397 = vadd.f32 %v267, %v387
      %vm398 = vcmask 130048
      %399 = vst.msk [vmem:[#allocation2] sm:$0xff] %vm398, %v390
      %400 = vst.msk [vmem:[#allocation2 + $0x8] sm:$0xff] %vm398, %v391
      %401 = vst.msk [vmem:[#allocation2 + $0x10] sm:$0xff] %vm398, %v392
      %402 = vst.msk [vmem:[#allocation2 + $0x18] sm:$0xff] %vm398, %v393
      %403 = vst.msk [vmem:[#allocation2 + $0x20] sm:$0xff] %vm398, %v394
      %404 = vst.msk [vmem:[#allocation2 + $0x28] sm:$0xff] %vm398, %v395
      %405 = vst.msk [vmem:[#allocation2 + $0x30] sm:$0xff] %vm398, %v396
      %406 = vst.msk [vmem:[#allocation2 + $0x38] sm:$0xff] %vm398, %v397
      // Predicated region
      $region41: #{vqvae2_forward.55} parent=35 // pred_check
        %p407 = pneg %p247
      $region42: #{vqvae2_forward.55} parent=35 // pred_check_branch
        %409 = sbr.rel (%p407) target = $region44
      $region43: #{vqvae2_forward.55} parent=35 // pred_region
        %v410 = vld [vmem:[#allocation2] sm:$0xff]
        %v411 = vld [vmem:[#allocation2 + $0x8] sm:$0xff]
        %v412 = vld [vmem:[#allocation2 + $0x10] sm:$0xff]
        %v413 = vld [vmem:[#allocation2 + $0x18] sm:$0xff]
        %v414 = vld [vmem:[#allocation2 + $0x20] sm:$0xff]
        %v415 = vld [vmem:[#allocation2 + $0x28] sm:$0xff]
        %v416 = vld [vmem:[#allocation2 + $0x30] sm:$0xff]
        %v417 = vld [vmem:[#allocation2 + $0x38] sm:$0xff]
        %v418 = vld [vmem:[%s2] sm:$0x1]
        %v420 = vlaneseq
        %v421 = vshrl.u32 %v420, 7
        %v422 = vsub.s32 0, %v421
        %v423 = vrot.slane %v418, %v422
        %v425 = vmul.f32 %v410, %v423
        %v426 = vmul.f32 %v411, %v423
        %v427 = vmul.f32 %v412, %v423
        %v428 = vmul.f32 %v413, %v423
        %v429 = vmul.f32 %v414, %v423
        %v430 = vmul.f32 %v415, %v423
        %v431 = vmul.f32 %v416, %v423
        %v432 = vmul.f32 %v417, %v423
        %v433 = vld [vmem:[%s3] sm:$0x1]
        %v435 = vlaneseq
        %v436 = vshrl.u32 %v435, 7
        %v437 = vsub.s32 0, %v436
        %v438 = vrot.slane %v433, %v437
        %v440 = vadd.f32 %v425, %v438
        %v441 = vadd.f32 %v426, %v438
        %v442 = vadd.f32 %v427, %v438
        %v443 = vadd.f32 %v428, %v438
        %v444 = vadd.f32 %v429, %v438
        %v445 = vadd.f32 %v430, %v438
        %v446 = vadd.f32 %v431, %v438
        %v447 = vadd.f32 %v432, %v438
        %v448 = vtanh.pop %v440
        %v449 = vtanh.pop %v441
        %v450 = vtanh.pop %v442
        %v451 = vtanh.pop %v443
        %v452 = vtanh.pop %v444
        %v453 = vtanh.pop %v445
        %v454 = vtanh.pop %v446
        %v455 = vtanh.pop %v447
        %v456 = vpack.c.bf16 %v449, %v448
        %v457 = vpack.c.bf16 %v451, %v450
        %v458 = vpack.c.bf16 %v453, %v452
        %v459 = vpack.c.bf16 %v455, %v454
        %v464 = vunpack.c.l.b16 %v456
        %v465 = vunpack.c.h.b16 %v456
        %v466 = vunpack.c.l.b16 %v457
        %v467 = vunpack.c.h.b16 %v457
        %v468 = vunpack.c.l.b16 %v458
        %v469 = vunpack.c.h.b16 %v458
        %v470 = vunpack.c.l.b16 %v459
        %v471 = vunpack.c.h.b16 %v459
        %v472 = vpack.c.b16 %v464, %v464
        %v473 = vpack.c.b16 %v465, %v465
        %v474 = vpack.c.b16 %v466, %v466
        %v475 = vpack.c.b16 %v467, %v467
        %v476 = vpack.c.b16 %v468, %v468
        %v477 = vpack.c.b16 %v469, %v469
        %v478 = vpack.c.b16 %v470, %v470
        %v479 = vpack.c.b16 %v471, %v471
        %vm488 = vcmask 125952
        %489 = vst.msk [vmem:[%s244] sm:$0xf] %vm488, %v472
        %490 = vst.msk [vmem:[%s244 + $0x4] sm:$0xf] %vm488, %v473
        %491 = vst.msk [vmem:[%s244 + $0x8] sm:$0xf] %vm488, %v474
        %492 = vst.msk [vmem:[%s244 + $0xc] sm:$0xf] %vm488, %v475
        %493 = vst.msk [vmem:[%s244 + $0x10] sm:$0xf] %vm488, %v476
        %494 = vst.msk [vmem:[%s244 + $0x14] sm:$0xf] %vm488, %v477
        %495 = vst.msk [vmem:[%s244 + $0x18] sm:$0xf] %vm488, %v478
        %496 = vst.msk [vmem:[%s244 + $0x1c] sm:$0xf] %vm488, %v479
      $region44: #{vqvae2_forward.55} parent=35 // pred_fallthru
        _
      %s497 = smul.u32 8, %s19
      %p498 = scmp.lt.s32.totalorder %s497, 15
      %s499 = scalar_select %p498, %s497, 15
      %s500 = smul.addr %s499, 4
      %s501 = scalar_lea.vmem %s4, %s500
      // Predicated region
      $region45: #{vqvae2_forward.55} parent=35 // pred_check
        %p502 = pneg %p141
      $region46: #{vqvae2_forward.55} parent=35 // pred_check_branch
        %504 = sbr.rel (%p502) target = $region48
      $region47: #{vqvae2_forward.55} parent=35 // pred_region
        %s505 = smul.u32 8, %s19
      $region48: #{vqvae2_forward.55} parent=35 // pred_fallthru
        _
    $region36: #{vqvae2_forward.55} parent=5 // pred_fallthru
      _
    %p506 = scmp.le.s32.totalorder 2, %s10
    // Predicated region
    $region49: #{vqvae2_forward.55} parent=5 // pred_check
      %p507 = pneg %p506
    $region50: #{vqvae2_forward.55} parent=5 // pred_check_branch
      %509 = sbr.rel (%p507) target = $region52
    $region51: #{vqvae2_forward.55} parent=5 // pred_region
      %s510 = ssub.s32 %s10, 2
      // Predicated region
      $region53: #{vqvae2_forward.55} parent=51 // pred_check
        %p511 = pneg %p147
      $region54: #{vqvae2_forward.55} parent=51 // pred_check_branch
        %513 = sbr.rel (%p511) target = $region56
      $region55: #{vqvae2_forward.55} parent=51 // pred_region
        %s514 = smul.u32 8, %s21
        %p515 = scmp.lt.s32.totalorder %s514, 15
        %s516 = scalar_select %p515, %s514, 15
        %s517 = smul.addr %s516, 4
        %s518 = scalar_lea.vmem %s4, %s517
      $region56: #{vqvae2_forward.55} parent=51 // pred_fallthru
        _
    $region52: #{vqvae2_forward.55} parent=5 // pred_fallthru
      _
  $region6: #{vqvae2_forward.55} parent=0 // loop_footer
    %s14 = sadd.s32 1, %s10
  $region7: #{vqvae2_forward.55} parent=0 // loop_footer_branch
    %9 = sbr.rel target = $region3
  $region8: #{vqvae2_forward.55} parent=0 // loop_exit
    _

</llo_original>
